<compile_context>
chip_gen: v6e
topology: v6e:2x2x1
jax: 0.10.0
libtpu: 0.0.40
codegen_flags: <defaults>
</compile_context>

<pallas_src>
import functools
import math

import jax
import jax.numpy as jnp
from jax.experimental import pallas as pl
from jax.experimental.pallas import tpu as pltpu

_BN_EPS = 1e-5
_MXU_DTYPE = jnp.bfloat16   # 1x1-conv operands; f32 MXU accumulation.


def _elementwise_dtype():
    # bf16 elementwise math only where the VPU/EUP are bf16-native (v6e/v7x+);
    # v5e and older emulate bf16 elementwise, so keep f32 there (perf review).
    try:
        kind = jax.devices()[0].device_kind.lower()
    except Exception:
        return jnp.bfloat16
    if any(tag in kind for tag in ("v2", "v3", "v4", "v5")):
        return jnp.float32
    return jnp.bfloat16


_EW_DTYPE = _elementwise_dtype()


def _probe_packed_roll():
    # Import-time feature probe: do packed (bf16) lane rotates lower cleanly on
    # this jaxlib/Mosaic?  If yes, run the depthwise tap math in bf16 (halves
    # XLU roll traffic and vreg pressure); if not, keep the validated f32 path.
    if _EW_DTYPE != jnp.bfloat16:
        return False

    def _k(x_ref, o_ref):
        o_ref[...] = pltpu.roll(x_ref[...], shift=3, axis=1)

    try:
        x = jnp.ones((16, 256), jnp.bfloat16)
        out = pl.pallas_call(
            _k, out_shape=jax.ShapeDtypeStruct((16, 256), jnp.bfloat16))(x)
        jax.block_until_ready(out)
        return True
    except Exception:
        return False


_TAP_DTYPE = jnp.bfloat16 if _probe_packed_roll() else jnp.float32


# ----------------------------- in-kernel helpers -----------------------------

def _gelu_tanh(x, ew_dtype):
    # tanh-form GELU (single EUP tanh); <~1e-3 off the exact erf GELU.
    xc = x.astype(ew_dtype)
    c = 0.7978845608028654  # sqrt(2/pi)
    return 0.5 * xc * (1.0 + jnp.tanh(c * (xc + 0.044715 * (xc * xc * xc))))


def _batchnorm(x, gamma, beta, ones_cols):
    # Training-mode BatchNorm2d over the fused (B*H*W) axis.  Both lane-axis
    # reductions ride the MXU (dot with an all-ones (N,128) matrix, column 0)
    # so they stay off the roll-saturated XLU; x and the stats stay f32 and the
    # variance is computed mean-subtracted (no E[x^2]-E[x]^2 cancellation).
    n_inv = 1.0 / x.shape[1]
    mean = jnp.dot(x, ones_cols, preferred_element_type=jnp.float32)[:, 0:1] * n_inv
    xm = x - mean
    var = jnp.dot(xm * xm, ones_cols, preferred_element_type=jnp.float32)[:, 0:1] * n_inv
    scale = gamma * jax.lax.rsqrt(var + _BN_EPS)
    return xm * scale + beta


def _conv1x1(x, w_ref, b_ref):
    # 1x1 conv as (Cout, Cin) @ (Cin, N) on the MXU, bf16 in / f32 accumulate.
    y = jnp.dot(w_ref[...], x.astype(_MXU_DTYPE),
                preferred_element_type=jnp.float32)
    return y + b_ref[...]


def _dwconv(x, w_ref, b_ref, k, H, W, hpos, wpos, tap_dtype):
    # Depthwise k x k conv, stride 1, SAME zero padding, on the fused spatial
    # axis.  Each tap is one pltpu.roll (XLU) plus a per-channel weight
    # multiply; out-of-image taps are killed by a boundary mask built from the
    # in-kernel hpos/wpos maps (no mask DMA, no padded copies, no unaligned
    # sublane slices).  Tap math runs in tap_dtype (bf16 on v6e/v7x when packed
    # rolls lower), taps accumulate in f32.
    N = x.shape[1]
    p = k // 2
    xc = x.astype(tap_dtype)
    acc = None
    for dy in range(k):
        oy = dy - p
        hval = (hpos + oy >= 0) & (hpos + oy < H)
        for dx in range(k):
            ox = dx - p
            delta = oy * W + ox
            shifted = pltpu.roll(xc, shift=(-delta) % N, axis=1) if delta else xc
            tap = shifted * w_ref[dy * k + dx]                   # (C,N) * (C,1)
            if oy or ox:
                wval = (wpos + ox >= 0) & (wpos + ox < W)
                m = jnp.where(hval & wval, 1.0, 0.0).astype(tap_dtype)
                tap = tap * m                                    # (C,N) * (1,N)
            t32 = tap.astype(jnp.float32)
            acc = t32 if acc is None else acc + t32
    return acc + b_ref[...]


# --------------------------------- kernel ------------------------------------

def _hfo_kernel(B, H, W, tap_dtype, ew_dtype,
                x_ref,
                w_pos_ref, b_pos_ref,
                g1_ref, be1_ref,
                w_c1_ref, b_c1_ref,
                w_attn_ref, b_attn_ref,
                w_c2_ref, b_c2_ref,
                g2_ref, be2_ref,
                w_fc1_ref, b_fc1_ref,
                w_fc2_ref, b_fc2_ref,
                o_ref, xbuf_ref):
    HW = H * W
    N = B * HW

    # Assemble the channels-major (C, B*H*W) slab in VMEM (the wrapper only
    # does metadata reshapes -- no host-side transpose / extra HBM pass).
    for b in range(B):
        xbuf_ref[:, b * HW:(b + 1) * HW] = x_ref[b]
    x = xbuf_ref[...]                                            # (C, N) f32

    # Fused-axis pixel coordinates for the dwconv boundary masks, computed once
    # without vector integer div/mod: n//W via an exact float multiply + trunc
    # (the +0.5 keeps truncation exact for any practical N), then h = row % H.
    n_idx = jax.lax.broadcasted_iota(jnp.int32, (1, N), 1)
    row = ((n_idx.astype(jnp.float32) + 0.5) * (1.0 / W)).astype(jnp.int32)
    wpos = n_idx - row * W                                       # n %  W
    img = ((row.astype(jnp.float32) + 0.5) * (1.0 / H)).astype(jnp.int32)
    hpos = row - img * H                                         # (n // W) % H

    # All-ones MXU helper for the two BatchNorm lane reductions.
    ones_cols = jnp.ones((N, 128), jnp.float32)

    # x = x + pos_embed(x)                    (depthwise 3x3, groups=dim)
    x1 = x + _dwconv(x, w_pos_ref, b_pos_ref, 3, H, W, hpos, wpos, tap_dtype)

    # x = x + conv2(attn(conv1(norm1(x))))    (1x1 -> dw 5x5 -> 1x1)
    t = _batchnorm(x1, g1_ref[...], be1_ref[...], ones_cols)
    t = _conv1x1(t, w_c1_ref, b_c1_ref)
    t = _dwconv(t, w_attn_ref, b_attn_ref, 5, H, W, hpos, wpos, tap_dtype)
    t = _conv1x1(t, w_c2_ref, b_c2_ref)
    x2 = x1 + t

    # x = x + mlp(norm2(x))                   (1x1 -> GELU -> 1x1)
    u = _batchnorm(x2, g2_ref[...], be2_ref[...], ones_cols)
    u = _conv1x1(u, w_fc1_ref, b_fc1_ref)
    u = _gelu_tanh(u, ew_dtype)
    u = _conv1x1(u, w_fc2_ref, b_fc2_ref)

    y = (x2 + u).astype(o_ref.dtype)
    for b in range(B):                                           # lane-dense stores
        o_ref[b] = y[:, b * HW:(b + 1) * HW]


# ------------------------------ params & wrapper ------------------------------

_PARAM_ORDER = ("w_pos", "b_pos", "g1", "be1", "w_c1", "b_c1", "w_attn",
                "b_attn", "w_c2", "b_c2", "g2", "be2", "w_fc1", "b_fc1",
                "w_fc2", "b_fc2")
_MXU_PARAMS = frozenset({"w_c1", "w_c2", "w_fc1", "w_fc2"})
_DW_PARAMS = frozenset({"w_pos", "w_attn"})


def init_params(key, dim, mlp_ratio=4.0):
    """Mirror HighFrequencyOperator._init_weights (normal init, zero bias)."""
    hidden = int(dim * mlp_ratio)
    ks = jax.random.split(key, 6)

    def conv_std(k, out_ch, groups=1):
        fan_out = (k * k * out_ch) // groups
        return math.sqrt(2.0 / fan_out)

    return dict(
        # depthwise 3x3 (torch (dim,1,3,3)) -> (9, dim, 1), tap index dy*3+dx
        w_pos=jax.random.normal(ks[0], (9, dim, 1), jnp.float32) * conv_std(3, dim, dim),
        b_pos=jnp.zeros((dim, 1), jnp.float32),
        g1=jnp.ones((dim, 1), jnp.float32),
        be1=jnp.zeros((dim, 1), jnp.float32),
        # 1x1 convs (torch (out,in,1,1)) -> (out, in)
        w_c1=jax.random.normal(ks[1], (dim, dim), jnp.float32) * conv_std(1, dim),
        b_c1=jnp.zeros((dim, 1), jnp.float32),
        # depthwise 5x5 -> (25, dim, 1)
        w_attn=jax.random.normal(ks[2], (25, dim, 1), jnp.float32) * conv_std(5, dim, dim),
        b_attn=jnp.zeros((dim, 1), jnp.float32),
        w_c2=jax.random.normal(ks[3], (dim, dim), jnp.float32) * conv_std(1, dim),
        b_c2=jnp.zeros((dim, 1), jnp.float32),
        g2=jnp.ones((dim, 1), jnp.float32),
        be2=jnp.zeros((dim, 1), jnp.float32),
        w_fc1=jax.random.normal(ks[4], (hidden, dim), jnp.float32) * conv_std(1, hidden),
        b_fc1=jnp.zeros((hidden, 1), jnp.float32),
        w_fc2=jax.random.normal(ks[5], (dim, hidden), jnp.float32) * conv_std(1, dim),
        b_fc2=jnp.zeros((dim, 1), jnp.float32),
    )


@jax.jit
def high_frequency_operator(x_nchw, params):
    B, C, H, W = x_nchw.shape
    HW = H * W
    N = B * HW
    hidden = params["w_fc1"].shape[0]

    # Metadata-only reshape: the channels-major permute happens inside the
    # kernel (saves one full HBM read+write on both the input and the output).
    x3 = x_nchw.reshape(B, C, HW).astype(jnp.float32)

    inputs = [x3]
    for name in _PARAM_ORDER:
        p = params[name]
        if name in _MXU_PARAMS:
            p = p.astype(_MXU_DTYPE)
        elif name in _DW_PARAMS:
            p = p.astype(_TAP_DTYPE)
        inputs.append(p)

    # Advisory cost so XLA schedules around the custom call sensibly.
    mm_flops = 2 * N * (2 * C * C + 2 * C * hidden) + 8 * C * N * 128
    dw_flops = 2 * N * C * (9 + 25) * 2
    ew_flops = N * (24 * C + 12 * hidden)
    cost = pl.CostEstimate(
        flops=mm_flops + dw_flops + ew_flops,
        transcendentals=N * hidden + 4 * C,
        bytes_accessed=8 * C * N + 2 * (2 * C * C + 2 * C * hidden) + 4 * 44 * C)

    # VMEM budget from the live-set estimate (activations, residuals, the
    # (hidden, N) MLP intermediates, ones helper) plus generous headroom --
    # not a blanket 32 MiB; capped below v7x's 64 MiB physical VMEM.
    cn, hn = 4 * C * N, 4 * hidden * N
    vmem_limit = int(min(max(20 * cn + 10 * hn + (2 << 20), 8 << 20), 64 << 20))

    # TODO(synk): a multi-TensorCore / spatially-tiled variant (v7x megacore or
    # large activations) needs the BatchNorm batch statistics computed in a
    # separate global-reduction pass before tiling over B/H/W; this single-step
    # fully-VMEM-resident kernel keeps the batch stats exact.
    out = pl.pallas_call(
        functools.partial(_hfo_kernel, B, H, W, _TAP_DTYPE, _EW_DTYPE),
        out_shape=jax.ShapeDtypeStruct((B, C, HW), jnp.float32),
        scratch_shapes=[pltpu.VMEM((C, N), jnp.float32)],
        cost_estimate=cost,
        compiler_params=pltpu.CompilerParams(vmem_limit_bytes=vmem_limit),
    )(*inputs)

    return out.reshape(B, C, H, W)


# ------------------------------ pure-JAX reference ----------------------------

@jax.jit
def _reference(x_nchw, params):
    x = jnp.transpose(x_nchw, (0, 2, 3, 1)).astype(jnp.float32)   # NHWC
    hi = jax.lax.Precision.HIGHEST

    def dw(x, w_taps, b, k):
        C = x.shape[-1]
        rhs = w_taps.reshape(k, k, C)[:, :, None, :]              # HWIO, I=1
        y = jax.lax.conv_general_dilated(
            x, rhs, window_strides=(1, 1), padding="SAME",
            dimension_numbers=("NHWC", "HWIO", "NHWC"),
            feature_group_count=C, precision=hi)
        return y + b[:, 0]

    def pw(x, w, b):   # w: (Cout, Cin), b: (Cout, 1)
        return jnp.einsum("bhwi,oi->bhwo", x, w, precision=hi) + b[:, 0]

    def bn(x, g, be):
        m = jnp.mean(x, axis=(0, 1, 2), keepdims=True)
        v = jnp.mean((x - m) ** 2, axis=(0, 1, 2), keepdims=True)
        return (x - m) / jnp.sqrt(v + _BN_EPS) * g[:, 0] + be[:, 0]

    p = params
    x1 = x + dw(x, p["w_pos"], p["b_pos"], 3)
    t = pw(bn(x1, p["g1"], p["be1"]), p["w_c1"], p["b_c1"])
    t = dw(t, p["w_attn"], p["b_attn"], 5)
    t = pw(t, p["w_c2"], p["b_c2"])
    x2 = x1 + t
    u = pw(bn(x2, p["g2"], p["be2"]), p["w_fc1"], p["b_fc1"])
    u = jax.nn.gelu(u, approximate=False)     # exact erf-GELU (PyTorch default)
    u = pw(u, p["w_fc2"], p["b_fc2"])
    return jnp.transpose(x2 + u, (0, 3, 1, 2))


# ----------------------------------- main -------------------------------------

if __name__ == "__main__":
    B, C, H, W = 2, 32, 16, 16          # dim=32 -> mlp hidden = 128
    key = jax.random.PRNGKey(0)
    kx, kp = jax.random.split(key)
    x = jax.random.normal(kx, (B, C, H, W), jnp.float32)
    params = init_params(kp, C, mlp_ratio=4.0)

    out = jax.block_until_ready(high_frequency_operator(x, params))
    assert out.shape == (B, C, H, W) and out.dtype == jnp.float32

    ref = jax.block_until_ready(_reference(x, params))
    # bf16 MXU operands (f32 accumulation), bf16 GELU / tap math on v6e+,
    # tanh-GELU -> scale-aware bounds.
    rel_rms = float(jnp.sqrt(jnp.mean((out - ref) ** 2) / jnp.mean(ref ** 2)))
    rel_max = float(jnp.max(jnp.abs(out - ref)) /
                    jnp.maximum(jnp.max(jnp.abs(ref)), 1.0))
    assert rel_rms < 2e-2 and rel_max < 5e-2, (rel_rms, rel_max)

    print("KERNEL_OK")
</pallas_src>

<mosaic_0001>
module attributes {stable_mosaic.version = 11 : i64} {
  func.func @_k(%arg0: memref<16x256xbf16, #tpu.memory_space<vmem>>, %arg1: memref<16x256xbf16, #tpu.memory_space<vmem>>) attributes {dimension_semantics = [], scalar_prefetch = 0 : i64, scratch_operands = 0 : i64, tpu.core_type = #tpu.core_type<tc>} {
    %c0 = arith.constant 0 : index
    %c0_0 = arith.constant 0 : index
    %0 = vector.load %arg0[%c0, %c0_0] : memref<16x256xbf16, #tpu.memory_space<vmem>>, vector<16x256xbf16>
    %c3_i32 = arith.constant 3 : i32
    %1 = tpu.dynamic_rotate %0 by %c3_i32 dim 1 : vector<16x256xbf16>, i32 -> vector<16x256xbf16>
    %c0_1 = arith.constant 0 : index
    %c0_2 = arith.constant 0 : index
    %2 = vector.load %arg1[%c0_1, %c0_2] : memref<16x256xbf16, #tpu.memory_space<vmem>>, vector<16x256xbf16>
    tpu.vector_store %arg1[%c0_1, %c0_2], %1 {strides = array<i32>} : memref<16x256xbf16, #tpu.memory_space<vmem>>, vector<16x256xbf16>,
    return
  }
}

module attributes {stable_mosaic.version = 11 : i64} {
  func.func @_hfo_kernel(%arg0: memref<2x32x256xf32, #tpu.memory_space<vmem>>, %arg1: memref<9x32x1xf32, #tpu.memory_space<vmem>>, %arg2: memref<32x1xf32, #tpu.memory_space<vmem>>, %arg3: memref<32x1xf32, #tpu.memory_space<vmem>>, %arg4: memref<32x1xf32, #tpu.memory_space<vmem>>, %arg5: memref<32x32xbf16, #tpu.memory_space<vmem>>, %arg6: memref<32x1xf32, #tpu.memory_space<vmem>>, %arg7: memref<25x32x1xf32, #tpu.memory_space<vmem>>, %arg8: memref<32x1xf32, #tpu.memory_space<vmem>>, %arg9: memref<32x32xbf16, #tpu.memory_space<vmem>>, %arg10: memref<32x1xf32, #tpu.memory_space<vmem>>, %arg11: memref<32x1xf32, #tpu.memory_space<vmem>>, %arg12: memref<32x1xf32, #tpu.memory_space<vmem>>, %arg13: memref<128x32xbf16, #tpu.memory_space<vmem>>, %arg14: memref<128x1xf32, #tpu.memory_space<vmem>>, %arg15: memref<32x128xbf16, #tpu.memory_space<vmem>>, %arg16: memref<32x1xf32, #tpu.memory_space<vmem>>, %arg17: memref<2x32x256xf32, #tpu.memory_space<vmem>>, %arg18: memref<32x512xf32, #tpu.memory_space<vmem>>) attributes {dimension_semantics = [], scalar_prefetch = 0 : i64, scratch_operands = 1 : i64, tpu.core_type = #tpu.core_type<tc>} {
    %c0 = arith.constant 0 : index
    %c0_0 = arith.constant 0 : index
    %c0_1 = arith.constant 0 : index
    %0 = vector.load %arg0[%c0, %c0_0, %c0_1] : memref<2x32x256xf32, #tpu.memory_space<vmem>>, vector<1x32x256xf32>
    %1 = vector.shape_cast %0 : vector<1x32x256xf32> to vector<32x256xf32>
    %c0_2 = arith.constant 0 : index
    %c0_3 = arith.constant 0 : index
    %2 = vector.load %arg18[%c0_2, %c0_3] : memref<32x512xf32, #tpu.memory_space<vmem>>, vector<32x256xf32>
    tpu.vector_store %arg18[%c0_2, %c0_3], %1 {strides = array<i32>} : memref<32x512xf32, #tpu.memory_space<vmem>>, vector<32x256xf32>,
    %c1 = arith.constant 1 : index
    %c0_4 = arith.constant 0 : index
    %c0_5 = arith.constant 0 : index
    %3 = vector.load %arg0[%c1, %c0_4, %c0_5] : memref<2x32x256xf32, #tpu.memory_space<vmem>>, vector<1x32x256xf32>
    %4 = vector.shape_cast %3 : vector<1x32x256xf32> to vector<32x256xf32>
    %c0_6 = arith.constant 0 : index
    %c256 = arith.constant 256 : index
    %5 = vector.load %arg18[%c0_6, %c256] : memref<32x512xf32, #tpu.memory_space<vmem>>, vector<32x256xf32>
    tpu.vector_store %arg18[%c0_6, %c256], %4 {strides = array<i32>} : memref<32x512xf32, #tpu.memory_space<vmem>>, vector<32x256xf32>,
    %c0_7 = arith.constant 0 : index
    %c0_8 = arith.constant 0 : index
    %6 = vector.load %arg18[%c0_7, %c0_8] : memref<32x512xf32, #tpu.memory_space<vmem>>, vector<32x512xf32>
    %7 = tpu.iota {dimensions = array<i32: 1>} : vector<1x512xi32>
    %8 = arith.sitofp %7 : vector<1x512xi32> to vector<1x512xf32>
    %cst = arith.constant 5.000000e-01 : f32
    %9 = vector.broadcast %cst : f32 to vector<1x512xf32>
    %10 = arith.addf %8, %9 : vector<1x512xf32>
    %cst_9 = arith.constant 6.250000e-02 : f32
    %11 = vector.broadcast %cst_9 : f32 to vector<1x512xf32>
    %12 = arith.mulf %10, %11 : vector<1x512xf32>
    %13 = arith.fptosi %12 : vector<1x512xf32> to vector<1x512xi32>
    %c16_i32 = arith.constant 16 : i32
    %14 = vector.broadcast %c16_i32 : i32 to vector<1x512xi32>
    %15 = arith.muli %13, %14 : vector<1x512xi32>
    %16 = arith.subi %7, %15 : vector<1x512xi32>
    %17 = arith.sitofp %13 : vector<1x512xi32> to vector<1x512xf32>
    %cst_10 = arith.constant 5.000000e-01 : f32
    %18 = vector.broadcast %cst_10 : f32 to vector<1x512xf32>
    %19 = arith.addf %17, %18 : vector<1x512xf32>
    %cst_11 = arith.constant 6.250000e-02 : f32
    %20 = vector.broadcast %cst_11 : f32 to vector<1x512xf32>
    %21 = arith.mulf %19, %20 : vector<1x512xf32>
    %22 = arith.fptosi %21 : vector<1x512xf32> to vector<1x512xi32>
    %c16_i32_12 = arith.constant 16 : i32
    %23 = vector.broadcast %c16_i32_12 : i32 to vector<1x512xi32>
    %24 = arith.muli %22, %23 : vector<1x512xi32>
    %25 = arith.subi %13, %24 : vector<1x512xi32>
    %cst_13 = arith.constant 1.000000e+00 : f32
    %26 = vector.broadcast %cst_13 : f32 to vector<512x128xf32>
    %c-1_i32 = arith.constant -1 : i32
    %27 = vector.broadcast %c-1_i32 : i32 to vector<1x512xi32>
    %28 = arith.addi %25, %27 : vector<1x512xi32>
    %c0_i32 = arith.constant 0 : i32
    %29 = vector.broadcast %c0_i32 : i32 to vector<1x512xi32>
    %30 = arith.cmpi sge, %28, %29 : vector<1x512xi32>
    %c-1_i32_14 = arith.constant -1 : i32
    %31 = vector.broadcast %c-1_i32_14 : i32 to vector<1x512xi32>
    %32 = arith.addi %25, %31 : vector<1x512xi32>
    %c16_i32_15 = arith.constant 16 : i32
    %33 = vector.broadcast %c16_i32_15 : i32 to vector<1x512xi32>
    %34 = arith.cmpi slt, %32, %33 : vector<1x512xi32>
    %35 = arith.andi %30, %34 : vector<1x512xi1>
    %c17_i32 = arith.constant 17 : i32
    %36 = tpu.dynamic_rotate %6 by %c17_i32 dim 1 : vector<32x512xf32>, i32 -> vector<32x512xf32>
    %c0_16 = arith.constant 0 : index
    %c0_17 = arith.constant 0 : index
    %c0_18 = arith.constant 0 : index
    %37 = vector.load %arg1[%c0_16, %c0_17, %c0_18] : memref<9x32x1xf32, #tpu.memory_space<vmem>>, vector<1x32x1xf32>
    %38 = vector.shape_cast %37 : vector<1x32x1xf32> to vector<32x1xf32>
    %39 = vector.broadcast %38 : vector<32x1xf32> to vector<32x512xf32>
    %40 = arith.mulf %36, %39 : vector<32x512xf32>
    %c-1_i32_19 = arith.constant -1 : i32
    %41 = vector.broadcast %c-1_i32_19 : i32 to vector<1x512xi32>
    %42 = arith.addi %16, %41 : vector<1x512xi32>
    %c0_i32_20 = arith.constant 0 : i32
    %43 = vector.broadcast %c0_i32_20 : i32 to vector<1x512xi32>
    %44 = arith.cmpi sge, %42, %43 : vector<1x512xi32>
    %c-1_i32_21 = arith.constant -1 : i32
    %45 = vector.broadcast %c-1_i32_21 : i32 to vector<1x512xi32>
    %46 = arith.addi %16, %45 : vector<1x512xi32>
    %c16_i32_22 = arith.constant 16 : i32
    %47 = vector.broadcast %c16_i32_22 : i32 to vector<1x512xi32>
    %48 = arith.cmpi slt, %46, %47 : vector<1x512xi32>
    %49 = arith.andi %44, %48 : vector<1x512xi1>
    %50 = arith.andi %35, %49 : vector<1x512xi1>
    %cst_23 = arith.constant 1.000000e+00 : f32
    %cst_24 = arith.constant 0.000000e+00 : f32
    %51 = vector.broadcast %cst_23 : f32 to vector<1x512xf32>
    %52 = vector.broadcast %cst_24 : f32 to vector<1x512xf32>
    %53 = arith.select %50, %51, %52 : vector<1x512xi1>, vector<1x512xf32>
    %54 = vector.broadcast %53 : vector<1x512xf32> to vector<32x512xf32>
    %55 = arith.mulf %40, %54 : vector<32x512xf32>
    %c16_i32_25 = arith.constant 16 : i32
    %56 = tpu.dynamic_rotate %6 by %c16_i32_25 dim 1 : vector<32x512xf32>, i32 -> vector<32x512xf32>
    %c1_26 = arith.constant 1 : index
    %c0_27 = arith.constant 0 : index
    %c0_28 = arith.constant 0 : index
    %57 = vector.load %arg1[%c1_26, %c0_27, %c0_28] : memref<9x32x1xf32, #tpu.memory_space<vmem>>, vector<1x32x1xf32>
    %58 = vector.shape_cast %57 : vector<1x32x1xf32> to vector<32x1xf32>
    %59 = vector.broadcast %58 : vector<32x1xf32> to vector<32x512xf32>
    %60 = arith.mulf %56, %59 : vector<32x512xf32>
    %c0_i32_29 = arith.constant 0 : i32
    %61 = vector.broadcast %c0_i32_29 : i32 to vector<1x512xi32>
    %62 = arith.addi %16, %61 : vector<1x512xi32>
    %c0_i32_30 = arith.constant 0 : i32
    %63 = vector.broadcast %c0_i32_30 : i32 to vector<1x512xi32>
    %64 = arith.cmpi sge, %62, %63 : vector<1x512xi32>
    %c0_i32_31 = arith.constant 0 : i32
    %65 = vector.broadcast %c0_i32_31 : i32 to vector<1x512xi32>
    %66 = arith.addi %16, %65 : vector<1x512xi32>
    %c16_i32_32 = arith.constant 16 : i32
    %67 = vector.broadcast %c16_i32_32 : i32 to vector<1x512xi32>
    %68 = arith.cmpi slt, %66, %67 : vector<1x512xi32>
    %69 = arith.andi %64, %68 : vector<1x512xi1>
    %70 = arith.andi %35, %69 : vector<1x512xi1>
    %cst_33 = arith.constant 1.000000e+00 : f32
    %cst_34 = arith.constant 0.000000e+00 : f32
    %71 = vector.broadcast %cst_33 : f32 to vector<1x512xf32>
    %72 = vector.broadcast %cst_34 : f32 to vector<1x512xf32>
    %73 = arith.select %70, %71, %72 : vector<1x512xi1>, vector<1x512xf32>
    %74 = vector.broadcast %73 : vector<1x512xf32> to vector<32x512xf32>
    %75 = arith.mulf %60, %74 : vector<32x512xf32>
    %76 = arith.addf %55, %75 : vector<32x512xf32>
    %c15_i32 = arith.constant 15 : i32
    %77 = tpu.dynamic_rotate %6 by %c15_i32 dim 1 : vector<32x512xf32>, i32 -> vector<32x512xf32>
    %c2 = arith.constant 2 : index
    %c0_35 = arith.constant 0 : index
    %c0_36 = arith.constant 0 : index
    %78 = vector.load %arg1[%c2, %c0_35, %c0_36] : memref<9x32x1xf32, #tpu.memory_space<vmem>>, vector<1x32x1xf32>
    %79 = vector.shape_cast %78 : vector<1x32x1xf32> to vector<32x1xf32>
    %80 = vector.broadcast %79 : vector<32x1xf32> to vector<32x512xf32>
    %81 = arith.mulf %77, %80 : vector<32x512xf32>
    %c1_i32 = arith.constant 1 : i32
    %82 = vector.broadcast %c1_i32 : i32 to vector<1x512xi32>
    %83 = arith.addi %16, %82 : vector<1x512xi32>
    %c0_i32_37 = arith.constant 0 : i32
    %84 = vector.broadcast %c0_i32_37 : i32 to vector<1x512xi32>
    %85 = arith.cmpi sge, %83, %84 : vector<1x512xi32>
    %c1_i32_38 = arith.constant 1 : i32
    %86 = vector.broadcast %c1_i32_38 : i32 to vector<1x512xi32>
    %87 = arith.addi %16, %86 : vector<1x512xi32>
    %c16_i32_39 = arith.constant 16 : i32
    %88 = vector.broadcast %c16_i32_39 : i32 to vector<1x512xi32>
    %89 = arith.cmpi slt, %87, %88 : vector<1x512xi32>
    %90 = arith.andi %85, %89 : vector<1x512xi1>
    %91 = arith.andi %35, %90 : vector<1x512xi1>
    %cst_40 = arith.constant 1.000000e+00 : f32
    %cst_41 = arith.constant 0.000000e+00 : f32
    %92 = vector.broadcast %cst_40 : f32 to vector<1x512xf32>
    %93 = vector.broadcast %cst_41 : f32 to vector<1x512xf32>
    %94 = arith.select %91, %92, %93 : vector<1x512xi1>, vector<1x512xf32>
    %95 = vector.broadcast %94 : vector<1x512xf32> to vector<32x512xf32>
    %96 = arith.mulf %81, %95 : vector<32x512xf32>
    %97 = arith.addf %76, %96 : vector<32x512xf32>
    %c0_i32_42 = arith.constant 0 : i32
    %98 = vector.broadcast %c0_i32_42 : i32 to vector<1x512xi32>
    %99 = arith.addi %25, %98 : vector<1x512xi32>
    %c0_i32_43 = arith.constant 0 : i32
    %100 = vector.broadcast %c0_i32_43 : i32 to vector<1x512xi32>
    %101 = arith.cmpi sge, %99, %100 : vector<1x512xi32>
    %c0_i32_44 = arith.constant 0 : i32
    %102 = vector.broadcast %c0_i32_44 : i32 to vector<1x512xi32>
    %103 = arith.addi %25, %102 : vector<1x512xi32>
    %c16_i32_45 = arith.constant 16 : i32
    %104 = vector.broadcast %c16_i32_45 : i32 to vector<1x512xi32>
    %105 = arith.cmpi slt, %103, %104 : vector<1x512xi32>
    %106 = arith.andi %101, %105 : vector<1x512xi1>
    %c1_i32_46 = arith.constant 1 : i32
    %107 = tpu.dynamic_rotate %6 by %c1_i32_46 dim 1 : vector<32x512xf32>, i32 -> vector<32x512xf32>
    %c3 = arith.constant 3 : index
    %c0_47 = arith.constant 0 : index
    %c0_48 = arith.constant 0 : index
    %108 = vector.load %arg1[%c3, %c0_47, %c0_48] : memref<9x32x1xf32, #tpu.memory_space<vmem>>, vector<1x32x1xf32>
    %109 = vector.shape_cast %108 : vector<1x32x1xf32> to vector<32x1xf32>
    %110 = vector.broadcast %109 : vector<32x1xf32> to vector<32x512xf32>
    %111 = arith.mulf %107, %110 : vector<32x512xf32>
    %c-1_i32_49 = arith.constant -1 : i32
    %112 = vector.broadcast %c-1_i32_49 : i32 to vector<1x512xi32>
    %113 = arith.addi %16, %112 : vector<1x512xi32>
    %c0_i32_50 = arith.constant 0 : i32
    %114 = vector.broadcast %c0_i32_50 : i32 to vector<1x512xi32>
    %115 = arith.cmpi sge, %113, %114 : vector<1x512xi32>
    %c-1_i32_51 = arith.constant -1 : i32
    %116 = vector.broadcast %c-1_i32_51 : i32 to vector<1x512xi32>
    %117 = arith.addi %16, %116 : vector<1x512xi32>
    %c16_i32_52 = arith.constant 16 : i32
    %118 = vector.broadcast %c16_i32_52 : i32 to vector<1x512xi32>
    %119 = arith.cmpi slt, %117, %118 : vector<1x512xi32>
    %120 = arith.andi %115, %119 : vector<1x512xi1>
    %121 = arith.andi %106, %120 : vector<1x512xi1>
    %cst_53 = arith.constant 1.000000e+00 : f32
    %cst_54 = arith.constant 0.000000e+00 : f32
    %122 = vector.broadcast %cst_53 : f32 to vector<1x512xf32>
    %123 = vector.broadcast %cst_54 : f32 to vector<1x512xf32>
    %124 = arith.select %121, %122, %123 : vector<1x512xi1>, vector<1x512xf32>
    %125 = vector.broadcast %124 : vector<1x512xf32> to vector<32x512xf32>
    %126 = arith.mulf %111, %125 : vector<32x512xf32>
    %127 = arith.addf %97, %126 : vector<32x512xf32>
    %c4 = arith.constant 4 : index
    %c0_55 = arith.constant 0 : index
    %c0_56 = arith.constant 0 : index
    %128 = vector.load %arg1[%c4, %c0_55, %c0_56] : memref<9x32x1xf32, #tpu.memory_space<vmem>>, vector<1x32x1xf32>
    %129 = vector.shape_cast %128 : vector<1x32x1xf32> to vector<32x1xf32>
    %130 = vector.broadcast %129 : vector<32x1xf32> to vector<32x512xf32>
    %131 = arith.mulf %6, %130 : vector<32x512xf32>
    %132 = arith.addf %127, %131 : vector<32x512xf32>
    %c511_i32 = arith.constant 511 : i32
    %133 = tpu.dynamic_rotate %6 by %c511_i32 dim 1 : vector<32x512xf32>, i32 -> vector<32x512xf32>
    %c5 = arith.constant 5 : index
    %c0_57 = arith.constant 0 : index
    %c0_58 = arith.constant 0 : index
    %134 = vector.load %arg1[%c5, %c0_57, %c0_58] : memref<9x32x1xf32, #tpu.memory_space<vmem>>, vector<1x32x1xf32>
    %135 = vector.shape_cast %134 : vector<1x32x1xf32> to vector<32x1xf32>
    %136 = vector.broadcast %135 : vector<32x1xf32> to vector<32x512xf32>
    %137 = arith.mulf %133, %136 : vector<32x512xf32>
    %c1_i32_59 = arith.constant 1 : i32
    %138 = vector.broadcast %c1_i32_59 : i32 to vector<1x512xi32>
    %139 = arith.addi %16, %138 : vector<1x512xi32>
    %c0_i32_60 = arith.constant 0 : i32
    %140 = vector.broadcast %c0_i32_60 : i32 to vector<1x512xi32>
    %141 = arith.cmpi sge, %139, %140 : vector<1x512xi32>
    %c1_i32_61 = arith.constant 1 : i32
    %142 = vector.broadcast %c1_i32_61 : i32 to vector<1x512xi32>
    %143 = arith.addi %16, %142 : vector<1x512xi32>
    %c16_i32_62 = arith.constant 16 : i32
    %144 = vector.broadcast %c16_i32_62 : i32 to vector<1x512xi32>
    %145 = arith.cmpi slt, %143, %144 : vector<1x512xi32>
    %146 = arith.andi %141, %145 : vector<1x512xi1>
    %147 = arith.andi %106, %146 : vector<1x512xi1>
    %cst_63 = arith.constant 1.000000e+00 : f32
    %cst_64 = arith.constant 0.000000e+00 : f32
    %148 = vector.broadcast %cst_63 : f32 to vector<1x512xf32>
    %149 = vector.broadcast %cst_64 : f32 to vector<1x512xf32>
    %150 = arith.select %147, %148, %149 : vector<1x512xi1>, vector<1x512xf32>
    %151 = vector.broadcast %150 : vector<1x512xf32> to vector<32x512xf32>
    %152 = arith.mulf %137, %151 : vector<32x512xf32>
    %153 = arith.addf %132, %152 : vector<32x512xf32>
    %c1_i32_65 = arith.constant 1 : i32
    %154 = vector.broadcast %c1_i32_65 : i32 to vector<1x512xi32>
    %155 = arith.addi %25, %154 : vector<1x512xi32>
    %c0_i32_66 = arith.constant 0 : i32
    %156 = vector.broadcast %c0_i32_66 : i32 to vector<1x512xi32>
    %157 = arith.cmpi sge, %155, %156 : vector<1x512xi32>
    %c1_i32_67 = arith.constant 1 : i32
    %158 = vector.broadcast %c1_i32_67 : i32 to vector<1x512xi32>
    %159 = arith.addi %25, %158 : vector<1x512xi32>
    %c16_i32_68 = arith.constant 16 : i32
    %160 = vector.broadcast %c16_i32_68 : i32 to vector<1x512xi32>
    %161 = arith.cmpi slt, %159, %160 : vector<1x512xi32>
    %162 = arith.andi %157, %161 : vector<1x512xi1>
    %c497_i32 = arith.constant 497 : i32
    %163 = tpu.dynamic_rotate %6 by %c497_i32 dim 1 : vector<32x512xf32>, i32 -> vector<32x512xf32>
    %c6 = arith.constant 6 : index
    %c0_69 = arith.constant 0 : index
    %c0_70 = arith.constant 0 : index
    %164 = vector.load %arg1[%c6, %c0_69, %c0_70] : memref<9x32x1xf32, #tpu.memory_space<vmem>>, vector<1x32x1xf32>
    %165 = vector.shape_cast %164 : vector<1x32x1xf32> to vector<32x1xf32>
    %166 = vector.broadcast %165 : vector<32x1xf32> to vector<32x512xf32>
    %167 = arith.mulf %163, %166 : vector<32x512xf32>
    %c-1_i32_71 = arith.constant -1 : i32
    %168 = vector.broadcast %c-1_i32_71 : i32 to vector<1x512xi32>
    %169 = arith.addi %16, %168 : vector<1x512xi32>
    %c0_i32_72 = arith.constant 0 : i32
    %170 = vector.broadcast %c0_i32_72 : i32 to vector<1x512xi32>
    %171 = arith.cmpi sge, %169, %170 : vector<1x512xi32>
    %c-1_i32_73 = arith.constant -1 : i32
    %172 = vector.broadcast %c-1_i32_73 : i32 to vector<1x512xi32>
    %173 = arith.addi %16, %172 : vector<1x512xi32>
    %c16_i32_74 = arith.constant 16 : i32
    %174 = vector.broadcast %c16_i32_74 : i32 to vector<1x512xi32>
    %175 = arith.cmpi slt, %173, %174 : vector<1x512xi32>
    %176 = arith.andi %171, %175 : vector<1x512xi1>
    %177 = arith.andi %162, %176 : vector<1x512xi1>
    %cst_75 = arith.constant 1.000000e+00 : f32
    %cst_76 = arith.constant 0.000000e+00 : f32
    %178 = vector.broadcast %cst_75 : f32 to vector<1x512xf32>
    %179 = vector.broadcast %cst_76 : f32 to vector<1x512xf32>
    %180 = arith.select %177, %178, %179 : vector<1x512xi1>, vector<1x512xf32>
    %181 = vector.broadcast %180 : vector<1x512xf32> to vector<32x512xf32>
    %182 = arith.mulf %167, %181 : vector<32x512xf32>
    %183 = arith.addf %153, %182 : vector<32x512xf32>
    %c496_i32 = arith.constant 496 : i32
    %184 = tpu.dynamic_rotate %6 by %c496_i32 dim 1 : vector<32x512xf32>, i32 -> vector<32x512xf32>
    %c7 = arith.constant 7 : index
    %c0_77 = arith.constant 0 : index
    %c0_78 = arith.constant 0 : index
    %185 = vector.load %arg1[%c7, %c0_77, %c0_78] : memref<9x32x1xf32, #tpu.memory_space<vmem>>, vector<1x32x1xf32>
    %186 = vector.shape_cast %185 : vector<1x32x1xf32> to vector<32x1xf32>
    %187 = vector.broadcast %186 : vector<32x1xf32> to vector<32x512xf32>
    %188 = arith.mulf %184, %187 : vector<32x512xf32>
    %c0_i32_79 = arith.constant 0 : i32
    %189 = vector.broadcast %c0_i32_79 : i32 to vector<1x512xi32>
    %190 = arith.addi %16, %189 : vector<1x512xi32>
    %c0_i32_80 = arith.constant 0 : i32
    %191 = vector.broadcast %c0_i32_80 : i32 to vector<1x512xi32>
    %192 = arith.cmpi sge, %190, %191 : vector<1x512xi32>
    %c0_i32_81 = arith.constant 0 : i32
    %193 = vector.broadcast %c0_i32_81 : i32 to vector<1x512xi32>
    %194 = arith.addi %16, %193 : vector<1x512xi32>
    %c16_i32_82 = arith.constant 16 : i32
    %195 = vector.broadcast %c16_i32_82 : i32 to vector<1x512xi32>
    %196 = arith.cmpi slt, %194, %195 : vector<1x512xi32>
    %197 = arith.andi %192, %196 : vector<1x512xi1>
    %198 = arith.andi %162, %197 : vector<1x512xi1>
    %cst_83 = arith.constant 1.000000e+00 : f32
    %cst_84 = arith.constant 0.000000e+00 : f32
    %199 = vector.broadcast %cst_83 : f32 to vector<1x512xf32>
    %200 = vector.broadcast %cst_84 : f32 to vector<1x512xf32>
    %201 = arith.select %198, %199, %200 : vector<1x512xi1>, vector<1x512xf32>
    %202 = vector.broadcast %201 : vector<1x512xf32> to vector<32x512xf32>
    %203 = arith.mulf %188, %202 : vector<32x512xf32>
    %204 = arith.addf %183, %203 : vector<32x512xf32>
    %c495_i32 = arith.constant 495 : i32
    %205 = tpu.dynamic_rotate %6 by %c495_i32 dim 1 : vector<32x512xf32>, i32 -> vector<32x512xf32>
    %c8 = arith.constant 8 : index
    %c0_85 = arith.constant 0 : index
    %c0_86 = arith.constant 0 : index
    %206 = vector.load %arg1[%c8, %c0_85, %c0_86] : memref<9x32x1xf32, #tpu.memory_space<vmem>>, vector<1x32x1xf32>
    %207 = vector.shape_cast %206 : vector<1x32x1xf32> to vector<32x1xf32>
    %208 = vector.broadcast %207 : vector<32x1xf32> to vector<32x512xf32>
    %209 = arith.mulf %205, %208 : vector<32x512xf32>
    %c1_i32_87 = arith.constant 1 : i32
    %210 = vector.broadcast %c1_i32_87 : i32 to vector<1x512xi32>
    %211 = arith.addi %16, %210 : vector<1x512xi32>
    %c0_i32_88 = arith.constant 0 : i32
    %212 = vector.broadcast %c0_i32_88 : i32 to vector<1x512xi32>
    %213 = arith.cmpi sge, %211, %212 : vector<1x512xi32>
    %c1_i32_89 = arith.constant 1 : i32
    %214 = vector.broadcast %c1_i32_89 : i32 to vector<1x512xi32>
    %215 = arith.addi %16, %214 : vector<1x512xi32>
    %c16_i32_90 = arith.constant 16 : i32
    %216 = vector.broadcast %c16_i32_90 : i32 to vector<1x512xi32>
    %217 = arith.cmpi slt, %215, %216 : vector<1x512xi32>
    %218 = arith.andi %213, %217 : vector<1x512xi1>
    %219 = arith.andi %162, %218 : vector<1x512xi1>
    %cst_91 = arith.constant 1.000000e+00 : f32
    %cst_92 = arith.constant 0.000000e+00 : f32
    %220 = vector.broadcast %cst_91 : f32 to vector<1x512xf32>
    %221 = vector.broadcast %cst_92 : f32 to vector<1x512xf32>
    %222 = arith.select %219, %220, %221 : vector<1x512xi1>, vector<1x512xf32>
    %223 = vector.broadcast %222 : vector<1x512xf32> to vector<32x512xf32>
    %224 = arith.mulf %209, %223 : vector<32x512xf32>
    %225 = arith.addf %204, %224 : vector<32x512xf32>
    %c0_93 = arith.constant 0 : index
    %c0_94 = arith.constant 0 : index
    %226 = vector.load %arg2[%c0_93, %c0_94] : memref<32x1xf32, #tpu.memory_space<vmem>>, vector<32x1xf32>
    %227 = vector.broadcast %226 : vector<32x1xf32> to vector<32x512xf32>
    %228 = arith.addf %225, %227 : vector<32x512xf32>
    %229 = arith.addf %6, %228 : vector<32x512xf32>
    %c0_95 = arith.constant 0 : index
    %c0_96 = arith.constant 0 : index
    %230 = vector.load %arg3[%c0_95, %c0_96] : memref<32x1xf32, #tpu.memory_space<vmem>>, vector<32x1xf32>
    %c0_97 = arith.constant 0 : index
    %c0_98 = arith.constant 0 : index
    %231 = vector.load %arg4[%c0_97, %c0_98] : memref<32x1xf32, #tpu.memory_space<vmem>>, vector<32x1xf32>
    %cst_99 = arith.constant dense<0.000000e+00> : vector<32x128xf32>
    %232 = tpu.matmul %229, %26, %cst_99 {dimension_numbers = #tpu.dot_dimension_numbers<[1], [0], [0], [1], [0, 0, 1, 1], [], []>} : vector<32x512xf32>, vector<512x128xf32>, vector<32x128xf32> -> vector<32x128xf32>
    %233 = vector.extract_strided_slice %232 {offsets = [0, 0], sizes = [32, 1], strides = [1, 1]} : vector<32x128xf32> to vector<32x1xf32>
    %cst_100 = arith.constant 0.001953125 : f32
    %234 = vector.broadcast %cst_100 : f32 to vector<32x1xf32>
    %235 = arith.mulf %233, %234 : vector<32x1xf32>
    %236 = vector.broadcast %235 : vector<32x1xf32> to vector<32x512xf32>
    %237 = arith.subf %229, %236 : vector<32x512xf32>
    %238 = arith.mulf %237, %237 : vector<32x512xf32>
    %cst_101 = arith.constant dense<0.000000e+00> : vector<32x128xf32>
    %239 = tpu.matmul %238, %26, %cst_101 {dimension_numbers = #tpu.dot_dimension_numbers<[1], [0], [0], [1], [0, 0, 1, 1], [], []>} : vector<32x512xf32>, vector<512x128xf32>, vector<32x128xf32> -> vector<32x128xf32>
    %240 = vector.extract_strided_slice %239 {offsets = [0, 0], sizes = [32, 1], strides = [1, 1]} : vector<32x128xf32> to vector<32x1xf32>
    %cst_102 = arith.constant 0.001953125 : f32
    %241 = vector.broadcast %cst_102 : f32 to vector<32x1xf32>
    %242 = arith.mulf %240, %241 : vector<32x1xf32>
    %cst_103 = arith.constant 9.99999974E-6 : f32
    %243 = vector.broadcast %cst_103 : f32 to vector<32x1xf32>
    %244 = arith.addf %242, %243 : vector<32x1xf32>
    %245 = math.rsqrt %244 : vector<32x1xf32>
    %246 = arith.mulf %230, %245 : vector<32x1xf32>
    %247 = vector.broadcast %246 : vector<32x1xf32> to vector<32x512xf32>
    %248 = arith.mulf %237, %247 : vector<32x512xf32>
    %249 = vector.broadcast %231 : vector<32x1xf32> to vector<32x512xf32>
    %250 = arith.addf %248, %249 : vector<32x512xf32>
    %c0_104 = arith.constant 0 : index
    %c0_105 = arith.constant 0 : index
    %251 = vector.load %arg5[%c0_104, %c0_105] : memref<32x32xbf16, #tpu.memory_space<vmem>>, vector<32x32xbf16>
    %252 = arith.truncf %250 : vector<32x512xf32> to vector<32x512xbf16>
    %cst_106 = arith.constant dense<0.000000e+00> : vector<32x512xf32>
    %253 = tpu.matmul %251, %252, %cst_106 {dimension_numbers = #tpu.dot_dimension_numbers<[1], [0], [0], [1], [0, 0, 1, 1], [], []>} : vector<32x32xbf16>, vector<32x512xbf16>, vector<32x512xf32> -> vector<32x512xf32>
    %c0_107 = arith.constant 0 : index
    %c0_108 = arith.constant 0 : index
    %254 = vector.load %arg6[%c0_107, %c0_108] : memref<32x1xf32, #tpu.memory_space<vmem>>, vector<32x1xf32>
    %255 = vector.broadcast %254 : vector<32x1xf32> to vector<32x512xf32>
    %256 = arith.addf %253, %255 : vector<32x512xf32>
    %c-2_i32 = arith.constant -2 : i32
    %257 = vector.broadcast %c-2_i32 : i32 to vector<1x512xi32>
    %258 = arith.addi %25, %257 : vector<1x512xi32>
    %c0_i32_109 = arith.constant 0 : i32
    %259 = vector.broadcast %c0_i32_109 : i32 to vector<1x512xi32>
    %260 = arith.cmpi sge, %258, %259 : vector<1x512xi32>
    %c-2_i32_110 = arith.constant -2 : i32
    %261 = vector.broadcast %c-2_i32_110 : i32 to vector<1x512xi32>
    %262 = arith.addi %25, %261 : vector<1x512xi32>
    %c16_i32_111 = arith.constant 16 : i32
    %263 = vector.broadcast %c16_i32_111 : i32 to vector<1x512xi32>
    %264 = arith.cmpi slt, %262, %263 : vector<1x512xi32>
    %265 = arith.andi %260, %264 : vector<1x512xi1>
    %c34_i32 = arith.constant 34 : i32
    %266 = tpu.dynamic_rotate %256 by %c34_i32 dim 1 : vector<32x512xf32>, i32 -> vector<32x512xf32>
    %c0_112 = arith.constant 0 : index
    %c0_113 = arith.constant 0 : index
    %c0_114 = arith.constant 0 : index
    %267 = vector.load %arg7[%c0_112, %c0_113, %c0_114] : memref<25x32x1xf32, #tpu.memory_space<vmem>>, vector<1x32x1xf32>
    %268 = vector.shape_cast %267 : vector<1x32x1xf32> to vector<32x1xf32>
    %269 = vector.broadcast %268 : vector<32x1xf32> to vector<32x512xf32>
    %270 = arith.mulf %266, %269 : vector<32x512xf32>
    %c-2_i32_115 = arith.constant -2 : i32
    %271 = vector.broadcast %c-2_i32_115 : i32 to vector<1x512xi32>
    %272 = arith.addi %16, %271 : vector<1x512xi32>
    %c0_i32_116 = arith.constant 0 : i32
    %273 = vector.broadcast %c0_i32_116 : i32 to vector<1x512xi32>
    %274 = arith.cmpi sge, %272, %273 : vector<1x512xi32>
    %c-2_i32_117 = arith.constant -2 : i32
    %275 = vector.broadcast %c-2_i32_117 : i32 to vector<1x512xi32>
    %276 = arith.addi %16, %275 : vector<1x512xi32>
    %c16_i32_118 = arith.constant 16 : i32
    %277 = vector.broadcast %c16_i32_118 : i32 to vector<1x512xi32>
    %278 = arith.cmpi slt, %276, %277 : vector<1x512xi32>
    %279 = arith.andi %274, %278 : vector<1x512xi1>
    %280 = arith.andi %265, %279 : vector<1x512xi1>
    %cst_119 = arith.constant 1.000000e+00 : f32
    %cst_120 = arith.constant 0.000000e+00 : f32
    %281 = vector.broadcast %cst_119 : f32 to vector<1x512xf32>
    %282 = vector.broadcast %cst_120 : f32 to vector<1x512xf32>
    %283 = arith.select %280, %281, %282 : vector<1x512xi1>, vector<1x512xf32>
    %284 = vector.broadcast %283 : vector<1x512xf32> to vector<32x512xf32>
    %285 = arith.mulf %270, %284 : vector<32x512xf32>
    %c33_i32 = arith.constant 33 : i32
    %286 = tpu.dynamic_rotate %256 by %c33_i32 dim 1 : vector<32x512xf32>, i32 -> vector<32x512xf32>
    %c1_121 = arith.constant 1 : index
    %c0_122 = arith.constant 0 : index
    %c0_123 = arith.constant 0 : index
    %287 = vector.load %arg7[%c1_121, %c0_122, %c0_123] : memref<25x32x1xf32, #tpu.memory_space<vmem>>, vector<1x32x1xf32>
    %288 = vector.shape_cast %287 : vector<1x32x1xf32> to vector<32x1xf32>
    %289 = vector.broadcast %288 : vector<32x1xf32> to vector<32x512xf32>
    %290 = arith.mulf %286, %289 : vector<32x512xf32>
    %c-1_i32_124 = arith.constant -1 : i32
    %291 = vector.broadcast %c-1_i32_124 : i32 to vector<1x512xi32>
    %292 = arith.addi %16, %291 : vector<1x512xi32>
    %c0_i32_125 = arith.constant 0 : i32
    %293 = vector.broadcast %c0_i32_125 : i32 to vector<1x512xi32>
    %294 = arith.cmpi sge, %292, %293 : vector<1x512xi32>
    %c-1_i32_126 = arith.constant -1 : i32
    %295 = vector.broadcast %c-1_i32_126 : i32 to vector<1x512xi32>
    %296 = arith.addi %16, %295 : vector<1x512xi32>
    %c16_i32_127 = arith.constant 16 : i32
    %297 = vector.broadcast %c16_i32_127 : i32 to vector<1x512xi32>
    %298 = arith.cmpi slt, %296, %297 : vector<1x512xi32>
    %299 = arith.andi %294, %298 : vector<1x512xi1>
    %300 = arith.andi %265, %299 : vector<1x512xi1>
    %cst_128 = arith.constant 1.000000e+00 : f32
    %cst_129 = arith.constant 0.000000e+00 : f32
    %301 = vector.broadcast %cst_128 : f32 to vector<1x512xf32>
    %302 = vector.broadcast %cst_129 : f32 to vector<1x512xf32>
    %303 = arith.select %300, %301, %302 : vector<1x512xi1>, vector<1x512xf32>
    %304 = vector.broadcast %303 : vector<1x512xf32> to vector<32x512xf32>
    %305 = arith.mulf %290, %304 : vector<32x512xf32>
    %306 = arith.addf %285, %305 : vector<32x512xf32>
    %c32_i32 = arith.constant 32 : i32
    %307 = tpu.dynamic_rotate %256 by %c32_i32 dim 1 : vector<32x512xf32>, i32 -> vector<32x512xf32>
    %c2_130 = arith.constant 2 : index
    %c0_131 = arith.constant 0 : index
    %c0_132 = arith.constant 0 : index
    %308 = vector.load %arg7[%c2_130, %c0_131, %c0_132] : memref<25x32x1xf32, #tpu.memory_space<vmem>>, vector<1x32x1xf32>
    %309 = vector.shape_cast %308 : vector<1x32x1xf32> to vector<32x1xf32>
    %310 = vector.broadcast %309 : vector<32x1xf32> to vector<32x512xf32>
    %311 = arith.mulf %307, %310 : vector<32x512xf32>
    %c0_i32_133 = arith.constant 0 : i32
    %312 = vector.broadcast %c0_i32_133 : i32 to vector<1x512xi32>
    %313 = arith.addi %16, %312 : vector<1x512xi32>
    %c0_i32_134 = arith.constant 0 : i32
    %314 = vector.broadcast %c0_i32_134 : i32 to vector<1x512xi32>
    %315 = arith.cmpi sge, %313, %314 : vector<1x512xi32>
    %c0_i32_135 = arith.constant 0 : i32
    %316 = vector.broadcast %c0_i32_135 : i32 to vector<1x512xi32>
    %317 = arith.addi %16, %316 : vector<1x512xi32>
    %c16_i32_136 = arith.constant 16 : i32
    %318 = vector.broadcast %c16_i32_136 : i32 to vector<1x512xi32>
    %319 = arith.cmpi slt, %317, %318 : vector<1x512xi32>
    %320 = arith.andi %315, %319 : vector<1x512xi1>
    %321 = arith.andi %265, %320 : vector<1x512xi1>
    %cst_137 = arith.constant 1.000000e+00 : f32
    %cst_138 = arith.constant 0.000000e+00 : f32
    %322 = vector.broadcast %cst_137 : f32 to vector<1x512xf32>
    %323 = vector.broadcast %cst_138 : f32 to vector<1x512xf32>
    %324 = arith.select %321, %322, %323 : vector<1x512xi1>, vector<1x512xf32>
    %325 = vector.broadcast %324 : vector<1x512xf32> to vector<32x512xf32>
    %326 = arith.mulf %311, %325 : vector<32x512xf32>
    %327 = arith.addf %306, %326 : vector<32x512xf32>
    %c31_i32 = arith.constant 31 : i32
    %328 = tpu.dynamic_rotate %256 by %c31_i32 dim 1 : vector<32x512xf32>, i32 -> vector<32x512xf32>
    %c3_139 = arith.constant 3 : index
    %c0_140 = arith.constant 0 : index
    %c0_141 = arith.constant 0 : index
    %329 = vector.load %arg7[%c3_139, %c0_140, %c0_141] : memref<25x32x1xf32, #tpu.memory_space<vmem>>, vector<1x32x1xf32>
    %330 = vector.shape_cast %329 : vector<1x32x1xf32> to vector<32x1xf32>
    %331 = vector.broadcast %330 : vector<32x1xf32> to vector<32x512xf32>
    %332 = arith.mulf %328, %331 : vector<32x512xf32>
    %c1_i32_142 = arith.constant 1 : i32
    %333 = vector.broadcast %c1_i32_142 : i32 to vector<1x512xi32>
    %334 = arith.addi %16, %333 : vector<1x512xi32>
    %c0_i32_143 = arith.constant 0 : i32
    %335 = vector.broadcast %c0_i32_143 : i32 to vector<1x512xi32>
    %336 = arith.cmpi sge, %334, %335 : vector<1x512xi32>
    %c1_i32_144 = arith.constant 1 : i32
    %337 = vector.broadcast %c1_i32_144 : i32 to vector<1x512xi32>
    %338 = arith.addi %16, %337 : vector<1x512xi32>
    %c16_i32_145 = arith.constant 16 : i32
    %339 = vector.broadcast %c16_i32_145 : i32 to vector<1x512xi32>
    %340 = arith.cmpi slt, %338, %339 : vector<1x512xi32>
    %341 = arith.andi %336, %340 : vector<1x512xi1>
    %342 = arith.andi %265, %341 : vector<1x512xi1>
    %cst_146 = arith.constant 1.000000e+00 : f32
    %cst_147 = arith.constant 0.000000e+00 : f32
    %343 = vector.broadcast %cst_146 : f32 to vector<1x512xf32>
    %344 = vector.broadcast %cst_147 : f32 to vector<1x512xf32>
    %345 = arith.select %342, %343, %344 : vector<1x512xi1>, vector<1x512xf32>
    %346 = vector.broadcast %345 : vector<1x512xf32> to vector<32x512xf32>
    %347 = arith.mulf %332, %346 : vector<32x512xf32>
    %348 = arith.addf %327, %347 : vector<32x512xf32>
    %c30_i32 = arith.constant 30 : i32
    %349 = tpu.dynamic_rotate %256 by %c30_i32 dim 1 : vector<32x512xf32>, i32 -> vector<32x512xf32>
    %c4_148 = arith.constant 4 : index
    %c0_149 = arith.constant 0 : index
    %c0_150 = arith.constant 0 : index
    %350 = vector.load %arg7[%c4_148, %c0_149, %c0_150] : memref<25x32x1xf32, #tpu.memory_space<vmem>>, vector<1x32x1xf32>
    %351 = vector.shape_cast %350 : vector<1x32x1xf32> to vector<32x1xf32>
    %352 = vector.broadcast %351 : vector<32x1xf32> to vector<32x512xf32>
    %353 = arith.mulf %349, %352 : vector<32x512xf32>
    %c2_i32 = arith.constant 2 : i32
    %354 = vector.broadcast %c2_i32 : i32 to vector<1x512xi32>
    %355 = arith.addi %16, %354 : vector<1x512xi32>
    %c0_i32_151 = arith.constant 0 : i32
    %356 = vector.broadcast %c0_i32_151 : i32 to vector<1x512xi32>
    %357 = arith.cmpi sge, %355, %356 : vector<1x512xi32>
    %c2_i32_152 = arith.constant 2 : i32
    %358 = vector.broadcast %c2_i32_152 : i32 to vector<1x512xi32>
    %359 = arith.addi %16, %358 : vector<1x512xi32>
    %c16_i32_153 = arith.constant 16 : i32
    %360 = vector.broadcast %c16_i32_153 : i32 to vector<1x512xi32>
    %361 = arith.cmpi slt, %359, %360 : vector<1x512xi32>
    %362 = arith.andi %357, %361 : vector<1x512xi1>
    %363 = arith.andi %265, %362 : vector<1x512xi1>
    %cst_154 = arith.constant 1.000000e+00 : f32
    %cst_155 = arith.constant 0.000000e+00 : f32
    %364 = vector.broadcast %cst_154 : f32 to vector<1x512xf32>
    %365 = vector.broadcast %cst_155 : f32 to vector<1x512xf32>
    %366 = arith.select %363, %364, %365 : vector<1x512xi1>, vector<1x512xf32>
    %367 = vector.broadcast %366 : vector<1x512xf32> to vector<32x512xf32>
    %368 = arith.mulf %353, %367 : vector<32x512xf32>
    %369 = arith.addf %348, %368 : vector<32x512xf32>
    %c-1_i32_156 = arith.constant -1 : i32
    %370 = vector.broadcast %c-1_i32_156 : i32 to vector<1x512xi32>
    %371 = arith.addi %25, %370 : vector<1x512xi32>
    %c0_i32_157 = arith.constant 0 : i32
    %372 = vector.broadcast %c0_i32_157 : i32 to vector<1x512xi32>
    %373 = arith.cmpi sge, %371, %372 : vector<1x512xi32>
    %c-1_i32_158 = arith.constant -1 : i32
    %374 = vector.broadcast %c-1_i32_158 : i32 to vector<1x512xi32>
    %375 = arith.addi %25, %374 : vector<1x512xi32>
    %c16_i32_159 = arith.constant 16 : i32
    %376 = vector.broadcast %c16_i32_159 : i32 to vector<1x512xi32>
    %377 = arith.cmpi slt, %375, %376 : vector<1x512xi32>
    %378 = arith.andi %373, %377 : vector<1x512xi1>
    %c18_i32 = arith.constant 18 : i32
    %379 = tpu.dynamic_rotate %256 by %c18_i32 dim 1 : vector<32x512xf32>, i32 -> vector<32x512xf32>
    %c5_160 = arith.constant 5 : index
    %c0_161 = arith.constant 0 : index
    %c0_162 = arith.constant 0 : index
    %380 = vector.load %arg7[%c5_160, %c0_161, %c0_162] : memref<25x32x1xf32, #tpu.memory_space<vmem>>, vector<1x32x1xf32>
    %381 = vector.shape_cast %380 : vector<1x32x1xf32> to vector<32x1xf32>
    %382 = vector.broadcast %381 : vector<32x1xf32> to vector<32x512xf32>
    %383 = arith.mulf %379, %382 : vector<32x512xf32>
    %c-2_i32_163 = arith.constant -2 : i32
    %384 = vector.broadcast %c-2_i32_163 : i32 to vector<1x512xi32>
    %385 = arith.addi %16, %384 : vector<1x512xi32>
    %c0_i32_164 = arith.constant 0 : i32
    %386 = vector.broadcast %c0_i32_164 : i32 to vector<1x512xi32>
    %387 = arith.cmpi sge, %385, %386 : vector<1x512xi32>
    %c-2_i32_165 = arith.constant -2 : i32
    %388 = vector.broadcast %c-2_i32_165 : i32 to vector<1x512xi32>
    %389 = arith.addi %16, %388 : vector<1x512xi32>
    %c16_i32_166 = arith.constant 16 : i32
    %390 = vector.broadcast %c16_i32_166 : i32 to vector<1x512xi32>
    %391 = arith.cmpi slt, %389, %390 : vector<1x512xi32>
    %392 = arith.andi %387, %391 : vector<1x512xi1>
    %393 = arith.andi %378, %392 : vector<1x512xi1>
    %cst_167 = arith.constant 1.000000e+00 : f32
    %cst_168 = arith.constant 0.000000e+00 : f32
    %394 = vector.broadcast %cst_167 : f32 to vector<1x512xf32>
    %395 = vector.broadcast %cst_168 : f32 to vector<1x512xf32>
    %396 = arith.select %393, %394, %395 : vector<1x512xi1>, vector<1x512xf32>
    %397 = vector.broadcast %396 : vector<1x512xf32> to vector<32x512xf32>
    %398 = arith.mulf %383, %397 : vector<32x512xf32>
    %399 = arith.addf %369, %398 : vector<32x512xf32>
    %c17_i32_169 = arith.constant 17 : i32
    %400 = tpu.dynamic_rotate %256 by %c17_i32_169 dim 1 : vector<32x512xf32>, i32 -> vector<32x512xf32>
    %c6_170 = arith.constant 6 : index
    %c0_171 = arith.constant 0 : index
    %c0_172 = arith.constant 0 : index
    %401 = vector.load %arg7[%c6_170, %c0_171, %c0_172] : memref<25x32x1xf32, #tpu.memory_space<vmem>>, vector<1x32x1xf32>
    %402 = vector.shape_cast %401 : vector<1x32x1xf32> to vector<32x1xf32>
    %403 = vector.broadcast %402 : vector<32x1xf32> to vector<32x512xf32>
    %404 = arith.mulf %400, %403 : vector<32x512xf32>
    %c-1_i32_173 = arith.constant -1 : i32
    %405 = vector.broadcast %c-1_i32_173 : i32 to vector<1x512xi32>
    %406 = arith.addi %16, %405 : vector<1x512xi32>
    %c0_i32_174 = arith.constant 0 : i32
    %407 = vector.broadcast %c0_i32_174 : i32 to vector<1x512xi32>
    %408 = arith.cmpi sge, %406, %407 : vector<1x512xi32>
    %c-1_i32_175 = arith.constant -1 : i32
    %409 = vector.broadcast %c-1_i32_175 : i32 to vector<1x512xi32>
    %410 = arith.addi %16, %409 : vector<1x512xi32>
    %c16_i32_176 = arith.constant 16 : i32
    %411 = vector.broadcast %c16_i32_176 : i32 to vector<1x512xi32>
    %412 = arith.cmpi slt, %410, %411 : vector<1x512xi32>
    %413 = arith.andi %408, %412 : vector<1x512xi1>
    %414 = arith.andi %378, %413 : vector<1x512xi1>
    %cst_177 = arith.constant 1.000000e+00 : f32
    %cst_178 = arith.constant 0.000000e+00 : f32
    %415 = vector.broadcast %cst_177 : f32 to vector<1x512xf32>
    %416 = vector.broadcast %cst_178 : f32 to vector<1x512xf32>
    %417 = arith.select %414, %415, %416 : vector<1x512xi1>, vector<1x512xf32>
    %418 = vector.broadcast %417 : vector<1x512xf32> to vector<32x512xf32>
    %419 = arith.mulf %404, %418 : vector<32x512xf32>
    %420 = arith.addf %399, %419 : vector<32x512xf32>
    %c16_i32_179 = arith.constant 16 : i32
    %421 = tpu.dynamic_rotate %256 by %c16_i32_179 dim 1 : vector<32x512xf32>, i32 -> vector<32x512xf32>
    %c7_180 = arith.constant 7 : index
    %c0_181 = arith.constant 0 : index
    %c0_182 = arith.constant 0 : index
    %422 = vector.load %arg7[%c7_180, %c0_181, %c0_182] : memref<25x32x1xf32, #tpu.memory_space<vmem>>, vector<1x32x1xf32>
    %423 = vector.shape_cast %422 : vector<1x32x1xf32> to vector<32x1xf32>
    %424 = vector.broadcast %423 : vector<32x1xf32> to vector<32x512xf32>
    %425 = arith.mulf %421, %424 : vector<32x512xf32>
    %c0_i32_183 = arith.constant 0 : i32
    %426 = vector.broadcast %c0_i32_183 : i32 to vector<1x512xi32>
    %427 = arith.addi %16, %426 : vector<1x512xi32>
    %c0_i32_184 = arith.constant 0 : i32
    %428 = vector.broadcast %c0_i32_184 : i32 to vector<1x512xi32>
    %429 = arith.cmpi sge, %427, %428 : vector<1x512xi32>
    %c0_i32_185 = arith.constant 0 : i32
    %430 = vector.broadcast %c0_i32_185 : i32 to vector<1x512xi32>
    %431 = arith.addi %16, %430 : vector<1x512xi32>
    %c16_i32_186 = arith.constant 16 : i32
    %432 = vector.broadcast %c16_i32_186 : i32 to vector<1x512xi32>
    %433 = arith.cmpi slt, %431, %432 : vector<1x512xi32>
    %434 = arith.andi %429, %433 : vector<1x512xi1>
    %435 = arith.andi %378, %434 : vector<1x512xi1>
    %cst_187 = arith.constant 1.000000e+00 : f32
    %cst_188 = arith.constant 0.000000e+00 : f32
    %436 = vector.broadcast %cst_187 : f32 to vector<1x512xf32>
    %437 = vector.broadcast %cst_188 : f32 to vector<1x512xf32>
    %438 = arith.select %435, %436, %437 : vector<1x512xi1>, vector<1x512xf32>
    %439 = vector.broadcast %438 : vector<1x512xf32> to vector<32x512xf32>
    %440 = arith.mulf %425, %439 : vector<32x512xf32>
    %441 = arith.addf %420, %440 : vector<32x512xf32>
    %c15_i32_189 = arith.constant 15 : i32
    %442 = tpu.dynamic_rotate %256 by %c15_i32_189 dim 1 : vector<32x512xf32>, i32 -> vector<32x512xf32>
    %c8_190 = arith.constant 8 : index
    %c0_191 = arith.constant 0 : index
    %c0_192 = arith.constant 0 : index
    %443 = vector.load %arg7[%c8_190, %c0_191, %c0_192] : memref<25x32x1xf32, #tpu.memory_space<vmem>>, vector<1x32x1xf32>
    %444 = vector.shape_cast %443 : vector<1x32x1xf32> to vector<32x1xf32>
    %445 = vector.broadcast %444 : vector<32x1xf32> to vector<32x512xf32>
    %446 = arith.mulf %442, %445 : vector<32x512xf32>
    %c1_i32_193 = arith.constant 1 : i32
    %447 = vector.broadcast %c1_i32_193 : i32 to vector<1x512xi32>
    %448 = arith.addi %16, %447 : vector<1x512xi32>
    %c0_i32_194 = arith.constant 0 : i32
    %449 = vector.broadcast %c0_i32_194 : i32 to vector<1x512xi32>
    %450 = arith.cmpi sge, %448, %449 : vector<1x512xi32>
    %c1_i32_195 = arith.constant 1 : i32
    %451 = vector.broadcast %c1_i32_195 : i32 to vector<1x512xi32>
    %452 = arith.addi %16, %451 : vector<1x512xi32>
    %c16_i32_196 = arith.constant 16 : i32
    %453 = vector.broadcast %c16_i32_196 : i32 to vector<1x512xi32>
    %454 = arith.cmpi slt, %452, %453 : vector<1x512xi32>
    %455 = arith.andi %450, %454 : vector<1x512xi1>
    %456 = arith.andi %378, %455 : vector<1x512xi1>
    %cst_197 = arith.constant 1.000000e+00 : f32
    %cst_198 = arith.constant 0.000000e+00 : f32
    %457 = vector.broadcast %cst_197 : f32 to vector<1x512xf32>
    %458 = vector.broadcast %cst_198 : f32 to vector<1x512xf32>
    %459 = arith.select %456, %457, %458 : vector<1x512xi1>, vector<1x512xf32>
    %460 = vector.broadcast %459 : vector<1x512xf32> to vector<32x512xf32>
    %461 = arith.mulf %446, %460 : vector<32x512xf32>
    %462 = arith.addf %441, %461 : vector<32x512xf32>
    %c14_i32 = arith.constant 14 : i32
    %463 = tpu.dynamic_rotate %256 by %c14_i32 dim 1 : vector<32x512xf32>, i32 -> vector<32x512xf32>
    %c9 = arith.constant 9 : index
    %c0_199 = arith.constant 0 : index
    %c0_200 = arith.constant 0 : index
    %464 = vector.load %arg7[%c9, %c0_199, %c0_200] : memref<25x32x1xf32, #tpu.memory_space<vmem>>, vector<1x32x1xf32>
    %465 = vector.shape_cast %464 : vector<1x32x1xf32> to vector<32x1xf32>
    %466 = vector.broadcast %465 : vector<32x1xf32> to vector<32x512xf32>
    %467 = arith.mulf %463, %466 : vector<32x512xf32>
    %c2_i32_201 = arith.constant 2 : i32
    %468 = vector.broadcast %c2_i32_201 : i32 to vector<1x512xi32>
    %469 = arith.addi %16, %468 : vector<1x512xi32>
    %c0_i32_202 = arith.constant 0 : i32
    %470 = vector.broadcast %c0_i32_202 : i32 to vector<1x512xi32>
    %471 = arith.cmpi sge, %469, %470 : vector<1x512xi32>
    %c2_i32_203 = arith.constant 2 : i32
    %472 = vector.broadcast %c2_i32_203 : i32 to vector<1x512xi32>
    %473 = arith.addi %16, %472 : vector<1x512xi32>
    %c16_i32_204 = arith.constant 16 : i32
    %474 = vector.broadcast %c16_i32_204 : i32 to vector<1x512xi32>
    %475 = arith.cmpi slt, %473, %474 : vector<1x512xi32>
    %476 = arith.andi %471, %475 : vector<1x512xi1>
    %477 = arith.andi %378, %476 : vector<1x512xi1>
    %cst_205 = arith.constant 1.000000e+00 : f32
    %cst_206 = arith.constant 0.000000e+00 : f32
    %478 = vector.broadcast %cst_205 : f32 to vector<1x512xf32>
    %479 = vector.broadcast %cst_206 : f32 to vector<1x512xf32>
    %480 = arith.select %477, %478, %479 : vector<1x512xi1>, vector<1x512xf32>
    %481 = vector.broadcast %480 : vector<1x512xf32> to vector<32x512xf32>
    %482 = arith.mulf %467, %481 : vector<32x512xf32>
    %483 = arith.addf %462, %482 : vector<32x512xf32>
    %c0_i32_207 = arith.constant 0 : i32
    %484 = vector.broadcast %c0_i32_207 : i32 to vector<1x512xi32>
    %485 = arith.addi %25, %484 : vector<1x512xi32>
    %c0_i32_208 = arith.constant 0 : i32
    %486 = vector.broadcast %c0_i32_208 : i32 to vector<1x512xi32>
    %487 = arith.cmpi sge, %485, %486 : vector<1x512xi32>
    %c0_i32_209 = arith.constant 0 : i32
    %488 = vector.broadcast %c0_i32_209 : i32 to vector<1x512xi32>
    %489 = arith.addi %25, %488 : vector<1x512xi32>
    %c16_i32_210 = arith.constant 16 : i32
    %490 = vector.broadcast %c16_i32_210 : i32 to vector<1x512xi32>
    %491 = arith.cmpi slt, %489, %490 : vector<1x512xi32>
    %492 = arith.andi %487, %491 : vector<1x512xi1>
    %c2_i32_211 = arith.constant 2 : i32
    %493 = tpu.dynamic_rotate %256 by %c2_i32_211 dim 1 : vector<32x512xf32>, i32 -> vector<32x512xf32>
    %c10 = arith.constant 10 : index
    %c0_212 = arith.constant 0 : index
    %c0_213 = arith.constant 0 : index
    %494 = vector.load %arg7[%c10, %c0_212, %c0_213] : memref<25x32x1xf32, #tpu.memory_space<vmem>>, vector<1x32x1xf32>
    %495 = vector.shape_cast %494 : vector<1x32x1xf32> to vector<32x1xf32>
    %496 = vector.broadcast %495 : vector<32x1xf32> to vector<32x512xf32>
    %497 = arith.mulf %493, %496 : vector<32x512xf32>
    %c-2_i32_214 = arith.constant -2 : i32
    %498 = vector.broadcast %c-2_i32_214 : i32 to vector<1x512xi32>
    %499 = arith.addi %16, %498 : vector<1x512xi32>
    %c0_i32_215 = arith.constant 0 : i32
    %500 = vector.broadcast %c0_i32_215 : i32 to vector<1x512xi32>
    %501 = arith.cmpi sge, %499, %500 : vector<1x512xi32>
    %c-2_i32_216 = arith.constant -2 : i32
    %502 = vector.broadcast %c-2_i32_216 : i32 to vector<1x512xi32>
    %503 = arith.addi %16, %502 : vector<1x512xi32>
    %c16_i32_217 = arith.constant 16 : i32
    %504 = vector.broadcast %c16_i32_217 : i32 to vector<1x512xi32>
    %505 = arith.cmpi slt, %503, %504 : vector<1x512xi32>
    %506 = arith.andi %501, %505 : vector<1x512xi1>
    %507 = arith.andi %492, %506 : vector<1x512xi1>
    %cst_218 = arith.constant 1.000000e+00 : f32
    %cst_219 = arith.constant 0.000000e+00 : f32
    %508 = vector.broadcast %cst_218 : f32 to vector<1x512xf32>
    %509 = vector.broadcast %cst_219 : f32 to vector<1x512xf32>
    %510 = arith.select %507, %508, %509 : vector<1x512xi1>, vector<1x512xf32>
    %511 = vector.broadcast %510 : vector<1x512xf32> to vector<32x512xf32>
    %512 = arith.mulf %497, %511 : vector<32x512xf32>
    %513 = arith.addf %483, %512 : vector<32x512xf32>
    %c1_i32_220 = arith.constant 1 : i32
    %514 = tpu.dynamic_rotate %256 by %c1_i32_220 dim 1 : vector<32x512xf32>, i32 -> vector<32x512xf32>
    %c11 = arith.constant 11 : index
    %c0_221 = arith.constant 0 : index
    %c0_222 = arith.constant 0 : index
    %515 = vector.load %arg7[%c11, %c0_221, %c0_222] : memref<25x32x1xf32, #tpu.memory_space<vmem>>, vector<1x32x1xf32>
    %516 = vector.shape_cast %515 : vector<1x32x1xf32> to vector<32x1xf32>
    %517 = vector.broadcast %516 : vector<32x1xf32> to vector<32x512xf32>
    %518 = arith.mulf %514, %517 : vector<32x512xf32>
    %c-1_i32_223 = arith.constant -1 : i32
    %519 = vector.broadcast %c-1_i32_223 : i32 to vector<1x512xi32>
    %520 = arith.addi %16, %519 : vector<1x512xi32>
    %c0_i32_224 = arith.constant 0 : i32
    %521 = vector.broadcast %c0_i32_224 : i32 to vector<1x512xi32>
    %522 = arith.cmpi sge, %520, %521 : vector<1x512xi32>
    %c-1_i32_225 = arith.constant -1 : i32
    %523 = vector.broadcast %c-1_i32_225 : i32 to vector<1x512xi32>
    %524 = arith.addi %16, %523 : vector<1x512xi32>
    %c16_i32_226 = arith.constant 16 : i32
    %525 = vector.broadcast %c16_i32_226 : i32 to vector<1x512xi32>
    %526 = arith.cmpi slt, %524, %525 : vector<1x512xi32>
    %527 = arith.andi %522, %526 : vector<1x512xi1>
    %528 = arith.andi %492, %527 : vector<1x512xi1>
    %cst_227 = arith.constant 1.000000e+00 : f32
    %cst_228 = arith.constant 0.000000e+00 : f32
    %529 = vector.broadcast %cst_227 : f32 to vector<1x512xf32>
    %530 = vector.broadcast %cst_228 : f32 to vector<1x512xf32>
    %531 = arith.select %528, %529, %530 : vector<1x512xi1>, vector<1x512xf32>
    %532 = vector.broadcast %531 : vector<1x512xf32> to vector<32x512xf32>
    %533 = arith.mulf %518, %532 : vector<32x512xf32>
    %534 = arith.addf %513, %533 : vector<32x512xf32>
    %c12 = arith.constant 12 : index
    %c0_229 = arith.constant 0 : index
    %c0_230 = arith.constant 0 : index
    %535 = vector.load %arg7[%c12, %c0_229, %c0_230] : memref<25x32x1xf32, #tpu.memory_space<vmem>>, vector<1x32x1xf32>
    %536 = vector.shape_cast %535 : vector<1x32x1xf32> to vector<32x1xf32>
    %537 = vector.broadcast %536 : vector<32x1xf32> to vector<32x512xf32>
    %538 = arith.mulf %256, %537 : vector<32x512xf32>
    %539 = arith.addf %534, %538 : vector<32x512xf32>
    %c511_i32_231 = arith.constant 511 : i32
    %540 = tpu.dynamic_rotate %256 by %c511_i32_231 dim 1 : vector<32x512xf32>, i32 -> vector<32x512xf32>
    %c13 = arith.constant 13 : index
    %c0_232 = arith.constant 0 : index
    %c0_233 = arith.constant 0 : index
    %541 = vector.load %arg7[%c13, %c0_232, %c0_233] : memref<25x32x1xf32, #tpu.memory_space<vmem>>, vector<1x32x1xf32>
    %542 = vector.shape_cast %541 : vector<1x32x1xf32> to vector<32x1xf32>
    %543 = vector.broadcast %542 : vector<32x1xf32> to vector<32x512xf32>
    %544 = arith.mulf %540, %543 : vector<32x512xf32>
    %c1_i32_234 = arith.constant 1 : i32
    %545 = vector.broadcast %c1_i32_234 : i32 to vector<1x512xi32>
    %546 = arith.addi %16, %545 : vector<1x512xi32>
    %c0_i32_235 = arith.constant 0 : i32
    %547 = vector.broadcast %c0_i32_235 : i32 to vector<1x512xi32>
    %548 = arith.cmpi sge, %546, %547 : vector<1x512xi32>
    %c1_i32_236 = arith.constant 1 : i32
    %549 = vector.broadcast %c1_i32_236 : i32 to vector<1x512xi32>
    %550 = arith.addi %16, %549 : vector<1x512xi32>
    %c16_i32_237 = arith.constant 16 : i32
    %551 = vector.broadcast %c16_i32_237 : i32 to vector<1x512xi32>
    %552 = arith.cmpi slt, %550, %551 : vector<1x512xi32>
    %553 = arith.andi %548, %552 : vector<1x512xi1>
    %554 = arith.andi %492, %553 : vector<1x512xi1>
    %cst_238 = arith.constant 1.000000e+00 : f32
    %cst_239 = arith.constant 0.000000e+00 : f32
    %555 = vector.broadcast %cst_238 : f32 to vector<1x512xf32>
    %556 = vector.broadcast %cst_239 : f32 to vector<1x512xf32>
    %557 = arith.select %554, %555, %556 : vector<1x512xi1>, vector<1x512xf32>
    %558 = vector.broadcast %557 : vector<1x512xf32> to vector<32x512xf32>
    %559 = arith.mulf %544, %558 : vector<32x512xf32>
    %560 = arith.addf %539, %559 : vector<32x512xf32>
    %c510_i32 = arith.constant 510 : i32
    %561 = tpu.dynamic_rotate %256 by %c510_i32 dim 1 : vector<32x512xf32>, i32 -> vector<32x512xf32>
    %c14 = arith.constant 14 : index
    %c0_240 = arith.constant 0 : index
    %c0_241 = arith.constant 0 : index
    %562 = vector.load %arg7[%c14, %c0_240, %c0_241] : memref<25x32x1xf32, #tpu.memory_space<vmem>>, vector<1x32x1xf32>
    %563 = vector.shape_cast %562 : vector<1x32x1xf32> to vector<32x1xf32>
    %564 = vector.broadcast %563 : vector<32x1xf32> to vector<32x512xf32>
    %565 = arith.mulf %561, %564 : vector<32x512xf32>
    %c2_i32_242 = arith.constant 2 : i32
    %566 = vector.broadcast %c2_i32_242 : i32 to vector<1x512xi32>
    %567 = arith.addi %16, %566 : vector<1x512xi32>
    %c0_i32_243 = arith.constant 0 : i32
    %568 = vector.broadcast %c0_i32_243 : i32 to vector<1x512xi32>
    %569 = arith.cmpi sge, %567, %568 : vector<1x512xi32>
    %c2_i32_244 = arith.constant 2 : i32
    %570 = vector.broadcast %c2_i32_244 : i32 to vector<1x512xi32>
    %571 = arith.addi %16, %570 : vector<1x512xi32>
    %c16_i32_245 = arith.constant 16 : i32
    %572 = vector.broadcast %c16_i32_245 : i32 to vector<1x512xi32>
    %573 = arith.cmpi slt, %571, %572 : vector<1x512xi32>
    %574 = arith.andi %569, %573 : vector<1x512xi1>
    %575 = arith.andi %492, %574 : vector<1x512xi1>
    %cst_246 = arith.constant 1.000000e+00 : f32
    %cst_247 = arith.constant 0.000000e+00 : f32
    %576 = vector.broadcast %cst_246 : f32 to vector<1x512xf32>
    %577 = vector.broadcast %cst_247 : f32 to vector<1x512xf32>
    %578 = arith.select %575, %576, %577 : vector<1x512xi1>, vector<1x512xf32>
    %579 = vector.broadcast %578 : vector<1x512xf32> to vector<32x512xf32>
    %580 = arith.mulf %565, %579 : vector<32x512xf32>
    %581 = arith.addf %560, %580 : vector<32x512xf32>
    %c1_i32_248 = arith.constant 1 : i32
    %582 = vector.broadcast %c1_i32_248 : i32 to vector<1x512xi32>
    %583 = arith.addi %25, %582 : vector<1x512xi32>
    %c0_i32_249 = arith.constant 0 : i32
    %584 = vector.broadcast %c0_i32_249 : i32 to vector<1x512xi32>
    %585 = arith.cmpi sge, %583, %584 : vector<1x512xi32>
    %c1_i32_250 = arith.constant 1 : i32
    %586 = vector.broadcast %c1_i32_250 : i32 to vector<1x512xi32>
    %587 = arith.addi %25, %586 : vector<1x512xi32>
    %c16_i32_251 = arith.constant 16 : i32
    %588 = vector.broadcast %c16_i32_251 : i32 to vector<1x512xi32>
    %589 = arith.cmpi slt, %587, %588 : vector<1x512xi32>
    %590 = arith.andi %585, %589 : vector<1x512xi1>
    %c498_i32 = arith.constant 498 : i32
    %591 = tpu.dynamic_rotate %256 by %c498_i32 dim 1 : vector<32x512xf32>, i32 -> vector<32x512xf32>
    %c15 = arith.constant 15 : index
    %c0_252 = arith.constant 0 : index
    %c0_253 = arith.constant 0 : index
    %592 = vector.load %arg7[%c15, %c0_252, %c0_253] : memref<25x32x1xf32, #tpu.memory_space<vmem>>, vector<1x32x1xf32>
    %593 = vector.shape_cast %592 : vector<1x32x1xf32> to vector<32x1xf32>
    %594 = vector.broadcast %593 : vector<32x1xf32> to vector<32x512xf32>
    %595 = arith.mulf %591, %594 : vector<32x512xf32>
    %c-2_i32_254 = arith.constant -2 : i32
    %596 = vector.broadcast %c-2_i32_254 : i32 to vector<1x512xi32>
    %597 = arith.addi %16, %596 : vector<1x512xi32>
    %c0_i32_255 = arith.constant 0 : i32
    %598 = vector.broadcast %c0_i32_255 : i32 to vector<1x512xi32>
    %599 = arith.cmpi sge, %597, %598 : vector<1x512xi32>
    %c-2_i32_256 = arith.constant -2 : i32
    %600 = vector.broadcast %c-2_i32_256 : i32 to vector<1x512xi32>
    %601 = arith.addi %16, %600 : vector<1x512xi32>
    %c16_i32_257 = arith.constant 16 : i32
    %602 = vector.broadcast %c16_i32_257 : i32 to vector<1x512xi32>
    %603 = arith.cmpi slt, %601, %602 : vector<1x512xi32>
    %604 = arith.andi %599, %603 : vector<1x512xi1>
    %605 = arith.andi %590, %604 : vector<1x512xi1>
    %cst_258 = arith.constant 1.000000e+00 : f32
    %cst_259 = arith.constant 0.000000e+00 : f32
    %606 = vector.broadcast %cst_258 : f32 to vector<1x512xf32>
    %607 = vector.broadcast %cst_259 : f32 to vector<1x512xf32>
    %608 = arith.select %605, %606, %607 : vector<1x512xi1>, vector<1x512xf32>
    %609 = vector.broadcast %608 : vector<1x512xf32> to vector<32x512xf32>
    %610 = arith.mulf %595, %609 : vector<32x512xf32>
    %611 = arith.addf %581, %610 : vector<32x512xf32>
    %c497_i32_260 = arith.constant 497 : i32
    %612 = tpu.dynamic_rotate %256 by %c497_i32_260 dim 1 : vector<32x512xf32>, i32 -> vector<32x512xf32>
    %c16 = arith.constant 16 : index
    %c0_261 = arith.constant 0 : index
    %c0_262 = arith.constant 0 : index
    %613 = vector.load %arg7[%c16, %c0_261, %c0_262] : memref<25x32x1xf32, #tpu.memory_space<vmem>>, vector<1x32x1xf32>
    %614 = vector.shape_cast %613 : vector<1x32x1xf32> to vector<32x1xf32>
    %615 = vector.broadcast %614 : vector<32x1xf32> to vector<32x512xf32>
    %616 = arith.mulf %612, %615 : vector<32x512xf32>
    %c-1_i32_263 = arith.constant -1 : i32
    %617 = vector.broadcast %c-1_i32_263 : i32 to vector<1x512xi32>
    %618 = arith.addi %16, %617 : vector<1x512xi32>
    %c0_i32_264 = arith.constant 0 : i32
    %619 = vector.broadcast %c0_i32_264 : i32 to vector<1x512xi32>
    %620 = arith.cmpi sge, %618, %619 : vector<1x512xi32>
    %c-1_i32_265 = arith.constant -1 : i32
    %621 = vector.broadcast %c-1_i32_265 : i32 to vector<1x512xi32>
    %622 = arith.addi %16, %621 : vector<1x512xi32>
    %c16_i32_266 = arith.constant 16 : i32
    %623 = vector.broadcast %c16_i32_266 : i32 to vector<1x512xi32>
    %624 = arith.cmpi slt, %622, %623 : vector<1x512xi32>
    %625 = arith.andi %620, %624 : vector<1x512xi1>
    %626 = arith.andi %590, %625 : vector<1x512xi1>
    %cst_267 = arith.constant 1.000000e+00 : f32
    %cst_268 = arith.constant 0.000000e+00 : f32
    %627 = vector.broadcast %cst_267 : f32 to vector<1x512xf32>
    %628 = vector.broadcast %cst_268 : f32 to vector<1x512xf32>
    %629 = arith.select %626, %627, %628 : vector<1x512xi1>, vector<1x512xf32>
    %630 = vector.broadcast %629 : vector<1x512xf32> to vector<32x512xf32>
    %631 = arith.mulf %616, %630 : vector<32x512xf32>
    %632 = arith.addf %611, %631 : vector<32x512xf32>
    %c496_i32_269 = arith.constant 496 : i32
    %633 = tpu.dynamic_rotate %256 by %c496_i32_269 dim 1 : vector<32x512xf32>, i32 -> vector<32x512xf32>
    %c17 = arith.constant 17 : index
    %c0_270 = arith.constant 0 : index
    %c0_271 = arith.constant 0 : index
    %634 = vector.load %arg7[%c17, %c0_270, %c0_271] : memref<25x32x1xf32, #tpu.memory_space<vmem>>, vector<1x32x1xf32>
    %635 = vector.shape_cast %634 : vector<1x32x1xf32> to vector<32x1xf32>
    %636 = vector.broadcast %635 : vector<32x1xf32> to vector<32x512xf32>
    %637 = arith.mulf %633, %636 : vector<32x512xf32>
    %c0_i32_272 = arith.constant 0 : i32
    %638 = vector.broadcast %c0_i32_272 : i32 to vector<1x512xi32>
    %639 = arith.addi %16, %638 : vector<1x512xi32>
    %c0_i32_273 = arith.constant 0 : i32
    %640 = vector.broadcast %c0_i32_273 : i32 to vector<1x512xi32>
    %641 = arith.cmpi sge, %639, %640 : vector<1x512xi32>
    %c0_i32_274 = arith.constant 0 : i32
    %642 = vector.broadcast %c0_i32_274 : i32 to vector<1x512xi32>
    %643 = arith.addi %16, %642 : vector<1x512xi32>
    %c16_i32_275 = arith.constant 16 : i32
    %644 = vector.broadcast %c16_i32_275 : i32 to vector<1x512xi32>
    %645 = arith.cmpi slt, %643, %644 : vector<1x512xi32>
    %646 = arith.andi %641, %645 : vector<1x512xi1>
    %647 = arith.andi %590, %646 : vector<1x512xi1>
    %cst_276 = arith.constant 1.000000e+00 : f32
    %cst_277 = arith.constant 0.000000e+00 : f32
    %648 = vector.broadcast %cst_276 : f32 to vector<1x512xf32>
    %649 = vector.broadcast %cst_277 : f32 to vector<1x512xf32>
    %650 = arith.select %647, %648, %649 : vector<1x512xi1>, vector<1x512xf32>
    %651 = vector.broadcast %650 : vector<1x512xf32> to vector<32x512xf32>
    %652 = arith.mulf %637, %651 : vector<32x512xf32>
    %653 = arith.addf %632, %652 : vector<32x512xf32>
    %c495_i32_278 = arith.constant 495 : i32
    %654 = tpu.dynamic_rotate %256 by %c495_i32_278 dim 1 : vector<32x512xf32>, i32 -> vector<32x512xf32>
    %c18 = arith.constant 18 : index
    %c0_279 = arith.constant 0 : index
    %c0_280 = arith.constant 0 : index
    %655 = vector.load %arg7[%c18, %c0_279, %c0_280] : memref<25x32x1xf32, #tpu.memory_space<vmem>>, vector<1x32x1xf32>
    %656 = vector.shape_cast %655 : vector<1x32x1xf32> to vector<32x1xf32>
    %657 = vector.broadcast %656 : vector<32x1xf32> to vector<32x512xf32>
    %658 = arith.mulf %654, %657 : vector<32x512xf32>
    %c1_i32_281 = arith.constant 1 : i32
    %659 = vector.broadcast %c1_i32_281 : i32 to vector<1x512xi32>
    %660 = arith.addi %16, %659 : vector<1x512xi32>
    %c0_i32_282 = arith.constant 0 : i32
    %661 = vector.broadcast %c0_i32_282 : i32 to vector<1x512xi32>
    %662 = arith.cmpi sge, %660, %661 : vector<1x512xi32>
    %c1_i32_283 = arith.constant 1 : i32
    %663 = vector.broadcast %c1_i32_283 : i32 to vector<1x512xi32>
    %664 = arith.addi %16, %663 : vector<1x512xi32>
    %c16_i32_284 = arith.constant 16 : i32
    %665 = vector.broadcast %c16_i32_284 : i32 to vector<1x512xi32>
    %666 = arith.cmpi slt, %664, %665 : vector<1x512xi32>
    %667 = arith.andi %662, %666 : vector<1x512xi1>
    %668 = arith.andi %590, %667 : vector<1x512xi1>
    %cst_285 = arith.constant 1.000000e+00 : f32
    %cst_286 = arith.constant 0.000000e+00 : f32
    %669 = vector.broadcast %cst_285 : f32 to vector<1x512xf32>
    %670 = vector.broadcast %cst_286 : f32 to vector<1x512xf32>
    %671 = arith.select %668, %669, %670 : vector<1x512xi1>, vector<1x512xf32>
    %672 = vector.broadcast %671 : vector<1x512xf32> to vector<32x512xf32>
    %673 = arith.mulf %658, %672 : vector<32x512xf32>
    %674 = arith.addf %653, %673 : vector<32x512xf32>
    %c494_i32 = arith.constant 494 : i32
    %675 = tpu.dynamic_rotate %256 by %c494_i32 dim 1 : vector<32x512xf32>, i32 -> vector<32x512xf32>
    %c19 = arith.constant 19 : index
    %c0_287 = arith.constant 0 : index
    %c0_288 = arith.constant 0 : index
    %676 = vector.load %arg7[%c19, %c0_287, %c0_288] : memref<25x32x1xf32, #tpu.memory_space<vmem>>, vector<1x32x1xf32>
    %677 = vector.shape_cast %676 : vector<1x32x1xf32> to vector<32x1xf32>
    %678 = vector.broadcast %677 : vector<32x1xf32> to vector<32x512xf32>
    %679 = arith.mulf %675, %678 : vector<32x512xf32>
    %c2_i32_289 = arith.constant 2 : i32
    %680 = vector.broadcast %c2_i32_289 : i32 to vector<1x512xi32>
    %681 = arith.addi %16, %680 : vector<1x512xi32>
    %c0_i32_290 = arith.constant 0 : i32
    %682 = vector.broadcast %c0_i32_290 : i32 to vector<1x512xi32>
    %683 = arith.cmpi sge, %681, %682 : vector<1x512xi32>
    %c2_i32_291 = arith.constant 2 : i32
    %684 = vector.broadcast %c2_i32_291 : i32 to vector<1x512xi32>
    %685 = arith.addi %16, %684 : vector<1x512xi32>
    %c16_i32_292 = arith.constant 16 : i32
    %686 = vector.broadcast %c16_i32_292 : i32 to vector<1x512xi32>
    %687 = arith.cmpi slt, %685, %686 : vector<1x512xi32>
    %688 = arith.andi %683, %687 : vector<1x512xi1>
    %689 = arith.andi %590, %688 : vector<1x512xi1>
    %cst_293 = arith.constant 1.000000e+00 : f32
    %cst_294 = arith.constant 0.000000e+00 : f32
    %690 = vector.broadcast %cst_293 : f32 to vector<1x512xf32>
    %691 = vector.broadcast %cst_294 : f32 to vector<1x512xf32>
    %692 = arith.select %689, %690, %691 : vector<1x512xi1>, vector<1x512xf32>
    %693 = vector.broadcast %692 : vector<1x512xf32> to vector<32x512xf32>
    %694 = arith.mulf %679, %693 : vector<32x512xf32>
    %695 = arith.addf %674, %694 : vector<32x512xf32>
    %c2_i32_295 = arith.constant 2 : i32
    %696 = vector.broadcast %c2_i32_295 : i32 to vector<1x512xi32>
    %697 = arith.addi %25, %696 : vector<1x512xi32>
    %c0_i32_296 = arith.constant 0 : i32
    %698 = vector.broadcast %c0_i32_296 : i32 to vector<1x512xi32>
    %699 = arith.cmpi sge, %697, %698 : vector<1x512xi32>
    %c2_i32_297 = arith.constant 2 : i32
    %700 = vector.broadcast %c2_i32_297 : i32 to vector<1x512xi32>
    %701 = arith.addi %25, %700 : vector<1x512xi32>
    %c16_i32_298 = arith.constant 16 : i32
    %702 = vector.broadcast %c16_i32_298 : i32 to vector<1x512xi32>
    %703 = arith.cmpi slt, %701, %702 : vector<1x512xi32>
    %704 = arith.andi %699, %703 : vector<1x512xi1>
    %c482_i32 = arith.constant 482 : i32
    %705 = tpu.dynamic_rotate %256 by %c482_i32 dim 1 : vector<32x512xf32>, i32 -> vector<32x512xf32>
    %c20 = arith.constant 20 : index
    %c0_299 = arith.constant 0 : index
    %c0_300 = arith.constant 0 : index
    %706 = vector.load %arg7[%c20, %c0_299, %c0_300] : memref<25x32x1xf32, #tpu.memory_space<vmem>>, vector<1x32x1xf32>
    %707 = vector.shape_cast %706 : vector<1x32x1xf32> to vector<32x1xf32>
    %708 = vector.broadcast %707 : vector<32x1xf32> to vector<32x512xf32>
    %709 = arith.mulf %705, %708 : vector<32x512xf32>
    %c-2_i32_301 = arith.constant -2 : i32
    %710 = vector.broadcast %c-2_i32_301 : i32 to vector<1x512xi32>
    %711 = arith.addi %16, %710 : vector<1x512xi32>
    %c0_i32_302 = arith.constant 0 : i32
    %712 = vector.broadcast %c0_i32_302 : i32 to vector<1x512xi32>
    %713 = arith.cmpi sge, %711, %712 : vector<1x512xi32>
    %c-2_i32_303 = arith.constant -2 : i32
    %714 = vector.broadcast %c-2_i32_303 : i32 to vector<1x512xi32>
    %715 = arith.addi %16, %714 : vector<1x512xi32>
    %c16_i32_304 = arith.constant 16 : i32
    %716 = vector.broadcast %c16_i32_304 : i32 to vector<1x512xi32>
    %717 = arith.cmpi slt, %715, %716 : vector<1x512xi32>
    %718 = arith.andi %713, %717 : vector<1x512xi1>
    %719 = arith.andi %704, %718 : vector<1x512xi1>
    %cst_305 = arith.constant 1.000000e+00 : f32
    %cst_306 = arith.constant 0.000000e+00 : f32
    %720 = vector.broadcast %cst_305 : f32 to vector<1x512xf32>
    %721 = vector.broadcast %cst_306 : f32 to vector<1x512xf32>
    %722 = arith.select %719, %720, %721 : vector<1x512xi1>, vector<1x512xf32>
    %723 = vector.broadcast %722 : vector<1x512xf32> to vector<32x512xf32>
    %724 = arith.mulf %709, %723 : vector<32x512xf32>
    %725 = arith.addf %695, %724 : vector<32x512xf32>
    %c481_i32 = arith.constant 481 : i32
    %726 = tpu.dynamic_rotate %256 by %c481_i32 dim 1 : vector<32x512xf32>, i32 -> vector<32x512xf32>
    %c21 = arith.constant 21 : index
    %c0_307 = arith.constant 0 : index
    %c0_308 = arith.constant 0 : index
    %727 = vector.load %arg7[%c21, %c0_307, %c0_308] : memref<25x32x1xf32, #tpu.memory_space<vmem>>, vector<1x32x1xf32>
    %728 = vector.shape_cast %727 : vector<1x32x1xf32> to vector<32x1xf32>
    %729 = vector.broadcast %728 : vector<32x1xf32> to vector<32x512xf32>
    %730 = arith.mulf %726, %729 : vector<32x512xf32>
    %c-1_i32_309 = arith.constant -1 : i32
    %731 = vector.broadcast %c-1_i32_309 : i32 to vector<1x512xi32>
    %732 = arith.addi %16, %731 : vector<1x512xi32>
    %c0_i32_310 = arith.constant 0 : i32
    %733 = vector.broadcast %c0_i32_310 : i32 to vector<1x512xi32>
    %734 = arith.cmpi sge, %732, %733 : vector<1x512xi32>
    %c-1_i32_311 = arith.constant -1 : i32
    %735 = vector.broadcast %c-1_i32_311 : i32 to vector<1x512xi32>
    %736 = arith.addi %16, %735 : vector<1x512xi32>
    %c16_i32_312 = arith.constant 16 : i32
    %737 = vector.broadcast %c16_i32_312 : i32 to vector<1x512xi32>
    %738 = arith.cmpi slt, %736, %737 : vector<1x512xi32>
    %739 = arith.andi %734, %738 : vector<1x512xi1>
    %740 = arith.andi %704, %739 : vector<1x512xi1>
    %cst_313 = arith.constant 1.000000e+00 : f32
    %cst_314 = arith.constant 0.000000e+00 : f32
    %741 = vector.broadcast %cst_313 : f32 to vector<1x512xf32>
    %742 = vector.broadcast %cst_314 : f32 to vector<1x512xf32>
    %743 = arith.select %740, %741, %742 : vector<1x512xi1>, vector<1x512xf32>
    %744 = vector.broadcast %743 : vector<1x512xf32> to vector<32x512xf32>
    %745 = arith.mulf %730, %744 : vector<32x512xf32>
    %746 = arith.addf %725, %745 : vector<32x512xf32>
    %c480_i32 = arith.constant 480 : i32
    %747 = tpu.dynamic_rotate %256 by %c480_i32 dim 1 : vector<32x512xf32>, i32 -> vector<32x512xf32>
    %c22 = arith.constant 22 : index
    %c0_315 = arith.constant 0 : index
    %c0_316 = arith.constant 0 : index
    %748 = vector.load %arg7[%c22, %c0_315, %c0_316] : memref<25x32x1xf32, #tpu.memory_space<vmem>>, vector<1x32x1xf32>
    %749 = vector.shape_cast %748 : vector<1x32x1xf32> to vector<32x1xf32>
    %750 = vector.broadcast %749 : vector<32x1xf32> to vector<32x512xf32>
    %751 = arith.mulf %747, %750 : vector<32x512xf32>
    %c0_i32_317 = arith.constant 0 : i32
    %752 = vector.broadcast %c0_i32_317 : i32 to vector<1x512xi32>
    %753 = arith.addi %16, %752 : vector<1x512xi32>
    %c0_i32_318 = arith.constant 0 : i32
    %754 = vector.broadcast %c0_i32_318 : i32 to vector<1x512xi32>
    %755 = arith.cmpi sge, %753, %754 : vector<1x512xi32>
    %c0_i32_319 = arith.constant 0 : i32
    %756 = vector.broadcast %c0_i32_319 : i32 to vector<1x512xi32>
    %757 = arith.addi %16, %756 : vector<1x512xi32>
    %c16_i32_320 = arith.constant 16 : i32
    %758 = vector.broadcast %c16_i32_320 : i32 to vector<1x512xi32>
    %759 = arith.cmpi slt, %757, %758 : vector<1x512xi32>
    %760 = arith.andi %755, %759 : vector<1x512xi1>
    %761 = arith.andi %704, %760 : vector<1x512xi1>
    %cst_321 = arith.constant 1.000000e+00 : f32
    %cst_322 = arith.constant 0.000000e+00 : f32
    %762 = vector.broadcast %cst_321 : f32 to vector<1x512xf32>
    %763 = vector.broadcast %cst_322 : f32 to vector<1x512xf32>
    %764 = arith.select %761, %762, %763 : vector<1x512xi1>, vector<1x512xf32>
    %765 = vector.broadcast %764 : vector<1x512xf32> to vector<32x512xf32>
    %766 = arith.mulf %751, %765 : vector<32x512xf32>
    %767 = arith.addf %746, %766 : vector<32x512xf32>
    %c479_i32 = arith.constant 479 : i32
    %768 = tpu.dynamic_rotate %256 by %c479_i32 dim 1 : vector<32x512xf32>, i32 -> vector<32x512xf32>
    %c23 = arith.constant 23 : index
    %c0_323 = arith.constant 0 : index
    %c0_324 = arith.constant 0 : index
    %769 = vector.load %arg7[%c23, %c0_323, %c0_324] : memref<25x32x1xf32, #tpu.memory_space<vmem>>, vector<1x32x1xf32>
    %770 = vector.shape_cast %769 : vector<1x32x1xf32> to vector<32x1xf32>
    %771 = vector.broadcast %770 : vector<32x1xf32> to vector<32x512xf32>
    %772 = arith.mulf %768, %771 : vector<32x512xf32>
    %c1_i32_325 = arith.constant 1 : i32
    %773 = vector.broadcast %c1_i32_325 : i32 to vector<1x512xi32>
    %774 = arith.addi %16, %773 : vector<1x512xi32>
    %c0_i32_326 = arith.constant 0 : i32
    %775 = vector.broadcast %c0_i32_326 : i32 to vector<1x512xi32>
    %776 = arith.cmpi sge, %774, %775 : vector<1x512xi32>
    %c1_i32_327 = arith.constant 1 : i32
    %777 = vector.broadcast %c1_i32_327 : i32 to vector<1x512xi32>
    %778 = arith.addi %16, %777 : vector<1x512xi32>
    %c16_i32_328 = arith.constant 16 : i32
    %779 = vector.broadcast %c16_i32_328 : i32 to vector<1x512xi32>
    %780 = arith.cmpi slt, %778, %779 : vector<1x512xi32>
    %781 = arith.andi %776, %780 : vector<1x512xi1>
    %782 = arith.andi %704, %781 : vector<1x512xi1>
    %cst_329 = arith.constant 1.000000e+00 : f32
    %cst_330 = arith.constant 0.000000e+00 : f32
    %783 = vector.broadcast %cst_329 : f32 to vector<1x512xf32>
    %784 = vector.broadcast %cst_330 : f32 to vector<1x512xf32>
    %785 = arith.select %782, %783, %784 : vector<1x512xi1>, vector<1x512xf32>
    %786 = vector.broadcast %785 : vector<1x512xf32> to vector<32x512xf32>
    %787 = arith.mulf %772, %786 : vector<32x512xf32>
    %788 = arith.addf %767, %787 : vector<32x512xf32>
    %c478_i32 = arith.constant 478 : i32
    %789 = tpu.dynamic_rotate %256 by %c478_i32 dim 1 : vector<32x512xf32>, i32 -> vector<32x512xf32>
    %c24 = arith.constant 24 : index
    %c0_331 = arith.constant 0 : index
    %c0_332 = arith.constant 0 : index
    %790 = vector.load %arg7[%c24, %c0_331, %c0_332] : memref<25x32x1xf32, #tpu.memory_space<vmem>>, vector<1x32x1xf32>
    %791 = vector.shape_cast %790 : vector<1x32x1xf32> to vector<32x1xf32>
    %792 = vector.broadcast %791 : vector<32x1xf32> to vector<32x512xf32>
    %793 = arith.mulf %789, %792 : vector<32x512xf32>
    %c2_i32_333 = arith.constant 2 : i32
    %794 = vector.broadcast %c2_i32_333 : i32 to vector<1x512xi32>
    %795 = arith.addi %16, %794 : vector<1x512xi32>
    %c0_i32_334 = arith.constant 0 : i32
    %796 = vector.broadcast %c0_i32_334 : i32 to vector<1x512xi32>
    %797 = arith.cmpi sge, %795, %796 : vector<1x512xi32>
    %c2_i32_335 = arith.constant 2 : i32
    %798 = vector.broadcast %c2_i32_335 : i32 to vector<1x512xi32>
    %799 = arith.addi %16, %798 : vector<1x512xi32>
    %c16_i32_336 = arith.constant 16 : i32
    %800 = vector.broadcast %c16_i32_336 : i32 to vector<1x512xi32>
    %801 = arith.cmpi slt, %799, %800 : vector<1x512xi32>
    %802 = arith.andi %797, %801 : vector<1x512xi1>
    %803 = arith.andi %704, %802 : vector<1x512xi1>
    %cst_337 = arith.constant 1.000000e+00 : f32
    %cst_338 = arith.constant 0.000000e+00 : f32
    %804 = vector.broadcast %cst_337 : f32 to vector<1x512xf32>
    %805 = vector.broadcast %cst_338 : f32 to vector<1x512xf32>
    %806 = arith.select %803, %804, %805 : vector<1x512xi1>, vector<1x512xf32>
    %807 = vector.broadcast %806 : vector<1x512xf32> to vector<32x512xf32>
    %808 = arith.mulf %793, %807 : vector<32x512xf32>
    %809 = arith.addf %788, %808 : vector<32x512xf32>
    %c0_339 = arith.constant 0 : index
    %c0_340 = arith.constant 0 : index
    %810 = vector.load %arg8[%c0_339, %c0_340] : memref<32x1xf32, #tpu.memory_space<vmem>>, vector<32x1xf32>
    %811 = vector.broadcast %810 : vector<32x1xf32> to vector<32x512xf32>
    %812 = arith.addf %809, %811 : vector<32x512xf32>
    %c0_341 = arith.constant 0 : index
    %c0_342 = arith.constant 0 : index
    %813 = vector.load %arg9[%c0_341, %c0_342] : memref<32x32xbf16, #tpu.memory_space<vmem>>, vector<32x32xbf16>
    %814 = arith.truncf %812 : vector<32x512xf32> to vector<32x512xbf16>
    %cst_343 = arith.constant dense<0.000000e+00> : vector<32x512xf32>
    %815 = tpu.matmul %813, %814, %cst_343 {dimension_numbers = #tpu.dot_dimension_numbers<[1], [0], [0], [1], [0, 0, 1, 1], [], []>} : vector<32x32xbf16>, vector<32x512xbf16>, vector<32x512xf32> -> vector<32x512xf32>
    %c0_344 = arith.constant 0 : index
    %c0_345 = arith.constant 0 : index
    %816 = vector.load %arg10[%c0_344, %c0_345] : memref<32x1xf32, #tpu.memory_space<vmem>>, vector<32x1xf32>
    %817 = vector.broadcast %816 : vector<32x1xf32> to vector<32x512xf32>
    %818 = arith.addf %815, %817 : vector<32x512xf32>
    %819 = arith.addf %229, %818 : vector<32x512xf32>
    %c0_346 = arith.constant 0 : index
    %c0_347 = arith.constant 0 : index
    %820 = vector.load %arg11[%c0_346, %c0_347] : memref<32x1xf32, #tpu.memory_space<vmem>>, vector<32x1xf32>
    %c0_348 = arith.constant 0 : index
    %c0_349 = arith.constant 0 : index
    %821 = vector.load %arg12[%c0_348, %c0_349] : memref<32x1xf32, #tpu.memory_space<vmem>>, vector<32x1xf32>
    %cst_350 = arith.constant dense<0.000000e+00> : vector<32x128xf32>
    %822 = tpu.matmul %819, %26, %cst_350 {dimension_numbers = #tpu.dot_dimension_numbers<[1], [0], [0], [1], [0, 0, 1, 1], [], []>} : vector<32x512xf32>, vector<512x128xf32>, vector<32x128xf32> -> vector<32x128xf32>
    %823 = vector.extract_strided_slice %822 {offsets = [0, 0], sizes = [32, 1], strides = [1, 1]} : vector<32x128xf32> to vector<32x1xf32>
    %cst_351 = arith.constant 0.001953125 : f32
    %824 = vector.broadcast %cst_351 : f32 to vector<32x1xf32>
    %825 = arith.mulf %823, %824 : vector<32x1xf32>
    %826 = vector.broadcast %825 : vector<32x1xf32> to vector<32x512xf32>
    %827 = arith.subf %819, %826 : vector<32x512xf32>
    %828 = arith.mulf %827, %827 : vector<32x512xf32>
    %cst_352 = arith.constant dense<0.000000e+00> : vector<32x128xf32>
    %829 = tpu.matmul %828, %26, %cst_352 {dimension_numbers = #tpu.dot_dimension_numbers<[1], [0], [0], [1], [0, 0, 1, 1], [], []>} : vector<32x512xf32>, vector<512x128xf32>, vector<32x128xf32> -> vector<32x128xf32>
    %830 = vector.extract_strided_slice %829 {offsets = [0, 0], sizes = [32, 1], strides = [1, 1]} : vector<32x128xf32> to vector<32x1xf32>
    %cst_353 = arith.constant 0.001953125 : f32
    %831 = vector.broadcast %cst_353 : f32 to vector<32x1xf32>
    %832 = arith.mulf %830, %831 : vector<32x1xf32>
    %cst_354 = arith.constant 9.99999974E-6 : f32
    %833 = vector.broadcast %cst_354 : f32 to vector<32x1xf32>
    %834 = arith.addf %832, %833 : vector<32x1xf32>
    %835 = math.rsqrt %834 : vector<32x1xf32>
    %836 = arith.mulf %820, %835 : vector<32x1xf32>
    %837 = vector.broadcast %836 : vector<32x1xf32> to vector<32x512xf32>
    %838 = arith.mulf %827, %837 : vector<32x512xf32>
    %839 = vector.broadcast %821 : vector<32x1xf32> to vector<32x512xf32>
    %840 = arith.addf %838, %839 : vector<32x512xf32>
    %c0_355 = arith.constant 0 : index
    %c0_356 = arith.constant 0 : index
    %841 = vector.load %arg13[%c0_355, %c0_356] : memref<128x32xbf16, #tpu.memory_space<vmem>>, vector<128x32xbf16>
    %842 = arith.truncf %840 : vector<32x512xf32> to vector<32x512xbf16>
    %cst_357 = arith.constant dense<0.000000e+00> : vector<128x512xf32>
    %843 = tpu.matmul %841, %842, %cst_357 {dimension_numbers = #tpu.dot_dimension_numbers<[1], [0], [0], [1], [0, 0, 1, 1], [], []>} : vector<128x32xbf16>, vector<32x512xbf16>, vector<128x512xf32> -> vector<128x512xf32>
    %c0_358 = arith.constant 0 : index
    %c0_359 = arith.constant 0 : index
    %844 = vector.load %arg14[%c0_358, %c0_359] : memref<128x1xf32, #tpu.memory_space<vmem>>, vector<128x1xf32>
    %845 = vector.broadcast %844 : vector<128x1xf32> to vector<128x512xf32>
    %846 = arith.addf %843, %845 : vector<128x512xf32>
    %847 = arith.truncf %846 : vector<128x512xf32> to vector<128x512xbf16>
    %cst_360 = arith.constant 5.000000e-01 : bf16
    %848 = vector.broadcast %cst_360 : bf16 to vector<128x512xbf16>
    %849 = arith.mulf %848, %847 : vector<128x512xbf16>
    %850 = arith.mulf %847, %847 : vector<128x512xbf16>
    %851 = arith.mulf %850, %847 : vector<128x512xbf16>
    %cst_361 = arith.constant 4.467770e-02 : bf16
    %852 = vector.broadcast %cst_361 : bf16 to vector<128x512xbf16>
    %853 = arith.mulf %852, %851 : vector<128x512xbf16>
    %854 = arith.addf %847, %853 : vector<128x512xbf16>
    %cst_362 = arith.constant 7.968750e-01 : bf16
    %855 = vector.broadcast %cst_362 : bf16 to vector<128x512xbf16>
    %856 = arith.mulf %855, %854 : vector<128x512xbf16>
    %857 = math.tanh %856 : vector<128x512xbf16>
    %cst_363 = arith.constant 1.000000e+00 : bf16
    %858 = vector.broadcast %cst_363 : bf16 to vector<128x512xbf16>
    %859 = arith.addf %858, %857 : vector<128x512xbf16>
    %860 = arith.mulf %849, %859 : vector<128x512xbf16>
    %c0_364 = arith.constant 0 : index
    %c0_365 = arith.constant 0 : index
    %861 = vector.load %arg15[%c0_364, %c0_365] : memref<32x128xbf16, #tpu.memory_space<vmem>>, vector<32x128xbf16>
    %cst_366 = arith.constant dense<0.000000e+00> : vector<32x512xf32>
    %862 = tpu.matmul %861, %860, %cst_366 {dimension_numbers = #tpu.dot_dimension_numbers<[1], [0], [0], [1], [0, 0, 1, 1], [], []>} : vector<32x128xbf16>, vector<128x512xbf16>, vector<32x512xf32> -> vector<32x512xf32>
    %c0_367 = arith.constant 0 : index
    %c0_368 = arith.constant 0 : index
    %863 = vector.load %arg16[%c0_367, %c0_368] : memref<32x1xf32, #tpu.memory_space<vmem>>, vector<32x1xf32>
    %864 = vector.broadcast %863 : vector<32x1xf32> to vector<32x512xf32>
    %865 = arith.addf %862, %864 : vector<32x512xf32>
    %866 = arith.addf %819, %865 : vector<32x512xf32>
    %867 = vector.extract_strided_slice %866 {offsets = [0, 0], sizes = [32, 256], strides = [1, 1]} : vector<32x512xf32> to vector<32x256xf32>
    %c0_369 = arith.constant 0 : index
    %c0_370 = arith.constant 0 : index
    %c0_371 = arith.constant 0 : index
    %868 = vector.load %arg17[%c0_369, %c0_370, %c0_371] : memref<2x32x256xf32, #tpu.memory_space<vmem>>, vector<1x32x256xf32>
    %869 = vector.shape_cast %868 : vector<1x32x256xf32> to vector<32x256xf32>
    %870 = vector.shape_cast %867 : vector<32x256xf32> to vector<1x32x256xf32>
    tpu.vector_store %arg17[%c0_369, %c0_370, %c0_371], %870 {strides = array<i32>} : memref<2x32x256xf32, #tpu.memory_space<vmem>>, vector<1x32x256xf32>,
    %871 = vector.extract_strided_slice %866 {offsets = [0, 256], sizes = [32, 256], strides = [1, 1]} : vector<32x512xf32> to vector<32x256xf32>
    %c1_372 = arith.constant 1 : index
    %c0_373 = arith.constant 0 : index
    %c0_374 = arith.constant 0 : index
    %872 = vector.load %arg17[%c1_372, %c0_373, %c0_374] : memref<2x32x256xf32, #tpu.memory_space<vmem>>, vector<1x32x256xf32>
    %873 = vector.shape_cast %872 : vector<1x32x256xf32> to vector<32x256xf32>
    %874 = vector.shape_cast %871 : vector<32x256xf32> to vector<1x32x256xf32>
    tpu.vector_store %arg17[%c1_372, %c0_373, %c0_374], %874 {strides = array<i32>} : memref<2x32x256xf32, #tpu.memory_space<vmem>>, vector<1x32x256xf32>,
    return
  }
}

</mosaic_0001>

<llo_original>
// kernel: high_frequency_operator.1
$region0: #{high_frequency_operator.1}
  #allocation0 [shape = 'u32[]', space=smem, size = 0x4, offset = 0x4, fixed_abs, tag = 'smem constant byte address 0x4 - core index']
  #allocation1 [shape = 'u32[144,128]{1,0:T(1,128)}', space=vmem, size = 0x12000, scoped, tag = 'internal scratch']
  #allocation2 [shape = 'f32[32,512]{1,0:T(8,128)}', space=vmem, size = 0x10000, scoped, tag = 'scratch operand']
  %s0 = inlined_call_operand.vmem [shape: f32[2,32,256], index: 0, kind: input, shape index: {}]
  %s1 = inlined_call_operand.vmem [shape: f32[9,32,1], index: 1, kind: input, shape index: {}]
  %s2 = inlined_call_operand.vmem [shape: f32[32,1], index: 2, kind: input, shape index: {}]
  %s3 = inlined_call_operand.vmem [shape: f32[32,1], index: 3, kind: input, shape index: {}]
  %s4 = inlined_call_operand.vmem [shape: f32[32,1], index: 4, kind: input, shape index: {}]
  %s5 = inlined_call_operand.vmem [shape: bf16[32,32], index: 5, kind: input, shape index: {}]
  %s6 = inlined_call_operand.vmem [shape: f32[32,1], index: 6, kind: input, shape index: {}]
  %s7 = inlined_call_operand.vmem [shape: f32[25,32,1], index: 7, kind: input, shape index: {}]
  %s8 = inlined_call_operand.vmem [shape: f32[32,1], index: 8, kind: input, shape index: {}]
  %s9 = inlined_call_operand.vmem [shape: bf16[32,32], index: 9, kind: input, shape index: {}]
  %s10 = inlined_call_operand.vmem [shape: f32[32,1], index: 10, kind: input, shape index: {}]
  %s11 = inlined_call_operand.vmem [shape: f32[32,1], index: 11, kind: input, shape index: {}]
  %s12 = inlined_call_operand.vmem [shape: f32[32,1], index: 12, kind: input, shape index: {}]
  %s13 = inlined_call_operand.vmem [shape: bf16[128,32], index: 13, kind: input, shape index: {}]
  %s14 = inlined_call_operand.vmem [shape: f32[128,1], index: 14, kind: input, shape index: {}]
  %s15 = inlined_call_operand.vmem [shape: bf16[32,128], index: 15, kind: input, shape index: {}]
  %s16 = inlined_call_operand.vmem [shape: f32[32,1], index: 16, kind: input, shape index: {}]
  %s17 = inlined_call_operand.vmem [shape: f32[2,32,256], index: 17, kind: output, shape index: {}]
  %s18 = sld [smem:[#allocation0]]
  $region78: #{high_frequency_operator.1} parent=0
    _
  %s20 = ssub.s32 1, %s18
  %s21 = scalar_select 0, %s20, %s18
  // Predicated region
  $region2: #{high_frequency_operator.1} parent=0 // pred_check
    _
  $region3: #{high_frequency_operator.1} parent=0 // pred_check_branch
    %23 = sbr.rel (0) target = $region5
  $region4: #{high_frequency_operator.1} parent=0 // pred_region
    _
  $region5: #{high_frequency_operator.1} parent=0 // pred_fallthru
    _
  // Predicated region
  $region6: #{high_frequency_operator.1} parent=0 // pred_check
    _
  $region7: #{high_frequency_operator.1} parent=0 // pred_check_branch
    %25 = sbr.rel (0) target = $region9
  $region8: #{high_frequency_operator.1} parent=0 // pred_region
    _
  $region9: #{high_frequency_operator.1} parent=0 // pred_fallthru
    _
  // Predicated region
  $region10: #{high_frequency_operator.1} parent=0 // pred_check
    _
  $region11: #{high_frequency_operator.1} parent=0 // pred_check_branch
    %27 = sbr.rel (0) target = $region13
  $region12: #{high_frequency_operator.1} parent=0 // pred_region
    _
  $region13: #{high_frequency_operator.1} parent=0 // pred_fallthru
    _
  // Predicated region
  $region14: #{high_frequency_operator.1} parent=0 // pred_check
    _
  $region15: #{high_frequency_operator.1} parent=0 // pred_check_branch
    %29 = sbr.rel (0) target = $region17
  $region16: #{high_frequency_operator.1} parent=0 // pred_region
    _
  $region17: #{high_frequency_operator.1} parent=0 // pred_fallthru
    _
  // Predicated region
  $region18: #{high_frequency_operator.1} parent=0 // pred_check
    _
  $region19: #{high_frequency_operator.1} parent=0 // pred_check_branch
    %31 = sbr.rel (0) target = $region21
  $region20: #{high_frequency_operator.1} parent=0 // pred_region
    _
  $region21: #{high_frequency_operator.1} parent=0 // pred_fallthru
    _
  // Predicated region
  $region22: #{high_frequency_operator.1} parent=0 // pred_check
    _
  $region23: #{high_frequency_operator.1} parent=0 // pred_check_branch
    %33 = sbr.rel (0) target = $region25
  $region24: #{high_frequency_operator.1} parent=0 // pred_region
    _
  $region25: #{high_frequency_operator.1} parent=0 // pred_fallthru
    _
  // Predicated region
  $region26: #{high_frequency_operator.1} parent=0 // pred_check
    _
  $region27: #{high_frequency_operator.1} parent=0 // pred_check_branch
    %35 = sbr.rel (0) target = $region29
  $region28: #{high_frequency_operator.1} parent=0 // pred_region
    _
  $region29: #{high_frequency_operator.1} parent=0 // pred_fallthru
    _
  // Predicated region
  $region30: #{high_frequency_operator.1} parent=0 // pred_check
    _
  $region31: #{high_frequency_operator.1} parent=0 // pred_check_branch
    %37 = sbr.rel (0) target = $region33
  $region32: #{high_frequency_operator.1} parent=0 // pred_region
    _
  $region33: #{high_frequency_operator.1} parent=0 // pred_fallthru
    _
  // Predicated region
  $region34: #{high_frequency_operator.1} parent=0 // pred_check
    _
  $region35: #{high_frequency_operator.1} parent=0 // pred_check_branch
    %39 = sbr.rel (0) target = $region37
  $region36: #{high_frequency_operator.1} parent=0 // pred_region
    _
  $region37: #{high_frequency_operator.1} parent=0 // pred_fallthru
    _
  // Predicated region
  $region38: #{high_frequency_operator.1} parent=0 // pred_check
    _
  $region39: #{high_frequency_operator.1} parent=0 // pred_check_branch
    %41 = sbr.rel (0) target = $region41
  $region40: #{high_frequency_operator.1} parent=0 // pred_region
    _
  $region41: #{high_frequency_operator.1} parent=0 // pred_fallthru
    _
  // Predicated region
  $region42: #{high_frequency_operator.1} parent=0 // pred_check
    _
  $region43: #{high_frequency_operator.1} parent=0 // pred_check_branch
    %43 = sbr.rel (0) target = $region45
  $region44: #{high_frequency_operator.1} parent=0 // pred_region
    _
  $region45: #{high_frequency_operator.1} parent=0 // pred_fallthru
    _
  // Predicated region
  $region46: #{high_frequency_operator.1} parent=0 // pred_check
    _
  $region47: #{high_frequency_operator.1} parent=0 // pred_check_branch
    %45 = sbr.rel (0) target = $region49
  $region48: #{high_frequency_operator.1} parent=0 // pred_region
    _
  $region49: #{high_frequency_operator.1} parent=0 // pred_fallthru
    _
  // Predicated region
  $region50: #{high_frequency_operator.1} parent=0 // pred_check
    _
  $region51: #{high_frequency_operator.1} parent=0 // pred_check_branch
    %47 = sbr.rel (0) target = $region53
  $region52: #{high_frequency_operator.1} parent=0 // pred_region
    _
  $region53: #{high_frequency_operator.1} parent=0 // pred_fallthru
    _
  // Predicated region
  $region54: #{high_frequency_operator.1} parent=0 // pred_check
    _
  $region55: #{high_frequency_operator.1} parent=0 // pred_check_branch
    %49 = sbr.rel (0) target = $region57
  $region56: #{high_frequency_operator.1} parent=0 // pred_region
    _
  $region57: #{high_frequency_operator.1} parent=0 // pred_fallthru
    _
  // Predicated region
  $region58: #{high_frequency_operator.1} parent=0 // pred_check
    _
  $region59: #{high_frequency_operator.1} parent=0 // pred_check_branch
    %51 = sbr.rel (0) target = $region61
  $region60: #{high_frequency_operator.1} parent=0 // pred_region
    _
  $region61: #{high_frequency_operator.1} parent=0 // pred_fallthru
    _
  // Predicated region
  $region62: #{high_frequency_operator.1} parent=0 // pred_check
    _
  $region63: #{high_frequency_operator.1} parent=0 // pred_check_branch
    %53 = sbr.rel (0) target = $region65
  $region64: #{high_frequency_operator.1} parent=0 // pred_region
    _
  $region65: #{high_frequency_operator.1} parent=0 // pred_fallthru
    _
  // Predicated region
  $region66: #{high_frequency_operator.1} parent=0 // pred_check
    _
  $region67: #{high_frequency_operator.1} parent=0 // pred_check_branch
    %55 = sbr.rel (0) target = $region69
  $region68: #{high_frequency_operator.1} parent=0 // pred_region
    _
  $region69: #{high_frequency_operator.1} parent=0 // pred_fallthru
    _
  %v61 = vld [vmem:[%s0] sm:$0xff]
  %v62 = vld [vmem:[%s0 + $0x8] sm:$0xff]
  %v63 = vld [vmem:[%s0 + $0x10] sm:$0xff]
  %v64 = vld [vmem:[%s0 + $0x18] sm:$0xff]
  %v65 = vld [vmem:[%s0 + $0x20] sm:$0xff]
  %v66 = vld [vmem:[%s0 + $0x28] sm:$0xff]
  %v67 = vld [vmem:[%s0 + $0x30] sm:$0xff]
  %v68 = vld [vmem:[%s0 + $0x38] sm:$0xff]
  %69 = vst [vmem:[#allocation2] sm:$0xff] %v61
  %70 = vst [vmem:[#allocation2 + $0x8] sm:$0xff] %v62
  %71 = vst [vmem:[#allocation2 + $0x20] sm:$0xff] %v63
  %72 = vst [vmem:[#allocation2 + $0x28] sm:$0xff] %v64
  %73 = vst [vmem:[#allocation2 + $0x40] sm:$0xff] %v65
  %74 = vst [vmem:[#allocation2 + $0x48] sm:$0xff] %v66
  %75 = vst [vmem:[#allocation2 + $0x60] sm:$0xff] %v67
  %76 = vst [vmem:[#allocation2 + $0x68] sm:$0xff] %v68
  %s77 = scalar_lea.vmem %s0, 64
  %v78 = vld [vmem:[%s77] sm:$0xff]
  %v79 = vld [vmem:[%s77 + $0x8] sm:$0xff]
  %v80 = vld [vmem:[%s77 + $0x10] sm:$0xff]
  %v81 = vld [vmem:[%s77 + $0x18] sm:$0xff]
  %v82 = vld [vmem:[%s77 + $0x20] sm:$0xff]
  %v83 = vld [vmem:[%s77 + $0x28] sm:$0xff]
  %v84 = vld [vmem:[%s77 + $0x30] sm:$0xff]
  %v85 = vld [vmem:[%s77 + $0x38] sm:$0xff]
  %86 = vst [vmem:[#allocation2 + $0x10] sm:$0xff] %v78
  %87 = vst [vmem:[#allocation2 + $0x18] sm:$0xff] %v79
  %88 = vst [vmem:[#allocation2 + $0x30] sm:$0xff] %v80
  %89 = vst [vmem:[#allocation2 + $0x38] sm:$0xff] %v81
  %90 = vst [vmem:[#allocation2 + $0x50] sm:$0xff] %v82
  %91 = vst [vmem:[#allocation2 + $0x58] sm:$0xff] %v83
  %92 = vst [vmem:[#allocation2 + $0x70] sm:$0xff] %v84
  %93 = vst [vmem:[#allocation2 + $0x78] sm:$0xff] %v85
  %v94 = vld [vmem:[#allocation2] sm:$0xff]
  %v95 = vld [vmem:[#allocation2 + $0x8] sm:$0xff]
  %v96 = vld [vmem:[#allocation2 + $0x10] sm:$0xff]
  %v97 = vld [vmem:[#allocation2 + $0x18] sm:$0xff]
  %v98 = vld [vmem:[#allocation2 + $0x20] sm:$0xff]
  %v99 = vld [vmem:[#allocation2 + $0x28] sm:$0xff]
  %v100 = vld [vmem:[#allocation2 + $0x30] sm:$0xff]
  %v101 = vld [vmem:[#allocation2 + $0x38] sm:$0xff]
  %v102 = vld [vmem:[#allocation2 + $0x40] sm:$0xff]
  %v103 = vld [vmem:[#allocation2 + $0x48] sm:$0xff]
  %v104 = vld [vmem:[#allocation2 + $0x50] sm:$0xff]
  %v105 = vld [vmem:[#allocation2 + $0x58] sm:$0xff]
  %v106 = vld [vmem:[#allocation2 + $0x60] sm:$0xff]
  %v107 = vld [vmem:[#allocation2 + $0x68] sm:$0xff]
  %v108 = vld [vmem:[#allocation2 + $0x70] sm:$0xff]
  %v109 = vld [vmem:[#allocation2 + $0x78] sm:$0xff]
  %v110 = vlaneseq
  %v111 = vand.u32 %v110, 127
  %v112 = vadd.s32 %v111, 128
  %v113 = vadd.s32 %v111, 256
  %v114 = vadd.s32 %v111, 384
  %v115 = vcvt.s32.f32 %v111
  %v116 = vcvt.s32.f32 %v112
  %v117 = vcvt.s32.f32 %v113
  %v118 = vcvt.s32.f32 %v114
  %v119 = vadd.f32 %v115, 0.5
  %v120 = vadd.f32 %v116, 0.5
  %v121 = vadd.f32 %v117, 0.5
  %v122 = vadd.f32 %v118, 0.5
  %v123 = vmul.f32 %v119, 0.0625
  %v124 = vmul.f32 %v120, 0.0625
  %v125 = vmul.f32 %v121, 0.0625
  %v126 = vmul.f32 %v122, 0.0625
  %v127 = vcvt.f32.s32.to.zero.pseudo %v123
  %v128 = vcvt.f32.s32.to.zero.pseudo %v124
  %v129 = vcvt.f32.s32.to.zero.pseudo %v125
  %v130 = vcvt.f32.s32.to.zero.pseudo %v126
  %v131 = vmul.u32 %v127, 16
  %v132 = vmul.u32 %v128, 16
  %v133 = vmul.u32 %v129, 16
  %v134 = vmul.u32 %v130, 16
  %v135 = vsub.s32 %v111, %v131
  %v136 = vsub.s32 %v112, %v132
  %v137 = vsub.s32 %v113, %v133
  %v138 = vsub.s32 %v114, %v134
  %v139 = vcvt.s32.f32 %v127
  %v140 = vcvt.s32.f32 %v128
  %v141 = vcvt.s32.f32 %v129
  %v142 = vcvt.s32.f32 %v130
  %v143 = vadd.f32 %v139, 0.5
  %v144 = vadd.f32 %v140, 0.5
  %v145 = vadd.f32 %v141, 0.5
  %v146 = vadd.f32 %v142, 0.5
  %v147 = vmul.f32 %v143, 0.0625
  %v148 = vmul.f32 %v144, 0.0625
  %v149 = vmul.f32 %v145, 0.0625
  %v150 = vmul.f32 %v146, 0.0625
  %v151 = vcvt.f32.s32.to.zero.pseudo %v147
  %v152 = vcvt.f32.s32.to.zero.pseudo %v148
  %v153 = vcvt.f32.s32.to.zero.pseudo %v149
  %v154 = vcvt.f32.s32.to.zero.pseudo %v150
  %v155 = vmul.u32 %v151, 16
  %v156 = vmul.u32 %v152, 16
  %v157 = vmul.u32 %v153, 16
  %v158 = vmul.u32 %v154, 16
  %v159 = vsub.s32 %v127, %v155
  %v160 = vsub.s32 %v128, %v156
  %v161 = vsub.s32 %v129, %v157
  %v162 = vsub.s32 %v130, %v158
  %v163 = vadd.s32 %v159, 4294967295
  %v164 = vadd.s32 %v160, 4294967295
  %v165 = vadd.s32 %v161, 4294967295
  %v166 = vadd.s32 %v162, 4294967295
  %vm167 = vcmp.ge.s32.totalorder %v163, 0
  %vm168 = vcmp.ge.s32.totalorder %v164, 0
  %vm169 = vcmp.ge.s32.totalorder %v165, 0
  %vm170 = vcmp.ge.s32.totalorder %v166, 0
  %vm171 = vcmp.lt.s32.totalorder %v163, 16
  %vm172 = vcmp.lt.s32.totalorder %v164, 16
  %vm173 = vcmp.lt.s32.totalorder %v165, 16
  %vm174 = vcmp.lt.s32.totalorder %v166, 16
  %vm175 = vmand %vm167, %vm171
  %vm176 = vmand %vm168, %vm172
  %vm177 = vmand %vm169, %vm173
  %vm178 = vmand %vm170, %vm174
  %179 = vrot.lane.b32.xlu0 %v94, 17
  %v180 = vpop.permute.xlu0 %179
  %181 = vrot.lane.b32.xlu0 %v98, 17
  %v182 = vpop.permute.xlu0 %181
  %183 = vrot.lane.b32.xlu0 %v102, 17
  %v184 = vpop.permute.xlu0 %183
  %185 = vrot.lane.b32.xlu0 %v106, 17
  %v186 = vpop.permute.xlu0 %185
  %187 = vrot.lane.b32.xlu0 %v95, 17
  %v188 = vpop.permute.xlu0 %187
  %189 = vrot.lane.b32.xlu0 %v99, 17
  %v190 = vpop.permute.xlu0 %189
  %191 = vrot.lane.b32.xlu0 %v103, 17
  %v192 = vpop.permute.xlu0 %191
  %193 = vrot.lane.b32.xlu0 %v107, 17
  %v194 = vpop.permute.xlu0 %193
  %195 = vrot.lane.b32.xlu0 %v96, 17
  %v196 = vpop.permute.xlu0 %195
  %197 = vrot.lane.b32.xlu0 %v100, 17
  %v198 = vpop.permute.xlu0 %197
  %199 = vrot.lane.b32.xlu0 %v104, 17
  %v200 = vpop.permute.xlu0 %199
  %201 = vrot.lane.b32.xlu0 %v108, 17
  %v202 = vpop.permute.xlu0 %201
  %203 = vrot.lane.b32.xlu0 %v97, 17
  %v204 = vpop.permute.xlu0 %203
  %205 = vrot.lane.b32.xlu0 %v101, 17
  %v206 = vpop.permute.xlu0 %205
  %207 = vrot.lane.b32.xlu0 %v105, 17
  %v208 = vpop.permute.xlu0 %207
  %209 = vrot.lane.b32.xlu0 %v109, 17
  %v210 = vpop.permute.xlu0 %209
  %vm211 = vcmp.lt.s32.totalorder %v111, 17
  %v212 = vsel %vm211, %v196, %v204
  %v213 = vsel %vm211, %v198, %v206
  %v214 = vsel %vm211, %v200, %v208
  %v215 = vsel %vm211, %v202, %v210
  %v216 = vsel %vm211, %v188, %v196
  %v217 = vsel %vm211, %v190, %v198
  %v218 = vsel %vm211, %v192, %v200
  %v219 = vsel %vm211, %v194, %v202
  %v220 = vsel %vm211, %v180, %v188
  %v221 = vsel %vm211, %v182, %v190
  %v222 = vsel %vm211, %v184, %v192
  %v223 = vsel %vm211, %v186, %v194
  %v224 = vsel %vm211, %v204, %v180
  %v225 = vsel %vm211, %v206, %v182
  %v226 = vsel %vm211, %v208, %v184
  %v227 = vsel %vm211, %v210, %v186
  %v228 = vld [vmem:[%s1] sm:$0xff]
  %v229 = vld [vmem:[%s1 + $0x8] sm:$0xff]
  %v230 = vld [vmem:[%s1 + $0x10] sm:$0xff]
  %v231 = vld [vmem:[%s1 + $0x18] sm:$0xff]
  %233 = vset.pattern.permute.xlu0 0
  %234 = vperm.xlu0 %233, %v228
  %v235 = vpop.permute.xlu0 %234
  %238 = vset.pattern.permute.xlu0 0
  %239 = vperm.xlu0 %238, %v229
  %v240 = vpop.permute.xlu0 %239
  %243 = vset.pattern.permute.xlu0 0
  %244 = vperm.xlu0 %243, %v230
  %v245 = vpop.permute.xlu0 %244
  %248 = vset.pattern.permute.xlu0 0
  %249 = vperm.xlu0 %248, %v231
  %v250 = vpop.permute.xlu0 %249
  %v252 = vmul.f32 %v224, %v235
  %v253 = vmul.f32 %v220, %v235
  %v254 = vmul.f32 %v216, %v235
  %v255 = vmul.f32 %v212, %v235
  %v256 = vmul.f32 %v225, %v240
  %v257 = vmul.f32 %v221, %v240
  %v258 = vmul.f32 %v217, %v240
  %v259 = vmul.f32 %v213, %v240
  %v260 = vmul.f32 %v226, %v245
  %v261 = vmul.f32 %v222, %v245
  %v262 = vmul.f32 %v218, %v245
  %v263 = vmul.f32 %v214, %v245
  %v264 = vmul.f32 %v227, %v250
  %v265 = vmul.f32 %v223, %v250
  %v266 = vmul.f32 %v219, %v250
  %v267 = vmul.f32 %v215, %v250
  %v268 = vadd.s32 %v135, 4294967295
  %v269 = vadd.s32 %v136, 4294967295
  %v270 = vadd.s32 %v137, 4294967295
  %v271 = vadd.s32 %v138, 4294967295
  %vm272 = vcmp.ge.s32.totalorder %v268, 0
  %vm273 = vcmp.ge.s32.totalorder %v269, 0
  %vm274 = vcmp.ge.s32.totalorder %v270, 0
  %vm275 = vcmp.ge.s32.totalorder %v271, 0
  %vm276 = vcmp.lt.s32.totalorder %v268, 16
  %vm277 = vcmp.lt.s32.totalorder %v269, 16
  %vm278 = vcmp.lt.s32.totalorder %v270, 16
  %vm279 = vcmp.lt.s32.totalorder %v271, 16
  %vm280 = vmand %vm272, %vm276
  %vm281 = vmand %vm273, %vm277
  %vm282 = vmand %vm274, %vm278
  %vm283 = vmand %vm275, %vm279
  %vm284 = vmand %vm175, %vm280
  %vm285 = vmand %vm176, %vm281
  %vm286 = vmand %vm177, %vm282
  %vm287 = vmand %vm178, %vm283
  %v288 = vsel %vm284, 1.0, 0.0
  %v289 = vsel %vm285, 1.0, 0.0
  %v290 = vsel %vm286, 1.0, 0.0
  %v291 = vsel %vm287, 1.0, 0.0
  %v292 = vmul.f32 %v252, %v288
  %v293 = vmul.f32 %v253, %v289
  %v294 = vmul.f32 %v254, %v290
  %v295 = vmul.f32 %v255, %v291
  %v296 = vmul.f32 %v256, %v288
  %v297 = vmul.f32 %v257, %v289
  %v298 = vmul.f32 %v258, %v290
  %v299 = vmul.f32 %v259, %v291
  %v300 = vmul.f32 %v260, %v288
  %v301 = vmul.f32 %v261, %v289
  %v302 = vmul.f32 %v262, %v290
  %v303 = vmul.f32 %v263, %v291
  %v304 = vmul.f32 %v264, %v288
  %v305 = vmul.f32 %v265, %v289
  %v306 = vmul.f32 %v266, %v290
  %v307 = vmul.f32 %v267, %v291
  %308 = vrot.lane.b32.xlu0 %v94, 16
  %v309 = vpop.permute.xlu0 %308
  %310 = vrot.lane.b32.xlu0 %v98, 16
  %v311 = vpop.permute.xlu0 %310
  %312 = vrot.lane.b32.xlu0 %v102, 16
  %v313 = vpop.permute.xlu0 %312
  %314 = vrot.lane.b32.xlu0 %v106, 16
  %v315 = vpop.permute.xlu0 %314
  %316 = vrot.lane.b32.xlu0 %v95, 16
  %v317 = vpop.permute.xlu0 %316
  %318 = vrot.lane.b32.xlu0 %v99, 16
  %v319 = vpop.permute.xlu0 %318
  %320 = vrot.lane.b32.xlu0 %v103, 16
  %v321 = vpop.permute.xlu0 %320
  %322 = vrot.lane.b32.xlu0 %v107, 16
  %v323 = vpop.permute.xlu0 %322
  %324 = vrot.lane.b32.xlu0 %v96, 16
  %v325 = vpop.permute.xlu0 %324
  %326 = vrot.lane.b32.xlu0 %v100, 16
  %v327 = vpop.permute.xlu0 %326
  %328 = vrot.lane.b32.xlu0 %v104, 16
  %v329 = vpop.permute.xlu0 %328
  %330 = vrot.lane.b32.xlu0 %v108, 16
  %v331 = vpop.permute.xlu0 %330
  %332 = vrot.lane.b32.xlu0 %v97, 16
  %v333 = vpop.permute.xlu0 %332
  %334 = vrot.lane.b32.xlu0 %v101, 16
  %v335 = vpop.permute.xlu0 %334
  %336 = vrot.lane.b32.xlu0 %v105, 16
  %v337 = vpop.permute.xlu0 %336
  %338 = vrot.lane.b32.xlu0 %v109, 16
  %v339 = vpop.permute.xlu0 %338
  %vm340 = vcmp.lt.s32.totalorder %v111, 16
  %v341 = vsel %vm340, %v325, %v333
  %v342 = vsel %vm340, %v327, %v335
  %v343 = vsel %vm340, %v329, %v337
  %v344 = vsel %vm340, %v331, %v339
  %v345 = vsel %vm340, %v317, %v325
  %v346 = vsel %vm340, %v319, %v327
  %v347 = vsel %vm340, %v321, %v329
  %v348 = vsel %vm340, %v323, %v331
  %v349 = vsel %vm340, %v309, %v317
  %v350 = vsel %vm340, %v311, %v319
  %v351 = vsel %vm340, %v313, %v321
  %v352 = vsel %vm340, %v315, %v323
  %v353 = vsel %vm340, %v333, %v309
  %v354 = vsel %vm340, %v335, %v311
  %v355 = vsel %vm340, %v337, %v313
  %v356 = vsel %vm340, %v339, %v315
  %s357 = scalar_lea.vmem %s1, 32
  %v358 = vld [vmem:[%s357] sm:$0xff]
  %v359 = vld [vmem:[%s357 + $0x8] sm:$0xff]
  %v360 = vld [vmem:[%s357 + $0x10] sm:$0xff]
  %v361 = vld [vmem:[%s357 + $0x18] sm:$0xff]
  %363 = vset.pattern.permute.xlu0 0
  %364 = vperm.xlu0 %363, %v358
  %v365 = vpop.permute.xlu0 %364
  %368 = vset.pattern.permute.xlu0 0
  %369 = vperm.xlu0 %368, %v359
  %v370 = vpop.permute.xlu0 %369
  %373 = vset.pattern.permute.xlu0 0
  %374 = vperm.xlu0 %373, %v360
  %v375 = vpop.permute.xlu0 %374
  %378 = vset.pattern.permute.xlu0 0
  %379 = vperm.xlu0 %378, %v361
  %v380 = vpop.permute.xlu0 %379
  %v382 = vmul.f32 %v353, %v365
  %v383 = vmul.f32 %v349, %v365
  %v384 = vmul.f32 %v345, %v365
  %v385 = vmul.f32 %v341, %v365
  %v386 = vmul.f32 %v354, %v370
  %v387 = vmul.f32 %v350, %v370
  %v388 = vmul.f32 %v346, %v370
  %v389 = vmul.f32 %v342, %v370
  %v390 = vmul.f32 %v355, %v375
  %v391 = vmul.f32 %v351, %v375
  %v392 = vmul.f32 %v347, %v375
  %v393 = vmul.f32 %v343, %v375
  %v394 = vmul.f32 %v356, %v380
  %v395 = vmul.f32 %v352, %v380
  %v396 = vmul.f32 %v348, %v380
  %v397 = vmul.f32 %v344, %v380
  %vm398 = vcmp.ge.s32.totalorder %v135, 0
  %vm399 = vcmp.ge.s32.totalorder %v136, 0
  %vm400 = vcmp.ge.s32.totalorder %v137, 0
  %vm401 = vcmp.ge.s32.totalorder %v138, 0
  %vm402 = vcmp.lt.s32.totalorder %v135, 16
  %vm403 = vcmp.lt.s32.totalorder %v136, 16
  %vm404 = vcmp.lt.s32.totalorder %v137, 16
  %vm405 = vcmp.lt.s32.totalorder %v138, 16
  %vm406 = vmand %vm398, %vm402
  %vm407 = vmand %vm399, %vm403
  %vm408 = vmand %vm400, %vm404
  %vm409 = vmand %vm401, %vm405
  %vm410 = vmand %vm175, %vm406
  %vm411 = vmand %vm176, %vm407
  %vm412 = vmand %vm177, %vm408
  %vm413 = vmand %vm178, %vm409
  %v414 = vsel %vm410, 1.0, 0.0
  %v415 = vsel %vm411, 1.0, 0.0
  %v416 = vsel %vm412, 1.0, 0.0
  %v417 = vsel %vm413, 1.0, 0.0
  %v418 = vmul.f32 %v382, %v414
  %v419 = vmul.f32 %v383, %v415
  %v420 = vmul.f32 %v384, %v416
  %v421 = vmul.f32 %v385, %v417
  %v422 = vmul.f32 %v386, %v414
  %v423 = vmul.f32 %v387, %v415
  %v424 = vmul.f32 %v388, %v416
  %v425 = vmul.f32 %v389, %v417
  %v426 = vmul.f32 %v390, %v414
  %v427 = vmul.f32 %v391, %v415
  %v428 = vmul.f32 %v392, %v416
  %v429 = vmul.f32 %v393, %v417
  %v430 = vmul.f32 %v394, %v414
  %v431 = vmul.f32 %v395, %v415
  %v432 = vmul.f32 %v396, %v416
  %v433 = vmul.f32 %v397, %v417
  %v434 = vadd.f32 %v292, %v418
  %v435 = vadd.f32 %v293, %v419
  %v436 = vadd.f32 %v294, %v420
  %v437 = vadd.f32 %v295, %v421
  %v438 = vadd.f32 %v296, %v422
  %v439 = vadd.f32 %v297, %v423
  %v440 = vadd.f32 %v298, %v424
  %v441 = vadd.f32 %v299, %v425
  %v442 = vadd.f32 %v300, %v426
  %v443 = vadd.f32 %v301, %v427
  %v444 = vadd.f32 %v302, %v428
  %v445 = vadd.f32 %v303, %v429
  %v446 = vadd.f32 %v304, %v430
  %v447 = vadd.f32 %v305, %v431
  %v448 = vadd.f32 %v306, %v432
  %v449 = vadd.f32 %v307, %v433
  %450 = vrot.lane.b32.xlu0 %v94, 15
  %v451 = vpop.permute.xlu0 %450
  %452 = vrot.lane.b32.xlu0 %v98, 15
  %v453 = vpop.permute.xlu0 %452
  %454 = vrot.lane.b32.xlu0 %v102, 15
  %v455 = vpop.permute.xlu0 %454
  %456 = vrot.lane.b32.xlu0 %v106, 15
  %v457 = vpop.permute.xlu0 %456
  %458 = vrot.lane.b32.xlu0 %v95, 15
  %v459 = vpop.permute.xlu0 %458
  %460 = vrot.lane.b32.xlu0 %v99, 15
  %v461 = vpop.permute.xlu0 %460
  %462 = vrot.lane.b32.xlu0 %v103, 15
  %v463 = vpop.permute.xlu0 %462
  %464 = vrot.lane.b32.xlu0 %v107, 15
  %v465 = vpop.permute.xlu0 %464
  %466 = vrot.lane.b32.xlu0 %v96, 15
  %v467 = vpop.permute.xlu0 %466
  %468 = vrot.lane.b32.xlu0 %v100, 15
  %v469 = vpop.permute.xlu0 %468
  %470 = vrot.lane.b32.xlu0 %v104, 15
  %v471 = vpop.permute.xlu0 %470
  %472 = vrot.lane.b32.xlu0 %v108, 15
  %v473 = vpop.permute.xlu0 %472
  %474 = vrot.lane.b32.xlu0 %v97, 15
  %v475 = vpop.permute.xlu0 %474
  %476 = vrot.lane.b32.xlu0 %v101, 15
  %v477 = vpop.permute.xlu0 %476
  %478 = vrot.lane.b32.xlu0 %v105, 15
  %v479 = vpop.permute.xlu0 %478
  %480 = vrot.lane.b32.xlu0 %v109, 15
  %v481 = vpop.permute.xlu0 %480
  %vm482 = vcmp.lt.s32.totalorder %v111, 15
  %v483 = vsel %vm482, %v467, %v475
  %v484 = vsel %vm482, %v469, %v477
  %v485 = vsel %vm482, %v471, %v479
  %v486 = vsel %vm482, %v473, %v481
  %v487 = vsel %vm482, %v459, %v467
  %v488 = vsel %vm482, %v461, %v469
  %v489 = vsel %vm482, %v463, %v471
  %v490 = vsel %vm482, %v465, %v473
  %v491 = vsel %vm482, %v451, %v459
  %v492 = vsel %vm482, %v453, %v461
  %v493 = vsel %vm482, %v455, %v463
  %v494 = vsel %vm482, %v457, %v465
  %v495 = vsel %vm482, %v475, %v451
  %v496 = vsel %vm482, %v477, %v453
  %v497 = vsel %vm482, %v479, %v455
  %v498 = vsel %vm482, %v481, %v457
  %s499 = scalar_lea.vmem %s1, 64
  %v500 = vld [vmem:[%s499] sm:$0xff]
  %v501 = vld [vmem:[%s499 + $0x8] sm:$0xff]
  %v502 = vld [vmem:[%s499 + $0x10] sm:$0xff]
  %v503 = vld [vmem:[%s499 + $0x18] sm:$0xff]
  %505 = vset.pattern.permute.xlu0 0
  %506 = vperm.xlu0 %505, %v500
  %v507 = vpop.permute.xlu0 %506
  %510 = vset.pattern.permute.xlu0 0
  %511 = vperm.xlu0 %510, %v501
  %v512 = vpop.permute.xlu0 %511
  %515 = vset.pattern.permute.xlu0 0
  %516 = vperm.xlu0 %515, %v502
  %v517 = vpop.permute.xlu0 %516
  %520 = vset.pattern.permute.xlu0 0
  %521 = vperm.xlu0 %520, %v503
  %v522 = vpop.permute.xlu0 %521
  %v524 = vmul.f32 %v495, %v507
  %v525 = vmul.f32 %v491, %v507
  %v526 = vmul.f32 %v487, %v507
  %v527 = vmul.f32 %v483, %v507
  %v528 = vmul.f32 %v496, %v512
  %v529 = vmul.f32 %v492, %v512
  %v530 = vmul.f32 %v488, %v512
  %v531 = vmul.f32 %v484, %v512
  %v532 = vmul.f32 %v497, %v517
  %v533 = vmul.f32 %v493, %v517
  %v534 = vmul.f32 %v489, %v517
  %v535 = vmul.f32 %v485, %v517
  %v536 = vmul.f32 %v498, %v522
  %v537 = vmul.f32 %v494, %v522
  %v538 = vmul.f32 %v490, %v522
  %v539 = vmul.f32 %v486, %v522
  %v540 = vadd.s32 %v135, 1
  %v541 = vadd.s32 %v136, 1
  %v542 = vadd.s32 %v137, 1
  %v543 = vadd.s32 %v138, 1
  %vm544 = vcmp.ge.s32.totalorder %v540, 0
  %vm545 = vcmp.ge.s32.totalorder %v541, 0
  %vm546 = vcmp.ge.s32.totalorder %v542, 0
  %vm547 = vcmp.ge.s32.totalorder %v543, 0
  %vm548 = vcmp.lt.s32.totalorder %v540, 16
  %vm549 = vcmp.lt.s32.totalorder %v541, 16
  %vm550 = vcmp.lt.s32.totalorder %v542, 16
  %vm551 = vcmp.lt.s32.totalorder %v543, 16
  %vm552 = vmand %vm544, %vm548
  %vm553 = vmand %vm545, %vm549
  %vm554 = vmand %vm546, %vm550
  %vm555 = vmand %vm547, %vm551
  %vm556 = vmand %vm175, %vm552
  %vm557 = vmand %vm176, %vm553
  %vm558 = vmand %vm177, %vm554
  %vm559 = vmand %vm178, %vm555
  %v560 = vsel %vm556, 1.0, 0.0
  %v561 = vsel %vm557, 1.0, 0.0
  %v562 = vsel %vm558, 1.0, 0.0
  %v563 = vsel %vm559, 1.0, 0.0
  %v564 = vmul.f32 %v524, %v560
  %v565 = vmul.f32 %v525, %v561
  %v566 = vmul.f32 %v526, %v562
  %v567 = vmul.f32 %v527, %v563
  %v568 = vmul.f32 %v528, %v560
  %v569 = vmul.f32 %v529, %v561
  %v570 = vmul.f32 %v530, %v562
  %v571 = vmul.f32 %v531, %v563
  %v572 = vmul.f32 %v532, %v560
  %v573 = vmul.f32 %v533, %v561
  %v574 = vmul.f32 %v534, %v562
  %v575 = vmul.f32 %v535, %v563
  %v576 = vmul.f32 %v536, %v560
  %v577 = vmul.f32 %v537, %v561
  %v578 = vmul.f32 %v538, %v562
  %v579 = vmul.f32 %v539, %v563
  %v580 = vadd.f32 %v434, %v564
  %v581 = vadd.f32 %v435, %v565
  %v582 = vadd.f32 %v436, %v566
  %v583 = vadd.f32 %v437, %v567
  %v584 = vadd.f32 %v438, %v568
  %v585 = vadd.f32 %v439, %v569
  %v586 = vadd.f32 %v440, %v570
  %v587 = vadd.f32 %v441, %v571
  %v588 = vadd.f32 %v442, %v572
  %v589 = vadd.f32 %v443, %v573
  %v590 = vadd.f32 %v444, %v574
  %v591 = vadd.f32 %v445, %v575
  %v592 = vadd.f32 %v446, %v576
  %v593 = vadd.f32 %v447, %v577
  %v594 = vadd.f32 %v448, %v578
  %v595 = vadd.f32 %v449, %v579
  %vm596 = vcmp.ge.s32.totalorder %v159, 0
  %vm597 = vcmp.ge.s32.totalorder %v160, 0
  %vm598 = vcmp.ge.s32.totalorder %v161, 0
  %vm599 = vcmp.ge.s32.totalorder %v162, 0
  %vm600 = vcmp.lt.s32.totalorder %v159, 16
  %vm601 = vcmp.lt.s32.totalorder %v160, 16
  %vm602 = vcmp.lt.s32.totalorder %v161, 16
  %vm603 = vcmp.lt.s32.totalorder %v162, 16
  %vm604 = vmand %vm596, %vm600
  %vm605 = vmand %vm597, %vm601
  %vm606 = vmand %vm598, %vm602
  %vm607 = vmand %vm599, %vm603
  %608 = vrot.lane.b32.xlu0 %v94, 1
  %v609 = vpop.permute.xlu0 %608
  %610 = vrot.lane.b32.xlu0 %v98, 1
  %v611 = vpop.permute.xlu0 %610
  %612 = vrot.lane.b32.xlu0 %v102, 1
  %v613 = vpop.permute.xlu0 %612
  %614 = vrot.lane.b32.xlu0 %v106, 1
  %v615 = vpop.permute.xlu0 %614
  %616 = vrot.lane.b32.xlu0 %v95, 1
  %v617 = vpop.permute.xlu0 %616
  %618 = vrot.lane.b32.xlu0 %v99, 1
  %v619 = vpop.permute.xlu0 %618
  %620 = vrot.lane.b32.xlu0 %v103, 1
  %v621 = vpop.permute.xlu0 %620
  %622 = vrot.lane.b32.xlu0 %v107, 1
  %v623 = vpop.permute.xlu0 %622
  %624 = vrot.lane.b32.xlu0 %v96, 1
  %v625 = vpop.permute.xlu0 %624
  %626 = vrot.lane.b32.xlu0 %v100, 1
  %v627 = vpop.permute.xlu0 %626
  %628 = vrot.lane.b32.xlu0 %v104, 1
  %v629 = vpop.permute.xlu0 %628
  %630 = vrot.lane.b32.xlu0 %v108, 1
  %v631 = vpop.permute.xlu0 %630
  %632 = vrot.lane.b32.xlu0 %v97, 1
  %v633 = vpop.permute.xlu0 %632
  %634 = vrot.lane.b32.xlu0 %v101, 1
  %v635 = vpop.permute.xlu0 %634
  %636 = vrot.lane.b32.xlu0 %v105, 1
  %v637 = vpop.permute.xlu0 %636
  %638 = vrot.lane.b32.xlu0 %v109, 1
  %v639 = vpop.permute.xlu0 %638
  %vm640 = vcmp.lt.s32.totalorder %v111, 1
  %v641 = vsel %vm640, %v625, %v633
  %v642 = vsel %vm640, %v627, %v635
  %v643 = vsel %vm640, %v629, %v637
  %v644 = vsel %vm640, %v631, %v639
  %v645 = vsel %vm640, %v617, %v625
  %v646 = vsel %vm640, %v619, %v627
  %v647 = vsel %vm640, %v621, %v629
  %v648 = vsel %vm640, %v623, %v631
  %v649 = vsel %vm640, %v609, %v617
  %v650 = vsel %vm640, %v611, %v619
  %v651 = vsel %vm640, %v613, %v621
  %v652 = vsel %vm640, %v615, %v623
  %v653 = vsel %vm640, %v633, %v609
  %v654 = vsel %vm640, %v635, %v611
  %v655 = vsel %vm640, %v637, %v613
  %v656 = vsel %vm640, %v639, %v615
  %s657 = scalar_lea.vmem %s1, 96
  %v658 = vld [vmem:[%s657] sm:$0xff]
  %v659 = vld [vmem:[%s657 + $0x8] sm:$0xff]
  %v660 = vld [vmem:[%s657 + $0x10] sm:$0xff]
  %v661 = vld [vmem:[%s657 + $0x18] sm:$0xff]
  %663 = vset.pattern.permute.xlu0 0
  %664 = vperm.xlu0 %663, %v658
  %v665 = vpop.permute.xlu0 %664
  %668 = vset.pattern.permute.xlu0 0
  %669 = vperm.xlu0 %668, %v659
  %v670 = vpop.permute.xlu0 %669
  %673 = vset.pattern.permute.xlu0 0
  %674 = vperm.xlu0 %673, %v660
  %v675 = vpop.permute.xlu0 %674
  %678 = vset.pattern.permute.xlu0 0
  %679 = vperm.xlu0 %678, %v661
  %v680 = vpop.permute.xlu0 %679
  %v682 = vmul.f32 %v653, %v665
  %v683 = vmul.f32 %v649, %v665
  %v684 = vmul.f32 %v645, %v665
  %v685 = vmul.f32 %v641, %v665
  %v686 = vmul.f32 %v654, %v670
  %v687 = vmul.f32 %v650, %v670
  %v688 = vmul.f32 %v646, %v670
  %v689 = vmul.f32 %v642, %v670
  %v690 = vmul.f32 %v655, %v675
  %v691 = vmul.f32 %v651, %v675
  %v692 = vmul.f32 %v647, %v675
  %v693 = vmul.f32 %v643, %v675
  %v694 = vmul.f32 %v656, %v680
  %v695 = vmul.f32 %v652, %v680
  %v696 = vmul.f32 %v648, %v680
  %v697 = vmul.f32 %v644, %v680
  %vm698 = vmand %vm604, %vm280
  %vm699 = vmand %vm605, %vm281
  %vm700 = vmand %vm606, %vm282
  %vm701 = vmand %vm607, %vm283
  %v702 = vsel %vm698, 1.0, 0.0
  %v703 = vsel %vm699, 1.0, 0.0
  %v704 = vsel %vm700, 1.0, 0.0
  %v705 = vsel %vm701, 1.0, 0.0
  %v706 = vmul.f32 %v682, %v702
  %v707 = vmul.f32 %v683, %v703
  %v708 = vmul.f32 %v684, %v704
  %v709 = vmul.f32 %v685, %v705
  %v710 = vmul.f32 %v686, %v702
  %v711 = vmul.f32 %v687, %v703
  %v712 = vmul.f32 %v688, %v704
  %v713 = vmul.f32 %v689, %v705
  %v714 = vmul.f32 %v690, %v702
  %v715 = vmul.f32 %v691, %v703
  %v716 = vmul.f32 %v692, %v704
  %v717 = vmul.f32 %v693, %v705
  %v718 = vmul.f32 %v694, %v702
  %v719 = vmul.f32 %v695, %v703
  %v720 = vmul.f32 %v696, %v704
  %v721 = vmul.f32 %v697, %v705
  %v722 = vadd.f32 %v580, %v706
  %v723 = vadd.f32 %v581, %v707
  %v724 = vadd.f32 %v582, %v708
  %v725 = vadd.f32 %v583, %v709
  %v726 = vadd.f32 %v584, %v710
  %v727 = vadd.f32 %v585, %v711
  %v728 = vadd.f32 %v586, %v712
  %v729 = vadd.f32 %v587, %v713
  %v730 = vadd.f32 %v588, %v714
  %v731 = vadd.f32 %v589, %v715
  %v732 = vadd.f32 %v590, %v716
  %v733 = vadd.f32 %v591, %v717
  %v734 = vadd.f32 %v592, %v718
  %v735 = vadd.f32 %v593, %v719
  %v736 = vadd.f32 %v594, %v720
  %v737 = vadd.f32 %v595, %v721
  %s738 = scalar_lea.vmem %s1, 128
  %v739 = vld [vmem:[%s738] sm:$0xff]
  %v740 = vld [vmem:[%s738 + $0x8] sm:$0xff]
  %v741 = vld [vmem:[%s738 + $0x10] sm:$0xff]
  %v742 = vld [vmem:[%s738 + $0x18] sm:$0xff]
  %744 = vset.pattern.permute.xlu0 0
  %745 = vperm.xlu0 %744, %v739
  %v746 = vpop.permute.xlu0 %745
  %749 = vset.pattern.permute.xlu0 0
  %750 = vperm.xlu0 %749, %v740
  %v751 = vpop.permute.xlu0 %750
  %754 = vset.pattern.permute.xlu0 0
  %755 = vperm.xlu0 %754, %v741
  %v756 = vpop.permute.xlu0 %755
  %759 = vset.pattern.permute.xlu0 0
  %760 = vperm.xlu0 %759, %v742
  %v761 = vpop.permute.xlu0 %760
  %v763 = vmul.f32 %v94, %v746
  %v764 = vmul.f32 %v95, %v746
  %v765 = vmul.f32 %v96, %v746
  %v766 = vmul.f32 %v97, %v746
  %v767 = vmul.f32 %v98, %v751
  %v768 = vmul.f32 %v99, %v751
  %v769 = vmul.f32 %v100, %v751
  %v770 = vmul.f32 %v101, %v751
  %v771 = vmul.f32 %v102, %v756
  %v772 = vmul.f32 %v103, %v756
  %v773 = vmul.f32 %v104, %v756
  %v774 = vmul.f32 %v105, %v756
  %v775 = vmul.f32 %v106, %v761
  %v776 = vmul.f32 %v107, %v761
  %v777 = vmul.f32 %v108, %v761
  %v778 = vmul.f32 %v109, %v761
  %v779 = vadd.f32 %v722, %v763
  %v780 = vadd.f32 %v723, %v764
  %v781 = vadd.f32 %v724, %v765
  %v782 = vadd.f32 %v725, %v766
  %v783 = vadd.f32 %v726, %v767
  %v784 = vadd.f32 %v727, %v768
  %v785 = vadd.f32 %v728, %v769
  %v786 = vadd.f32 %v729, %v770
  %v787 = vadd.f32 %v730, %v771
  %v788 = vadd.f32 %v731, %v772
  %v789 = vadd.f32 %v732, %v773
  %v790 = vadd.f32 %v733, %v774
  %v791 = vadd.f32 %v734, %v775
  %v792 = vadd.f32 %v735, %v776
  %v793 = vadd.f32 %v736, %v777
  %v794 = vadd.f32 %v737, %v778
  %795 = vrot.lane.b32.xlu0 %v94, 127
  %v796 = vpop.permute.xlu0 %795
  %797 = vrot.lane.b32.xlu0 %v98, 127
  %v798 = vpop.permute.xlu0 %797
  %799 = vrot.lane.b32.xlu0 %v102, 127
  %v800 = vpop.permute.xlu0 %799
  %801 = vrot.lane.b32.xlu0 %v106, 127
  %v802 = vpop.permute.xlu0 %801
  %803 = vrot.lane.b32.xlu0 %v95, 127
  %v804 = vpop.permute.xlu0 %803
  %805 = vrot.lane.b32.xlu0 %v99, 127
  %v806 = vpop.permute.xlu0 %805
  %807 = vrot.lane.b32.xlu0 %v103, 127
  %v808 = vpop.permute.xlu0 %807
  %809 = vrot.lane.b32.xlu0 %v107, 127
  %v810 = vpop.permute.xlu0 %809
  %811 = vrot.lane.b32.xlu0 %v96, 127
  %v812 = vpop.permute.xlu0 %811
  %813 = vrot.lane.b32.xlu0 %v100, 127
  %v814 = vpop.permute.xlu0 %813
  %815 = vrot.lane.b32.xlu0 %v104, 127
  %v816 = vpop.permute.xlu0 %815
  %817 = vrot.lane.b32.xlu0 %v108, 127
  %v818 = vpop.permute.xlu0 %817
  %819 = vrot.lane.b32.xlu0 %v97, 127
  %v820 = vpop.permute.xlu0 %819
  %821 = vrot.lane.b32.xlu0 %v101, 127
  %v822 = vpop.permute.xlu0 %821
  %823 = vrot.lane.b32.xlu0 %v105, 127
  %v824 = vpop.permute.xlu0 %823
  %825 = vrot.lane.b32.xlu0 %v109, 127
  %v826 = vpop.permute.xlu0 %825
  %vm827 = vcmp.lt.s32.totalorder %v111, 127
  %v828 = vsel %vm827, %v812, %v820
  %v829 = vsel %vm827, %v814, %v822
  %v830 = vsel %vm827, %v816, %v824
  %v831 = vsel %vm827, %v818, %v826
  %v832 = vsel %vm827, %v804, %v812
  %v833 = vsel %vm827, %v806, %v814
  %v834 = vsel %vm827, %v808, %v816
  %v835 = vsel %vm827, %v810, %v818
  %v836 = vsel %vm827, %v796, %v804
  %v837 = vsel %vm827, %v798, %v806
  %v838 = vsel %vm827, %v800, %v808
  %v839 = vsel %vm827, %v802, %v810
  %v840 = vsel %vm827, %v820, %v796
  %v841 = vsel %vm827, %v822, %v798
  %v842 = vsel %vm827, %v824, %v800
  %v843 = vsel %vm827, %v826, %v802
  %s844 = scalar_lea.vmem %s1, 160
  %v845 = vld [vmem:[%s844] sm:$0xff]
  %v846 = vld [vmem:[%s844 + $0x8] sm:$0xff]
  %v847 = vld [vmem:[%s844 + $0x10] sm:$0xff]
  %v848 = vld [vmem:[%s844 + $0x18] sm:$0xff]
  %850 = vset.pattern.permute.xlu0 0
  %851 = vperm.xlu0 %850, %v845
  %v852 = vpop.permute.xlu0 %851
  %855 = vset.pattern.permute.xlu0 0
  %856 = vperm.xlu0 %855, %v846
  %v857 = vpop.permute.xlu0 %856
  %860 = vset.pattern.permute.xlu0 0
  %861 = vperm.xlu0 %860, %v847
  %v862 = vpop.permute.xlu0 %861
  %865 = vset.pattern.permute.xlu0 0
  %866 = vperm.xlu0 %865, %v848
  %v867 = vpop.permute.xlu0 %866
  %v869 = vmul.f32 %v836, %v852
  %v870 = vmul.f32 %v832, %v852
  %v871 = vmul.f32 %v828, %v852
  %v872 = vmul.f32 %v840, %v852
  %v873 = vmul.f32 %v837, %v857
  %v874 = vmul.f32 %v833, %v857
  %v875 = vmul.f32 %v829, %v857
  %v876 = vmul.f32 %v841, %v857
  %v877 = vmul.f32 %v838, %v862
  %v878 = vmul.f32 %v834, %v862
  %v879 = vmul.f32 %v830, %v862
  %v880 = vmul.f32 %v842, %v862
  %v881 = vmul.f32 %v839, %v867
  %v882 = vmul.f32 %v835, %v867
  %v883 = vmul.f32 %v831, %v867
  %v884 = vmul.f32 %v843, %v867
  %vm885 = vmand %vm604, %vm552
  %vm886 = vmand %vm605, %vm553
  %vm887 = vmand %vm606, %vm554
  %vm888 = vmand %vm607, %vm555
  %v889 = vsel %vm885, 1.0, 0.0
  %v890 = vsel %vm886, 1.0, 0.0
  %v891 = vsel %vm887, 1.0, 0.0
  %v892 = vsel %vm888, 1.0, 0.0
  %v893 = vmul.f32 %v869, %v889
  %v894 = vmul.f32 %v870, %v890
  %v895 = vmul.f32 %v871, %v891
  %v896 = vmul.f32 %v872, %v892
  %v897 = vmul.f32 %v873, %v889
  %v898 = vmul.f32 %v874, %v890
  %v899 = vmul.f32 %v875, %v891
  %v900 = vmul.f32 %v876, %v892
  %v901 = vmul.f32 %v877, %v889
  %v902 = vmul.f32 %v878, %v890
  %v903 = vmul.f32 %v879, %v891
  %v904 = vmul.f32 %v880, %v892
  %v905 = vmul.f32 %v881, %v889
  %v906 = vmul.f32 %v882, %v890
  %v907 = vmul.f32 %v883, %v891
  %v908 = vmul.f32 %v884, %v892
  %v909 = vadd.f32 %v779, %v893
  %v910 = vadd.f32 %v780, %v894
  %v911 = vadd.f32 %v781, %v895
  %v912 = vadd.f32 %v782, %v896
  %v913 = vadd.f32 %v783, %v897
  %v914 = vadd.f32 %v784, %v898
  %v915 = vadd.f32 %v785, %v899
  %v916 = vadd.f32 %v786, %v900
  %v917 = vadd.f32 %v787, %v901
  %v918 = vadd.f32 %v788, %v902
  %v919 = vadd.f32 %v789, %v903
  %v920 = vadd.f32 %v790, %v904
  %v921 = vadd.f32 %v791, %v905
  %v922 = vadd.f32 %v792, %v906
  %v923 = vadd.f32 %v793, %v907
  %v924 = vadd.f32 %v794, %v908
  %v925 = vadd.s32 %v159, 1
  %v926 = vadd.s32 %v160, 1
  %v927 = vadd.s32 %v161, 1
  %v928 = vadd.s32 %v162, 1
  %vm929 = vcmp.ge.s32.totalorder %v925, 0
  %vm930 = vcmp.ge.s32.totalorder %v926, 0
  %vm931 = vcmp.ge.s32.totalorder %v927, 0
  %vm932 = vcmp.ge.s32.totalorder %v928, 0
  %vm933 = vcmp.lt.s32.totalorder %v925, 16
  %vm934 = vcmp.lt.s32.totalorder %v926, 16
  %vm935 = vcmp.lt.s32.totalorder %v927, 16
  %vm936 = vcmp.lt.s32.totalorder %v928, 16
  %vm937 = vmand %vm929, %vm933
  %vm938 = vmand %vm930, %vm934
  %vm939 = vmand %vm931, %vm935
  %vm940 = vmand %vm932, %vm936
  %941 = vrot.lane.b32.xlu0 %v94, 113
  %v942 = vpop.permute.xlu0 %941
  %943 = vrot.lane.b32.xlu0 %v98, 113
  %v944 = vpop.permute.xlu0 %943
  %945 = vrot.lane.b32.xlu0 %v102, 113
  %v946 = vpop.permute.xlu0 %945
  %947 = vrot.lane.b32.xlu0 %v106, 113
  %v948 = vpop.permute.xlu0 %947
  %949 = vrot.lane.b32.xlu0 %v95, 113
  %v950 = vpop.permute.xlu0 %949
  %951 = vrot.lane.b32.xlu0 %v99, 113
  %v952 = vpop.permute.xlu0 %951
  %953 = vrot.lane.b32.xlu0 %v103, 113
  %v954 = vpop.permute.xlu0 %953
  %955 = vrot.lane.b32.xlu0 %v107, 113
  %v956 = vpop.permute.xlu0 %955
  %957 = vrot.lane.b32.xlu0 %v96, 113
  %v958 = vpop.permute.xlu0 %957
  %959 = vrot.lane.b32.xlu0 %v100, 113
  %v960 = vpop.permute.xlu0 %959
  %961 = vrot.lane.b32.xlu0 %v104, 113
  %v962 = vpop.permute.xlu0 %961
  %963 = vrot.lane.b32.xlu0 %v108, 113
  %v964 = vpop.permute.xlu0 %963
  %965 = vrot.lane.b32.xlu0 %v97, 113
  %v966 = vpop.permute.xlu0 %965
  %967 = vrot.lane.b32.xlu0 %v101, 113
  %v968 = vpop.permute.xlu0 %967
  %969 = vrot.lane.b32.xlu0 %v105, 113
  %v970 = vpop.permute.xlu0 %969
  %971 = vrot.lane.b32.xlu0 %v109, 113
  %v972 = vpop.permute.xlu0 %971
  %vm973 = vcmp.lt.s32.totalorder %v111, 113
  %v974 = vsel %vm973, %v958, %v966
  %v975 = vsel %vm973, %v960, %v968
  %v976 = vsel %vm973, %v962, %v970
  %v977 = vsel %vm973, %v964, %v972
  %v978 = vsel %vm973, %v950, %v958
  %v979 = vsel %vm973, %v952, %v960
  %v980 = vsel %vm973, %v954, %v962
  %v981 = vsel %vm973, %v956, %v964
  %v982 = vsel %vm973, %v942, %v950
  %v983 = vsel %vm973, %v944, %v952
  %v984 = vsel %vm973, %v946, %v954
  %v985 = vsel %vm973, %v948, %v956
  %v986 = vsel %vm973, %v966, %v942
  %v987 = vsel %vm973, %v968, %v944
  %v988 = vsel %vm973, %v970, %v946
  %v989 = vsel %vm973, %v972, %v948
  %s990 = scalar_lea.vmem %s1, 192
  %v991 = vld [vmem:[%s990] sm:$0xff]
  %v992 = vld [vmem:[%s990 + $0x8] sm:$0xff]
  %v993 = vld [vmem:[%s990 + $0x10] sm:$0xff]
  %v994 = vld [vmem:[%s990 + $0x18] sm:$0xff]
  %996 = vset.pattern.permute.xlu0 0
  %997 = vperm.xlu0 %996, %v991
  %v998 = vpop.permute.xlu0 %997
  %1001 = vset.pattern.permute.xlu0 0
  %1002 = vperm.xlu0 %1001, %v992
  %v1003 = vpop.permute.xlu0 %1002
  %1006 = vset.pattern.permute.xlu0 0
  %1007 = vperm.xlu0 %1006, %v993
  %v1008 = vpop.permute.xlu0 %1007
  %1011 = vset.pattern.permute.xlu0 0
  %1012 = vperm.xlu0 %1011, %v994
  %v1013 = vpop.permute.xlu0 %1012
  %v1015 = vmul.f32 %v982, %v998
  %v1016 = vmul.f32 %v978, %v998
  %v1017 = vmul.f32 %v974, %v998
  %v1018 = vmul.f32 %v986, %v998
  %v1019 = vmul.f32 %v983, %v1003
  %v1020 = vmul.f32 %v979, %v1003
  %v1021 = vmul.f32 %v975, %v1003
  %v1022 = vmul.f32 %v987, %v1003
  %v1023 = vmul.f32 %v984, %v1008
  %v1024 = vmul.f32 %v980, %v1008
  %v1025 = vmul.f32 %v976, %v1008
  %v1026 = vmul.f32 %v988, %v1008
  %v1027 = vmul.f32 %v985, %v1013
  %v1028 = vmul.f32 %v981, %v1013
  %v1029 = vmul.f32 %v977, %v1013
  %v1030 = vmul.f32 %v989, %v1013
  %vm1031 = vmand %vm937, %vm280
  %vm1032 = vmand %vm938, %vm281
  %vm1033 = vmand %vm939, %vm282
  %vm1034 = vmand %vm940, %vm283
  %v1035 = vsel %vm1031, 1.0, 0.0
  %v1036 = vsel %vm1032, 1.0, 0.0
  %v1037 = vsel %vm1033, 1.0, 0.0
  %v1038 = vsel %vm1034, 1.0, 0.0
  %v1039 = vmul.f32 %v1015, %v1035
  %v1040 = vmul.f32 %v1016, %v1036
  %v1041 = vmul.f32 %v1017, %v1037
  %v1042 = vmul.f32 %v1018, %v1038
  %v1043 = vmul.f32 %v1019, %v1035
  %v1044 = vmul.f32 %v1020, %v1036
  %v1045 = vmul.f32 %v1021, %v1037
  %v1046 = vmul.f32 %v1022, %v1038
  %v1047 = vmul.f32 %v1023, %v1035
  %v1048 = vmul.f32 %v1024, %v1036
  %v1049 = vmul.f32 %v1025, %v1037
  %v1050 = vmul.f32 %v1026, %v1038
  %v1051 = vmul.f32 %v1027, %v1035
  %v1052 = vmul.f32 %v1028, %v1036
  %v1053 = vmul.f32 %v1029, %v1037
  %v1054 = vmul.f32 %v1030, %v1038
  %v1055 = vadd.f32 %v909, %v1039
  %v1056 = vadd.f32 %v910, %v1040
  %v1057 = vadd.f32 %v911, %v1041
  %v1058 = vadd.f32 %v912, %v1042
  %v1059 = vadd.f32 %v913, %v1043
  %v1060 = vadd.f32 %v914, %v1044
  %v1061 = vadd.f32 %v915, %v1045
  %v1062 = vadd.f32 %v916, %v1046
  %v1063 = vadd.f32 %v917, %v1047
  %v1064 = vadd.f32 %v918, %v1048
  %v1065 = vadd.f32 %v919, %v1049
  %v1066 = vadd.f32 %v920, %v1050
  %v1067 = vadd.f32 %v921, %v1051
  %v1068 = vadd.f32 %v922, %v1052
  %v1069 = vadd.f32 %v923, %v1053
  %v1070 = vadd.f32 %v924, %v1054
  %1071 = vrot.lane.b32.xlu0 %v94, 112
  %v1072 = vpop.permute.xlu0 %1071
  %1073 = vrot.lane.b32.xlu0 %v98, 112
  %v1074 = vpop.permute.xlu0 %1073
  %1075 = vrot.lane.b32.xlu0 %v102, 112
  %v1076 = vpop.permute.xlu0 %1075
  %1077 = vrot.lane.b32.xlu0 %v106, 112
  %v1078 = vpop.permute.xlu0 %1077
  %1079 = vrot.lane.b32.xlu0 %v95, 112
  %v1080 = vpop.permute.xlu0 %1079
  %1081 = vrot.lane.b32.xlu0 %v99, 112
  %v1082 = vpop.permute.xlu0 %1081
  %1083 = vrot.lane.b32.xlu0 %v103, 112
  %v1084 = vpop.permute.xlu0 %1083
  %1085 = vrot.lane.b32.xlu0 %v107, 112
  %v1086 = vpop.permute.xlu0 %1085
  %1087 = vrot.lane.b32.xlu0 %v96, 112
  %v1088 = vpop.permute.xlu0 %1087
  %1089 = vrot.lane.b32.xlu0 %v100, 112
  %v1090 = vpop.permute.xlu0 %1089
  %1091 = vrot.lane.b32.xlu0 %v104, 112
  %v1092 = vpop.permute.xlu0 %1091
  %1093 = vrot.lane.b32.xlu0 %v108, 112
  %v1094 = vpop.permute.xlu0 %1093
  %1095 = vrot.lane.b32.xlu0 %v97, 112
  %v1096 = vpop.permute.xlu0 %1095
  %1097 = vrot.lane.b32.xlu0 %v101, 112
  %v1098 = vpop.permute.xlu0 %1097
  %1099 = vrot.lane.b32.xlu0 %v105, 112
  %v1100 = vpop.permute.xlu0 %1099
  %1101 = vrot.lane.b32.xlu0 %v109, 112
  %v1102 = vpop.permute.xlu0 %1101
  %vm1103 = vcmp.lt.s32.totalorder %v111, 112
  %v1104 = vsel %vm1103, %v1088, %v1096
  %v1105 = vsel %vm1103, %v1090, %v1098
  %v1106 = vsel %vm1103, %v1092, %v1100
  %v1107 = vsel %vm1103, %v1094, %v1102
  %v1108 = vsel %vm1103, %v1080, %v1088
  %v1109 = vsel %vm1103, %v1082, %v1090
  %v1110 = vsel %vm1103, %v1084, %v1092
  %v1111 = vsel %vm1103, %v1086, %v1094
  %v1112 = vsel %vm1103, %v1072, %v1080
  %v1113 = vsel %vm1103, %v1074, %v1082
  %v1114 = vsel %vm1103, %v1076, %v1084
  %v1115 = vsel %vm1103, %v1078, %v1086
  %v1116 = vsel %vm1103, %v1096, %v1072
  %v1117 = vsel %vm1103, %v1098, %v1074
  %v1118 = vsel %vm1103, %v1100, %v1076
  %v1119 = vsel %vm1103, %v1102, %v1078
  %s1120 = scalar_lea.vmem %s1, 224
  %v1121 = vld [vmem:[%s1120] sm:$0xff]
  %v1122 = vld [vmem:[%s1120 + $0x8] sm:$0xff]
  %v1123 = vld [vmem:[%s1120 + $0x10] sm:$0xff]
  %v1124 = vld [vmem:[%s1120 + $0x18] sm:$0xff]
  %1126 = vset.pattern.permute.xlu0 0
  %1127 = vperm.xlu0 %1126, %v1121
  %v1128 = vpop.permute.xlu0 %1127
  %1131 = vset.pattern.permute.xlu0 0
  %1132 = vperm.xlu0 %1131, %v1122
  %v1133 = vpop.permute.xlu0 %1132
  %1136 = vset.pattern.permute.xlu0 0
  %1137 = vperm.xlu0 %1136, %v1123
  %v1138 = vpop.permute.xlu0 %1137
  %1141 = vset.pattern.permute.xlu0 0
  %1142 = vperm.xlu0 %1141, %v1124
  %v1143 = vpop.permute.xlu0 %1142
  %v1145 = vmul.f32 %v1112, %v1128
  %v1146 = vmul.f32 %v1108, %v1128
  %v1147 = vmul.f32 %v1104, %v1128
  %v1148 = vmul.f32 %v1116, %v1128
  %v1149 = vmul.f32 %v1113, %v1133
  %v1150 = vmul.f32 %v1109, %v1133
  %v1151 = vmul.f32 %v1105, %v1133
  %v1152 = vmul.f32 %v1117, %v1133
  %v1153 = vmul.f32 %v1114, %v1138
  %v1154 = vmul.f32 %v1110, %v1138
  %v1155 = vmul.f32 %v1106, %v1138
  %v1156 = vmul.f32 %v1118, %v1138
  %v1157 = vmul.f32 %v1115, %v1143
  %v1158 = vmul.f32 %v1111, %v1143
  %v1159 = vmul.f32 %v1107, %v1143
  %v1160 = vmul.f32 %v1119, %v1143
  %vm1161 = vmand %vm937, %vm406
  %vm1162 = vmand %vm938, %vm407
  %vm1163 = vmand %vm939, %vm408
  %vm1164 = vmand %vm940, %vm409
  %v1165 = vsel %vm1161, 1.0, 0.0
  %v1166 = vsel %vm1162, 1.0, 0.0
  %v1167 = vsel %vm1163, 1.0, 0.0
  %v1168 = vsel %vm1164, 1.0, 0.0
  %v1169 = vmul.f32 %v1145, %v1165
  %v1170 = vmul.f32 %v1146, %v1166
  %v1171 = vmul.f32 %v1147, %v1167
  %v1172 = vmul.f32 %v1148, %v1168
  %v1173 = vmul.f32 %v1149, %v1165
  %v1174 = vmul.f32 %v1150, %v1166
  %v1175 = vmul.f32 %v1151, %v1167
  %v1176 = vmul.f32 %v1152, %v1168
  %v1177 = vmul.f32 %v1153, %v1165
  %v1178 = vmul.f32 %v1154, %v1166
  %v1179 = vmul.f32 %v1155, %v1167
  %v1180 = vmul.f32 %v1156, %v1168
  %v1181 = vmul.f32 %v1157, %v1165
  %v1182 = vmul.f32 %v1158, %v1166
  %v1183 = vmul.f32 %v1159, %v1167
  %v1184 = vmul.f32 %v1160, %v1168
  %v1185 = vadd.f32 %v1055, %v1169
  %v1186 = vadd.f32 %v1056, %v1170
  %v1187 = vadd.f32 %v1057, %v1171
  %v1188 = vadd.f32 %v1058, %v1172
  %v1189 = vadd.f32 %v1059, %v1173
  %v1190 = vadd.f32 %v1060, %v1174
  %v1191 = vadd.f32 %v1061, %v1175
  %v1192 = vadd.f32 %v1062, %v1176
  %v1193 = vadd.f32 %v1063, %v1177
  %v1194 = vadd.f32 %v1064, %v1178
  %v1195 = vadd.f32 %v1065, %v1179
  %v1196 = vadd.f32 %v1066, %v1180
  %v1197 = vadd.f32 %v1067, %v1181
  %v1198 = vadd.f32 %v1068, %v1182
  %v1199 = vadd.f32 %v1069, %v1183
  %v1200 = vadd.f32 %v1070, %v1184
  %1201 = vrot.lane.b32.xlu0 %v94, 111
  %v1202 = vpop.permute.xlu0 %1201
  %1203 = vrot.lane.b32.xlu0 %v98, 111
  %v1204 = vpop.permute.xlu0 %1203
  %1205 = vrot.lane.b32.xlu0 %v102, 111
  %v1206 = vpop.permute.xlu0 %1205
  %1207 = vrot.lane.b32.xlu0 %v106, 111
  %v1208 = vpop.permute.xlu0 %1207
  %1209 = vrot.lane.b32.xlu0 %v95, 111
  %v1210 = vpop.permute.xlu0 %1209
  %1211 = vrot.lane.b32.xlu0 %v99, 111
  %v1212 = vpop.permute.xlu0 %1211
  %1213 = vrot.lane.b32.xlu0 %v103, 111
  %v1214 = vpop.permute.xlu0 %1213
  %1215 = vrot.lane.b32.xlu0 %v107, 111
  %v1216 = vpop.permute.xlu0 %1215
  %1217 = vrot.lane.b32.xlu0 %v96, 111
  %v1218 = vpop.permute.xlu0 %1217
  %1219 = vrot.lane.b32.xlu0 %v100, 111
  %v1220 = vpop.permute.xlu0 %1219
  %1221 = vrot.lane.b32.xlu0 %v104, 111
  %v1222 = vpop.permute.xlu0 %1221
  %1223 = vrot.lane.b32.xlu0 %v108, 111
  %v1224 = vpop.permute.xlu0 %1223
  %1225 = vrot.lane.b32.xlu0 %v97, 111
  %v1226 = vpop.permute.xlu0 %1225
  %1227 = vrot.lane.b32.xlu0 %v101, 111
  %v1228 = vpop.permute.xlu0 %1227
  %1229 = vrot.lane.b32.xlu0 %v105, 111
  %v1230 = vpop.permute.xlu0 %1229
  %1231 = vrot.lane.b32.xlu0 %v109, 111
  %v1232 = vpop.permute.xlu0 %1231
  %vm1233 = vcmp.lt.s32.totalorder %v111, 111
  %v1234 = vsel %vm1233, %v1218, %v1226
  %v1235 = vsel %vm1233, %v1220, %v1228
  %v1236 = vsel %vm1233, %v1222, %v1230
  %v1237 = vsel %vm1233, %v1224, %v1232
  %v1238 = vsel %vm1233, %v1210, %v1218
  %v1239 = vsel %vm1233, %v1212, %v1220
  %v1240 = vsel %vm1233, %v1214, %v1222
  %v1241 = vsel %vm1233, %v1216, %v1224
  %v1242 = vsel %vm1233, %v1202, %v1210
  %v1243 = vsel %vm1233, %v1204, %v1212
  %v1244 = vsel %vm1233, %v1206, %v1214
  %v1245 = vsel %vm1233, %v1208, %v1216
  %v1246 = vsel %vm1233, %v1226, %v1202
  %v1247 = vsel %vm1233, %v1228, %v1204
  %v1248 = vsel %vm1233, %v1230, %v1206
  %v1249 = vsel %vm1233, %v1232, %v1208
  %s1250 = scalar_lea.vmem %s1, 256
  %v1251 = vld [vmem:[%s1250] sm:$0xff]
  %v1252 = vld [vmem:[%s1250 + $0x8] sm:$0xff]
  %v1253 = vld [vmem:[%s1250 + $0x10] sm:$0xff]
  %v1254 = vld [vmem:[%s1250 + $0x18] sm:$0xff]
  %1256 = vset.pattern.permute.xlu0 0
  %1257 = vperm.xlu0 %1256, %v1251
  %v1258 = vpop.permute.xlu0 %1257
  %1261 = vset.pattern.permute.xlu0 0
  %1262 = vperm.xlu0 %1261, %v1252
  %v1263 = vpop.permute.xlu0 %1262
  %1266 = vset.pattern.permute.xlu0 0
  %1267 = vperm.xlu0 %1266, %v1253
  %v1268 = vpop.permute.xlu0 %1267
  %1271 = vset.pattern.permute.xlu0 0
  %1272 = vperm.xlu0 %1271, %v1254
  %v1273 = vpop.permute.xlu0 %1272
  %v1275 = vmul.f32 %v1242, %v1258
  %v1276 = vmul.f32 %v1238, %v1258
  %v1277 = vmul.f32 %v1234, %v1258
  %v1278 = vmul.f32 %v1246, %v1258
  %v1279 = vmul.f32 %v1243, %v1263
  %v1280 = vmul.f32 %v1239, %v1263
  %v1281 = vmul.f32 %v1235, %v1263
  %v1282 = vmul.f32 %v1247, %v1263
  %v1283 = vmul.f32 %v1244, %v1268
  %v1284 = vmul.f32 %v1240, %v1268
  %v1285 = vmul.f32 %v1236, %v1268
  %v1286 = vmul.f32 %v1248, %v1268
  %v1287 = vmul.f32 %v1245, %v1273
  %v1288 = vmul.f32 %v1241, %v1273
  %v1289 = vmul.f32 %v1237, %v1273
  %v1290 = vmul.f32 %v1249, %v1273
  %vm1291 = vmand %vm937, %vm552
  %vm1292 = vmand %vm938, %vm553
  %vm1293 = vmand %vm939, %vm554
  %vm1294 = vmand %vm940, %vm555
  %v1295 = vsel %vm1291, 1.0, 0.0
  %v1296 = vsel %vm1292, 1.0, 0.0
  %v1297 = vsel %vm1293, 1.0, 0.0
  %v1298 = vsel %vm1294, 1.0, 0.0
  %v1299 = vmul.f32 %v1275, %v1295
  %v1300 = vmul.f32 %v1276, %v1296
  %v1301 = vmul.f32 %v1277, %v1297
  %v1302 = vmul.f32 %v1278, %v1298
  %v1303 = vmul.f32 %v1279, %v1295
  %v1304 = vmul.f32 %v1280, %v1296
  %v1305 = vmul.f32 %v1281, %v1297
  %v1306 = vmul.f32 %v1282, %v1298
  %v1307 = vmul.f32 %v1283, %v1295
  %v1308 = vmul.f32 %v1284, %v1296
  %v1309 = vmul.f32 %v1285, %v1297
  %v1310 = vmul.f32 %v1286, %v1298
  %v1311 = vmul.f32 %v1287, %v1295
  %v1312 = vmul.f32 %v1288, %v1296
  %v1313 = vmul.f32 %v1289, %v1297
  %v1314 = vmul.f32 %v1290, %v1298
  %v1315 = vadd.f32 %v1185, %v1299
  %v1316 = vadd.f32 %v1186, %v1300
  %v1317 = vadd.f32 %v1187, %v1301
  %v1318 = vadd.f32 %v1188, %v1302
  %v1319 = vadd.f32 %v1189, %v1303
  %v1320 = vadd.f32 %v1190, %v1304
  %v1321 = vadd.f32 %v1191, %v1305
  %v1322 = vadd.f32 %v1192, %v1306
  %v1323 = vadd.f32 %v1193, %v1307
  %v1324 = vadd.f32 %v1194, %v1308
  %v1325 = vadd.f32 %v1195, %v1309
  %v1326 = vadd.f32 %v1196, %v1310
  %v1327 = vadd.f32 %v1197, %v1311
  %v1328 = vadd.f32 %v1198, %v1312
  %v1329 = vadd.f32 %v1199, %v1313
  %v1330 = vadd.f32 %v1200, %v1314
  %v1331 = vld [vmem:[%s2] sm:$0xff]
  %v1332 = vld [vmem:[%s2 + $0x8] sm:$0xff]
  %v1333 = vld [vmem:[%s2 + $0x10] sm:$0xff]
  %v1334 = vld [vmem:[%s2 + $0x18] sm:$0xff]
  %1336 = vset.pattern.permute.xlu0 0
  %1337 = vperm.xlu0 %1336, %v1331
  %v1338 = vpop.permute.xlu0 %1337
  %1341 = vset.pattern.permute.xlu0 0
  %1342 = vperm.xlu0 %1341, %v1332
  %v1343 = vpop.permute.xlu0 %1342
  %1346 = vset.pattern.permute.xlu0 0
  %1347 = vperm.xlu0 %1346, %v1333
  %v1348 = vpop.permute.xlu0 %1347
  %1351 = vset.pattern.permute.xlu0 0
  %1352 = vperm.xlu0 %1351, %v1334
  %v1353 = vpop.permute.xlu0 %1352
  %v1355 = vadd.f32 %v1315, %v1338
  %v1356 = vadd.f32 %v1316, %v1338
  %v1357 = vadd.f32 %v1317, %v1338
  %v1358 = vadd.f32 %v1318, %v1338
  %v1359 = vadd.f32 %v1319, %v1343
  %v1360 = vadd.f32 %v1320, %v1343
  %v1361 = vadd.f32 %v1321, %v1343
  %v1362 = vadd.f32 %v1322, %v1343
  %v1363 = vadd.f32 %v1323, %v1348
  %v1364 = vadd.f32 %v1324, %v1348
  %v1365 = vadd.f32 %v1325, %v1348
  %v1366 = vadd.f32 %v1326, %v1348
  %v1367 = vadd.f32 %v1327, %v1353
  %v1368 = vadd.f32 %v1328, %v1353
  %v1369 = vadd.f32 %v1329, %v1353
  %v1370 = vadd.f32 %v1330, %v1353
  %v1371 = vadd.f32 %v94, %v1355
  %v1372 = vadd.f32 %v95, %v1356
  %v1373 = vadd.f32 %v96, %v1357
  %v1374 = vadd.f32 %v97, %v1358
  %v1375 = vadd.f32 %v98, %v1359
  %v1376 = vadd.f32 %v99, %v1360
  %v1377 = vadd.f32 %v100, %v1361
  %v1378 = vadd.f32 %v101, %v1362
  %v1379 = vadd.f32 %v102, %v1363
  %v1380 = vadd.f32 %v103, %v1364
  %v1381 = vadd.f32 %v104, %v1365
  %v1382 = vadd.f32 %v105, %v1366
  %v1383 = vadd.f32 %v106, %v1367
  %v1384 = vadd.f32 %v107, %v1368
  %v1385 = vadd.f32 %v108, %v1369
  %v1386 = vadd.f32 %v109, %v1370
  %v1387 = vld [vmem:[%s3] sm:$0xff]
  %v1388 = vld [vmem:[%s3 + $0x8] sm:$0xff]
  %v1389 = vld [vmem:[%s3 + $0x10] sm:$0xff]
  %v1390 = vld [vmem:[%s3 + $0x18] sm:$0xff]
  %v1391 = vld [vmem:[%s4] sm:$0xff]
  %v1392 = vld [vmem:[%s4 + $0x8] sm:$0xff]
  %v1393 = vld [vmem:[%s4 + $0x10] sm:$0xff]
  %v1394 = vld [vmem:[%s4 + $0x18] sm:$0xff]
  %1395 = vmatprep.subr.mxu0 0.0
  %1396 = vmatpush1.msra.mxu0 1.0
  %1397 = vmatprep.subr.mxu0 0.0
  %1398 = vmatpush1.msra.mxu0 1.0
  %1399 = vmatprep.subr.mxu0 0.0
  %1400 = vmatpush1.msra.mxu0 1.0
  %1401 = vmatprep.subr.mxu0 0.0
  %1402 = vmatpush1.msra.mxu0 1.0
  %1403 = vmatprep.subr.mxu0 0.0
  %1404 = vmatpush1.msra.mxu0 1.0
  %1405 = vmatprep.subr.mxu0 0.0
  %1406 = vmatpush1.msra.mxu0 1.0
  %1407 = vmatprep.subr.mxu0 0.0
  %1408 = vmatpush1.msra.mxu0 1.0
  %1409 = vmatprep.subr.mxu0 0.0
  %1410 = vmatpush1.msra.mxu0 1.0
  %1411 = vmatprep.subr.mxu0 0.0
  %1412 = vmatpush1.msra.mxu0 1.0
  %1413 = vmatprep.subr.mxu0 0.0
  %1414 = vmatpush1.msra.mxu0 1.0
  %1415 = vmatprep.subr.mxu0 0.0
  %1416 = vmatpush1.msra.mxu0 1.0
  %1417 = vmatprep.subr.mxu0 0.0
  %1418 = vmatpush1.msra.mxu0 1.0
  %1419 = vmatprep.subr.mxu0 0.0
  %1420 = vmatpush1.msra.mxu0 1.0
  %1421 = vmatprep.subr.mxu0 0.0
  %1422 = vmatpush1.msra.mxu0 1.0
  %1423 = vmatprep.subr.mxu0 0.0
  %1424 = vmatpush1.msra.mxu0 1.0
  %1425 = vmatprep.subr.mxu0 0.0
  %1426 = vmatpush1.msra.mxu0 1.0
  %1427 = vmatprep.subr.mxu0 0.0
  %1428 = vmatpush2.msra.mxu0 1.0
  %1429 = vmatprep.subr.mxu0 0.0
  %1430 = vmatpush2.msra.mxu0 1.0
  %1431 = vmatprep.subr.mxu0 0.0
  %1432 = vmatpush2.msra.mxu0 1.0
  %1433 = vmatprep.subr.mxu0 0.0
  %1434 = vmatpush2.msra.mxu0 1.0
  %1435 = vmatprep.subr.mxu0 0.0
  %1436 = vmatpush2.msra.mxu0 1.0
  %1437 = vmatprep.subr.mxu0 0.0
  %1438 = vmatpush2.msra.mxu0 1.0
  %1439 = vmatprep.subr.mxu0 0.0
  %1440 = vmatpush2.msra.mxu0 1.0
  %1441 = vmatprep.subr.mxu0 0.0
  %1442 = vmatpush2.msra.mxu0 1.0
  %1443 = vmatprep.subr.mxu0 0.0
  %1444 = vmatpush2.msra.mxu0 1.0
  %1445 = vmatprep.subr.mxu0 0.0
  %1446 = vmatpush2.msra.mxu0 1.0
  %1447 = vmatprep.subr.mxu0 0.0
  %1448 = vmatpush2.msra.mxu0 1.0
  %1449 = vmatprep.subr.mxu0 0.0
  %1450 = vmatpush2.msra.mxu0 1.0
  %1451 = vmatprep.subr.mxu0 0.0
  %1452 = vmatpush2.msra.mxu0 1.0
  %1453 = vmatprep.subr.mxu0 0.0
  %1454 = vmatpush2.msra.mxu0 1.0
  %1455 = vmatprep.subr.mxu0 0.0
  %1456 = vmatpush2.msra.mxu0 1.0
  %1457 = vmatprep.subr.mxu0 0.0
  %1458 = vmatpush2.msra.mxu0 1.0
  %1459 = vmatprep.mubr.f32.mxu0 %v1372
  %1460 = vmatmul.mubr.f32.gmra.mxu0 %v1371
  %v1461 = vpop.f32.mrf.mxu0
  %v1462 = vadd.f32 0.0, %v1461
  %v1463 = vpop.f32.mrf.mxu0
  %1464 = vmatprep.mubr.f32.mxu0 %v1376
  %1465 = vmatmul.mubr.f32.gmra.mxu0 %v1375
  %v1466 = vpop.f32.mrf.mxu0
  %v1467 = vadd.f32 0.0, %v1466
  %v1468 = vpop.f32.mrf.mxu0
  %1469 = vmatprep.mubr.f32.mxu0 %v1380
  %1470 = vmatmul.mubr.f32.gmra.mxu0 %v1379
  %v1471 = vpop.f32.mrf.mxu0
  %v1472 = vadd.f32 0.0, %v1471
  %v1473 = vpop.f32.mrf.mxu0
  %1474 = vmatprep.mubr.f32.mxu0 %v1384
  %1475 = vmatmul.mubr.f32.gmra.mxu0 %v1383
  %v1476 = vpop.f32.mrf.mxu0
  %v1477 = vadd.f32 0.0, %v1476
  %v1478 = vpop.f32.mrf.mxu0
  %1479 = vdwg.mxu0
  %1480 = vmatprep.subr.mxu0 0.0
  %1481 = vmatpush1.msra.mxu0 1.0
  %1482 = vmatprep.subr.mxu0 0.0
  %1483 = vmatpush1.msra.mxu0 1.0
  %1484 = vmatprep.subr.mxu0 0.0
  %1485 = vmatpush1.msra.mxu0 1.0
  %1486 = vmatprep.subr.mxu0 0.0
  %1487 = vmatpush1.msra.mxu0 1.0
  %1488 = vmatprep.subr.mxu0 0.0
  %1489 = vmatpush1.msra.mxu0 1.0
  %1490 = vmatprep.subr.mxu0 0.0
  %1491 = vmatpush1.msra.mxu0 1.0
  %1492 = vmatprep.subr.mxu0 0.0
  %1493 = vmatpush1.msra.mxu0 1.0
  %1494 = vmatprep.subr.mxu0 0.0
  %1495 = vmatpush1.msra.mxu0 1.0
  %1496 = vmatprep.subr.mxu0 0.0
  %1497 = vmatpush1.msra.mxu0 1.0
  %1498 = vmatprep.subr.mxu0 0.0
  %1499 = vmatpush1.msra.mxu0 1.0
  %1500 = vmatprep.subr.mxu0 0.0
  %1501 = vmatpush1.msra.mxu0 1.0
  %1502 = vmatprep.subr.mxu0 0.0
  %1503 = vmatpush1.msra.mxu0 1.0
  %1504 = vmatprep.subr.mxu0 0.0
  %1505 = vmatpush1.msra.mxu0 1.0
  %1506 = vmatprep.subr.mxu0 0.0
  %1507 = vmatpush1.msra.mxu0 1.0
  %1508 = vmatprep.subr.mxu0 0.0
  %1509 = vmatpush1.msra.mxu0 1.0
  %1510 = vmatprep.subr.mxu0 0.0
  %1511 = vmatpush1.msra.mxu0 1.0
  %1512 = vmatprep.subr.mxu0 0.0
  %1513 = vmatpush2.msra.mxu0 1.0
  %1514 = vmatprep.subr.mxu0 0.0
  %1515 = vmatpush2.msra.mxu0 1.0
  %1516 = vmatprep.subr.mxu0 0.0
  %1517 = vmatpush2.msra.mxu0 1.0
  %1518 = vmatprep.subr.mxu0 0.0
  %1519 = vmatpush2.msra.mxu0 1.0
  %1520 = vmatprep.subr.mxu0 0.0
  %1521 = vmatpush2.msra.mxu0 1.0
  %1522 = vmatprep.subr.mxu0 0.0
  %1523 = vmatpush2.msra.mxu0 1.0
  %1524 = vmatprep.subr.mxu0 0.0
  %1525 = vmatpush2.msra.mxu0 1.0
  %1526 = vmatprep.subr.mxu0 0.0
  %1527 = vmatpush2.msra.mxu0 1.0
  %1528 = vmatprep.subr.mxu0 0.0
  %1529 = vmatpush2.msra.mxu0 1.0
  %1530 = vmatprep.subr.mxu0 0.0
  %1531 = vmatpush2.msra.mxu0 1.0
  %1532 = vmatprep.subr.mxu0 0.0
  %1533 = vmatpush2.msra.mxu0 1.0
  %1534 = vmatprep.subr.mxu0 0.0
  %1535 = vmatpush2.msra.mxu0 1.0
  %1536 = vmatprep.subr.mxu0 0.0
  %1537 = vmatpush2.msra.mxu0 1.0
  %1538 = vmatprep.subr.mxu0 0.0
  %1539 = vmatpush2.msra.mxu0 1.0
  %1540 = vmatprep.subr.mxu0 0.0
  %1541 = vmatpush2.msra.mxu0 1.0
  %1542 = vmatprep.subr.mxu0 0.0
  %1543 = vmatpush2.msra.mxu0 1.0
  %1544 = vmatprep.mubr.f32.mxu0 %v1374
  %1545 = vmatmul.mubr.f32.gmra.mxu0 %v1373
  %v1546 = vpop.f32.mrf.mxu0
  %v1547 = vadd.f32 %v1462, %v1546
  %v1548 = vpop.f32.mrf.mxu0
  %1549 = vmatprep.mubr.f32.mxu0 %v1378
  %1550 = vmatmul.mubr.f32.gmra.mxu0 %v1377
  %v1551 = vpop.f32.mrf.mxu0
  %v1552 = vadd.f32 %v1467, %v1551
  %v1553 = vpop.f32.mrf.mxu0
  %1554 = vmatprep.mubr.f32.mxu0 %v1382
  %1555 = vmatmul.mubr.f32.gmra.mxu0 %v1381
  %v1556 = vpop.f32.mrf.mxu0
  %v1557 = vadd.f32 %v1472, %v1556
  %v1558 = vpop.f32.mrf.mxu0
  %1559 = vmatprep.mubr.f32.mxu0 %v1386
  %1560 = vmatmul.mubr.f32.gmra.mxu0 %v1385
  %v1561 = vpop.f32.mrf.mxu0
  %v1562 = vadd.f32 %v1477, %v1561
  %v1563 = vpop.f32.mrf.mxu0
  %1564 = vdwg.mxu0
  %v1565 = vmul.f32 %v1547, 0.001953125
  %v1566 = vmul.f32 %v1552, 0.001953125
  %v1567 = vmul.f32 %v1557, 0.001953125
  %v1568 = vmul.f32 %v1562, 0.001953125
  %1570 = vset.pattern.permute.xlu0 0
  %1571 = vperm.xlu0 %1570, %v1565
  %v1572 = vpop.permute.xlu0 %1571
  %1575 = vset.pattern.permute.xlu0 0
  %1576 = vperm.xlu0 %1575, %v1566
  %v1577 = vpop.permute.xlu0 %1576
  %1580 = vset.pattern.permute.xlu0 0
  %1581 = vperm.xlu0 %1580, %v1567
  %v1582 = vpop.permute.xlu0 %1581
  %1585 = vset.pattern.permute.xlu0 0
  %1586 = vperm.xlu0 %1585, %v1568
  %v1587 = vpop.permute.xlu0 %1586
  %v1589 = vsub.f32 %v1371, %v1572
  %v1590 = vsub.f32 %v1372, %v1572
  %v1591 = vsub.f32 %v1373, %v1572
  %v1592 = vsub.f32 %v1374, %v1572
  %v1593 = vsub.f32 %v1375, %v1577
  %v1594 = vsub.f32 %v1376, %v1577
  %v1595 = vsub.f32 %v1377, %v1577
  %v1596 = vsub.f32 %v1378, %v1577
  %v1597 = vsub.f32 %v1379, %v1582
  %v1598 = vsub.f32 %v1380, %v1582
  %v1599 = vsub.f32 %v1381, %v1582
  %v1600 = vsub.f32 %v1382, %v1582
  %v1601 = vsub.f32 %v1383, %v1587
  %v1602 = vsub.f32 %v1384, %v1587
  %v1603 = vsub.f32 %v1385, %v1587
  %v1604 = vsub.f32 %v1386, %v1587
  %v1605 = vmul.f32 %v1589, %v1589
  %v1606 = vmul.f32 %v1590, %v1590
  %v1607 = vmul.f32 %v1591, %v1591
  %v1608 = vmul.f32 %v1592, %v1592
  %v1609 = vmul.f32 %v1593, %v1593
  %v1610 = vmul.f32 %v1594, %v1594
  %v1611 = vmul.f32 %v1595, %v1595
  %v1612 = vmul.f32 %v1596, %v1596
  %v1613 = vmul.f32 %v1597, %v1597
  %v1614 = vmul.f32 %v1598, %v1598
  %v1615 = vmul.f32 %v1599, %v1599
  %v1616 = vmul.f32 %v1600, %v1600
  %v1617 = vmul.f32 %v1601, %v1601
  %v1618 = vmul.f32 %v1602, %v1602
  %v1619 = vmul.f32 %v1603, %v1603
  %v1620 = vmul.f32 %v1604, %v1604
  %1621 = vmatprep.subr.mxu0 0.0
  %1622 = vmatpush1.msra.mxu0 1.0
  %1623 = vmatprep.subr.mxu0 0.0
  %1624 = vmatpush1.msra.mxu0 1.0
  %1625 = vmatprep.subr.mxu0 0.0
  %1626 = vmatpush1.msra.mxu0 1.0
  %1627 = vmatprep.subr.mxu0 0.0
  %1628 = vmatpush1.msra.mxu0 1.0
  %1629 = vmatprep.subr.mxu0 0.0
  %1630 = vmatpush1.msra.mxu0 1.0
  %1631 = vmatprep.subr.mxu0 0.0
  %1632 = vmatpush1.msra.mxu0 1.0
  %1633 = vmatprep.subr.mxu0 0.0
  %1634 = vmatpush1.msra.mxu0 1.0
  %1635 = vmatprep.subr.mxu0 0.0
  %1636 = vmatpush1.msra.mxu0 1.0
  %1637 = vmatprep.subr.mxu0 0.0
  %1638 = vmatpush1.msra.mxu0 1.0
  %1639 = vmatprep.subr.mxu0 0.0
  %1640 = vmatpush1.msra.mxu0 1.0
  %1641 = vmatprep.subr.mxu0 0.0
  %1642 = vmatpush1.msra.mxu0 1.0
  %1643 = vmatprep.subr.mxu0 0.0
  %1644 = vmatpush1.msra.mxu0 1.0
  %1645 = vmatprep.subr.mxu0 0.0
  %1646 = vmatpush1.msra.mxu0 1.0
  %1647 = vmatprep.subr.mxu0 0.0
  %1648 = vmatpush1.msra.mxu0 1.0
  %1649 = vmatprep.subr.mxu0 0.0
  %1650 = vmatpush1.msra.mxu0 1.0
  %1651 = vmatprep.subr.mxu0 0.0
  %1652 = vmatpush1.msra.mxu0 1.0
  %1653 = vmatprep.subr.mxu0 0.0
  %1654 = vmatpush2.msra.mxu0 1.0
  %1655 = vmatprep.subr.mxu0 0.0
  %1656 = vmatpush2.msra.mxu0 1.0
  %1657 = vmatprep.subr.mxu0 0.0
  %1658 = vmatpush2.msra.mxu0 1.0
  %1659 = vmatprep.subr.mxu0 0.0
  %1660 = vmatpush2.msra.mxu0 1.0
  %1661 = vmatprep.subr.mxu0 0.0
  %1662 = vmatpush2.msra.mxu0 1.0
  %1663 = vmatprep.subr.mxu0 0.0
  %1664 = vmatpush2.msra.mxu0 1.0
  %1665 = vmatprep.subr.mxu0 0.0
  %1666 = vmatpush2.msra.mxu0 1.0
  %1667 = vmatprep.subr.mxu0 0.0
  %1668 = vmatpush2.msra.mxu0 1.0
  %1669 = vmatprep.subr.mxu0 0.0
  %1670 = vmatpush2.msra.mxu0 1.0
  %1671 = vmatprep.subr.mxu0 0.0
  %1672 = vmatpush2.msra.mxu0 1.0
  %1673 = vmatprep.subr.mxu0 0.0
  %1674 = vmatpush2.msra.mxu0 1.0
  %1675 = vmatprep.subr.mxu0 0.0
  %1676 = vmatpush2.msra.mxu0 1.0
  %1677 = vmatprep.subr.mxu0 0.0
  %1678 = vmatpush2.msra.mxu0 1.0
  %1679 = vmatprep.subr.mxu0 0.0
  %1680 = vmatpush2.msra.mxu0 1.0
  %1681 = vmatprep.subr.mxu0 0.0
  %1682 = vmatpush2.msra.mxu0 1.0
  %1683 = vmatprep.subr.mxu0 0.0
  %1684 = vmatpush2.msra.mxu0 1.0
  %1685 = vmatprep.mubr.f32.mxu0 %v1606
  %1686 = vmatmul.mubr.f32.gmra.mxu0 %v1605
  %v1687 = vpop.f32.mrf.mxu0
  %v1688 = vadd.f32 0.0, %v1687
  %v1689 = vpop.f32.mrf.mxu0
  %1690 = vmatprep.mubr.f32.mxu0 %v1610
  %1691 = vmatmul.mubr.f32.gmra.mxu0 %v1609
  %v1692 = vpop.f32.mrf.mxu0
  %v1693 = vadd.f32 0.0, %v1692
  %v1694 = vpop.f32.mrf.mxu0
  %1695 = vmatprep.mubr.f32.mxu0 %v1614
  %1696 = vmatmul.mubr.f32.gmra.mxu0 %v1613
  %v1697 = vpop.f32.mrf.mxu0
  %v1698 = vadd.f32 0.0, %v1697
  %v1699 = vpop.f32.mrf.mxu0
  %1700 = vmatprep.mubr.f32.mxu0 %v1618
  %1701 = vmatmul.mubr.f32.gmra.mxu0 %v1617
  %v1702 = vpop.f32.mrf.mxu0
  %v1703 = vadd.f32 0.0, %v1702
  %v1704 = vpop.f32.mrf.mxu0
  %1705 = vdwg.mxu0
  %1706 = vmatprep.subr.mxu0 0.0
  %1707 = vmatpush1.msra.mxu0 1.0
  %1708 = vmatprep.subr.mxu0 0.0
  %1709 = vmatpush1.msra.mxu0 1.0
  %1710 = vmatprep.subr.mxu0 0.0
  %1711 = vmatpush1.msra.mxu0 1.0
  %1712 = vmatprep.subr.mxu0 0.0
  %1713 = vmatpush1.msra.mxu0 1.0
  %1714 = vmatprep.subr.mxu0 0.0
  %1715 = vmatpush1.msra.mxu0 1.0
  %1716 = vmatprep.subr.mxu0 0.0
  %1717 = vmatpush1.msra.mxu0 1.0
  %1718 = vmatprep.subr.mxu0 0.0
  %1719 = vmatpush1.msra.mxu0 1.0
  %1720 = vmatprep.subr.mxu0 0.0
  %1721 = vmatpush1.msra.mxu0 1.0
  %1722 = vmatprep.subr.mxu0 0.0
  %1723 = vmatpush1.msra.mxu0 1.0
  %1724 = vmatprep.subr.mxu0 0.0
  %1725 = vmatpush1.msra.mxu0 1.0
  %1726 = vmatprep.subr.mxu0 0.0
  %1727 = vmatpush1.msra.mxu0 1.0
  %1728 = vmatprep.subr.mxu0 0.0
  %1729 = vmatpush1.msra.mxu0 1.0
  %1730 = vmatprep.subr.mxu0 0.0
  %1731 = vmatpush1.msra.mxu0 1.0
  %1732 = vmatprep.subr.mxu0 0.0
  %1733 = vmatpush1.msra.mxu0 1.0
  %1734 = vmatprep.subr.mxu0 0.0
  %1735 = vmatpush1.msra.mxu0 1.0
  %1736 = vmatprep.subr.mxu0 0.0
  %1737 = vmatpush1.msra.mxu0 1.0
  %1738 = vmatprep.subr.mxu0 0.0
  %1739 = vmatpush2.msra.mxu0 1.0
  %1740 = vmatprep.subr.mxu0 0.0
  %1741 = vmatpush2.msra.mxu0 1.0
  %1742 = vmatprep.subr.mxu0 0.0
  %1743 = vmatpush2.msra.mxu0 1.0
  %1744 = vmatprep.subr.mxu0 0.0
  %1745 = vmatpush2.msra.mxu0 1.0
  %1746 = vmatprep.subr.mxu0 0.0
  %1747 = vmatpush2.msra.mxu0 1.0
  %1748 = vmatprep.subr.mxu0 0.0
  %1749 = vmatpush2.msra.mxu0 1.0
  %1750 = vmatprep.subr.mxu0 0.0
  %1751 = vmatpush2.msra.mxu0 1.0
  %1752 = vmatprep.subr.mxu0 0.0
  %1753 = vmatpush2.msra.mxu0 1.0
  %1754 = vmatprep.subr.mxu0 0.0
  %1755 = vmatpush2.msra.mxu0 1.0
  %1756 = vmatprep.subr.mxu0 0.0
  %1757 = vmatpush2.msra.mxu0 1.0
  %1758 = vmatprep.subr.mxu0 0.0
  %1759 = vmatpush2.msra.mxu0 1.0
  %1760 = vmatprep.subr.mxu0 0.0
  %1761 = vmatpush2.msra.mxu0 1.0
  %1762 = vmatprep.subr.mxu0 0.0
  %1763 = vmatpush2.msra.mxu0 1.0
  %1764 = vmatprep.subr.mxu0 0.0
  %1765 = vmatpush2.msra.mxu0 1.0
  %1766 = vmatprep.subr.mxu0 0.0
  %1767 = vmatpush2.msra.mxu0 1.0
  %1768 = vmatprep.subr.mxu0 0.0
  %1769 = vmatpush2.msra.mxu0 1.0
  %1770 = vmatprep.mubr.f32.mxu0 %v1608
  %1771 = vmatmul.mubr.f32.gmra.mxu0 %v1607
  %v1772 = vpop.f32.mrf.mxu0
  %v1773 = vadd.f32 %v1688, %v1772
  %v1774 = vpop.f32.mrf.mxu0
  %1775 = vmatprep.mubr.f32.mxu0 %v1612
  %1776 = vmatmul.mubr.f32.gmra.mxu0 %v1611
  %v1777 = vpop.f32.mrf.mxu0
  %v1778 = vadd.f32 %v1693, %v1777
  %v1779 = vpop.f32.mrf.mxu0
  %1780 = vmatprep.mubr.f32.mxu0 %v1616
  %1781 = vmatmul.mubr.f32.gmra.mxu0 %v1615
  %v1782 = vpop.f32.mrf.mxu0
  %v1783 = vadd.f32 %v1698, %v1782
  %v1784 = vpop.f32.mrf.mxu0
  %1785 = vmatprep.mubr.f32.mxu0 %v1620
  %1786 = vmatmul.mubr.f32.gmra.mxu0 %v1619
  %v1787 = vpop.f32.mrf.mxu0
  %v1788 = vadd.f32 %v1703, %v1787
  %v1789 = vpop.f32.mrf.mxu0
  %1790 = vdwg.mxu0
  %v1791 = vmul.f32 %v1773, 0.001953125
  %v1792 = vmul.f32 %v1778, 0.001953125
  %v1793 = vmul.f32 %v1783, 0.001953125
  %v1794 = vmul.f32 %v1788, 0.001953125
  %v1795 = vadd.f32 %v1791, 1e-05
  %v1796 = vadd.f32 %v1792, 1e-05
  %v1797 = vadd.f32 %v1793, 1e-05
  %v1798 = vadd.f32 %v1794, 1e-05
  %v1799 = vrsqrt.pop %v1795
  %v1800 = vrsqrt.pop %v1796
  %v1801 = vrsqrt.pop %v1797
  %v1802 = vrsqrt.pop %v1798
  %v1803 = vmul.f32 %v1387, %v1799
  %v1804 = vmul.f32 %v1388, %v1800
  %v1805 = vmul.f32 %v1389, %v1801
  %v1806 = vmul.f32 %v1390, %v1802
  %1808 = vset.pattern.permute.xlu0 0
  %1809 = vperm.xlu0 %1808, %v1803
  %v1810 = vpop.permute.xlu0 %1809
  %1813 = vset.pattern.permute.xlu0 0
  %1814 = vperm.xlu0 %1813, %v1804
  %v1815 = vpop.permute.xlu0 %1814
  %1818 = vset.pattern.permute.xlu0 0
  %1819 = vperm.xlu0 %1818, %v1805
  %v1820 = vpop.permute.xlu0 %1819
  %1823 = vset.pattern.permute.xlu0 0
  %1824 = vperm.xlu0 %1823, %v1806
  %v1825 = vpop.permute.xlu0 %1824
  %v1827 = vmul.f32 %v1589, %v1810
  %v1828 = vmul.f32 %v1590, %v1810
  %v1829 = vmul.f32 %v1591, %v1810
  %v1830 = vmul.f32 %v1592, %v1810
  %v1831 = vmul.f32 %v1593, %v1815
  %v1832 = vmul.f32 %v1594, %v1815
  %v1833 = vmul.f32 %v1595, %v1815
  %v1834 = vmul.f32 %v1596, %v1815
  %v1835 = vmul.f32 %v1597, %v1820
  %v1836 = vmul.f32 %v1598, %v1820
  %v1837 = vmul.f32 %v1599, %v1820
  %v1838 = vmul.f32 %v1600, %v1820
  %v1839 = vmul.f32 %v1601, %v1825
  %v1840 = vmul.f32 %v1602, %v1825
  %v1841 = vmul.f32 %v1603, %v1825
  %v1842 = vmul.f32 %v1604, %v1825
  %1844 = vset.pattern.permute.xlu0 0
  %1845 = vperm.xlu0 %1844, %v1391
  %v1846 = vpop.permute.xlu0 %1845
  %1849 = vset.pattern.permute.xlu0 0
  %1850 = vperm.xlu0 %1849, %v1392
  %v1851 = vpop.permute.xlu0 %1850
  %1854 = vset.pattern.permute.xlu0 0
  %1855 = vperm.xlu0 %1854, %v1393
  %v1856 = vpop.permute.xlu0 %1855
  %1859 = vset.pattern.permute.xlu0 0
  %1860 = vperm.xlu0 %1859, %v1394
  %v1861 = vpop.permute.xlu0 %1860
  %v1863 = vadd.f32 %v1827, %v1846
  %v1864 = vadd.f32 %v1828, %v1846
  %v1865 = vadd.f32 %v1829, %v1846
  %v1866 = vadd.f32 %v1830, %v1846
  %v1867 = vadd.f32 %v1831, %v1851
  %v1868 = vadd.f32 %v1832, %v1851
  %v1869 = vadd.f32 %v1833, %v1851
  %v1870 = vadd.f32 %v1834, %v1851
  %v1871 = vadd.f32 %v1835, %v1856
  %v1872 = vadd.f32 %v1836, %v1856
  %v1873 = vadd.f32 %v1837, %v1856
  %v1874 = vadd.f32 %v1838, %v1856
  %v1875 = vadd.f32 %v1839, %v1861
  %v1876 = vadd.f32 %v1840, %v1861
  %v1877 = vadd.f32 %v1841, %v1861
  %v1878 = vadd.f32 %v1842, %v1861
  %v1879 = vld [vmem:[%s5] sm:$0xf]
  %v1880 = vld [vmem:[%s5 + $0x4] sm:$0xf]
  %v1881 = vld [vmem:[%s5 + $0x8] sm:$0xf]
  %v1882 = vld [vmem:[%s5 + $0xc] sm:$0xf]
  %v1883 = vpack.c.bf16 %v1867, %v1863
  %v1884 = vpack.c.bf16 %v1868, %v1864
  %v1885 = vpack.c.bf16 %v1869, %v1865
  %v1886 = vpack.c.bf16 %v1870, %v1866
  %v1887 = vpack.c.bf16 %v1875, %v1871
  %v1888 = vpack.c.bf16 %v1876, %v1872
  %v1889 = vpack.c.bf16 %v1877, %v1873
  %v1890 = vpack.c.bf16 %v1878, %v1874
  %v1891 = vld [vmem:[%s6] sm:$0xff]
  %v1892 = vld [vmem:[%s6 + $0x8] sm:$0xff]
  %v1893 = vld [vmem:[%s6 + $0x10] sm:$0xff]
  %v1894 = vld [vmem:[%s6 + $0x18] sm:$0xff]
  %1896 = vset.pattern.permute.xlu0 0
  %1897 = vperm.xlu0 %1896, %v1891
  %v1898 = vpop.permute.xlu0 %1897
  %1901 = vset.pattern.permute.xlu0 0
  %1902 = vperm.xlu0 %1901, %v1892
  %v1903 = vpop.permute.xlu0 %1902
  %1906 = vset.pattern.permute.xlu0 0
  %1907 = vperm.xlu0 %1906, %v1893
  %v1908 = vpop.permute.xlu0 %1907
  %1911 = vset.pattern.permute.xlu0 0
  %1912 = vperm.xlu0 %1911, %v1894
  %v1913 = vpop.permute.xlu0 %1912
  %v1919 = vunpack.c.l.b16 %v1879
  %v1920 = vunpack.c.l.b16 %v1880
  %v1921 = vunpack.c.l.b16 %v1881
  %v1922 = vunpack.c.l.b16 %v1882
  %v1923 = vpack.c.b16 %v1920, %v1919
  %v1924 = vpack.c.b16 %v1922, %v1921
  %vm1925 = vcmask 261120
  %v1927 = vsel %vm1925, %v1923, 0
  %v1930 = vsel %vm1925, %v1924, 0
  %1932 = vmatprep.subr.bf16.mxu0 0
  %1933 = vmatpush1.bf16.msra.mxu0 0
  %1934 = vmatprep.subr.bf16.mxu0 0
  %1935 = vmatpush1.bf16.msra.mxu0 0
  %1936 = vmatprep.subr.bf16.mxu0 0
  %1937 = vmatpush1.bf16.msra.mxu0 0
  %1938 = vmatprep.subr.bf16.mxu0 0
  %1939 = vmatpush1.bf16.msra.mxu0 0
  %1940 = vmatprep.subr.bf16.mxu0 0
  %1941 = vmatpush1.bf16.msra.mxu0 0
  %1942 = vmatprep.subr.bf16.mxu0 0
  %1943 = vmatpush1.bf16.msra.mxu0 0
  %1944 = vmatprep.subr.bf16.mxu0 %v1888
  %1945 = vmatpush1.bf16.msra.mxu0 %v1887
  %1946 = vmatprep.subr.bf16.mxu0 %v1884
  %1947 = vmatpush1.bf16.msra.mxu0 %v1883
  %1948 = vmatprep.subr.bf16.mxu0 0
  %1949 = vmatpush2.bf16.msra.mxu0 0
  %1950 = vmatprep.subr.bf16.mxu0 0
  %1951 = vmatpush2.bf16.msra.mxu0 0
  %1952 = vmatprep.subr.bf16.mxu0 0
  %1953 = vmatpush2.bf16.msra.mxu0 0
  %1954 = vmatprep.subr.bf16.mxu0 0
  %1955 = vmatpush2.bf16.msra.mxu0 0
  %1956 = vmatprep.subr.bf16.mxu0 0
  %1957 = vmatpush2.bf16.msra.mxu0 0
  %1958 = vmatprep.subr.bf16.mxu0 0
  %1959 = vmatpush2.bf16.msra.mxu0 0
  %1960 = vmatprep.subr.bf16.mxu0 0
  %1961 = vmatpush2.bf16.msra.mxu0 0
  %1962 = vmatprep.subr.bf16.mxu0 0
  %1963 = vmatpush2.bf16.msra.mxu0 0
  %1964 = vmatprep.mubr.bf16.mxu0 0
  %1965 = vmatmul.mubr.bf16.gmra.mxu0 %v1927
  %v1966 = vpop.f32.mrf.mxu0
  %v1967 = vadd.f32 %v1898, %v1966
  %v1968 = vpop.f32.mrf.mxu0
  %v1969 = vadd.f32 %v1898, %v1968
  %v1970 = vpop.f32.mrf.mxu0
  %v1971 = vadd.f32 %v1903, %v1970
  %v1972 = vpop.f32.mrf.mxu0
  %v1973 = vadd.f32 %v1903, %v1972
  %1974 = vmatprep.mubr.bf16.mxu0 0
  %1975 = vmatmul.mubr.bf16.gmra.mxu0 %v1930
  %v1976 = vpop.f32.mrf.mxu0
  %v1977 = vadd.f32 %v1908, %v1976
  %v1978 = vpop.f32.mrf.mxu0
  %v1979 = vadd.f32 %v1908, %v1978
  %v1980 = vpop.f32.mrf.mxu0
  %v1981 = vadd.f32 %v1913, %v1980
  %v1982 = vpop.f32.mrf.mxu0
  %v1983 = vadd.f32 %v1913, %v1982
  %1984 = vdwg.mxu0
  %1985 = vmatprep.subr.bf16.mxu0 0
  %1986 = vmatpush1.bf16.msra.mxu0 0
  %1987 = vmatprep.subr.bf16.mxu0 0
  %1988 = vmatpush1.bf16.msra.mxu0 0
  %1989 = vmatprep.subr.bf16.mxu0 0
  %1990 = vmatpush1.bf16.msra.mxu0 0
  %1991 = vmatprep.subr.bf16.mxu0 0
  %1992 = vmatpush1.bf16.msra.mxu0 0
  %1993 = vmatprep.subr.bf16.mxu0 0
  %1994 = vmatpush1.bf16.msra.mxu0 0
  %1995 = vmatprep.subr.bf16.mxu0 0
  %1996 = vmatpush1.bf16.msra.mxu0 0
  %1997 = vmatprep.subr.bf16.mxu0 %v1890
  %1998 = vmatpush1.bf16.msra.mxu0 %v1889
  %1999 = vmatprep.subr.bf16.mxu0 %v1886
  %2000 = vmatpush1.bf16.msra.mxu0 %v1885
  %2001 = vmatprep.subr.bf16.mxu0 0
  %2002 = vmatpush2.bf16.msra.mxu0 0
  %2003 = vmatprep.subr.bf16.mxu0 0
  %2004 = vmatpush2.bf16.msra.mxu0 0
  %2005 = vmatprep.subr.bf16.mxu0 0
  %2006 = vmatpush2.bf16.msra.mxu0 0
  %2007 = vmatprep.subr.bf16.mxu0 0
  %2008 = vmatpush2.bf16.msra.mxu0 0
  %2009 = vmatprep.subr.bf16.mxu0 0
  %2010 = vmatpush2.bf16.msra.mxu0 0
  %2011 = vmatprep.subr.bf16.mxu0 0
  %2012 = vmatpush2.bf16.msra.mxu0 0
  %2013 = vmatprep.subr.bf16.mxu0 0
  %2014 = vmatpush2.bf16.msra.mxu0 0
  %2015 = vmatprep.subr.bf16.mxu0 0
  %2016 = vmatpush2.bf16.msra.mxu0 0
  %2017 = vmatprep.mubr.bf16.mxu0 0
  %2018 = vmatmul.mubr.bf16.gmra.mxu0 %v1927
  %v2019 = vpop.f32.mrf.mxu0
  %v2020 = vadd.f32 %v1898, %v2019
  %v2021 = vpop.f32.mrf.mxu0
  %v2022 = vadd.f32 %v1898, %v2021
  %v2023 = vpop.f32.mrf.mxu0
  %v2024 = vadd.f32 %v1903, %v2023
  %v2025 = vpop.f32.mrf.mxu0
  %v2026 = vadd.f32 %v1903, %v2025
  %2027 = vmatprep.mubr.bf16.mxu0 0
  %2028 = vmatmul.mubr.bf16.gmra.mxu0 %v1930
  %v2029 = vpop.f32.mrf.mxu0
  %v2030 = vadd.f32 %v1908, %v2029
  %v2031 = vpop.f32.mrf.mxu0
  %v2032 = vadd.f32 %v1908, %v2031
  %v2033 = vpop.f32.mrf.mxu0
  %v2034 = vadd.f32 %v1913, %v2033
  %v2035 = vpop.f32.mrf.mxu0
  %v2036 = vadd.f32 %v1913, %v2035
  %2037 = vdwg.mxu0
  %v2038 = vadd.s32 %v159, 4294967294
  %v2039 = vadd.s32 %v160, 4294967294
  %v2040 = vadd.s32 %v161, 4294967294
  %v2041 = vadd.s32 %v162, 4294967294
  %vm2042 = vcmp.ge.s32.totalorder %v2038, 0
  %vm2043 = vcmp.ge.s32.totalorder %v2039, 0
  %vm2044 = vcmp.ge.s32.totalorder %v2040, 0
  %vm2045 = vcmp.ge.s32.totalorder %v2041, 0
  %vm2046 = vcmp.lt.s32.totalorder %v2038, 16
  %vm2047 = vcmp.lt.s32.totalorder %v2039, 16
  %vm2048 = vcmp.lt.s32.totalorder %v2040, 16
  %vm2049 = vcmp.lt.s32.totalorder %v2041, 16
  %vm2050 = vmand %vm2042, %vm2046
  %vm2051 = vmand %vm2043, %vm2047
  %vm2052 = vmand %vm2044, %vm2048
  %vm2053 = vmand %vm2045, %vm2049
  %2054 = vrot.lane.b32.xlu0 %v1967, 34
  %v2055 = vpop.permute.xlu0 %2054
  %2056 = vrot.lane.b32.xlu0 %v1971, 34
  %v2057 = vpop.permute.xlu0 %2056
  %2058 = vrot.lane.b32.xlu0 %v1977, 34
  %v2059 = vpop.permute.xlu0 %2058
  %2060 = vrot.lane.b32.xlu0 %v1981, 34
  %v2061 = vpop.permute.xlu0 %2060
  %2062 = vrot.lane.b32.xlu0 %v1969, 34
  %v2063 = vpop.permute.xlu0 %2062
  %2064 = vrot.lane.b32.xlu0 %v1973, 34
  %v2065 = vpop.permute.xlu0 %2064
  %2066 = vrot.lane.b32.xlu0 %v1979, 34
  %v2067 = vpop.permute.xlu0 %2066
  %2068 = vrot.lane.b32.xlu0 %v1983, 34
  %v2069 = vpop.permute.xlu0 %2068
  %2070 = vrot.lane.b32.xlu0 %v2020, 34
  %v2071 = vpop.permute.xlu0 %2070
  %2072 = vrot.lane.b32.xlu0 %v2024, 34
  %v2073 = vpop.permute.xlu0 %2072
  %2074 = vrot.lane.b32.xlu0 %v2030, 34
  %v2075 = vpop.permute.xlu0 %2074
  %2076 = vrot.lane.b32.xlu0 %v2034, 34
  %v2077 = vpop.permute.xlu0 %2076
  %2078 = vrot.lane.b32.xlu0 %v2022, 34
  %v2079 = vpop.permute.xlu0 %2078
  %2080 = vrot.lane.b32.xlu0 %v2026, 34
  %v2081 = vpop.permute.xlu0 %2080
  %2082 = vrot.lane.b32.xlu0 %v2032, 34
  %v2083 = vpop.permute.xlu0 %2082
  %2084 = vrot.lane.b32.xlu0 %v2036, 34
  %v2085 = vpop.permute.xlu0 %2084
  %vm2086 = vcmp.lt.s32.totalorder %v111, 34
  %v2087 = vsel %vm2086, %v2071, %v2079
  %v2088 = vsel %vm2086, %v2073, %v2081
  %v2089 = vsel %vm2086, %v2075, %v2083
  %v2090 = vsel %vm2086, %v2077, %v2085
  %v2091 = vsel %vm2086, %v2063, %v2071
  %v2092 = vsel %vm2086, %v2065, %v2073
  %v2093 = vsel %vm2086, %v2067, %v2075
  %v2094 = vsel %vm2086, %v2069, %v2077
  %v2095 = vsel %vm2086, %v2055, %v2063
  %v2096 = vsel %vm2086, %v2057, %v2065
  %v2097 = vsel %vm2086, %v2059, %v2067
  %v2098 = vsel %vm2086, %v2061, %v2069
  %v2099 = vsel %vm2086, %v2079, %v2055
  %v2100 = vsel %vm2086, %v2081, %v2057
  %v2101 = vsel %vm2086, %v2083, %v2059
  %v2102 = vsel %vm2086, %v2085, %v2061
  %v2103 = vld [vmem:[%s7] sm:$0xff]
  %v2104 = vld [vmem:[%s7 + $0x8] sm:$0xff]
  %v2105 = vld [vmem:[%s7 + $0x10] sm:$0xff]
  %v2106 = vld [vmem:[%s7 + $0x18] sm:$0xff]
  %2108 = vset.pattern.permute.xlu0 0
  %2109 = vperm.xlu0 %2108, %v2103
  %v2110 = vpop.permute.xlu0 %2109
  %2113 = vset.pattern.permute.xlu0 0
  %2114 = vperm.xlu0 %2113, %v2104
  %v2115 = vpop.permute.xlu0 %2114
  %2118 = vset.pattern.permute.xlu0 0
  %2119 = vperm.xlu0 %2118, %v2105
  %v2120 = vpop.permute.xlu0 %2119
  %2123 = vset.pattern.permute.xlu0 0
  %2124 = vperm.xlu0 %2123, %v2106
  %v2125 = vpop.permute.xlu0 %2124
  %v2127 = vmul.f32 %v2099, %v2110
  %v2128 = vmul.f32 %v2095, %v2110
  %v2129 = vmul.f32 %v2091, %v2110
  %v2130 = vmul.f32 %v2087, %v2110
  %v2131 = vmul.f32 %v2100, %v2115
  %v2132 = vmul.f32 %v2096, %v2115
  %v2133 = vmul.f32 %v2092, %v2115
  %v2134 = vmul.f32 %v2088, %v2115
  %v2135 = vmul.f32 %v2101, %v2120
  %v2136 = vmul.f32 %v2097, %v2120
  %v2137 = vmul.f32 %v2093, %v2120
  %v2138 = vmul.f32 %v2089, %v2120
  %v2139 = vmul.f32 %v2102, %v2125
  %v2140 = vmul.f32 %v2098, %v2125
  %v2141 = vmul.f32 %v2094, %v2125
  %v2142 = vmul.f32 %v2090, %v2125
  %v2143 = vadd.s32 %v135, 4294967294
  %v2144 = vadd.s32 %v136, 4294967294
  %v2145 = vadd.s32 %v137, 4294967294
  %v2146 = vadd.s32 %v138, 4294967294
  %vm2147 = vcmp.ge.s32.totalorder %v2143, 0
  %vm2148 = vcmp.ge.s32.totalorder %v2144, 0
  %vm2149 = vcmp.ge.s32.totalorder %v2145, 0
  %vm2150 = vcmp.ge.s32.totalorder %v2146, 0
  %vm2151 = vcmp.lt.s32.totalorder %v2143, 16
  %vm2152 = vcmp.lt.s32.totalorder %v2144, 16
  %vm2153 = vcmp.lt.s32.totalorder %v2145, 16
  %vm2154 = vcmp.lt.s32.totalorder %v2146, 16
  %vm2155 = vmand %vm2147, %vm2151
  %vm2156 = vmand %vm2148, %vm2152
  %vm2157 = vmand %vm2149, %vm2153
  %vm2158 = vmand %vm2150, %vm2154
  %vm2159 = vmand %vm2050, %vm2155
  %vm2160 = vmand %vm2051, %vm2156
  %vm2161 = vmand %vm2052, %vm2157
  %vm2162 = vmand %vm2053, %vm2158
  %v2163 = vsel %vm2159, 1.0, 0.0
  %v2164 = vsel %vm2160, 1.0, 0.0
  %v2165 = vsel %vm2161, 1.0, 0.0
  %v2166 = vsel %vm2162, 1.0, 0.0
  %v2167 = vmul.f32 %v2127, %v2163
  %v2168 = vmul.f32 %v2128, %v2164
  %v2169 = vmul.f32 %v2129, %v2165
  %v2170 = vmul.f32 %v2130, %v2166
  %v2171 = vmul.f32 %v2131, %v2163
  %v2172 = vmul.f32 %v2132, %v2164
  %v2173 = vmul.f32 %v2133, %v2165
  %v2174 = vmul.f32 %v2134, %v2166
  %v2175 = vmul.f32 %v2135, %v2163
  %v2176 = vmul.f32 %v2136, %v2164
  %v2177 = vmul.f32 %v2137, %v2165
  %v2178 = vmul.f32 %v2138, %v2166
  %v2179 = vmul.f32 %v2139, %v2163
  %v2180 = vmul.f32 %v2140, %v2164
  %v2181 = vmul.f32 %v2141, %v2165
  %v2182 = vmul.f32 %v2142, %v2166
  %2183 = vrot.lane.b32.xlu0 %v1967, 33
  %v2184 = vpop.permute.xlu0 %2183
  %2185 = vrot.lane.b32.xlu0 %v1971, 33
  %v2186 = vpop.permute.xlu0 %2185
  %2187 = vrot.lane.b32.xlu0 %v1977, 33
  %v2188 = vpop.permute.xlu0 %2187
  %2189 = vrot.lane.b32.xlu0 %v1981, 33
  %v2190 = vpop.permute.xlu0 %2189
  %2191 = vrot.lane.b32.xlu0 %v1969, 33
  %v2192 = vpop.permute.xlu0 %2191
  %2193 = vrot.lane.b32.xlu0 %v1973, 33
  %v2194 = vpop.permute.xlu0 %2193
  %2195 = vrot.lane.b32.xlu0 %v1979, 33
  %v2196 = vpop.permute.xlu0 %2195
  %2197 = vrot.lane.b32.xlu0 %v1983, 33
  %v2198 = vpop.permute.xlu0 %2197
  %2199 = vrot.lane.b32.xlu0 %v2020, 33
  %v2200 = vpop.permute.xlu0 %2199
  %2201 = vrot.lane.b32.xlu0 %v2024, 33
  %v2202 = vpop.permute.xlu0 %2201
  %2203 = vrot.lane.b32.xlu0 %v2030, 33
  %v2204 = vpop.permute.xlu0 %2203
  %2205 = vrot.lane.b32.xlu0 %v2034, 33
  %v2206 = vpop.permute.xlu0 %2205
  %2207 = vrot.lane.b32.xlu0 %v2022, 33
  %v2208 = vpop.permute.xlu0 %2207
  %2209 = vrot.lane.b32.xlu0 %v2026, 33
  %v2210 = vpop.permute.xlu0 %2209
  %2211 = vrot.lane.b32.xlu0 %v2032, 33
  %v2212 = vpop.permute.xlu0 %2211
  %2213 = vrot.lane.b32.xlu0 %v2036, 33
  %v2214 = vpop.permute.xlu0 %2213
  %vm2215 = vcmp.lt.s32.totalorder %v111, 33
  %v2216 = vsel %vm2215, %v2200, %v2208
  %v2217 = vsel %vm2215, %v2202, %v2210
  %v2218 = vsel %vm2215, %v2204, %v2212
  %v2219 = vsel %vm2215, %v2206, %v2214
  %v2220 = vsel %vm2215, %v2192, %v2200
  %v2221 = vsel %vm2215, %v2194, %v2202
  %v2222 = vsel %vm2215, %v2196, %v2204
  %v2223 = vsel %vm2215, %v2198, %v2206
  %v2224 = vsel %vm2215, %v2184, %v2192
  %v2225 = vsel %vm2215, %v2186, %v2194
  %v2226 = vsel %vm2215, %v2188, %v2196
  %v2227 = vsel %vm2215, %v2190, %v2198
  %v2228 = vsel %vm2215, %v2208, %v2184
  %v2229 = vsel %vm2215, %v2210, %v2186
  %v2230 = vsel %vm2215, %v2212, %v2188
  %v2231 = vsel %vm2215, %v2214, %v2190
  %s2232 = scalar_lea.vmem %s7, 32
  %v2233 = vld [vmem:[%s2232] sm:$0xff]
  %v2234 = vld [vmem:[%s2232 + $0x8] sm:$0xff]
  %v2235 = vld [vmem:[%s2232 + $0x10] sm:$0xff]
  %v2236 = vld [vmem:[%s2232 + $0x18] sm:$0xff]
  %2238 = vset.pattern.permute.xlu0 0
  %2239 = vperm.xlu0 %2238, %v2233
  %v2240 = vpop.permute.xlu0 %2239
  %2243 = vset.pattern.permute.xlu0 0
  %2244 = vperm.xlu0 %2243, %v2234
  %v2245 = vpop.permute.xlu0 %2244
  %2248 = vset.pattern.permute.xlu0 0
  %2249 = vperm.xlu0 %2248, %v2235
  %v2250 = vpop.permute.xlu0 %2249
  %2253 = vset.pattern.permute.xlu0 0
  %2254 = vperm.xlu0 %2253, %v2236
  %v2255 = vpop.permute.xlu0 %2254
  %v2257 = vmul.f32 %v2228, %v2240
  %v2258 = vmul.f32 %v2224, %v2240
  %v2259 = vmul.f32 %v2220, %v2240
  %v2260 = vmul.f32 %v2216, %v2240
  %v2261 = vmul.f32 %v2229, %v2245
  %v2262 = vmul.f32 %v2225, %v2245
  %v2263 = vmul.f32 %v2221, %v2245
  %v2264 = vmul.f32 %v2217, %v2245
  %v2265 = vmul.f32 %v2230, %v2250
  %v2266 = vmul.f32 %v2226, %v2250
  %v2267 = vmul.f32 %v2222, %v2250
  %v2268 = vmul.f32 %v2218, %v2250
  %v2269 = vmul.f32 %v2231, %v2255
  %v2270 = vmul.f32 %v2227, %v2255
  %v2271 = vmul.f32 %v2223, %v2255
  %v2272 = vmul.f32 %v2219, %v2255
  %vm2273 = vmand %vm2050, %vm280
  %vm2274 = vmand %vm2051, %vm281
  %vm2275 = vmand %vm2052, %vm282
  %vm2276 = vmand %vm2053, %vm283
  %v2277 = vsel %vm2273, 1.0, 0.0
  %v2278 = vsel %vm2274, 1.0, 0.0
  %v2279 = vsel %vm2275, 1.0, 0.0
  %v2280 = vsel %vm2276, 1.0, 0.0
  %v2281 = vmul.f32 %v2257, %v2277
  %v2282 = vmul.f32 %v2258, %v2278
  %v2283 = vmul.f32 %v2259, %v2279
  %v2284 = vmul.f32 %v2260, %v2280
  %v2285 = vmul.f32 %v2261, %v2277
  %v2286 = vmul.f32 %v2262, %v2278
  %v2287 = vmul.f32 %v2263, %v2279
  %v2288 = vmul.f32 %v2264, %v2280
  %v2289 = vmul.f32 %v2265, %v2277
  %v2290 = vmul.f32 %v2266, %v2278
  %v2291 = vmul.f32 %v2267, %v2279
  %v2292 = vmul.f32 %v2268, %v2280
  %v2293 = vmul.f32 %v2269, %v2277
  %v2294 = vmul.f32 %v2270, %v2278
  %v2295 = vmul.f32 %v2271, %v2279
  %v2296 = vmul.f32 %v2272, %v2280
  %v2297 = vadd.f32 %v2167, %v2281
  %v2298 = vadd.f32 %v2168, %v2282
  %v2299 = vadd.f32 %v2169, %v2283
  %v2300 = vadd.f32 %v2170, %v2284
  %v2301 = vadd.f32 %v2171, %v2285
  %v2302 = vadd.f32 %v2172, %v2286
  %v2303 = vadd.f32 %v2173, %v2287
  %v2304 = vadd.f32 %v2174, %v2288
  %v2305 = vadd.f32 %v2175, %v2289
  %v2306 = vadd.f32 %v2176, %v2290
  %v2307 = vadd.f32 %v2177, %v2291
  %v2308 = vadd.f32 %v2178, %v2292
  %v2309 = vadd.f32 %v2179, %v2293
  %v2310 = vadd.f32 %v2180, %v2294
  %v2311 = vadd.f32 %v2181, %v2295
  %v2312 = vadd.f32 %v2182, %v2296
  %2313 = vrot.lane.b32.xlu0 %v1967, 32
  %v2314 = vpop.permute.xlu0 %2313
  %2315 = vrot.lane.b32.xlu0 %v1971, 32
  %v2316 = vpop.permute.xlu0 %2315
  %2317 = vrot.lane.b32.xlu0 %v1977, 32
  %v2318 = vpop.permute.xlu0 %2317
  %2319 = vrot.lane.b32.xlu0 %v1981, 32
  %v2320 = vpop.permute.xlu0 %2319
  %2321 = vrot.lane.b32.xlu0 %v1969, 32
  %v2322 = vpop.permute.xlu0 %2321
  %2323 = vrot.lane.b32.xlu0 %v1973, 32
  %v2324 = vpop.permute.xlu0 %2323
  %2325 = vrot.lane.b32.xlu0 %v1979, 32
  %v2326 = vpop.permute.xlu0 %2325
  %2327 = vrot.lane.b32.xlu0 %v1983, 32
  %v2328 = vpop.permute.xlu0 %2327
  %2329 = vrot.lane.b32.xlu0 %v2020, 32
  %v2330 = vpop.permute.xlu0 %2329
  %2331 = vrot.lane.b32.xlu0 %v2024, 32
  %v2332 = vpop.permute.xlu0 %2331
  %2333 = vrot.lane.b32.xlu0 %v2030, 32
  %v2334 = vpop.permute.xlu0 %2333
  %2335 = vrot.lane.b32.xlu0 %v2034, 32
  %v2336 = vpop.permute.xlu0 %2335
  %2337 = vrot.lane.b32.xlu0 %v2022, 32
  %v2338 = vpop.permute.xlu0 %2337
  %2339 = vrot.lane.b32.xlu0 %v2026, 32
  %v2340 = vpop.permute.xlu0 %2339
  %2341 = vrot.lane.b32.xlu0 %v2032, 32
  %v2342 = vpop.permute.xlu0 %2341
  %2343 = vrot.lane.b32.xlu0 %v2036, 32
  %v2344 = vpop.permute.xlu0 %2343
  %vm2345 = vcmp.lt.s32.totalorder %v111, 32
  %v2346 = vsel %vm2345, %v2330, %v2338
  %v2347 = vsel %vm2345, %v2332, %v2340
  %v2348 = vsel %vm2345, %v2334, %v2342
  %v2349 = vsel %vm2345, %v2336, %v2344
  %v2350 = vsel %vm2345, %v2322, %v2330
  %v2351 = vsel %vm2345, %v2324, %v2332
  %v2352 = vsel %vm2345, %v2326, %v2334
  %v2353 = vsel %vm2345, %v2328, %v2336
  %v2354 = vsel %vm2345, %v2314, %v2322
  %v2355 = vsel %vm2345, %v2316, %v2324
  %v2356 = vsel %vm2345, %v2318, %v2326
  %v2357 = vsel %vm2345, %v2320, %v2328
  %v2358 = vsel %vm2345, %v2338, %v2314
  %v2359 = vsel %vm2345, %v2340, %v2316
  %v2360 = vsel %vm2345, %v2342, %v2318
  %v2361 = vsel %vm2345, %v2344, %v2320
  %s2362 = scalar_lea.vmem %s7, 64
  %v2363 = vld [vmem:[%s2362] sm:$0xff]
  %v2364 = vld [vmem:[%s2362 + $0x8] sm:$0xff]
  %v2365 = vld [vmem:[%s2362 + $0x10] sm:$0xff]
  %v2366 = vld [vmem:[%s2362 + $0x18] sm:$0xff]
  %2368 = vset.pattern.permute.xlu0 0
  %2369 = vperm.xlu0 %2368, %v2363
  %v2370 = vpop.permute.xlu0 %2369
  %2373 = vset.pattern.permute.xlu0 0
  %2374 = vperm.xlu0 %2373, %v2364
  %v2375 = vpop.permute.xlu0 %2374
  %2378 = vset.pattern.permute.xlu0 0
  %2379 = vperm.xlu0 %2378, %v2365
  %v2380 = vpop.permute.xlu0 %2379
  %2383 = vset.pattern.permute.xlu0 0
  %2384 = vperm.xlu0 %2383, %v2366
  %v2385 = vpop.permute.xlu0 %2384
  %v2387 = vmul.f32 %v2358, %v2370
  %v2388 = vmul.f32 %v2354, %v2370
  %v2389 = vmul.f32 %v2350, %v2370
  %v2390 = vmul.f32 %v2346, %v2370
  %v2391 = vmul.f32 %v2359, %v2375
  %v2392 = vmul.f32 %v2355, %v2375
  %v2393 = vmul.f32 %v2351, %v2375
  %v2394 = vmul.f32 %v2347, %v2375
  %v2395 = vmul.f32 %v2360, %v2380
  %v2396 = vmul.f32 %v2356, %v2380
  %v2397 = vmul.f32 %v2352, %v2380
  %v2398 = vmul.f32 %v2348, %v2380
  %v2399 = vmul.f32 %v2361, %v2385
  %v2400 = vmul.f32 %v2357, %v2385
  %v2401 = vmul.f32 %v2353, %v2385
  %v2402 = vmul.f32 %v2349, %v2385
  %vm2403 = vmand %vm2050, %vm406
  %vm2404 = vmand %vm2051, %vm407
  %vm2405 = vmand %vm2052, %vm408
  %vm2406 = vmand %vm2053, %vm409
  %v2407 = vsel %vm2403, 1.0, 0.0
  %v2408 = vsel %vm2404, 1.0, 0.0
  %v2409 = vsel %vm2405, 1.0, 0.0
  %v2410 = vsel %vm2406, 1.0, 0.0
  %v2411 = vmul.f32 %v2387, %v2407
  %v2412 = vmul.f32 %v2388, %v2408
  %v2413 = vmul.f32 %v2389, %v2409
  %v2414 = vmul.f32 %v2390, %v2410
  %v2415 = vmul.f32 %v2391, %v2407
  %v2416 = vmul.f32 %v2392, %v2408
  %v2417 = vmul.f32 %v2393, %v2409
  %v2418 = vmul.f32 %v2394, %v2410
  %v2419 = vmul.f32 %v2395, %v2407
  %v2420 = vmul.f32 %v2396, %v2408
  %v2421 = vmul.f32 %v2397, %v2409
  %v2422 = vmul.f32 %v2398, %v2410
  %v2423 = vmul.f32 %v2399, %v2407
  %v2424 = vmul.f32 %v2400, %v2408
  %v2425 = vmul.f32 %v2401, %v2409
  %v2426 = vmul.f32 %v2402, %v2410
  %v2427 = vadd.f32 %v2297, %v2411
  %v2428 = vadd.f32 %v2298, %v2412
  %v2429 = vadd.f32 %v2299, %v2413
  %v2430 = vadd.f32 %v2300, %v2414
  %v2431 = vadd.f32 %v2301, %v2415
  %v2432 = vadd.f32 %v2302, %v2416
  %v2433 = vadd.f32 %v2303, %v2417
  %v2434 = vadd.f32 %v2304, %v2418
  %v2435 = vadd.f32 %v2305, %v2419
  %v2436 = vadd.f32 %v2306, %v2420
  %v2437 = vadd.f32 %v2307, %v2421
  %v2438 = vadd.f32 %v2308, %v2422
  %v2439 = vadd.f32 %v2309, %v2423
  %v2440 = vadd.f32 %v2310, %v2424
  %v2441 = vadd.f32 %v2311, %v2425
  %v2442 = vadd.f32 %v2312, %v2426
  %2443 = vrot.lane.b32.xlu0 %v1967, 31
  %v2444 = vpop.permute.xlu0 %2443
  %2445 = vrot.lane.b32.xlu0 %v1971, 31
  %v2446 = vpop.permute.xlu0 %2445
  %2447 = vrot.lane.b32.xlu0 %v1977, 31
  %v2448 = vpop.permute.xlu0 %2447
  %2449 = vrot.lane.b32.xlu0 %v1981, 31
  %v2450 = vpop.permute.xlu0 %2449
  %2451 = vrot.lane.b32.xlu0 %v1969, 31
  %v2452 = vpop.permute.xlu0 %2451
  %2453 = vrot.lane.b32.xlu0 %v1973, 31
  %v2454 = vpop.permute.xlu0 %2453
  %2455 = vrot.lane.b32.xlu0 %v1979, 31
  %v2456 = vpop.permute.xlu0 %2455
  %2457 = vrot.lane.b32.xlu0 %v1983, 31
  %v2458 = vpop.permute.xlu0 %2457
  %2459 = vrot.lane.b32.xlu0 %v2020, 31
  %v2460 = vpop.permute.xlu0 %2459
  %2461 = vrot.lane.b32.xlu0 %v2024, 31
  %v2462 = vpop.permute.xlu0 %2461
  %2463 = vrot.lane.b32.xlu0 %v2030, 31
  %v2464 = vpop.permute.xlu0 %2463
  %2465 = vrot.lane.b32.xlu0 %v2034, 31
  %v2466 = vpop.permute.xlu0 %2465
  %2467 = vrot.lane.b32.xlu0 %v2022, 31
  %v2468 = vpop.permute.xlu0 %2467
  %2469 = vrot.lane.b32.xlu0 %v2026, 31
  %v2470 = vpop.permute.xlu0 %2469
  %2471 = vrot.lane.b32.xlu0 %v2032, 31
  %v2472 = vpop.permute.xlu0 %2471
  %2473 = vrot.lane.b32.xlu0 %v2036, 31
  %v2474 = vpop.permute.xlu0 %2473
  %vm2475 = vcmp.lt.s32.totalorder %v111, 31
  %v2476 = vsel %vm2475, %v2460, %v2468
  %v2477 = vsel %vm2475, %v2462, %v2470
  %v2478 = vsel %vm2475, %v2464, %v2472
  %v2479 = vsel %vm2475, %v2466, %v2474
  %v2480 = vsel %vm2475, %v2452, %v2460
  %v2481 = vsel %vm2475, %v2454, %v2462
  %v2482 = vsel %vm2475, %v2456, %v2464
  %v2483 = vsel %vm2475, %v2458, %v2466
  %v2484 = vsel %vm2475, %v2444, %v2452
  %v2485 = vsel %vm2475, %v2446, %v2454
  %v2486 = vsel %vm2475, %v2448, %v2456
  %v2487 = vsel %vm2475, %v2450, %v2458
  %v2488 = vsel %vm2475, %v2468, %v2444
  %v2489 = vsel %vm2475, %v2470, %v2446
  %v2490 = vsel %vm2475, %v2472, %v2448
  %v2491 = vsel %vm2475, %v2474, %v2450
  %s2492 = scalar_lea.vmem %s7, 96
  %v2493 = vld [vmem:[%s2492] sm:$0xff]
  %v2494 = vld [vmem:[%s2492 + $0x8] sm:$0xff]
  %v2495 = vld [vmem:[%s2492 + $0x10] sm:$0xff]
  %v2496 = vld [vmem:[%s2492 + $0x18] sm:$0xff]
  %2498 = vset.pattern.permute.xlu0 0
  %2499 = vperm.xlu0 %2498, %v2493
  %v2500 = vpop.permute.xlu0 %2499
  %2503 = vset.pattern.permute.xlu0 0
  %2504 = vperm.xlu0 %2503, %v2494
  %v2505 = vpop.permute.xlu0 %2504
  %2508 = vset.pattern.permute.xlu0 0
  %2509 = vperm.xlu0 %2508, %v2495
  %v2510 = vpop.permute.xlu0 %2509
  %2513 = vset.pattern.permute.xlu0 0
  %2514 = vperm.xlu0 %2513, %v2496
  %v2515 = vpop.permute.xlu0 %2514
  %v2517 = vmul.f32 %v2488, %v2500
  %v2518 = vmul.f32 %v2484, %v2500
  %v2519 = vmul.f32 %v2480, %v2500
  %v2520 = vmul.f32 %v2476, %v2500
  %v2521 = vmul.f32 %v2489, %v2505
  %v2522 = vmul.f32 %v2485, %v2505
  %v2523 = vmul.f32 %v2481, %v2505
  %v2524 = vmul.f32 %v2477, %v2505
  %v2525 = vmul.f32 %v2490, %v2510
  %v2526 = vmul.f32 %v2486, %v2510
  %v2527 = vmul.f32 %v2482, %v2510
  %v2528 = vmul.f32 %v2478, %v2510
  %v2529 = vmul.f32 %v2491, %v2515
  %v2530 = vmul.f32 %v2487, %v2515
  %v2531 = vmul.f32 %v2483, %v2515
  %v2532 = vmul.f32 %v2479, %v2515
  %vm2533 = vmand %vm2050, %vm552
  %vm2534 = vmand %vm2051, %vm553
  %vm2535 = vmand %vm2052, %vm554
  %vm2536 = vmand %vm2053, %vm555
  %v2537 = vsel %vm2533, 1.0, 0.0
  %v2538 = vsel %vm2534, 1.0, 0.0
  %v2539 = vsel %vm2535, 1.0, 0.0
  %v2540 = vsel %vm2536, 1.0, 0.0
  %v2541 = vmul.f32 %v2517, %v2537
  %v2542 = vmul.f32 %v2518, %v2538
  %v2543 = vmul.f32 %v2519, %v2539
  %v2544 = vmul.f32 %v2520, %v2540
  %v2545 = vmul.f32 %v2521, %v2537
  %v2546 = vmul.f32 %v2522, %v2538
  %v2547 = vmul.f32 %v2523, %v2539
  %v2548 = vmul.f32 %v2524, %v2540
  %v2549 = vmul.f32 %v2525, %v2537
  %v2550 = vmul.f32 %v2526, %v2538
  %v2551 = vmul.f32 %v2527, %v2539
  %v2552 = vmul.f32 %v2528, %v2540
  %v2553 = vmul.f32 %v2529, %v2537
  %v2554 = vmul.f32 %v2530, %v2538
  %v2555 = vmul.f32 %v2531, %v2539
  %v2556 = vmul.f32 %v2532, %v2540
  %v2557 = vadd.f32 %v2427, %v2541
  %v2558 = vadd.f32 %v2428, %v2542
  %v2559 = vadd.f32 %v2429, %v2543
  %v2560 = vadd.f32 %v2430, %v2544
  %v2561 = vadd.f32 %v2431, %v2545
  %v2562 = vadd.f32 %v2432, %v2546
  %v2563 = vadd.f32 %v2433, %v2547
  %v2564 = vadd.f32 %v2434, %v2548
  %v2565 = vadd.f32 %v2435, %v2549
  %v2566 = vadd.f32 %v2436, %v2550
  %v2567 = vadd.f32 %v2437, %v2551
  %v2568 = vadd.f32 %v2438, %v2552
  %v2569 = vadd.f32 %v2439, %v2553
  %v2570 = vadd.f32 %v2440, %v2554
  %v2571 = vadd.f32 %v2441, %v2555
  %v2572 = vadd.f32 %v2442, %v2556
  %2573 = vrot.lane.b32.xlu0 %v1967, 30
  %v2574 = vpop.permute.xlu0 %2573
  %2575 = vrot.lane.b32.xlu0 %v1971, 30
  %v2576 = vpop.permute.xlu0 %2575
  %2577 = vrot.lane.b32.xlu0 %v1977, 30
  %v2578 = vpop.permute.xlu0 %2577
  %2579 = vrot.lane.b32.xlu0 %v1981, 30
  %v2580 = vpop.permute.xlu0 %2579
  %2581 = vrot.lane.b32.xlu0 %v1969, 30
  %v2582 = vpop.permute.xlu0 %2581
  %2583 = vrot.lane.b32.xlu0 %v1973, 30
  %v2584 = vpop.permute.xlu0 %2583
  %2585 = vrot.lane.b32.xlu0 %v1979, 30
  %v2586 = vpop.permute.xlu0 %2585
  %2587 = vrot.lane.b32.xlu0 %v1983, 30
  %v2588 = vpop.permute.xlu0 %2587
  %2589 = vrot.lane.b32.xlu0 %v2020, 30
  %v2590 = vpop.permute.xlu0 %2589
  %2591 = vrot.lane.b32.xlu0 %v2024, 30
  %v2592 = vpop.permute.xlu0 %2591
  %2593 = vrot.lane.b32.xlu0 %v2030, 30
  %v2594 = vpop.permute.xlu0 %2593
  %2595 = vrot.lane.b32.xlu0 %v2034, 30
  %v2596 = vpop.permute.xlu0 %2595
  %2597 = vrot.lane.b32.xlu0 %v2022, 30
  %v2598 = vpop.permute.xlu0 %2597
  %2599 = vrot.lane.b32.xlu0 %v2026, 30
  %v2600 = vpop.permute.xlu0 %2599
  %2601 = vrot.lane.b32.xlu0 %v2032, 30
  %v2602 = vpop.permute.xlu0 %2601
  %2603 = vrot.lane.b32.xlu0 %v2036, 30
  %v2604 = vpop.permute.xlu0 %2603
  %vm2605 = vcmp.lt.s32.totalorder %v111, 30
  %v2606 = vsel %vm2605, %v2590, %v2598
  %v2607 = vsel %vm2605, %v2592, %v2600
  %v2608 = vsel %vm2605, %v2594, %v2602
  %v2609 = vsel %vm2605, %v2596, %v2604
  %v2610 = vsel %vm2605, %v2582, %v2590
  %v2611 = vsel %vm2605, %v2584, %v2592
  %v2612 = vsel %vm2605, %v2586, %v2594
  %v2613 = vsel %vm2605, %v2588, %v2596
  %v2614 = vsel %vm2605, %v2574, %v2582
  %v2615 = vsel %vm2605, %v2576, %v2584
  %v2616 = vsel %vm2605, %v2578, %v2586
  %v2617 = vsel %vm2605, %v2580, %v2588
  %v2618 = vsel %vm2605, %v2598, %v2574
  %v2619 = vsel %vm2605, %v2600, %v2576
  %v2620 = vsel %vm2605, %v2602, %v2578
  %v2621 = vsel %vm2605, %v2604, %v2580
  %s2622 = scalar_lea.vmem %s7, 128
  %v2623 = vld [vmem:[%s2622] sm:$0xff]
  %v2624 = vld [vmem:[%s2622 + $0x8] sm:$0xff]
  %v2625 = vld [vmem:[%s2622 + $0x10] sm:$0xff]
  %v2626 = vld [vmem:[%s2622 + $0x18] sm:$0xff]
  %2628 = vset.pattern.permute.xlu0 0
  %2629 = vperm.xlu0 %2628, %v2623
  %v2630 = vpop.permute.xlu0 %2629
  %2633 = vset.pattern.permute.xlu0 0
  %2634 = vperm.xlu0 %2633, %v2624
  %v2635 = vpop.permute.xlu0 %2634
  %2638 = vset.pattern.permute.xlu0 0
  %2639 = vperm.xlu0 %2638, %v2625
  %v2640 = vpop.permute.xlu0 %2639
  %2643 = vset.pattern.permute.xlu0 0
  %2644 = vperm.xlu0 %2643, %v2626
  %v2645 = vpop.permute.xlu0 %2644
  %v2647 = vmul.f32 %v2618, %v2630
  %v2648 = vmul.f32 %v2614, %v2630
  %v2649 = vmul.f32 %v2610, %v2630
  %v2650 = vmul.f32 %v2606, %v2630
  %v2651 = vmul.f32 %v2619, %v2635
  %v2652 = vmul.f32 %v2615, %v2635
  %v2653 = vmul.f32 %v2611, %v2635
  %v2654 = vmul.f32 %v2607, %v2635
  %v2655 = vmul.f32 %v2620, %v2640
  %v2656 = vmul.f32 %v2616, %v2640
  %v2657 = vmul.f32 %v2612, %v2640
  %v2658 = vmul.f32 %v2608, %v2640
  %v2659 = vmul.f32 %v2621, %v2645
  %v2660 = vmul.f32 %v2617, %v2645
  %v2661 = vmul.f32 %v2613, %v2645
  %v2662 = vmul.f32 %v2609, %v2645
  %v2663 = vadd.s32 %v135, 2
  %v2664 = vadd.s32 %v136, 2
  %v2665 = vadd.s32 %v137, 2
  %v2666 = vadd.s32 %v138, 2
  %vm2667 = vcmp.ge.s32.totalorder %v2663, 0
  %vm2668 = vcmp.ge.s32.totalorder %v2664, 0
  %vm2669 = vcmp.ge.s32.totalorder %v2665, 0
  %vm2670 = vcmp.ge.s32.totalorder %v2666, 0
  %vm2671 = vcmp.lt.s32.totalorder %v2663, 16
  %vm2672 = vcmp.lt.s32.totalorder %v2664, 16
  %vm2673 = vcmp.lt.s32.totalorder %v2665, 16
  %vm2674 = vcmp.lt.s32.totalorder %v2666, 16
  %vm2675 = vmand %vm2667, %vm2671
  %vm2676 = vmand %vm2668, %vm2672
  %vm2677 = vmand %vm2669, %vm2673
  %vm2678 = vmand %vm2670, %vm2674
  %vm2679 = vmand %vm2050, %vm2675
  %vm2680 = vmand %vm2051, %vm2676
  %vm2681 = vmand %vm2052, %vm2677
  %vm2682 = vmand %vm2053, %vm2678
  %v2683 = vsel %vm2679, 1.0, 0.0
  %v2684 = vsel %vm2680, 1.0, 0.0
  %v2685 = vsel %vm2681, 1.0, 0.0
  %v2686 = vsel %vm2682, 1.0, 0.0
  %v2687 = vmul.f32 %v2647, %v2683
  %v2688 = vmul.f32 %v2648, %v2684
  %v2689 = vmul.f32 %v2649, %v2685
  %v2690 = vmul.f32 %v2650, %v2686
  %v2691 = vmul.f32 %v2651, %v2683
  %v2692 = vmul.f32 %v2652, %v2684
  %v2693 = vmul.f32 %v2653, %v2685
  %v2694 = vmul.f32 %v2654, %v2686
  %v2695 = vmul.f32 %v2655, %v2683
  %v2696 = vmul.f32 %v2656, %v2684
  %v2697 = vmul.f32 %v2657, %v2685
  %v2698 = vmul.f32 %v2658, %v2686
  %v2699 = vmul.f32 %v2659, %v2683
  %v2700 = vmul.f32 %v2660, %v2684
  %v2701 = vmul.f32 %v2661, %v2685
  %v2702 = vmul.f32 %v2662, %v2686
  %v2703 = vadd.f32 %v2557, %v2687
  %v2704 = vadd.f32 %v2558, %v2688
  %v2705 = vadd.f32 %v2559, %v2689
  %v2706 = vadd.f32 %v2560, %v2690
  %v2707 = vadd.f32 %v2561, %v2691
  %v2708 = vadd.f32 %v2562, %v2692
  %v2709 = vadd.f32 %v2563, %v2693
  %v2710 = vadd.f32 %v2564, %v2694
  %v2711 = vadd.f32 %v2565, %v2695
  %v2712 = vadd.f32 %v2566, %v2696
  %v2713 = vadd.f32 %v2567, %v2697
  %v2714 = vadd.f32 %v2568, %v2698
  %v2715 = vadd.f32 %v2569, %v2699
  %v2716 = vadd.f32 %v2570, %v2700
  %v2717 = vadd.f32 %v2571, %v2701
  %v2718 = vadd.f32 %v2572, %v2702
  %2719 = vrot.lane.b32.xlu0 %v1967, 18
  %v2720 = vpop.permute.xlu0 %2719
  %2721 = vrot.lane.b32.xlu0 %v1971, 18
  %v2722 = vpop.permute.xlu0 %2721
  %2723 = vrot.lane.b32.xlu0 %v1977, 18
  %v2724 = vpop.permute.xlu0 %2723
  %2725 = vrot.lane.b32.xlu0 %v1981, 18
  %v2726 = vpop.permute.xlu0 %2725
  %2727 = vrot.lane.b32.xlu0 %v1969, 18
  %v2728 = vpop.permute.xlu0 %2727
  %2729 = vrot.lane.b32.xlu0 %v1973, 18
  %v2730 = vpop.permute.xlu0 %2729
  %2731 = vrot.lane.b32.xlu0 %v1979, 18
  %v2732 = vpop.permute.xlu0 %2731
  %2733 = vrot.lane.b32.xlu0 %v1983, 18
  %v2734 = vpop.permute.xlu0 %2733
  %2735 = vrot.lane.b32.xlu0 %v2020, 18
  %v2736 = vpop.permute.xlu0 %2735
  %2737 = vrot.lane.b32.xlu0 %v2024, 18
  %v2738 = vpop.permute.xlu0 %2737
  %2739 = vrot.lane.b32.xlu0 %v2030, 18
  %v2740 = vpop.permute.xlu0 %2739
  %2741 = vrot.lane.b32.xlu0 %v2034, 18
  %v2742 = vpop.permute.xlu0 %2741
  %2743 = vrot.lane.b32.xlu0 %v2022, 18
  %v2744 = vpop.permute.xlu0 %2743
  %2745 = vrot.lane.b32.xlu0 %v2026, 18
  %v2746 = vpop.permute.xlu0 %2745
  %2747 = vrot.lane.b32.xlu0 %v2032, 18
  %v2748 = vpop.permute.xlu0 %2747
  %2749 = vrot.lane.b32.xlu0 %v2036, 18
  %v2750 = vpop.permute.xlu0 %2749
  %vm2751 = vcmp.lt.s32.totalorder %v111, 18
  %v2752 = vsel %vm2751, %v2736, %v2744
  %v2753 = vsel %vm2751, %v2738, %v2746
  %v2754 = vsel %vm2751, %v2740, %v2748
  %v2755 = vsel %vm2751, %v2742, %v2750
  %v2756 = vsel %vm2751, %v2728, %v2736
  %v2757 = vsel %vm2751, %v2730, %v2738
  %v2758 = vsel %vm2751, %v2732, %v2740
  %v2759 = vsel %vm2751, %v2734, %v2742
  %v2760 = vsel %vm2751, %v2720, %v2728
  %v2761 = vsel %vm2751, %v2722, %v2730
  %v2762 = vsel %vm2751, %v2724, %v2732
  %v2763 = vsel %vm2751, %v2726, %v2734
  %v2764 = vsel %vm2751, %v2744, %v2720
  %v2765 = vsel %vm2751, %v2746, %v2722
  %v2766 = vsel %vm2751, %v2748, %v2724
  %v2767 = vsel %vm2751, %v2750, %v2726
  %s2768 = scalar_lea.vmem %s7, 160
  %v2769 = vld [vmem:[%s2768] sm:$0xff]
  %v2770 = vld [vmem:[%s2768 + $0x8] sm:$0xff]
  %v2771 = vld [vmem:[%s2768 + $0x10] sm:$0xff]
  %v2772 = vld [vmem:[%s2768 + $0x18] sm:$0xff]
  %2774 = vset.pattern.permute.xlu0 0
  %2775 = vperm.xlu0 %2774, %v2769
  %v2776 = vpop.permute.xlu0 %2775
  %2779 = vset.pattern.permute.xlu0 0
  %2780 = vperm.xlu0 %2779, %v2770
  %v2781 = vpop.permute.xlu0 %2780
  %2784 = vset.pattern.permute.xlu0 0
  %2785 = vperm.xlu0 %2784, %v2771
  %v2786 = vpop.permute.xlu0 %2785
  %2789 = vset.pattern.permute.xlu0 0
  %2790 = vperm.xlu0 %2789, %v2772
  %v2791 = vpop.permute.xlu0 %2790
  %v2793 = vmul.f32 %v2764, %v2776
  %v2794 = vmul.f32 %v2760, %v2776
  %v2795 = vmul.f32 %v2756, %v2776
  %v2796 = vmul.f32 %v2752, %v2776
  %v2797 = vmul.f32 %v2765, %v2781
  %v2798 = vmul.f32 %v2761, %v2781
  %v2799 = vmul.f32 %v2757, %v2781
  %v2800 = vmul.f32 %v2753, %v2781
  %v2801 = vmul.f32 %v2766, %v2786
  %v2802 = vmul.f32 %v2762, %v2786
  %v2803 = vmul.f32 %v2758, %v2786
  %v2804 = vmul.f32 %v2754, %v2786
  %v2805 = vmul.f32 %v2767, %v2791
  %v2806 = vmul.f32 %v2763, %v2791
  %v2807 = vmul.f32 %v2759, %v2791
  %v2808 = vmul.f32 %v2755, %v2791
  %vm2809 = vmand %vm175, %vm2155
  %vm2810 = vmand %vm176, %vm2156
  %vm2811 = vmand %vm177, %vm2157
  %vm2812 = vmand %vm178, %vm2158
  %v2813 = vsel %vm2809, 1.0, 0.0
  %v2814 = vsel %vm2810, 1.0, 0.0
  %v2815 = vsel %vm2811, 1.0, 0.0
  %v2816 = vsel %vm2812, 1.0, 0.0
  %v2817 = vmul.f32 %v2793, %v2813
  %v2818 = vmul.f32 %v2794, %v2814
  %v2819 = vmul.f32 %v2795, %v2815
  %v2820 = vmul.f32 %v2796, %v2816
  %v2821 = vmul.f32 %v2797, %v2813
  %v2822 = vmul.f32 %v2798, %v2814
  %v2823 = vmul.f32 %v2799, %v2815
  %v2824 = vmul.f32 %v2800, %v2816
  %v2825 = vmul.f32 %v2801, %v2813
  %v2826 = vmul.f32 %v2802, %v2814
  %v2827 = vmul.f32 %v2803, %v2815
  %v2828 = vmul.f32 %v2804, %v2816
  %v2829 = vmul.f32 %v2805, %v2813
  %v2830 = vmul.f32 %v2806, %v2814
  %v2831 = vmul.f32 %v2807, %v2815
  %v2832 = vmul.f32 %v2808, %v2816
  %v2833 = vadd.f32 %v2703, %v2817
  %v2834 = vadd.f32 %v2704, %v2818
  %v2835 = vadd.f32 %v2705, %v2819
  %v2836 = vadd.f32 %v2706, %v2820
  %v2837 = vadd.f32 %v2707, %v2821
  %v2838 = vadd.f32 %v2708, %v2822
  %v2839 = vadd.f32 %v2709, %v2823
  %v2840 = vadd.f32 %v2710, %v2824
  %v2841 = vadd.f32 %v2711, %v2825
  %v2842 = vadd.f32 %v2712, %v2826
  %v2843 = vadd.f32 %v2713, %v2827
  %v2844 = vadd.f32 %v2714, %v2828
  %v2845 = vadd.f32 %v2715, %v2829
  %v2846 = vadd.f32 %v2716, %v2830
  %v2847 = vadd.f32 %v2717, %v2831
  %v2848 = vadd.f32 %v2718, %v2832
  %2849 = vrot.lane.b32.xlu0 %v1967, 17
  %v2850 = vpop.permute.xlu0 %2849
  %2851 = vrot.lane.b32.xlu0 %v1971, 17
  %v2852 = vpop.permute.xlu0 %2851
  %2853 = vrot.lane.b32.xlu0 %v1977, 17
  %v2854 = vpop.permute.xlu0 %2853
  %2855 = vrot.lane.b32.xlu0 %v1981, 17
  %v2856 = vpop.permute.xlu0 %2855
  %2857 = vrot.lane.b32.xlu0 %v1969, 17
  %v2858 = vpop.permute.xlu0 %2857
  %2859 = vrot.lane.b32.xlu0 %v1973, 17
  %v2860 = vpop.permute.xlu0 %2859
  %2861 = vrot.lane.b32.xlu0 %v1979, 17
  %v2862 = vpop.permute.xlu0 %2861
  %2863 = vrot.lane.b32.xlu0 %v1983, 17
  %v2864 = vpop.permute.xlu0 %2863
  %2865 = vrot.lane.b32.xlu0 %v2020, 17
  %v2866 = vpop.permute.xlu0 %2865
  %2867 = vrot.lane.b32.xlu0 %v2024, 17
  %v2868 = vpop.permute.xlu0 %2867
  %2869 = vrot.lane.b32.xlu0 %v2030, 17
  %v2870 = vpop.permute.xlu0 %2869
  %2871 = vrot.lane.b32.xlu0 %v2034, 17
  %v2872 = vpop.permute.xlu0 %2871
  %2873 = vrot.lane.b32.xlu0 %v2022, 17
  %v2874 = vpop.permute.xlu0 %2873
  %2875 = vrot.lane.b32.xlu0 %v2026, 17
  %v2876 = vpop.permute.xlu0 %2875
  %2877 = vrot.lane.b32.xlu0 %v2032, 17
  %v2878 = vpop.permute.xlu0 %2877
  %2879 = vrot.lane.b32.xlu0 %v2036, 17
  %v2880 = vpop.permute.xlu0 %2879
  %v2881 = vsel %vm211, %v2866, %v2874
  %v2882 = vsel %vm211, %v2868, %v2876
  %v2883 = vsel %vm211, %v2870, %v2878
  %v2884 = vsel %vm211, %v2872, %v2880
  %v2885 = vsel %vm211, %v2858, %v2866
  %v2886 = vsel %vm211, %v2860, %v2868
  %v2887 = vsel %vm211, %v2862, %v2870
  %v2888 = vsel %vm211, %v2864, %v2872
  %v2889 = vsel %vm211, %v2850, %v2858
  %v2890 = vsel %vm211, %v2852, %v2860
  %v2891 = vsel %vm211, %v2854, %v2862
  %v2892 = vsel %vm211, %v2856, %v2864
  %v2893 = vsel %vm211, %v2874, %v2850
  %v2894 = vsel %vm211, %v2876, %v2852
  %v2895 = vsel %vm211, %v2878, %v2854
  %v2896 = vsel %vm211, %v2880, %v2856
  %s2897 = scalar_lea.vmem %s7, 192
  %v2898 = vld [vmem:[%s2897] sm:$0xff]
  %v2899 = vld [vmem:[%s2897 + $0x8] sm:$0xff]
  %v2900 = vld [vmem:[%s2897 + $0x10] sm:$0xff]
  %v2901 = vld [vmem:[%s2897 + $0x18] sm:$0xff]
  %2903 = vset.pattern.permute.xlu0 0
  %2904 = vperm.xlu0 %2903, %v2898
  %v2905 = vpop.permute.xlu0 %2904
  %2908 = vset.pattern.permute.xlu0 0
  %2909 = vperm.xlu0 %2908, %v2899
  %v2910 = vpop.permute.xlu0 %2909
  %2913 = vset.pattern.permute.xlu0 0
  %2914 = vperm.xlu0 %2913, %v2900
  %v2915 = vpop.permute.xlu0 %2914
  %2918 = vset.pattern.permute.xlu0 0
  %2919 = vperm.xlu0 %2918, %v2901
  %v2920 = vpop.permute.xlu0 %2919
  %v2922 = vmul.f32 %v2893, %v2905
  %v2923 = vmul.f32 %v2889, %v2905
  %v2924 = vmul.f32 %v2885, %v2905
  %v2925 = vmul.f32 %v2881, %v2905
  %v2926 = vmul.f32 %v2894, %v2910
  %v2927 = vmul.f32 %v2890, %v2910
  %v2928 = vmul.f32 %v2886, %v2910
  %v2929 = vmul.f32 %v2882, %v2910
  %v2930 = vmul.f32 %v2895, %v2915
  %v2931 = vmul.f32 %v2891, %v2915
  %v2932 = vmul.f32 %v2887, %v2915
  %v2933 = vmul.f32 %v2883, %v2915
  %v2934 = vmul.f32 %v2896, %v2920
  %v2935 = vmul.f32 %v2892, %v2920
  %v2936 = vmul.f32 %v2888, %v2920
  %v2937 = vmul.f32 %v2884, %v2920
  %v2938 = vmul.f32 %v2922, %v288
  %v2939 = vmul.f32 %v2923, %v289
  %v2940 = vmul.f32 %v2924, %v290
  %v2941 = vmul.f32 %v2925, %v291
  %v2942 = vmul.f32 %v2926, %v288
  %v2943 = vmul.f32 %v2927, %v289
  %v2944 = vmul.f32 %v2928, %v290
  %v2945 = vmul.f32 %v2929, %v291
  %v2946 = vmul.f32 %v2930, %v288
  %v2947 = vmul.f32 %v2931, %v289
  %v2948 = vmul.f32 %v2932, %v290
  %v2949 = vmul.f32 %v2933, %v291
  %v2950 = vmul.f32 %v2934, %v288
  %v2951 = vmul.f32 %v2935, %v289
  %v2952 = vmul.f32 %v2936, %v290
  %v2953 = vmul.f32 %v2937, %v291
  %v2954 = vadd.f32 %v2833, %v2938
  %v2955 = vadd.f32 %v2834, %v2939
  %v2956 = vadd.f32 %v2835, %v2940
  %v2957 = vadd.f32 %v2836, %v2941
  %v2958 = vadd.f32 %v2837, %v2942
  %v2959 = vadd.f32 %v2838, %v2943
  %v2960 = vadd.f32 %v2839, %v2944
  %v2961 = vadd.f32 %v2840, %v2945
  %v2962 = vadd.f32 %v2841, %v2946
  %v2963 = vadd.f32 %v2842, %v2947
  %v2964 = vadd.f32 %v2843, %v2948
  %v2965 = vadd.f32 %v2844, %v2949
  %v2966 = vadd.f32 %v2845, %v2950
  %v2967 = vadd.f32 %v2846, %v2951
  %v2968 = vadd.f32 %v2847, %v2952
  %v2969 = vadd.f32 %v2848, %v2953
  %2970 = vrot.lane.b32.xlu0 %v1967, 16
  %v2971 = vpop.permute.xlu0 %2970
  %2972 = vrot.lane.b32.xlu0 %v1971, 16
  %v2973 = vpop.permute.xlu0 %2972
  %2974 = vrot.lane.b32.xlu0 %v1977, 16
  %v2975 = vpop.permute.xlu0 %2974
  %2976 = vrot.lane.b32.xlu0 %v1981, 16
  %v2977 = vpop.permute.xlu0 %2976
  %2978 = vrot.lane.b32.xlu0 %v1969, 16
  %v2979 = vpop.permute.xlu0 %2978
  %2980 = vrot.lane.b32.xlu0 %v1973, 16
  %v2981 = vpop.permute.xlu0 %2980
  %2982 = vrot.lane.b32.xlu0 %v1979, 16
  %v2983 = vpop.permute.xlu0 %2982
  %2984 = vrot.lane.b32.xlu0 %v1983, 16
  %v2985 = vpop.permute.xlu0 %2984
  %2986 = vrot.lane.b32.xlu0 %v2020, 16
  %v2987 = vpop.permute.xlu0 %2986
  %2988 = vrot.lane.b32.xlu0 %v2024, 16
  %v2989 = vpop.permute.xlu0 %2988
  %2990 = vrot.lane.b32.xlu0 %v2030, 16
  %v2991 = vpop.permute.xlu0 %2990
  %2992 = vrot.lane.b32.xlu0 %v2034, 16
  %v2993 = vpop.permute.xlu0 %2992
  %2994 = vrot.lane.b32.xlu0 %v2022, 16
  %v2995 = vpop.permute.xlu0 %2994
  %2996 = vrot.lane.b32.xlu0 %v2026, 16
  %v2997 = vpop.permute.xlu0 %2996
  %2998 = vrot.lane.b32.xlu0 %v2032, 16
  %v2999 = vpop.permute.xlu0 %2998
  %3000 = vrot.lane.b32.xlu0 %v2036, 16
  %v3001 = vpop.permute.xlu0 %3000
  %v3002 = vsel %vm340, %v2987, %v2995
  %v3003 = vsel %vm340, %v2989, %v2997
  %v3004 = vsel %vm340, %v2991, %v2999
  %v3005 = vsel %vm340, %v2993, %v3001
  %v3006 = vsel %vm340, %v2979, %v2987
  %v3007 = vsel %vm340, %v2981, %v2989
  %v3008 = vsel %vm340, %v2983, %v2991
  %v3009 = vsel %vm340, %v2985, %v2993
  %v3010 = vsel %vm340, %v2971, %v2979
  %v3011 = vsel %vm340, %v2973, %v2981
  %v3012 = vsel %vm340, %v2975, %v2983
  %v3013 = vsel %vm340, %v2977, %v2985
  %v3014 = vsel %vm340, %v2995, %v2971
  %v3015 = vsel %vm340, %v2997, %v2973
  %v3016 = vsel %vm340, %v2999, %v2975
  %v3017 = vsel %vm340, %v3001, %v2977
  %s3018 = scalar_lea.vmem %s7, 224
  %v3019 = vld [vmem:[%s3018] sm:$0xff]
  %v3020 = vld [vmem:[%s3018 + $0x8] sm:$0xff]
  %v3021 = vld [vmem:[%s3018 + $0x10] sm:$0xff]
  %v3022 = vld [vmem:[%s3018 + $0x18] sm:$0xff]
  %3024 = vset.pattern.permute.xlu0 0
  %3025 = vperm.xlu0 %3024, %v3019
  %v3026 = vpop.permute.xlu0 %3025
  %3029 = vset.pattern.permute.xlu0 0
  %3030 = vperm.xlu0 %3029, %v3020
  %v3031 = vpop.permute.xlu0 %3030
  %3034 = vset.pattern.permute.xlu0 0
  %3035 = vperm.xlu0 %3034, %v3021
  %v3036 = vpop.permute.xlu0 %3035
  %3039 = vset.pattern.permute.xlu0 0
  %3040 = vperm.xlu0 %3039, %v3022
  %v3041 = vpop.permute.xlu0 %3040
  %v3043 = vmul.f32 %v3014, %v3026
  %v3044 = vmul.f32 %v3010, %v3026
  %v3045 = vmul.f32 %v3006, %v3026
  %v3046 = vmul.f32 %v3002, %v3026
  %v3047 = vmul.f32 %v3015, %v3031
  %v3048 = vmul.f32 %v3011, %v3031
  %v3049 = vmul.f32 %v3007, %v3031
  %v3050 = vmul.f32 %v3003, %v3031
  %v3051 = vmul.f32 %v3016, %v3036
  %v3052 = vmul.f32 %v3012, %v3036
  %v3053 = vmul.f32 %v3008, %v3036
  %v3054 = vmul.f32 %v3004, %v3036
  %v3055 = vmul.f32 %v3017, %v3041
  %v3056 = vmul.f32 %v3013, %v3041
  %v3057 = vmul.f32 %v3009, %v3041
  %v3058 = vmul.f32 %v3005, %v3041
  %v3059 = vmul.f32 %v3043, %v414
  %v3060 = vmul.f32 %v3044, %v415
  %v3061 = vmul.f32 %v3045, %v416
  %v3062 = vmul.f32 %v3046, %v417
  %v3063 = vmul.f32 %v3047, %v414
  %v3064 = vmul.f32 %v3048, %v415
  %v3065 = vmul.f32 %v3049, %v416
  %v3066 = vmul.f32 %v3050, %v417
  %v3067 = vmul.f32 %v3051, %v414
  %v3068 = vmul.f32 %v3052, %v415
  %v3069 = vmul.f32 %v3053, %v416
  %v3070 = vmul.f32 %v3054, %v417
  %v3071 = vmul.f32 %v3055, %v414
  %v3072 = vmul.f32 %v3056, %v415
  %v3073 = vmul.f32 %v3057, %v416
  %v3074 = vmul.f32 %v3058, %v417
  %v3075 = vadd.f32 %v2954, %v3059
  %v3076 = vadd.f32 %v2955, %v3060
  %v3077 = vadd.f32 %v2956, %v3061
  %v3078 = vadd.f32 %v2957, %v3062
  %v3079 = vadd.f32 %v2958, %v3063
  %v3080 = vadd.f32 %v2959, %v3064
  %v3081 = vadd.f32 %v2960, %v3065
  %v3082 = vadd.f32 %v2961, %v3066
  %v3083 = vadd.f32 %v2962, %v3067
  %v3084 = vadd.f32 %v2963, %v3068
  %v3085 = vadd.f32 %v2964, %v3069
  %v3086 = vadd.f32 %v2965, %v3070
  %v3087 = vadd.f32 %v2966, %v3071
  %v3088 = vadd.f32 %v2967, %v3072
  %v3089 = vadd.f32 %v2968, %v3073
  %v3090 = vadd.f32 %v2969, %v3074
  %3091 = vrot.lane.b32.xlu0 %v1967, 15
  %v3092 = vpop.permute.xlu0 %3091
  %3093 = vrot.lane.b32.xlu0 %v1971, 15
  %v3094 = vpop.permute.xlu0 %3093
  %3095 = vrot.lane.b32.xlu0 %v1977, 15
  %v3096 = vpop.permute.xlu0 %3095
  %3097 = vrot.lane.b32.xlu0 %v1981, 15
  %v3098 = vpop.permute.xlu0 %3097
  %3099 = vrot.lane.b32.xlu0 %v1969, 15
  %v3100 = vpop.permute.xlu0 %3099
  %3101 = vrot.lane.b32.xlu0 %v1973, 15
  %v3102 = vpop.permute.xlu0 %3101
  %3103 = vrot.lane.b32.xlu0 %v1979, 15
  %v3104 = vpop.permute.xlu0 %3103
  %3105 = vrot.lane.b32.xlu0 %v1983, 15
  %v3106 = vpop.permute.xlu0 %3105
  %3107 = vrot.lane.b32.xlu0 %v2020, 15
  %v3108 = vpop.permute.xlu0 %3107
  %3109 = vrot.lane.b32.xlu0 %v2024, 15
  %v3110 = vpop.permute.xlu0 %3109
  %3111 = vrot.lane.b32.xlu0 %v2030, 15
  %v3112 = vpop.permute.xlu0 %3111
  %3113 = vrot.lane.b32.xlu0 %v2034, 15
  %v3114 = vpop.permute.xlu0 %3113
  %3115 = vrot.lane.b32.xlu0 %v2022, 15
  %v3116 = vpop.permute.xlu0 %3115
  %3117 = vrot.lane.b32.xlu0 %v2026, 15
  %v3118 = vpop.permute.xlu0 %3117
  %3119 = vrot.lane.b32.xlu0 %v2032, 15
  %v3120 = vpop.permute.xlu0 %3119
  %3121 = vrot.lane.b32.xlu0 %v2036, 15
  %v3122 = vpop.permute.xlu0 %3121
  %v3123 = vsel %vm482, %v3108, %v3116
  %v3124 = vsel %vm482, %v3110, %v3118
  %v3125 = vsel %vm482, %v3112, %v3120
  %v3126 = vsel %vm482, %v3114, %v3122
  %v3127 = vsel %vm482, %v3100, %v3108
  %v3128 = vsel %vm482, %v3102, %v3110
  %v3129 = vsel %vm482, %v3104, %v3112
  %v3130 = vsel %vm482, %v3106, %v3114
  %v3131 = vsel %vm482, %v3092, %v3100
  %v3132 = vsel %vm482, %v3094, %v3102
  %v3133 = vsel %vm482, %v3096, %v3104
  %v3134 = vsel %vm482, %v3098, %v3106
  %v3135 = vsel %vm482, %v3116, %v3092
  %v3136 = vsel %vm482, %v3118, %v3094
  %v3137 = vsel %vm482, %v3120, %v3096
  %v3138 = vsel %vm482, %v3122, %v3098
  %s3139 = scalar_lea.vmem %s7, 256
  %v3140 = vld [vmem:[%s3139] sm:$0xff]
  %v3141 = vld [vmem:[%s3139 + $0x8] sm:$0xff]
  %v3142 = vld [vmem:[%s3139 + $0x10] sm:$0xff]
  %v3143 = vld [vmem:[%s3139 + $0x18] sm:$0xff]
  %3145 = vset.pattern.permute.xlu0 0
  %3146 = vperm.xlu0 %3145, %v3140
  %v3147 = vpop.permute.xlu0 %3146
  %3150 = vset.pattern.permute.xlu0 0
  %3151 = vperm.xlu0 %3150, %v3141
  %v3152 = vpop.permute.xlu0 %3151
  %3155 = vset.pattern.permute.xlu0 0
  %3156 = vperm.xlu0 %3155, %v3142
  %v3157 = vpop.permute.xlu0 %3156
  %3160 = vset.pattern.permute.xlu0 0
  %3161 = vperm.xlu0 %3160, %v3143
  %v3162 = vpop.permute.xlu0 %3161
  %v3164 = vmul.f32 %v3135, %v3147
  %v3165 = vmul.f32 %v3131, %v3147
  %v3166 = vmul.f32 %v3127, %v3147
  %v3167 = vmul.f32 %v3123, %v3147
  %v3168 = vmul.f32 %v3136, %v3152
  %v3169 = vmul.f32 %v3132, %v3152
  %v3170 = vmul.f32 %v3128, %v3152
  %v3171 = vmul.f32 %v3124, %v3152
  %v3172 = vmul.f32 %v3137, %v3157
  %v3173 = vmul.f32 %v3133, %v3157
  %v3174 = vmul.f32 %v3129, %v3157
  %v3175 = vmul.f32 %v3125, %v3157
  %v3176 = vmul.f32 %v3138, %v3162
  %v3177 = vmul.f32 %v3134, %v3162
  %v3178 = vmul.f32 %v3130, %v3162
  %v3179 = vmul.f32 %v3126, %v3162
  %v3180 = vmul.f32 %v3164, %v560
  %v3181 = vmul.f32 %v3165, %v561
  %v3182 = vmul.f32 %v3166, %v562
  %v3183 = vmul.f32 %v3167, %v563
  %v3184 = vmul.f32 %v3168, %v560
  %v3185 = vmul.f32 %v3169, %v561
  %v3186 = vmul.f32 %v3170, %v562
  %v3187 = vmul.f32 %v3171, %v563
  %v3188 = vmul.f32 %v3172, %v560
  %v3189 = vmul.f32 %v3173, %v561
  %v3190 = vmul.f32 %v3174, %v562
  %v3191 = vmul.f32 %v3175, %v563
  %v3192 = vmul.f32 %v3176, %v560
  %v3193 = vmul.f32 %v3177, %v561
  %v3194 = vmul.f32 %v3178, %v562
  %v3195 = vmul.f32 %v3179, %v563
  %v3196 = vadd.f32 %v3075, %v3180
  %v3197 = vadd.f32 %v3076, %v3181
  %v3198 = vadd.f32 %v3077, %v3182
  %v3199 = vadd.f32 %v3078, %v3183
  %v3200 = vadd.f32 %v3079, %v3184
  %v3201 = vadd.f32 %v3080, %v3185
  %v3202 = vadd.f32 %v3081, %v3186
  %v3203 = vadd.f32 %v3082, %v3187
  %v3204 = vadd.f32 %v3083, %v3188
  %v3205 = vadd.f32 %v3084, %v3189
  %v3206 = vadd.f32 %v3085, %v3190
  %v3207 = vadd.f32 %v3086, %v3191
  %v3208 = vadd.f32 %v3087, %v3192
  %v3209 = vadd.f32 %v3088, %v3193
  %v3210 = vadd.f32 %v3089, %v3194
  %v3211 = vadd.f32 %v3090, %v3195
  %3212 = vrot.lane.b32.xlu0 %v1967, 14
  %v3213 = vpop.permute.xlu0 %3212
  %3214 = vrot.lane.b32.xlu0 %v1971, 14
  %v3215 = vpop.permute.xlu0 %3214
  %3216 = vrot.lane.b32.xlu0 %v1977, 14
  %v3217 = vpop.permute.xlu0 %3216
  %3218 = vrot.lane.b32.xlu0 %v1981, 14
  %v3219 = vpop.permute.xlu0 %3218
  %3220 = vrot.lane.b32.xlu0 %v1969, 14
  %v3221 = vpop.permute.xlu0 %3220
  %3222 = vrot.lane.b32.xlu0 %v1973, 14
  %v3223 = vpop.permute.xlu0 %3222
  %3224 = vrot.lane.b32.xlu0 %v1979, 14
  %v3225 = vpop.permute.xlu0 %3224
  %3226 = vrot.lane.b32.xlu0 %v1983, 14
  %v3227 = vpop.permute.xlu0 %3226
  %3228 = vrot.lane.b32.xlu0 %v2020, 14
  %v3229 = vpop.permute.xlu0 %3228
  %3230 = vrot.lane.b32.xlu0 %v2024, 14
  %v3231 = vpop.permute.xlu0 %3230
  %3232 = vrot.lane.b32.xlu0 %v2030, 14
  %v3233 = vpop.permute.xlu0 %3232
  %3234 = vrot.lane.b32.xlu0 %v2034, 14
  %v3235 = vpop.permute.xlu0 %3234
  %3236 = vrot.lane.b32.xlu0 %v2022, 14
  %v3237 = vpop.permute.xlu0 %3236
  %3238 = vrot.lane.b32.xlu0 %v2026, 14
  %v3239 = vpop.permute.xlu0 %3238
  %3240 = vrot.lane.b32.xlu0 %v2032, 14
  %v3241 = vpop.permute.xlu0 %3240
  %3242 = vrot.lane.b32.xlu0 %v2036, 14
  %v3243 = vpop.permute.xlu0 %3242
  %vm3244 = vcmp.lt.s32.totalorder %v111, 14
  %v3245 = vsel %vm3244, %v3229, %v3237
  %v3246 = vsel %vm3244, %v3231, %v3239
  %v3247 = vsel %vm3244, %v3233, %v3241
  %v3248 = vsel %vm3244, %v3235, %v3243
  %v3249 = vsel %vm3244, %v3221, %v3229
  %v3250 = vsel %vm3244, %v3223, %v3231
  %v3251 = vsel %vm3244, %v3225, %v3233
  %v3252 = vsel %vm3244, %v3227, %v3235
  %v3253 = vsel %vm3244, %v3213, %v3221
  %v3254 = vsel %vm3244, %v3215, %v3223
  %v3255 = vsel %vm3244, %v3217, %v3225
  %v3256 = vsel %vm3244, %v3219, %v3227
  %v3257 = vsel %vm3244, %v3237, %v3213
  %v3258 = vsel %vm3244, %v3239, %v3215
  %v3259 = vsel %vm3244, %v3241, %v3217
  %v3260 = vsel %vm3244, %v3243, %v3219
  %s3261 = scalar_lea.vmem %s7, 288
  %v3262 = vld [vmem:[%s3261] sm:$0xff]
  %v3263 = vld [vmem:[%s3261 + $0x8] sm:$0xff]
  %v3264 = vld [vmem:[%s3261 + $0x10] sm:$0xff]
  %v3265 = vld [vmem:[%s3261 + $0x18] sm:$0xff]
  %3267 = vset.pattern.permute.xlu0 0
  %3268 = vperm.xlu0 %3267, %v3262
  %v3269 = vpop.permute.xlu0 %3268
  %3272 = vset.pattern.permute.xlu0 0
  %3273 = vperm.xlu0 %3272, %v3263
  %v3274 = vpop.permute.xlu0 %3273
  %3277 = vset.pattern.permute.xlu0 0
  %3278 = vperm.xlu0 %3277, %v3264
  %v3279 = vpop.permute.xlu0 %3278
  %3282 = vset.pattern.permute.xlu0 0
  %3283 = vperm.xlu0 %3282, %v3265
  %v3284 = vpop.permute.xlu0 %3283
  %v3286 = vmul.f32 %v3257, %v3269
  %v3287 = vmul.f32 %v3253, %v3269
  %v3288 = vmul.f32 %v3249, %v3269
  %v3289 = vmul.f32 %v3245, %v3269
  %v3290 = vmul.f32 %v3258, %v3274
  %v3291 = vmul.f32 %v3254, %v3274
  %v3292 = vmul.f32 %v3250, %v3274
  %v3293 = vmul.f32 %v3246, %v3274
  %v3294 = vmul.f32 %v3259, %v3279
  %v3295 = vmul.f32 %v3255, %v3279
  %v3296 = vmul.f32 %v3251, %v3279
  %v3297 = vmul.f32 %v3247, %v3279
  %v3298 = vmul.f32 %v3260, %v3284
  %v3299 = vmul.f32 %v3256, %v3284
  %v3300 = vmul.f32 %v3252, %v3284
  %v3301 = vmul.f32 %v3248, %v3284
  %vm3302 = vmand %vm175, %vm2675
  %vm3303 = vmand %vm176, %vm2676
  %vm3304 = vmand %vm177, %vm2677
  %vm3305 = vmand %vm178, %vm2678
  %v3306 = vsel %vm3302, 1.0, 0.0
  %v3307 = vsel %vm3303, 1.0, 0.0
  %v3308 = vsel %vm3304, 1.0, 0.0
  %v3309 = vsel %vm3305, 1.0, 0.0
  %v3310 = vmul.f32 %v3286, %v3306
  %v3311 = vmul.f32 %v3287, %v3307
  %v3312 = vmul.f32 %v3288, %v3308
  %v3313 = vmul.f32 %v3289, %v3309
  %v3314 = vmul.f32 %v3290, %v3306
  %v3315 = vmul.f32 %v3291, %v3307
  %v3316 = vmul.f32 %v3292, %v3308
  %v3317 = vmul.f32 %v3293, %v3309
  %v3318 = vmul.f32 %v3294, %v3306
  %v3319 = vmul.f32 %v3295, %v3307
  %v3320 = vmul.f32 %v3296, %v3308
  %v3321 = vmul.f32 %v3297, %v3309
  %v3322 = vmul.f32 %v3298, %v3306
  %v3323 = vmul.f32 %v3299, %v3307
  %v3324 = vmul.f32 %v3300, %v3308
  %v3325 = vmul.f32 %v3301, %v3309
  %v3326 = vadd.f32 %v3196, %v3310
  %v3327 = vadd.f32 %v3197, %v3311
  %v3328 = vadd.f32 %v3198, %v3312
  %v3329 = vadd.f32 %v3199, %v3313
  %v3330 = vadd.f32 %v3200, %v3314
  %v3331 = vadd.f32 %v3201, %v3315
  %v3332 = vadd.f32 %v3202, %v3316
  %v3333 = vadd.f32 %v3203, %v3317
  %v3334 = vadd.f32 %v3204, %v3318
  %v3335 = vadd.f32 %v3205, %v3319
  %v3336 = vadd.f32 %v3206, %v3320
  %v3337 = vadd.f32 %v3207, %v3321
  %v3338 = vadd.f32 %v3208, %v3322
  %v3339 = vadd.f32 %v3209, %v3323
  %v3340 = vadd.f32 %v3210, %v3324
  %v3341 = vadd.f32 %v3211, %v3325
  %3342 = vrot.lane.b32.xlu0 %v1967, 2
  %v3343 = vpop.permute.xlu0 %3342
  %3344 = vrot.lane.b32.xlu0 %v1971, 2
  %v3345 = vpop.permute.xlu0 %3344
  %3346 = vrot.lane.b32.xlu0 %v1977, 2
  %v3347 = vpop.permute.xlu0 %3346
  %3348 = vrot.lane.b32.xlu0 %v1981, 2
  %v3349 = vpop.permute.xlu0 %3348
  %3350 = vrot.lane.b32.xlu0 %v1969, 2
  %v3351 = vpop.permute.xlu0 %3350
  %3352 = vrot.lane.b32.xlu0 %v1973, 2
  %v3353 = vpop.permute.xlu0 %3352
  %3354 = vrot.lane.b32.xlu0 %v1979, 2
  %v3355 = vpop.permute.xlu0 %3354
  %3356 = vrot.lane.b32.xlu0 %v1983, 2
  %v3357 = vpop.permute.xlu0 %3356
  %3358 = vrot.lane.b32.xlu0 %v2020, 2
  %v3359 = vpop.permute.xlu0 %3358
  %3360 = vrot.lane.b32.xlu0 %v2024, 2
  %v3361 = vpop.permute.xlu0 %3360
  %3362 = vrot.lane.b32.xlu0 %v2030, 2
  %v3363 = vpop.permute.xlu0 %3362
  %3364 = vrot.lane.b32.xlu0 %v2034, 2
  %v3365 = vpop.permute.xlu0 %3364
  %3366 = vrot.lane.b32.xlu0 %v2022, 2
  %v3367 = vpop.permute.xlu0 %3366
  %3368 = vrot.lane.b32.xlu0 %v2026, 2
  %v3369 = vpop.permute.xlu0 %3368
  %3370 = vrot.lane.b32.xlu0 %v2032, 2
  %v3371 = vpop.permute.xlu0 %3370
  %3372 = vrot.lane.b32.xlu0 %v2036, 2
  %v3373 = vpop.permute.xlu0 %3372
  %vm3374 = vcmp.lt.s32.totalorder %v111, 2
  %v3375 = vsel %vm3374, %v3359, %v3367
  %v3376 = vsel %vm3374, %v3361, %v3369
  %v3377 = vsel %vm3374, %v3363, %v3371
  %v3378 = vsel %vm3374, %v3365, %v3373
  %v3379 = vsel %vm3374, %v3351, %v3359
  %v3380 = vsel %vm3374, %v3353, %v3361
  %v3381 = vsel %vm3374, %v3355, %v3363
  %v3382 = vsel %vm3374, %v3357, %v3365
  %v3383 = vsel %vm3374, %v3343, %v3351
  %v3384 = vsel %vm3374, %v3345, %v3353
  %v3385 = vsel %vm3374, %v3347, %v3355
  %v3386 = vsel %vm3374, %v3349, %v3357
  %v3387 = vsel %vm3374, %v3367, %v3343
  %v3388 = vsel %vm3374, %v3369, %v3345
  %v3389 = vsel %vm3374, %v3371, %v3347
  %v3390 = vsel %vm3374, %v3373, %v3349
  %s3391 = scalar_lea.vmem %s7, 320
  %v3392 = vld [vmem:[%s3391] sm:$0xff]
  %v3393 = vld [vmem:[%s3391 + $0x8] sm:$0xff]
  %v3394 = vld [vmem:[%s3391 + $0x10] sm:$0xff]
  %v3395 = vld [vmem:[%s3391 + $0x18] sm:$0xff]
  %3397 = vset.pattern.permute.xlu0 0
  %3398 = vperm.xlu0 %3397, %v3392
  %v3399 = vpop.permute.xlu0 %3398
  %3402 = vset.pattern.permute.xlu0 0
  %3403 = vperm.xlu0 %3402, %v3393
  %v3404 = vpop.permute.xlu0 %3403
  %3407 = vset.pattern.permute.xlu0 0
  %3408 = vperm.xlu0 %3407, %v3394
  %v3409 = vpop.permute.xlu0 %3408
  %3412 = vset.pattern.permute.xlu0 0
  %3413 = vperm.xlu0 %3412, %v3395
  %v3414 = vpop.permute.xlu0 %3413
  %v3416 = vmul.f32 %v3387, %v3399
  %v3417 = vmul.f32 %v3383, %v3399
  %v3418 = vmul.f32 %v3379, %v3399
  %v3419 = vmul.f32 %v3375, %v3399
  %v3420 = vmul.f32 %v3388, %v3404
  %v3421 = vmul.f32 %v3384, %v3404
  %v3422 = vmul.f32 %v3380, %v3404
  %v3423 = vmul.f32 %v3376, %v3404
  %v3424 = vmul.f32 %v3389, %v3409
  %v3425 = vmul.f32 %v3385, %v3409
  %v3426 = vmul.f32 %v3381, %v3409
  %v3427 = vmul.f32 %v3377, %v3409
  %v3428 = vmul.f32 %v3390, %v3414
  %v3429 = vmul.f32 %v3386, %v3414
  %v3430 = vmul.f32 %v3382, %v3414
  %v3431 = vmul.f32 %v3378, %v3414
  %vm3432 = vmand %vm604, %vm2155
  %vm3433 = vmand %vm605, %vm2156
  %vm3434 = vmand %vm606, %vm2157
  %vm3435 = vmand %vm607, %vm2158
  %v3436 = vsel %vm3432, 1.0, 0.0
  %v3437 = vsel %vm3433, 1.0, 0.0
  %v3438 = vsel %vm3434, 1.0, 0.0
  %v3439 = vsel %vm3435, 1.0, 0.0
  %v3440 = vmul.f32 %v3416, %v3436
  %v3441 = vmul.f32 %v3417, %v3437
  %v3442 = vmul.f32 %v3418, %v3438
  %v3443 = vmul.f32 %v3419, %v3439
  %v3444 = vmul.f32 %v3420, %v3436
  %v3445 = vmul.f32 %v3421, %v3437
  %v3446 = vmul.f32 %v3422, %v3438
  %v3447 = vmul.f32 %v3423, %v3439
  %v3448 = vmul.f32 %v3424, %v3436
  %v3449 = vmul.f32 %v3425, %v3437
  %v3450 = vmul.f32 %v3426, %v3438
  %v3451 = vmul.f32 %v3427, %v3439
  %v3452 = vmul.f32 %v3428, %v3436
  %v3453 = vmul.f32 %v3429, %v3437
  %v3454 = vmul.f32 %v3430, %v3438
  %v3455 = vmul.f32 %v3431, %v3439
  %v3456 = vadd.f32 %v3326, %v3440
  %v3457 = vadd.f32 %v3327, %v3441
  %v3458 = vadd.f32 %v3328, %v3442
  %v3459 = vadd.f32 %v3329, %v3443
  %v3460 = vadd.f32 %v3330, %v3444
  %v3461 = vadd.f32 %v3331, %v3445
  %v3462 = vadd.f32 %v3332, %v3446
  %v3463 = vadd.f32 %v3333, %v3447
  %v3464 = vadd.f32 %v3334, %v3448
  %v3465 = vadd.f32 %v3335, %v3449
  %v3466 = vadd.f32 %v3336, %v3450
  %v3467 = vadd.f32 %v3337, %v3451
  %v3468 = vadd.f32 %v3338, %v3452
  %v3469 = vadd.f32 %v3339, %v3453
  %v3470 = vadd.f32 %v3340, %v3454
  %v3471 = vadd.f32 %v3341, %v3455
  %3472 = vrot.lane.b32.xlu0 %v1967, 1
  %v3473 = vpop.permute.xlu0 %3472
  %3474 = vrot.lane.b32.xlu0 %v1971, 1
  %v3475 = vpop.permute.xlu0 %3474
  %3476 = vrot.lane.b32.xlu0 %v1977, 1
  %v3477 = vpop.permute.xlu0 %3476
  %3478 = vrot.lane.b32.xlu0 %v1981, 1
  %v3479 = vpop.permute.xlu0 %3478
  %3480 = vrot.lane.b32.xlu0 %v1969, 1
  %v3481 = vpop.permute.xlu0 %3480
  %3482 = vrot.lane.b32.xlu0 %v1973, 1
  %v3483 = vpop.permute.xlu0 %3482
  %3484 = vrot.lane.b32.xlu0 %v1979, 1
  %v3485 = vpop.permute.xlu0 %3484
  %3486 = vrot.lane.b32.xlu0 %v1983, 1
  %v3487 = vpop.permute.xlu0 %3486
  %3488 = vrot.lane.b32.xlu0 %v2020, 1
  %v3489 = vpop.permute.xlu0 %3488
  %3490 = vrot.lane.b32.xlu0 %v2024, 1
  %v3491 = vpop.permute.xlu0 %3490
  %3492 = vrot.lane.b32.xlu0 %v2030, 1
  %v3493 = vpop.permute.xlu0 %3492
  %3494 = vrot.lane.b32.xlu0 %v2034, 1
  %v3495 = vpop.permute.xlu0 %3494
  %3496 = vrot.lane.b32.xlu0 %v2022, 1
  %v3497 = vpop.permute.xlu0 %3496
  %3498 = vrot.lane.b32.xlu0 %v2026, 1
  %v3499 = vpop.permute.xlu0 %3498
  %3500 = vrot.lane.b32.xlu0 %v2032, 1
  %v3501 = vpop.permute.xlu0 %3500
  %3502 = vrot.lane.b32.xlu0 %v2036, 1
  %v3503 = vpop.permute.xlu0 %3502
  %v3504 = vsel %vm640, %v3489, %v3497
  %v3505 = vsel %vm640, %v3491, %v3499
  %v3506 = vsel %vm640, %v3493, %v3501
  %v3507 = vsel %vm640, %v3495, %v3503
  %v3508 = vsel %vm640, %v3481, %v3489
  %v3509 = vsel %vm640, %v3483, %v3491
  %v3510 = vsel %vm640, %v3485, %v3493
  %v3511 = vsel %vm640, %v3487, %v3495
  %v3512 = vsel %vm640, %v3473, %v3481
  %v3513 = vsel %vm640, %v3475, %v3483
  %v3514 = vsel %vm640, %v3477, %v3485
  %v3515 = vsel %vm640, %v3479, %v3487
  %v3516 = vsel %vm640, %v3497, %v3473
  %v3517 = vsel %vm640, %v3499, %v3475
  %v3518 = vsel %vm640, %v3501, %v3477
  %v3519 = vsel %vm640, %v3503, %v3479
  %s3520 = scalar_lea.vmem %s7, 352
  %v3521 = vld [vmem:[%s3520] sm:$0xff]
  %v3522 = vld [vmem:[%s3520 + $0x8] sm:$0xff]
  %v3523 = vld [vmem:[%s3520 + $0x10] sm:$0xff]
  %v3524 = vld [vmem:[%s3520 + $0x18] sm:$0xff]
  %3526 = vset.pattern.permute.xlu0 0
  %3527 = vperm.xlu0 %3526, %v3521
  %v3528 = vpop.permute.xlu0 %3527
  %3531 = vset.pattern.permute.xlu0 0
  %3532 = vperm.xlu0 %3531, %v3522
  %v3533 = vpop.permute.xlu0 %3532
  %3536 = vset.pattern.permute.xlu0 0
  %3537 = vperm.xlu0 %3536, %v3523
  %v3538 = vpop.permute.xlu0 %3537
  %3541 = vset.pattern.permute.xlu0 0
  %3542 = vperm.xlu0 %3541, %v3524
  %v3543 = vpop.permute.xlu0 %3542
  %v3545 = vmul.f32 %v3516, %v3528
  %v3546 = vmul.f32 %v3512, %v3528
  %v3547 = vmul.f32 %v3508, %v3528
  %v3548 = vmul.f32 %v3504, %v3528
  %v3549 = vmul.f32 %v3517, %v3533
  %v3550 = vmul.f32 %v3513, %v3533
  %v3551 = vmul.f32 %v3509, %v3533
  %v3552 = vmul.f32 %v3505, %v3533
  %v3553 = vmul.f32 %v3518, %v3538
  %v3554 = vmul.f32 %v3514, %v3538
  %v3555 = vmul.f32 %v3510, %v3538
  %v3556 = vmul.f32 %v3506, %v3538
  %v3557 = vmul.f32 %v3519, %v3543
  %v3558 = vmul.f32 %v3515, %v3543
  %v3559 = vmul.f32 %v3511, %v3543
  %v3560 = vmul.f32 %v3507, %v3543
  %v3561 = vmul.f32 %v3545, %v702
  %v3562 = vmul.f32 %v3546, %v703
  %v3563 = vmul.f32 %v3547, %v704
  %v3564 = vmul.f32 %v3548, %v705
  %v3565 = vmul.f32 %v3549, %v702
  %v3566 = vmul.f32 %v3550, %v703
  %v3567 = vmul.f32 %v3551, %v704
  %v3568 = vmul.f32 %v3552, %v705
  %v3569 = vmul.f32 %v3553, %v702
  %v3570 = vmul.f32 %v3554, %v703
  %v3571 = vmul.f32 %v3555, %v704
  %v3572 = vmul.f32 %v3556, %v705
  %v3573 = vmul.f32 %v3557, %v702
  %v3574 = vmul.f32 %v3558, %v703
  %v3575 = vmul.f32 %v3559, %v704
  %v3576 = vmul.f32 %v3560, %v705
  %v3577 = vadd.f32 %v3456, %v3561
  %v3578 = vadd.f32 %v3457, %v3562
  %v3579 = vadd.f32 %v3458, %v3563
  %v3580 = vadd.f32 %v3459, %v3564
  %v3581 = vadd.f32 %v3460, %v3565
  %v3582 = vadd.f32 %v3461, %v3566
  %v3583 = vadd.f32 %v3462, %v3567
  %v3584 = vadd.f32 %v3463, %v3568
  %v3585 = vadd.f32 %v3464, %v3569
  %v3586 = vadd.f32 %v3465, %v3570
  %v3587 = vadd.f32 %v3466, %v3571
  %v3588 = vadd.f32 %v3467, %v3572
  %v3589 = vadd.f32 %v3468, %v3573
  %v3590 = vadd.f32 %v3469, %v3574
  %v3591 = vadd.f32 %v3470, %v3575
  %v3592 = vadd.f32 %v3471, %v3576
  %s3593 = scalar_lea.vmem %s7, 384
  %v3594 = vld [vmem:[%s3593] sm:$0xff]
  %v3595 = vld [vmem:[%s3593 + $0x8] sm:$0xff]
  %v3596 = vld [vmem:[%s3593 + $0x10] sm:$0xff]
  %v3597 = vld [vmem:[%s3593 + $0x18] sm:$0xff]
  %3599 = vset.pattern.permute.xlu0 0
  %3600 = vperm.xlu0 %3599, %v3594
  %v3601 = vpop.permute.xlu0 %3600
  %3604 = vset.pattern.permute.xlu0 0
  %3605 = vperm.xlu0 %3604, %v3595
  %v3606 = vpop.permute.xlu0 %3605
  %3609 = vset.pattern.permute.xlu0 0
  %3610 = vperm.xlu0 %3609, %v3596
  %v3611 = vpop.permute.xlu0 %3610
  %3614 = vset.pattern.permute.xlu0 0
  %3615 = vperm.xlu0 %3614, %v3597
  %v3616 = vpop.permute.xlu0 %3615
  %v3618 = vmul.f32 %v1967, %v3601
  %v3619 = vmul.f32 %v1969, %v3601
  %v3620 = vmul.f32 %v2020, %v3601
  %v3621 = vmul.f32 %v2022, %v3601
  %v3622 = vmul.f32 %v1971, %v3606
  %v3623 = vmul.f32 %v1973, %v3606
  %v3624 = vmul.f32 %v2024, %v3606
  %v3625 = vmul.f32 %v2026, %v3606
  %v3626 = vmul.f32 %v1977, %v3611
  %v3627 = vmul.f32 %v1979, %v3611
  %v3628 = vmul.f32 %v2030, %v3611
  %v3629 = vmul.f32 %v2032, %v3611
  %v3630 = vmul.f32 %v1981, %v3616
  %v3631 = vmul.f32 %v1983, %v3616
  %v3632 = vmul.f32 %v2034, %v3616
  %v3633 = vmul.f32 %v2036, %v3616
  %v3634 = vadd.f32 %v3577, %v3618
  %v3635 = vadd.f32 %v3578, %v3619
  %v3636 = vadd.f32 %v3579, %v3620
  %v3637 = vadd.f32 %v3580, %v3621
  %v3638 = vadd.f32 %v3581, %v3622
  %v3639 = vadd.f32 %v3582, %v3623
  %v3640 = vadd.f32 %v3583, %v3624
  %v3641 = vadd.f32 %v3584, %v3625
  %v3642 = vadd.f32 %v3585, %v3626
  %v3643 = vadd.f32 %v3586, %v3627
  %v3644 = vadd.f32 %v3587, %v3628
  %v3645 = vadd.f32 %v3588, %v3629
  %v3646 = vadd.f32 %v3589, %v3630
  %v3647 = vadd.f32 %v3590, %v3631
  %v3648 = vadd.f32 %v3591, %v3632
  %v3649 = vadd.f32 %v3592, %v3633
  %3650 = vrot.lane.b32.xlu0 %v1967, 127
  %v3651 = vpop.permute.xlu0 %3650
  %3652 = vrot.lane.b32.xlu0 %v1971, 127
  %v3653 = vpop.permute.xlu0 %3652
  %3654 = vrot.lane.b32.xlu0 %v1977, 127
  %v3655 = vpop.permute.xlu0 %3654
  %3656 = vrot.lane.b32.xlu0 %v1981, 127
  %v3657 = vpop.permute.xlu0 %3656
  %3658 = vrot.lane.b32.xlu0 %v1969, 127
  %v3659 = vpop.permute.xlu0 %3658
  %3660 = vrot.lane.b32.xlu0 %v1973, 127
  %v3661 = vpop.permute.xlu0 %3660
  %3662 = vrot.lane.b32.xlu0 %v1979, 127
  %v3663 = vpop.permute.xlu0 %3662
  %3664 = vrot.lane.b32.xlu0 %v1983, 127
  %v3665 = vpop.permute.xlu0 %3664
  %3666 = vrot.lane.b32.xlu0 %v2020, 127
  %v3667 = vpop.permute.xlu0 %3666
  %3668 = vrot.lane.b32.xlu0 %v2024, 127
  %v3669 = vpop.permute.xlu0 %3668
  %3670 = vrot.lane.b32.xlu0 %v2030, 127
  %v3671 = vpop.permute.xlu0 %3670
  %3672 = vrot.lane.b32.xlu0 %v2034, 127
  %v3673 = vpop.permute.xlu0 %3672
  %3674 = vrot.lane.b32.xlu0 %v2022, 127
  %v3675 = vpop.permute.xlu0 %3674
  %3676 = vrot.lane.b32.xlu0 %v2026, 127
  %v3677 = vpop.permute.xlu0 %3676
  %3678 = vrot.lane.b32.xlu0 %v2032, 127
  %v3679 = vpop.permute.xlu0 %3678
  %3680 = vrot.lane.b32.xlu0 %v2036, 127
  %v3681 = vpop.permute.xlu0 %3680
  %v3682 = vsel %vm827, %v3667, %v3675
  %v3683 = vsel %vm827, %v3669, %v3677
  %v3684 = vsel %vm827, %v3671, %v3679
  %v3685 = vsel %vm827, %v3673, %v3681
  %v3686 = vsel %vm827, %v3659, %v3667
  %v3687 = vsel %vm827, %v3661, %v3669
  %v3688 = vsel %vm827, %v3663, %v3671
  %v3689 = vsel %vm827, %v3665, %v3673
  %v3690 = vsel %vm827, %v3651, %v3659
  %v3691 = vsel %vm827, %v3653, %v3661
  %v3692 = vsel %vm827, %v3655, %v3663
  %v3693 = vsel %vm827, %v3657, %v3665
  %v3694 = vsel %vm827, %v3675, %v3651
  %v3695 = vsel %vm827, %v3677, %v3653
  %v3696 = vsel %vm827, %v3679, %v3655
  %v3697 = vsel %vm827, %v3681, %v3657
  %s3698 = scalar_lea.vmem %s7, 416
  %v3699 = vld [vmem:[%s3698] sm:$0xff]
  %v3700 = vld [vmem:[%s3698 + $0x8] sm:$0xff]
  %v3701 = vld [vmem:[%s3698 + $0x10] sm:$0xff]
  %v3702 = vld [vmem:[%s3698 + $0x18] sm:$0xff]
  %3704 = vset.pattern.permute.xlu0 0
  %3705 = vperm.xlu0 %3704, %v3699
  %v3706 = vpop.permute.xlu0 %3705
  %3709 = vset.pattern.permute.xlu0 0
  %3710 = vperm.xlu0 %3709, %v3700
  %v3711 = vpop.permute.xlu0 %3710
  %3714 = vset.pattern.permute.xlu0 0
  %3715 = vperm.xlu0 %3714, %v3701
  %v3716 = vpop.permute.xlu0 %3715
  %3719 = vset.pattern.permute.xlu0 0
  %3720 = vperm.xlu0 %3719, %v3702
  %v3721 = vpop.permute.xlu0 %3720
  %v3723 = vmul.f32 %v3690, %v3706
  %v3724 = vmul.f32 %v3686, %v3706
  %v3725 = vmul.f32 %v3682, %v3706
  %v3726 = vmul.f32 %v3694, %v3706
  %v3727 = vmul.f32 %v3691, %v3711
  %v3728 = vmul.f32 %v3687, %v3711
  %v3729 = vmul.f32 %v3683, %v3711
  %v3730 = vmul.f32 %v3695, %v3711
  %v3731 = vmul.f32 %v3692, %v3716
  %v3732 = vmul.f32 %v3688, %v3716
  %v3733 = vmul.f32 %v3684, %v3716
  %v3734 = vmul.f32 %v3696, %v3716
  %v3735 = vmul.f32 %v3693, %v3721
  %v3736 = vmul.f32 %v3689, %v3721
  %v3737 = vmul.f32 %v3685, %v3721
  %v3738 = vmul.f32 %v3697, %v3721
  %v3739 = vmul.f32 %v3723, %v889
  %v3740 = vmul.f32 %v3724, %v890
  %v3741 = vmul.f32 %v3725, %v891
  %v3742 = vmul.f32 %v3726, %v892
  %v3743 = vmul.f32 %v3727, %v889
  %v3744 = vmul.f32 %v3728, %v890
  %v3745 = vmul.f32 %v3729, %v891
  %v3746 = vmul.f32 %v3730, %v892
  %v3747 = vmul.f32 %v3731, %v889
  %v3748 = vmul.f32 %v3732, %v890
  %v3749 = vmul.f32 %v3733, %v891
  %v3750 = vmul.f32 %v3734, %v892
  %v3751 = vmul.f32 %v3735, %v889
  %v3752 = vmul.f32 %v3736, %v890
  %v3753 = vmul.f32 %v3737, %v891
  %v3754 = vmul.f32 %v3738, %v892
  %v3755 = vadd.f32 %v3634, %v3739
  %v3756 = vadd.f32 %v3635, %v3740
  %v3757 = vadd.f32 %v3636, %v3741
  %v3758 = vadd.f32 %v3637, %v3742
  %v3759 = vadd.f32 %v3638, %v3743
  %v3760 = vadd.f32 %v3639, %v3744
  %v3761 = vadd.f32 %v3640, %v3745
  %v3762 = vadd.f32 %v3641, %v3746
  %v3763 = vadd.f32 %v3642, %v3747
  %v3764 = vadd.f32 %v3643, %v3748
  %v3765 = vadd.f32 %v3644, %v3749
  %v3766 = vadd.f32 %v3645, %v3750
  %v3767 = vadd.f32 %v3646, %v3751
  %v3768 = vadd.f32 %v3647, %v3752
  %v3769 = vadd.f32 %v3648, %v3753
  %v3770 = vadd.f32 %v3649, %v3754
  %3771 = vrot.lane.b32.xlu0 %v1967, 126
  %v3772 = vpop.permute.xlu0 %3771
  %3773 = vrot.lane.b32.xlu0 %v1971, 126
  %v3774 = vpop.permute.xlu0 %3773
  %3775 = vrot.lane.b32.xlu0 %v1977, 126
  %v3776 = vpop.permute.xlu0 %3775
  %3777 = vrot.lane.b32.xlu0 %v1981, 126
  %v3778 = vpop.permute.xlu0 %3777
  %3779 = vrot.lane.b32.xlu0 %v1969, 126
  %v3780 = vpop.permute.xlu0 %3779
  %3781 = vrot.lane.b32.xlu0 %v1973, 126
  %v3782 = vpop.permute.xlu0 %3781
  %3783 = vrot.lane.b32.xlu0 %v1979, 126
  %v3784 = vpop.permute.xlu0 %3783
  %3785 = vrot.lane.b32.xlu0 %v1983, 126
  %v3786 = vpop.permute.xlu0 %3785
  %3787 = vrot.lane.b32.xlu0 %v2020, 126
  %v3788 = vpop.permute.xlu0 %3787
  %3789 = vrot.lane.b32.xlu0 %v2024, 126
  %v3790 = vpop.permute.xlu0 %3789
  %3791 = vrot.lane.b32.xlu0 %v2030, 126
  %v3792 = vpop.permute.xlu0 %3791
  %3793 = vrot.lane.b32.xlu0 %v2034, 126
  %v3794 = vpop.permute.xlu0 %3793
  %3795 = vrot.lane.b32.xlu0 %v2022, 126
  %v3796 = vpop.permute.xlu0 %3795
  %3797 = vrot.lane.b32.xlu0 %v2026, 126
  %v3798 = vpop.permute.xlu0 %3797
  %3799 = vrot.lane.b32.xlu0 %v2032, 126
  %v3800 = vpop.permute.xlu0 %3799
  %3801 = vrot.lane.b32.xlu0 %v2036, 126
  %v3802 = vpop.permute.xlu0 %3801
  %vm3803 = vcmp.lt.s32.totalorder %v111, 126
  %v3804 = vsel %vm3803, %v3788, %v3796
  %v3805 = vsel %vm3803, %v3790, %v3798
  %v3806 = vsel %vm3803, %v3792, %v3800
  %v3807 = vsel %vm3803, %v3794, %v3802
  %v3808 = vsel %vm3803, %v3780, %v3788
  %v3809 = vsel %vm3803, %v3782, %v3790
  %v3810 = vsel %vm3803, %v3784, %v3792
  %v3811 = vsel %vm3803, %v3786, %v3794
  %v3812 = vsel %vm3803, %v3772, %v3780
  %v3813 = vsel %vm3803, %v3774, %v3782
  %v3814 = vsel %vm3803, %v3776, %v3784
  %v3815 = vsel %vm3803, %v3778, %v3786
  %v3816 = vsel %vm3803, %v3796, %v3772
  %v3817 = vsel %vm3803, %v3798, %v3774
  %v3818 = vsel %vm3803, %v3800, %v3776
  %v3819 = vsel %vm3803, %v3802, %v3778
  %s3820 = scalar_lea.vmem %s7, 448
  %v3821 = vld [vmem:[%s3820] sm:$0xff]
  %v3822 = vld [vmem:[%s3820 + $0x8] sm:$0xff]
  %v3823 = vld [vmem:[%s3820 + $0x10] sm:$0xff]
  %v3824 = vld [vmem:[%s3820 + $0x18] sm:$0xff]
  %3826 = vset.pattern.permute.xlu0 0
  %3827 = vperm.xlu0 %3826, %v3821
  %v3828 = vpop.permute.xlu0 %3827
  %3831 = vset.pattern.permute.xlu0 0
  %3832 = vperm.xlu0 %3831, %v3822
  %v3833 = vpop.permute.xlu0 %3832
  %3836 = vset.pattern.permute.xlu0 0
  %3837 = vperm.xlu0 %3836, %v3823
  %v3838 = vpop.permute.xlu0 %3837
  %3841 = vset.pattern.permute.xlu0 0
  %3842 = vperm.xlu0 %3841, %v3824
  %v3843 = vpop.permute.xlu0 %3842
  %v3845 = vmul.f32 %v3812, %v3828
  %v3846 = vmul.f32 %v3808, %v3828
  %v3847 = vmul.f32 %v3804, %v3828
  %v3848 = vmul.f32 %v3816, %v3828
  %v3849 = vmul.f32 %v3813, %v3833
  %v3850 = vmul.f32 %v3809, %v3833
  %v3851 = vmul.f32 %v3805, %v3833
  %v3852 = vmul.f32 %v3817, %v3833
  %v3853 = vmul.f32 %v3814, %v3838
  %v3854 = vmul.f32 %v3810, %v3838
  %v3855 = vmul.f32 %v3806, %v3838
  %v3856 = vmul.f32 %v3818, %v3838
  %v3857 = vmul.f32 %v3815, %v3843
  %v3858 = vmul.f32 %v3811, %v3843
  %v3859 = vmul.f32 %v3807, %v3843
  %v3860 = vmul.f32 %v3819, %v3843
  %vm3861 = vmand %vm604, %vm2675
  %vm3862 = vmand %vm605, %vm2676
  %vm3863 = vmand %vm606, %vm2677
  %vm3864 = vmand %vm607, %vm2678
  %v3865 = vsel %vm3861, 1.0, 0.0
  %v3866 = vsel %vm3862, 1.0, 0.0
  %v3867 = vsel %vm3863, 1.0, 0.0
  %v3868 = vsel %vm3864, 1.0, 0.0
  %v3869 = vmul.f32 %v3845, %v3865
  %v3870 = vmul.f32 %v3846, %v3866
  %v3871 = vmul.f32 %v3847, %v3867
  %v3872 = vmul.f32 %v3848, %v3868
  %v3873 = vmul.f32 %v3849, %v3865
  %v3874 = vmul.f32 %v3850, %v3866
  %v3875 = vmul.f32 %v3851, %v3867
  %v3876 = vmul.f32 %v3852, %v3868
  %v3877 = vmul.f32 %v3853, %v3865
  %v3878 = vmul.f32 %v3854, %v3866
  %v3879 = vmul.f32 %v3855, %v3867
  %v3880 = vmul.f32 %v3856, %v3868
  %v3881 = vmul.f32 %v3857, %v3865
  %v3882 = vmul.f32 %v3858, %v3866
  %v3883 = vmul.f32 %v3859, %v3867
  %v3884 = vmul.f32 %v3860, %v3868
  %v3885 = vadd.f32 %v3755, %v3869
  %v3886 = vadd.f32 %v3756, %v3870
  %v3887 = vadd.f32 %v3757, %v3871
  %v3888 = vadd.f32 %v3758, %v3872
  %v3889 = vadd.f32 %v3759, %v3873
  %v3890 = vadd.f32 %v3760, %v3874
  %v3891 = vadd.f32 %v3761, %v3875
  %v3892 = vadd.f32 %v3762, %v3876
  %v3893 = vadd.f32 %v3763, %v3877
  %v3894 = vadd.f32 %v3764, %v3878
  %v3895 = vadd.f32 %v3765, %v3879
  %v3896 = vadd.f32 %v3766, %v3880
  %v3897 = vadd.f32 %v3767, %v3881
  %v3898 = vadd.f32 %v3768, %v3882
  %v3899 = vadd.f32 %v3769, %v3883
  %v3900 = vadd.f32 %v3770, %v3884
  %3901 = vrot.lane.b32.xlu0 %v1967, 114
  %v3902 = vpop.permute.xlu0 %3901
  %3903 = vrot.lane.b32.xlu0 %v1971, 114
  %v3904 = vpop.permute.xlu0 %3903
  %3905 = vrot.lane.b32.xlu0 %v1977, 114
  %v3906 = vpop.permute.xlu0 %3905
  %3907 = vrot.lane.b32.xlu0 %v1981, 114
  %v3908 = vpop.permute.xlu0 %3907
  %3909 = vrot.lane.b32.xlu0 %v1969, 114
  %v3910 = vpop.permute.xlu0 %3909
  %3911 = vrot.lane.b32.xlu0 %v1973, 114
  %v3912 = vpop.permute.xlu0 %3911
  %3913 = vrot.lane.b32.xlu0 %v1979, 114
  %v3914 = vpop.permute.xlu0 %3913
  %3915 = vrot.lane.b32.xlu0 %v1983, 114
  %v3916 = vpop.permute.xlu0 %3915
  %3917 = vrot.lane.b32.xlu0 %v2020, 114
  %v3918 = vpop.permute.xlu0 %3917
  %3919 = vrot.lane.b32.xlu0 %v2024, 114
  %v3920 = vpop.permute.xlu0 %3919
  %3921 = vrot.lane.b32.xlu0 %v2030, 114
  %v3922 = vpop.permute.xlu0 %3921
  %3923 = vrot.lane.b32.xlu0 %v2034, 114
  %v3924 = vpop.permute.xlu0 %3923
  %3925 = vrot.lane.b32.xlu0 %v2022, 114
  %v3926 = vpop.permute.xlu0 %3925
  %3927 = vrot.lane.b32.xlu0 %v2026, 114
  %v3928 = vpop.permute.xlu0 %3927
  %3929 = vrot.lane.b32.xlu0 %v2032, 114
  %v3930 = vpop.permute.xlu0 %3929
  %3931 = vrot.lane.b32.xlu0 %v2036, 114
  %v3932 = vpop.permute.xlu0 %3931
  %vm3933 = vcmp.lt.s32.totalorder %v111, 114
  %v3934 = vsel %vm3933, %v3918, %v3926
  %v3935 = vsel %vm3933, %v3920, %v3928
  %v3936 = vsel %vm3933, %v3922, %v3930
  %v3937 = vsel %vm3933, %v3924, %v3932
  %v3938 = vsel %vm3933, %v3910, %v3918
  %v3939 = vsel %vm3933, %v3912, %v3920
  %v3940 = vsel %vm3933, %v3914, %v3922
  %v3941 = vsel %vm3933, %v3916, %v3924
  %v3942 = vsel %vm3933, %v3902, %v3910
  %v3943 = vsel %vm3933, %v3904, %v3912
  %v3944 = vsel %vm3933, %v3906, %v3914
  %v3945 = vsel %vm3933, %v3908, %v3916
  %v3946 = vsel %vm3933, %v3926, %v3902
  %v3947 = vsel %vm3933, %v3928, %v3904
  %v3948 = vsel %vm3933, %v3930, %v3906
  %v3949 = vsel %vm3933, %v3932, %v3908
  %s3950 = scalar_lea.vmem %s7, 480
  %v3951 = vld [vmem:[%s3950] sm:$0xff]
  %v3952 = vld [vmem:[%s3950 + $0x8] sm:$0xff]
  %v3953 = vld [vmem:[%s3950 + $0x10] sm:$0xff]
  %v3954 = vld [vmem:[%s3950 + $0x18] sm:$0xff]
  %3956 = vset.pattern.permute.xlu0 0
  %3957 = vperm.xlu0 %3956, %v3951
  %v3958 = vpop.permute.xlu0 %3957
  %3961 = vset.pattern.permute.xlu0 0
  %3962 = vperm.xlu0 %3961, %v3952
  %v3963 = vpop.permute.xlu0 %3962
  %3966 = vset.pattern.permute.xlu0 0
  %3967 = vperm.xlu0 %3966, %v3953
  %v3968 = vpop.permute.xlu0 %3967
  %3971 = vset.pattern.permute.xlu0 0
  %3972 = vperm.xlu0 %3971, %v3954
  %v3973 = vpop.permute.xlu0 %3972
  %v3975 = vmul.f32 %v3942, %v3958
  %v3976 = vmul.f32 %v3938, %v3958
  %v3977 = vmul.f32 %v3934, %v3958
  %v3978 = vmul.f32 %v3946, %v3958
  %v3979 = vmul.f32 %v3943, %v3963
  %v3980 = vmul.f32 %v3939, %v3963
  %v3981 = vmul.f32 %v3935, %v3963
  %v3982 = vmul.f32 %v3947, %v3963
  %v3983 = vmul.f32 %v3944, %v3968
  %v3984 = vmul.f32 %v3940, %v3968
  %v3985 = vmul.f32 %v3936, %v3968
  %v3986 = vmul.f32 %v3948, %v3968
  %v3987 = vmul.f32 %v3945, %v3973
  %v3988 = vmul.f32 %v3941, %v3973
  %v3989 = vmul.f32 %v3937, %v3973
  %v3990 = vmul.f32 %v3949, %v3973
  %vm3991 = vmand %vm937, %vm2155
  %vm3992 = vmand %vm938, %vm2156
  %vm3993 = vmand %vm939, %vm2157
  %vm3994 = vmand %vm940, %vm2158
  %v3995 = vsel %vm3991, 1.0, 0.0
  %v3996 = vsel %vm3992, 1.0, 0.0
  %v3997 = vsel %vm3993, 1.0, 0.0
  %v3998 = vsel %vm3994, 1.0, 0.0
  %v3999 = vmul.f32 %v3975, %v3995
  %v4000 = vmul.f32 %v3976, %v3996
  %v4001 = vmul.f32 %v3977, %v3997
  %v4002 = vmul.f32 %v3978, %v3998
  %v4003 = vmul.f32 %v3979, %v3995
  %v4004 = vmul.f32 %v3980, %v3996
  %v4005 = vmul.f32 %v3981, %v3997
  %v4006 = vmul.f32 %v3982, %v3998
  %v4007 = vmul.f32 %v3983, %v3995
  %v4008 = vmul.f32 %v3984, %v3996
  %v4009 = vmul.f32 %v3985, %v3997
  %v4010 = vmul.f32 %v3986, %v3998
  %v4011 = vmul.f32 %v3987, %v3995
  %v4012 = vmul.f32 %v3988, %v3996
  %v4013 = vmul.f32 %v3989, %v3997
  %v4014 = vmul.f32 %v3990, %v3998
  %v4015 = vadd.f32 %v3885, %v3999
  %v4016 = vadd.f32 %v3886, %v4000
  %v4017 = vadd.f32 %v3887, %v4001
  %v4018 = vadd.f32 %v3888, %v4002
  %v4019 = vadd.f32 %v3889, %v4003
  %v4020 = vadd.f32 %v3890, %v4004
  %v4021 = vadd.f32 %v3891, %v4005
  %v4022 = vadd.f32 %v3892, %v4006
  %v4023 = vadd.f32 %v3893, %v4007
  %v4024 = vadd.f32 %v3894, %v4008
  %v4025 = vadd.f32 %v3895, %v4009
  %v4026 = vadd.f32 %v3896, %v4010
  %v4027 = vadd.f32 %v3897, %v4011
  %v4028 = vadd.f32 %v3898, %v4012
  %v4029 = vadd.f32 %v3899, %v4013
  %v4030 = vadd.f32 %v3900, %v4014
  %4031 = vrot.lane.b32.xlu0 %v1967, 113
  %v4032 = vpop.permute.xlu0 %4031
  %4033 = vrot.lane.b32.xlu0 %v1971, 113
  %v4034 = vpop.permute.xlu0 %4033
  %4035 = vrot.lane.b32.xlu0 %v1977, 113
  %v4036 = vpop.permute.xlu0 %4035
  %4037 = vrot.lane.b32.xlu0 %v1981, 113
  %v4038 = vpop.permute.xlu0 %4037
  %4039 = vrot.lane.b32.xlu0 %v1969, 113
  %v4040 = vpop.permute.xlu0 %4039
  %4041 = vrot.lane.b32.xlu0 %v1973, 113
  %v4042 = vpop.permute.xlu0 %4041
  %4043 = vrot.lane.b32.xlu0 %v1979, 113
  %v4044 = vpop.permute.xlu0 %4043
  %4045 = vrot.lane.b32.xlu0 %v1983, 113
  %v4046 = vpop.permute.xlu0 %4045
  %4047 = vrot.lane.b32.xlu0 %v2020, 113
  %v4048 = vpop.permute.xlu0 %4047
  %4049 = vrot.lane.b32.xlu0 %v2024, 113
  %v4050 = vpop.permute.xlu0 %4049
  %4051 = vrot.lane.b32.xlu0 %v2030, 113
  %v4052 = vpop.permute.xlu0 %4051
  %4053 = vrot.lane.b32.xlu0 %v2034, 113
  %v4054 = vpop.permute.xlu0 %4053
  %4055 = vrot.lane.b32.xlu0 %v2022, 113
  %v4056 = vpop.permute.xlu0 %4055
  %4057 = vrot.lane.b32.xlu0 %v2026, 113
  %v4058 = vpop.permute.xlu0 %4057
  %4059 = vrot.lane.b32.xlu0 %v2032, 113
  %v4060 = vpop.permute.xlu0 %4059
  %4061 = vrot.lane.b32.xlu0 %v2036, 113
  %v4062 = vpop.permute.xlu0 %4061
  %v4063 = vsel %vm973, %v4048, %v4056
  %v4064 = vsel %vm973, %v4050, %v4058
  %v4065 = vsel %vm973, %v4052, %v4060
  %v4066 = vsel %vm973, %v4054, %v4062
  %v4067 = vsel %vm973, %v4040, %v4048
  %v4068 = vsel %vm973, %v4042, %v4050
  %v4069 = vsel %vm973, %v4044, %v4052
  %v4070 = vsel %vm973, %v4046, %v4054
  %v4071 = vsel %vm973, %v4032, %v4040
  %v4072 = vsel %vm973, %v4034, %v4042
  %v4073 = vsel %vm973, %v4036, %v4044
  %v4074 = vsel %vm973, %v4038, %v4046
  %v4075 = vsel %vm973, %v4056, %v4032
  %v4076 = vsel %vm973, %v4058, %v4034
  %v4077 = vsel %vm973, %v4060, %v4036
  %v4078 = vsel %vm973, %v4062, %v4038
  %s4079 = scalar_lea.vmem %s7, 512
  %v4080 = vld [vmem:[%s4079] sm:$0xff]
  %v4081 = vld [vmem:[%s4079 + $0x8] sm:$0xff]
  %v4082 = vld [vmem:[%s4079 + $0x10] sm:$0xff]
  %v4083 = vld [vmem:[%s4079 + $0x18] sm:$0xff]
  %4085 = vset.pattern.permute.xlu0 0
  %4086 = vperm.xlu0 %4085, %v4080
  %v4087 = vpop.permute.xlu0 %4086
  %4090 = vset.pattern.permute.xlu0 0
  %4091 = vperm.xlu0 %4090, %v4081
  %v4092 = vpop.permute.xlu0 %4091
  %4095 = vset.pattern.permute.xlu0 0
  %4096 = vperm.xlu0 %4095, %v4082
  %v4097 = vpop.permute.xlu0 %4096
  %4100 = vset.pattern.permute.xlu0 0
  %4101 = vperm.xlu0 %4100, %v4083
  %v4102 = vpop.permute.xlu0 %4101
  %v4104 = vmul.f32 %v4071, %v4087
  %v4105 = vmul.f32 %v4067, %v4087
  %v4106 = vmul.f32 %v4063, %v4087
  %v4107 = vmul.f32 %v4075, %v4087
  %v4108 = vmul.f32 %v4072, %v4092
  %v4109 = vmul.f32 %v4068, %v4092
  %v4110 = vmul.f32 %v4064, %v4092
  %v4111 = vmul.f32 %v4076, %v4092
  %v4112 = vmul.f32 %v4073, %v4097
  %v4113 = vmul.f32 %v4069, %v4097
  %v4114 = vmul.f32 %v4065, %v4097
  %v4115 = vmul.f32 %v4077, %v4097
  %v4116 = vmul.f32 %v4074, %v4102
  %v4117 = vmul.f32 %v4070, %v4102
  %v4118 = vmul.f32 %v4066, %v4102
  %v4119 = vmul.f32 %v4078, %v4102
  %v4120 = vmul.f32 %v4104, %v1035
  %v4121 = vmul.f32 %v4105, %v1036
  %v4122 = vmul.f32 %v4106, %v1037
  %v4123 = vmul.f32 %v4107, %v1038
  %v4124 = vmul.f32 %v4108, %v1035
  %v4125 = vmul.f32 %v4109, %v1036
  %v4126 = vmul.f32 %v4110, %v1037
  %v4127 = vmul.f32 %v4111, %v1038
  %v4128 = vmul.f32 %v4112, %v1035
  %v4129 = vmul.f32 %v4113, %v1036
  %v4130 = vmul.f32 %v4114, %v1037
  %v4131 = vmul.f32 %v4115, %v1038
  %v4132 = vmul.f32 %v4116, %v1035
  %v4133 = vmul.f32 %v4117, %v1036
  %v4134 = vmul.f32 %v4118, %v1037
  %v4135 = vmul.f32 %v4119, %v1038
  %v4136 = vadd.f32 %v4015, %v4120
  %v4137 = vadd.f32 %v4016, %v4121
  %v4138 = vadd.f32 %v4017, %v4122
  %v4139 = vadd.f32 %v4018, %v4123
  %v4140 = vadd.f32 %v4019, %v4124
  %v4141 = vadd.f32 %v4020, %v4125
  %v4142 = vadd.f32 %v4021, %v4126
  %v4143 = vadd.f32 %v4022, %v4127
  %v4144 = vadd.f32 %v4023, %v4128
  %v4145 = vadd.f32 %v4024, %v4129
  %v4146 = vadd.f32 %v4025, %v4130
  %v4147 = vadd.f32 %v4026, %v4131
  %v4148 = vadd.f32 %v4027, %v4132
  %v4149 = vadd.f32 %v4028, %v4133
  %v4150 = vadd.f32 %v4029, %v4134
  %v4151 = vadd.f32 %v4030, %v4135
  %4152 = vrot.lane.b32.xlu0 %v1967, 112
  %v4153 = vpop.permute.xlu0 %4152
  %4154 = vrot.lane.b32.xlu0 %v1971, 112
  %v4155 = vpop.permute.xlu0 %4154
  %4156 = vrot.lane.b32.xlu0 %v1977, 112
  %v4157 = vpop.permute.xlu0 %4156
  %4158 = vrot.lane.b32.xlu0 %v1981, 112
  %v4159 = vpop.permute.xlu0 %4158
  %4160 = vrot.lane.b32.xlu0 %v1969, 112
  %v4161 = vpop.permute.xlu0 %4160
  %4162 = vrot.lane.b32.xlu0 %v1973, 112
  %v4163 = vpop.permute.xlu0 %4162
  %4164 = vrot.lane.b32.xlu0 %v1979, 112
  %v4165 = vpop.permute.xlu0 %4164
  %4166 = vrot.lane.b32.xlu0 %v1983, 112
  %v4167 = vpop.permute.xlu0 %4166
  %4168 = vrot.lane.b32.xlu0 %v2020, 112
  %v4169 = vpop.permute.xlu0 %4168
  %4170 = vrot.lane.b32.xlu0 %v2024, 112
  %v4171 = vpop.permute.xlu0 %4170
  %4172 = vrot.lane.b32.xlu0 %v2030, 112
  %v4173 = vpop.permute.xlu0 %4172
  %4174 = vrot.lane.b32.xlu0 %v2034, 112
  %v4175 = vpop.permute.xlu0 %4174
  %4176 = vrot.lane.b32.xlu0 %v2022, 112
  %v4177 = vpop.permute.xlu0 %4176
  %4178 = vrot.lane.b32.xlu0 %v2026, 112
  %v4179 = vpop.permute.xlu0 %4178
  %4180 = vrot.lane.b32.xlu0 %v2032, 112
  %v4181 = vpop.permute.xlu0 %4180
  %4182 = vrot.lane.b32.xlu0 %v2036, 112
  %v4183 = vpop.permute.xlu0 %4182
  %v4184 = vsel %vm1103, %v4169, %v4177
  %v4185 = vsel %vm1103, %v4171, %v4179
  %v4186 = vsel %vm1103, %v4173, %v4181
  %v4187 = vsel %vm1103, %v4175, %v4183
  %v4188 = vsel %vm1103, %v4161, %v4169
  %v4189 = vsel %vm1103, %v4163, %v4171
  %v4190 = vsel %vm1103, %v4165, %v4173
  %v4191 = vsel %vm1103, %v4167, %v4175
  %v4192 = vsel %vm1103, %v4153, %v4161
  %v4193 = vsel %vm1103, %v4155, %v4163
  %v4194 = vsel %vm1103, %v4157, %v4165
  %v4195 = vsel %vm1103, %v4159, %v4167
  %v4196 = vsel %vm1103, %v4177, %v4153
  %v4197 = vsel %vm1103, %v4179, %v4155
  %v4198 = vsel %vm1103, %v4181, %v4157
  %v4199 = vsel %vm1103, %v4183, %v4159
  %s4200 = scalar_lea.vmem %s7, 544
  %v4201 = vld [vmem:[%s4200] sm:$0xff]
  %v4202 = vld [vmem:[%s4200 + $0x8] sm:$0xff]
  %v4203 = vld [vmem:[%s4200 + $0x10] sm:$0xff]
  %v4204 = vld [vmem:[%s4200 + $0x18] sm:$0xff]
  %4206 = vset.pattern.permute.xlu0 0
  %4207 = vperm.xlu0 %4206, %v4201
  %v4208 = vpop.permute.xlu0 %4207
  %4211 = vset.pattern.permute.xlu0 0
  %4212 = vperm.xlu0 %4211, %v4202
  %v4213 = vpop.permute.xlu0 %4212
  %4216 = vset.pattern.permute.xlu0 0
  %4217 = vperm.xlu0 %4216, %v4203
  %v4218 = vpop.permute.xlu0 %4217
  %4221 = vset.pattern.permute.xlu0 0
  %4222 = vperm.xlu0 %4221, %v4204
  %v4223 = vpop.permute.xlu0 %4222
  %v4225 = vmul.f32 %v4192, %v4208
  %v4226 = vmul.f32 %v4188, %v4208
  %v4227 = vmul.f32 %v4184, %v4208
  %v4228 = vmul.f32 %v4196, %v4208
  %v4229 = vmul.f32 %v4193, %v4213
  %v4230 = vmul.f32 %v4189, %v4213
  %v4231 = vmul.f32 %v4185, %v4213
  %v4232 = vmul.f32 %v4197, %v4213
  %v4233 = vmul.f32 %v4194, %v4218
  %v4234 = vmul.f32 %v4190, %v4218
  %v4235 = vmul.f32 %v4186, %v4218
  %v4236 = vmul.f32 %v4198, %v4218
  %v4237 = vmul.f32 %v4195, %v4223
  %v4238 = vmul.f32 %v4191, %v4223
  %v4239 = vmul.f32 %v4187, %v4223
  %v4240 = vmul.f32 %v4199, %v4223
  %v4241 = vmul.f32 %v4225, %v1165
  %v4242 = vmul.f32 %v4226, %v1166
  %v4243 = vmul.f32 %v4227, %v1167
  %v4244 = vmul.f32 %v4228, %v1168
  %v4245 = vmul.f32 %v4229, %v1165
  %v4246 = vmul.f32 %v4230, %v1166
  %v4247 = vmul.f32 %v4231, %v1167
  %v4248 = vmul.f32 %v4232, %v1168
  %v4249 = vmul.f32 %v4233, %v1165
  %v4250 = vmul.f32 %v4234, %v1166
  %v4251 = vmul.f32 %v4235, %v1167
  %v4252 = vmul.f32 %v4236, %v1168
  %v4253 = vmul.f32 %v4237, %v1165
  %v4254 = vmul.f32 %v4238, %v1166
  %v4255 = vmul.f32 %v4239, %v1167
  %v4256 = vmul.f32 %v4240, %v1168
  %v4257 = vadd.f32 %v4136, %v4241
  %v4258 = vadd.f32 %v4137, %v4242
  %v4259 = vadd.f32 %v4138, %v4243
  %v4260 = vadd.f32 %v4139, %v4244
  %v4261 = vadd.f32 %v4140, %v4245
  %v4262 = vadd.f32 %v4141, %v4246
  %v4263 = vadd.f32 %v4142, %v4247
  %v4264 = vadd.f32 %v4143, %v4248
  %v4265 = vadd.f32 %v4144, %v4249
  %v4266 = vadd.f32 %v4145, %v4250
  %v4267 = vadd.f32 %v4146, %v4251
  %v4268 = vadd.f32 %v4147, %v4252
  %v4269 = vadd.f32 %v4148, %v4253
  %v4270 = vadd.f32 %v4149, %v4254
  %v4271 = vadd.f32 %v4150, %v4255
  %v4272 = vadd.f32 %v4151, %v4256
  %4273 = vrot.lane.b32.xlu0 %v1967, 111
  %v4274 = vpop.permute.xlu0 %4273
  %4275 = vrot.lane.b32.xlu0 %v1971, 111
  %v4276 = vpop.permute.xlu0 %4275
  %4277 = vrot.lane.b32.xlu0 %v1977, 111
  %v4278 = vpop.permute.xlu0 %4277
  %4279 = vrot.lane.b32.xlu0 %v1981, 111
  %v4280 = vpop.permute.xlu0 %4279
  %4281 = vrot.lane.b32.xlu0 %v1969, 111
  %v4282 = vpop.permute.xlu0 %4281
  %4283 = vrot.lane.b32.xlu0 %v1973, 111
  %v4284 = vpop.permute.xlu0 %4283
  %4285 = vrot.lane.b32.xlu0 %v1979, 111
  %v4286 = vpop.permute.xlu0 %4285
  %4287 = vrot.lane.b32.xlu0 %v1983, 111
  %v4288 = vpop.permute.xlu0 %4287
  %4289 = vrot.lane.b32.xlu0 %v2020, 111
  %v4290 = vpop.permute.xlu0 %4289
  %4291 = vrot.lane.b32.xlu0 %v2024, 111
  %v4292 = vpop.permute.xlu0 %4291
  %4293 = vrot.lane.b32.xlu0 %v2030, 111
  %v4294 = vpop.permute.xlu0 %4293
  %4295 = vrot.lane.b32.xlu0 %v2034, 111
  %v4296 = vpop.permute.xlu0 %4295
  %4297 = vrot.lane.b32.xlu0 %v2022, 111
  %v4298 = vpop.permute.xlu0 %4297
  %4299 = vrot.lane.b32.xlu0 %v2026, 111
  %v4300 = vpop.permute.xlu0 %4299
  %4301 = vrot.lane.b32.xlu0 %v2032, 111
  %v4302 = vpop.permute.xlu0 %4301
  %4303 = vrot.lane.b32.xlu0 %v2036, 111
  %v4304 = vpop.permute.xlu0 %4303
  %v4305 = vsel %vm1233, %v4290, %v4298
  %v4306 = vsel %vm1233, %v4292, %v4300
  %v4307 = vsel %vm1233, %v4294, %v4302
  %v4308 = vsel %vm1233, %v4296, %v4304
  %v4309 = vsel %vm1233, %v4282, %v4290
  %v4310 = vsel %vm1233, %v4284, %v4292
  %v4311 = vsel %vm1233, %v4286, %v4294
  %v4312 = vsel %vm1233, %v4288, %v4296
  %v4313 = vsel %vm1233, %v4274, %v4282
  %v4314 = vsel %vm1233, %v4276, %v4284
  %v4315 = vsel %vm1233, %v4278, %v4286
  %v4316 = vsel %vm1233, %v4280, %v4288
  %v4317 = vsel %vm1233, %v4298, %v4274
  %v4318 = vsel %vm1233, %v4300, %v4276
  %v4319 = vsel %vm1233, %v4302, %v4278
  %v4320 = vsel %vm1233, %v4304, %v4280
  %s4321 = scalar_lea.vmem %s7, 576
  %v4322 = vld [vmem:[%s4321] sm:$0xff]
  %v4323 = vld [vmem:[%s4321 + $0x8] sm:$0xff]
  %v4324 = vld [vmem:[%s4321 + $0x10] sm:$0xff]
  %v4325 = vld [vmem:[%s4321 + $0x18] sm:$0xff]
  %4327 = vset.pattern.permute.xlu0 0
  %4328 = vperm.xlu0 %4327, %v4322
  %v4329 = vpop.permute.xlu0 %4328
  %4332 = vset.pattern.permute.xlu0 0
  %4333 = vperm.xlu0 %4332, %v4323
  %v4334 = vpop.permute.xlu0 %4333
  %4337 = vset.pattern.permute.xlu0 0
  %4338 = vperm.xlu0 %4337, %v4324
  %v4339 = vpop.permute.xlu0 %4338
  %4342 = vset.pattern.permute.xlu0 0
  %4343 = vperm.xlu0 %4342, %v4325
  %v4344 = vpop.permute.xlu0 %4343
  %v4346 = vmul.f32 %v4313, %v4329
  %v4347 = vmul.f32 %v4309, %v4329
  %v4348 = vmul.f32 %v4305, %v4329
  %v4349 = vmul.f32 %v4317, %v4329
  %v4350 = vmul.f32 %v4314, %v4334
  %v4351 = vmul.f32 %v4310, %v4334
  %v4352 = vmul.f32 %v4306, %v4334
  %v4353 = vmul.f32 %v4318, %v4334
  %v4354 = vmul.f32 %v4315, %v4339
  %v4355 = vmul.f32 %v4311, %v4339
  %v4356 = vmul.f32 %v4307, %v4339
  %v4357 = vmul.f32 %v4319, %v4339
  %v4358 = vmul.f32 %v4316, %v4344
  %v4359 = vmul.f32 %v4312, %v4344
  %v4360 = vmul.f32 %v4308, %v4344
  %v4361 = vmul.f32 %v4320, %v4344
  %v4362 = vmul.f32 %v4346, %v1295
  %v4363 = vmul.f32 %v4347, %v1296
  %v4364 = vmul.f32 %v4348, %v1297
  %v4365 = vmul.f32 %v4349, %v1298
  %v4366 = vmul.f32 %v4350, %v1295
  %v4367 = vmul.f32 %v4351, %v1296
  %v4368 = vmul.f32 %v4352, %v1297
  %v4369 = vmul.f32 %v4353, %v1298
  %v4370 = vmul.f32 %v4354, %v1295
  %v4371 = vmul.f32 %v4355, %v1296
  %v4372 = vmul.f32 %v4356, %v1297
  %v4373 = vmul.f32 %v4357, %v1298
  %v4374 = vmul.f32 %v4358, %v1295
  %v4375 = vmul.f32 %v4359, %v1296
  %v4376 = vmul.f32 %v4360, %v1297
  %v4377 = vmul.f32 %v4361, %v1298
  %v4378 = vadd.f32 %v4257, %v4362
  %v4379 = vadd.f32 %v4258, %v4363
  %v4380 = vadd.f32 %v4259, %v4364
  %v4381 = vadd.f32 %v4260, %v4365
  %v4382 = vadd.f32 %v4261, %v4366
  %v4383 = vadd.f32 %v4262, %v4367
  %v4384 = vadd.f32 %v4263, %v4368
  %v4385 = vadd.f32 %v4264, %v4369
  %v4386 = vadd.f32 %v4265, %v4370
  %v4387 = vadd.f32 %v4266, %v4371
  %v4388 = vadd.f32 %v4267, %v4372
  %v4389 = vadd.f32 %v4268, %v4373
  %v4390 = vadd.f32 %v4269, %v4374
  %v4391 = vadd.f32 %v4270, %v4375
  %v4392 = vadd.f32 %v4271, %v4376
  %v4393 = vadd.f32 %v4272, %v4377
  %4394 = vrot.lane.b32.xlu0 %v1967, 110
  %v4395 = vpop.permute.xlu0 %4394
  %4396 = vrot.lane.b32.xlu0 %v1971, 110
  %v4397 = vpop.permute.xlu0 %4396
  %4398 = vrot.lane.b32.xlu0 %v1977, 110
  %v4399 = vpop.permute.xlu0 %4398
  %4400 = vrot.lane.b32.xlu0 %v1981, 110
  %v4401 = vpop.permute.xlu0 %4400
  %4402 = vrot.lane.b32.xlu0 %v1969, 110
  %v4403 = vpop.permute.xlu0 %4402
  %4404 = vrot.lane.b32.xlu0 %v1973, 110
  %v4405 = vpop.permute.xlu0 %4404
  %4406 = vrot.lane.b32.xlu0 %v1979, 110
  %v4407 = vpop.permute.xlu0 %4406
  %4408 = vrot.lane.b32.xlu0 %v1983, 110
  %v4409 = vpop.permute.xlu0 %4408
  %4410 = vrot.lane.b32.xlu0 %v2020, 110
  %v4411 = vpop.permute.xlu0 %4410
  %4412 = vrot.lane.b32.xlu0 %v2024, 110
  %v4413 = vpop.permute.xlu0 %4412
  %4414 = vrot.lane.b32.xlu0 %v2030, 110
  %v4415 = vpop.permute.xlu0 %4414
  %4416 = vrot.lane.b32.xlu0 %v2034, 110
  %v4417 = vpop.permute.xlu0 %4416
  %4418 = vrot.lane.b32.xlu0 %v2022, 110
  %v4419 = vpop.permute.xlu0 %4418
  %4420 = vrot.lane.b32.xlu0 %v2026, 110
  %v4421 = vpop.permute.xlu0 %4420
  %4422 = vrot.lane.b32.xlu0 %v2032, 110
  %v4423 = vpop.permute.xlu0 %4422
  %4424 = vrot.lane.b32.xlu0 %v2036, 110
  %v4425 = vpop.permute.xlu0 %4424
  %vm4426 = vcmp.lt.s32.totalorder %v111, 110
  %v4427 = vsel %vm4426, %v4411, %v4419
  %v4428 = vsel %vm4426, %v4413, %v4421
  %v4429 = vsel %vm4426, %v4415, %v4423
  %v4430 = vsel %vm4426, %v4417, %v4425
  %v4431 = vsel %vm4426, %v4403, %v4411
  %v4432 = vsel %vm4426, %v4405, %v4413
  %v4433 = vsel %vm4426, %v4407, %v4415
  %v4434 = vsel %vm4426, %v4409, %v4417
  %v4435 = vsel %vm4426, %v4395, %v4403
  %v4436 = vsel %vm4426, %v4397, %v4405
  %v4437 = vsel %vm4426, %v4399, %v4407
  %v4438 = vsel %vm4426, %v4401, %v4409
  %v4439 = vsel %vm4426, %v4419, %v4395
  %v4440 = vsel %vm4426, %v4421, %v4397
  %v4441 = vsel %vm4426, %v4423, %v4399
  %v4442 = vsel %vm4426, %v4425, %v4401
  %s4443 = scalar_lea.vmem %s7, 608
  %v4444 = vld [vmem:[%s4443] sm:$0xff]
  %v4445 = vld [vmem:[%s4443 + $0x8] sm:$0xff]
  %v4446 = vld [vmem:[%s4443 + $0x10] sm:$0xff]
  %v4447 = vld [vmem:[%s4443 + $0x18] sm:$0xff]
  %4449 = vset.pattern.permute.xlu0 0
  %4450 = vperm.xlu0 %4449, %v4444
  %v4451 = vpop.permute.xlu0 %4450
  %4454 = vset.pattern.permute.xlu0 0
  %4455 = vperm.xlu0 %4454, %v4445
  %v4456 = vpop.permute.xlu0 %4455
  %4459 = vset.pattern.permute.xlu0 0
  %4460 = vperm.xlu0 %4459, %v4446
  %v4461 = vpop.permute.xlu0 %4460
  %4464 = vset.pattern.permute.xlu0 0
  %4465 = vperm.xlu0 %4464, %v4447
  %v4466 = vpop.permute.xlu0 %4465
  %v4468 = vmul.f32 %v4435, %v4451
  %v4469 = vmul.f32 %v4431, %v4451
  %v4470 = vmul.f32 %v4427, %v4451
  %v4471 = vmul.f32 %v4439, %v4451
  %v4472 = vmul.f32 %v4436, %v4456
  %v4473 = vmul.f32 %v4432, %v4456
  %v4474 = vmul.f32 %v4428, %v4456
  %v4475 = vmul.f32 %v4440, %v4456
  %v4476 = vmul.f32 %v4437, %v4461
  %v4477 = vmul.f32 %v4433, %v4461
  %v4478 = vmul.f32 %v4429, %v4461
  %v4479 = vmul.f32 %v4441, %v4461
  %v4480 = vmul.f32 %v4438, %v4466
  %v4481 = vmul.f32 %v4434, %v4466
  %v4482 = vmul.f32 %v4430, %v4466
  %v4483 = vmul.f32 %v4442, %v4466
  %vm4484 = vmand %vm937, %vm2675
  %vm4485 = vmand %vm938, %vm2676
  %vm4486 = vmand %vm939, %vm2677
  %vm4487 = vmand %vm940, %vm2678
  %v4488 = vsel %vm4484, 1.0, 0.0
  %v4489 = vsel %vm4485, 1.0, 0.0
  %v4490 = vsel %vm4486, 1.0, 0.0
  %v4491 = vsel %vm4487, 1.0, 0.0
  %v4492 = vmul.f32 %v4468, %v4488
  %v4493 = vmul.f32 %v4469, %v4489
  %v4494 = vmul.f32 %v4470, %v4490
  %v4495 = vmul.f32 %v4471, %v4491
  %v4496 = vmul.f32 %v4472, %v4488
  %v4497 = vmul.f32 %v4473, %v4489
  %v4498 = vmul.f32 %v4474, %v4490
  %v4499 = vmul.f32 %v4475, %v4491
  %v4500 = vmul.f32 %v4476, %v4488
  %v4501 = vmul.f32 %v4477, %v4489
  %v4502 = vmul.f32 %v4478, %v4490
  %v4503 = vmul.f32 %v4479, %v4491
  %v4504 = vmul.f32 %v4480, %v4488
  %v4505 = vmul.f32 %v4481, %v4489
  %v4506 = vmul.f32 %v4482, %v4490
  %v4507 = vmul.f32 %v4483, %v4491
  %v4508 = vadd.f32 %v4378, %v4492
  %v4509 = vadd.f32 %v4379, %v4493
  %v4510 = vadd.f32 %v4380, %v4494
  %v4511 = vadd.f32 %v4381, %v4495
  %v4512 = vadd.f32 %v4382, %v4496
  %v4513 = vadd.f32 %v4383, %v4497
  %v4514 = vadd.f32 %v4384, %v4498
  %v4515 = vadd.f32 %v4385, %v4499
  %v4516 = vadd.f32 %v4386, %v4500
  %v4517 = vadd.f32 %v4387, %v4501
  %v4518 = vadd.f32 %v4388, %v4502
  %v4519 = vadd.f32 %v4389, %v4503
  %v4520 = vadd.f32 %v4390, %v4504
  %v4521 = vadd.f32 %v4391, %v4505
  %v4522 = vadd.f32 %v4392, %v4506
  %v4523 = vadd.f32 %v4393, %v4507
  %v4524 = vadd.s32 %v159, 2
  %v4525 = vadd.s32 %v160, 2
  %v4526 = vadd.s32 %v161, 2
  %v4527 = vadd.s32 %v162, 2
  %vm4528 = vcmp.ge.s32.totalorder %v4524, 0
  %vm4529 = vcmp.ge.s32.totalorder %v4525, 0
  %vm4530 = vcmp.ge.s32.totalorder %v4526, 0
  %vm4531 = vcmp.ge.s32.totalorder %v4527, 0
  %vm4532 = vcmp.lt.s32.totalorder %v4524, 16
  %vm4533 = vcmp.lt.s32.totalorder %v4525, 16
  %vm4534 = vcmp.lt.s32.totalorder %v4526, 16
  %vm4535 = vcmp.lt.s32.totalorder %v4527, 16
  %vm4536 = vmand %vm4528, %vm4532
  %vm4537 = vmand %vm4529, %vm4533
  %vm4538 = vmand %vm4530, %vm4534
  %vm4539 = vmand %vm4531, %vm4535
  %4540 = vrot.lane.b32.xlu0 %v1967, 98
  %v4541 = vpop.permute.xlu0 %4540
  %4542 = vrot.lane.b32.xlu0 %v1971, 98
  %v4543 = vpop.permute.xlu0 %4542
  %4544 = vrot.lane.b32.xlu0 %v1977, 98
  %v4545 = vpop.permute.xlu0 %4544
  %4546 = vrot.lane.b32.xlu0 %v1981, 98
  %v4547 = vpop.permute.xlu0 %4546
  %4548 = vrot.lane.b32.xlu0 %v1969, 98
  %v4549 = vpop.permute.xlu0 %4548
  %4550 = vrot.lane.b32.xlu0 %v1973, 98
  %v4551 = vpop.permute.xlu0 %4550
  %4552 = vrot.lane.b32.xlu0 %v1979, 98
  %v4553 = vpop.permute.xlu0 %4552
  %4554 = vrot.lane.b32.xlu0 %v1983, 98
  %v4555 = vpop.permute.xlu0 %4554
  %4556 = vrot.lane.b32.xlu0 %v2020, 98
  %v4557 = vpop.permute.xlu0 %4556
  %4558 = vrot.lane.b32.xlu0 %v2024, 98
  %v4559 = vpop.permute.xlu0 %4558
  %4560 = vrot.lane.b32.xlu0 %v2030, 98
  %v4561 = vpop.permute.xlu0 %4560
  %4562 = vrot.lane.b32.xlu0 %v2034, 98
  %v4563 = vpop.permute.xlu0 %4562
  %4564 = vrot.lane.b32.xlu0 %v2022, 98
  %v4565 = vpop.permute.xlu0 %4564
  %4566 = vrot.lane.b32.xlu0 %v2026, 98
  %v4567 = vpop.permute.xlu0 %4566
  %4568 = vrot.lane.b32.xlu0 %v2032, 98
  %v4569 = vpop.permute.xlu0 %4568
  %4570 = vrot.lane.b32.xlu0 %v2036, 98
  %v4571 = vpop.permute.xlu0 %4570
  %vm4572 = vcmp.lt.s32.totalorder %v111, 98
  %v4573 = vsel %vm4572, %v4557, %v4565
  %v4574 = vsel %vm4572, %v4559, %v4567
  %v4575 = vsel %vm4572, %v4561, %v4569
  %v4576 = vsel %vm4572, %v4563, %v4571
  %v4577 = vsel %vm4572, %v4549, %v4557
  %v4578 = vsel %vm4572, %v4551, %v4559
  %v4579 = vsel %vm4572, %v4553, %v4561
  %v4580 = vsel %vm4572, %v4555, %v4563
  %v4581 = vsel %vm4572, %v4541, %v4549
  %v4582 = vsel %vm4572, %v4543, %v4551
  %v4583 = vsel %vm4572, %v4545, %v4553
  %v4584 = vsel %vm4572, %v4547, %v4555
  %v4585 = vsel %vm4572, %v4565, %v4541
  %v4586 = vsel %vm4572, %v4567, %v4543
  %v4587 = vsel %vm4572, %v4569, %v4545
  %v4588 = vsel %vm4572, %v4571, %v4547
  %s4589 = scalar_lea.vmem %s7, 640
  %v4590 = vld [vmem:[%s4589] sm:$0xff]
  %v4591 = vld [vmem:[%s4589 + $0x8] sm:$0xff]
  %v4592 = vld [vmem:[%s4589 + $0x10] sm:$0xff]
  %v4593 = vld [vmem:[%s4589 + $0x18] sm:$0xff]
  %4595 = vset.pattern.permute.xlu0 0
  %4596 = vperm.xlu0 %4595, %v4590
  %v4597 = vpop.permute.xlu0 %4596
  %4600 = vset.pattern.permute.xlu0 0
  %4601 = vperm.xlu0 %4600, %v4591
  %v4602 = vpop.permute.xlu0 %4601
  %4605 = vset.pattern.permute.xlu0 0
  %4606 = vperm.xlu0 %4605, %v4592
  %v4607 = vpop.permute.xlu0 %4606
  %4610 = vset.pattern.permute.xlu0 0
  %4611 = vperm.xlu0 %4610, %v4593
  %v4612 = vpop.permute.xlu0 %4611
  %v4614 = vmul.f32 %v4581, %v4597
  %v4615 = vmul.f32 %v4577, %v4597
  %v4616 = vmul.f32 %v4573, %v4597
  %v4617 = vmul.f32 %v4585, %v4597
  %v4618 = vmul.f32 %v4582, %v4602
  %v4619 = vmul.f32 %v4578, %v4602
  %v4620 = vmul.f32 %v4574, %v4602
  %v4621 = vmul.f32 %v4586, %v4602
  %v4622 = vmul.f32 %v4583, %v4607
  %v4623 = vmul.f32 %v4579, %v4607
  %v4624 = vmul.f32 %v4575, %v4607
  %v4625 = vmul.f32 %v4587, %v4607
  %v4626 = vmul.f32 %v4584, %v4612
  %v4627 = vmul.f32 %v4580, %v4612
  %v4628 = vmul.f32 %v4576, %v4612
  %v4629 = vmul.f32 %v4588, %v4612
  %vm4630 = vmand %vm4536, %vm2155
  %vm4631 = vmand %vm4537, %vm2156
  %vm4632 = vmand %vm4538, %vm2157
  %vm4633 = vmand %vm4539, %vm2158
  %v4634 = vsel %vm4630, 1.0, 0.0
  %v4635 = vsel %vm4631, 1.0, 0.0
  %v4636 = vsel %vm4632, 1.0, 0.0
  %v4637 = vsel %vm4633, 1.0, 0.0
  %v4638 = vmul.f32 %v4614, %v4634
  %v4639 = vmul.f32 %v4615, %v4635
  %v4640 = vmul.f32 %v4616, %v4636
  %v4641 = vmul.f32 %v4617, %v4637
  %v4642 = vmul.f32 %v4618, %v4634
  %v4643 = vmul.f32 %v4619, %v4635
  %v4644 = vmul.f32 %v4620, %v4636
  %v4645 = vmul.f32 %v4621, %v4637
  %v4646 = vmul.f32 %v4622, %v4634
  %v4647 = vmul.f32 %v4623, %v4635
  %v4648 = vmul.f32 %v4624, %v4636
  %v4649 = vmul.f32 %v4625, %v4637
  %v4650 = vmul.f32 %v4626, %v4634
  %v4651 = vmul.f32 %v4627, %v4635
  %v4652 = vmul.f32 %v4628, %v4636
  %v4653 = vmul.f32 %v4629, %v4637
  %v4654 = vadd.f32 %v4508, %v4638
  %v4655 = vadd.f32 %v4509, %v4639
  %v4656 = vadd.f32 %v4510, %v4640
  %v4657 = vadd.f32 %v4511, %v4641
  %v4658 = vadd.f32 %v4512, %v4642
  %v4659 = vadd.f32 %v4513, %v4643
  %v4660 = vadd.f32 %v4514, %v4644
  %v4661 = vadd.f32 %v4515, %v4645
  %v4662 = vadd.f32 %v4516, %v4646
  %v4663 = vadd.f32 %v4517, %v4647
  %v4664 = vadd.f32 %v4518, %v4648
  %v4665 = vadd.f32 %v4519, %v4649
  %v4666 = vadd.f32 %v4520, %v4650
  %v4667 = vadd.f32 %v4521, %v4651
  %v4668 = vadd.f32 %v4522, %v4652
  %v4669 = vadd.f32 %v4523, %v4653
  %4670 = vrot.lane.b32.xlu0 %v1967, 97
  %v4671 = vpop.permute.xlu0 %4670
  %4672 = vrot.lane.b32.xlu0 %v1971, 97
  %v4673 = vpop.permute.xlu0 %4672
  %4674 = vrot.lane.b32.xlu0 %v1977, 97
  %v4675 = vpop.permute.xlu0 %4674
  %4676 = vrot.lane.b32.xlu0 %v1981, 97
  %v4677 = vpop.permute.xlu0 %4676
  %4678 = vrot.lane.b32.xlu0 %v1969, 97
  %v4679 = vpop.permute.xlu0 %4678
  %4680 = vrot.lane.b32.xlu0 %v1973, 97
  %v4681 = vpop.permute.xlu0 %4680
  %4682 = vrot.lane.b32.xlu0 %v1979, 97
  %v4683 = vpop.permute.xlu0 %4682
  %4684 = vrot.lane.b32.xlu0 %v1983, 97
  %v4685 = vpop.permute.xlu0 %4684
  %4686 = vrot.lane.b32.xlu0 %v2020, 97
  %v4687 = vpop.permute.xlu0 %4686
  %4688 = vrot.lane.b32.xlu0 %v2024, 97
  %v4689 = vpop.permute.xlu0 %4688
  %4690 = vrot.lane.b32.xlu0 %v2030, 97
  %v4691 = vpop.permute.xlu0 %4690
  %4692 = vrot.lane.b32.xlu0 %v2034, 97
  %v4693 = vpop.permute.xlu0 %4692
  %4694 = vrot.lane.b32.xlu0 %v2022, 97
  %v4695 = vpop.permute.xlu0 %4694
  %4696 = vrot.lane.b32.xlu0 %v2026, 97
  %v4697 = vpop.permute.xlu0 %4696
  %4698 = vrot.lane.b32.xlu0 %v2032, 97
  %v4699 = vpop.permute.xlu0 %4698
  %4700 = vrot.lane.b32.xlu0 %v2036, 97
  %v4701 = vpop.permute.xlu0 %4700
  %vm4702 = vcmp.lt.s32.totalorder %v111, 97
  %v4703 = vsel %vm4702, %v4687, %v4695
  %v4704 = vsel %vm4702, %v4689, %v4697
  %v4705 = vsel %vm4702, %v4691, %v4699
  %v4706 = vsel %vm4702, %v4693, %v4701
  %v4707 = vsel %vm4702, %v4679, %v4687
  %v4708 = vsel %vm4702, %v4681, %v4689
  %v4709 = vsel %vm4702, %v4683, %v4691
  %v4710 = vsel %vm4702, %v4685, %v4693
  %v4711 = vsel %vm4702, %v4671, %v4679
  %v4712 = vsel %vm4702, %v4673, %v4681
  %v4713 = vsel %vm4702, %v4675, %v4683
  %v4714 = vsel %vm4702, %v4677, %v4685
  %v4715 = vsel %vm4702, %v4695, %v4671
  %v4716 = vsel %vm4702, %v4697, %v4673
  %v4717 = vsel %vm4702, %v4699, %v4675
  %v4718 = vsel %vm4702, %v4701, %v4677
  %s4719 = scalar_lea.vmem %s7, 672
  %v4720 = vld [vmem:[%s4719] sm:$0xff]
  %v4721 = vld [vmem:[%s4719 + $0x8] sm:$0xff]
  %v4722 = vld [vmem:[%s4719 + $0x10] sm:$0xff]
  %v4723 = vld [vmem:[%s4719 + $0x18] sm:$0xff]
  %4725 = vset.pattern.permute.xlu0 0
  %4726 = vperm.xlu0 %4725, %v4720
  %v4727 = vpop.permute.xlu0 %4726
  %4730 = vset.pattern.permute.xlu0 0
  %4731 = vperm.xlu0 %4730, %v4721
  %v4732 = vpop.permute.xlu0 %4731
  %4735 = vset.pattern.permute.xlu0 0
  %4736 = vperm.xlu0 %4735, %v4722
  %v4737 = vpop.permute.xlu0 %4736
  %4740 = vset.pattern.permute.xlu0 0
  %4741 = vperm.xlu0 %4740, %v4723
  %v4742 = vpop.permute.xlu0 %4741
  %v4744 = vmul.f32 %v4711, %v4727
  %v4745 = vmul.f32 %v4707, %v4727
  %v4746 = vmul.f32 %v4703, %v4727
  %v4747 = vmul.f32 %v4715, %v4727
  %v4748 = vmul.f32 %v4712, %v4732
  %v4749 = vmul.f32 %v4708, %v4732
  %v4750 = vmul.f32 %v4704, %v4732
  %v4751 = vmul.f32 %v4716, %v4732
  %v4752 = vmul.f32 %v4713, %v4737
  %v4753 = vmul.f32 %v4709, %v4737
  %v4754 = vmul.f32 %v4705, %v4737
  %v4755 = vmul.f32 %v4717, %v4737
  %v4756 = vmul.f32 %v4714, %v4742
  %v4757 = vmul.f32 %v4710, %v4742
  %v4758 = vmul.f32 %v4706, %v4742
  %v4759 = vmul.f32 %v4718, %v4742
  %vm4760 = vmand %vm4536, %vm280
  %vm4761 = vmand %vm4537, %vm281
  %vm4762 = vmand %vm4538, %vm282
  %vm4763 = vmand %vm4539, %vm283
  %v4764 = vsel %vm4760, 1.0, 0.0
  %v4765 = vsel %vm4761, 1.0, 0.0
  %v4766 = vsel %vm4762, 1.0, 0.0
  %v4767 = vsel %vm4763, 1.0, 0.0
  %v4768 = vmul.f32 %v4744, %v4764
  %v4769 = vmul.f32 %v4745, %v4765
  %v4770 = vmul.f32 %v4746, %v4766
  %v4771 = vmul.f32 %v4747, %v4767
  %v4772 = vmul.f32 %v4748, %v4764
  %v4773 = vmul.f32 %v4749, %v4765
  %v4774 = vmul.f32 %v4750, %v4766
  %v4775 = vmul.f32 %v4751, %v4767
  %v4776 = vmul.f32 %v4752, %v4764
  %v4777 = vmul.f32 %v4753, %v4765
  %v4778 = vmul.f32 %v4754, %v4766
  %v4779 = vmul.f32 %v4755, %v4767
  %v4780 = vmul.f32 %v4756, %v4764
  %v4781 = vmul.f32 %v4757, %v4765
  %v4782 = vmul.f32 %v4758, %v4766
  %v4783 = vmul.f32 %v4759, %v4767
  %v4784 = vadd.f32 %v4654, %v4768
  %v4785 = vadd.f32 %v4655, %v4769
  %v4786 = vadd.f32 %v4656, %v4770
  %v4787 = vadd.f32 %v4657, %v4771
  %v4788 = vadd.f32 %v4658, %v4772
  %v4789 = vadd.f32 %v4659, %v4773
  %v4790 = vadd.f32 %v4660, %v4774
  %v4791 = vadd.f32 %v4661, %v4775
  %v4792 = vadd.f32 %v4662, %v4776
  %v4793 = vadd.f32 %v4663, %v4777
  %v4794 = vadd.f32 %v4664, %v4778
  %v4795 = vadd.f32 %v4665, %v4779
  %v4796 = vadd.f32 %v4666, %v4780
  %v4797 = vadd.f32 %v4667, %v4781
  %v4798 = vadd.f32 %v4668, %v4782
  %v4799 = vadd.f32 %v4669, %v4783
  %4800 = vrot.lane.b32.xlu0 %v1967, 96
  %v4801 = vpop.permute.xlu0 %4800
  %4802 = vrot.lane.b32.xlu0 %v1971, 96
  %v4803 = vpop.permute.xlu0 %4802
  %4804 = vrot.lane.b32.xlu0 %v1977, 96
  %v4805 = vpop.permute.xlu0 %4804
  %4806 = vrot.lane.b32.xlu0 %v1981, 96
  %v4807 = vpop.permute.xlu0 %4806
  %4808 = vrot.lane.b32.xlu0 %v1969, 96
  %v4809 = vpop.permute.xlu0 %4808
  %4810 = vrot.lane.b32.xlu0 %v1973, 96
  %v4811 = vpop.permute.xlu0 %4810
  %4812 = vrot.lane.b32.xlu0 %v1979, 96
  %v4813 = vpop.permute.xlu0 %4812
  %4814 = vrot.lane.b32.xlu0 %v1983, 96
  %v4815 = vpop.permute.xlu0 %4814
  %4816 = vrot.lane.b32.xlu0 %v2020, 96
  %v4817 = vpop.permute.xlu0 %4816
  %4818 = vrot.lane.b32.xlu0 %v2024, 96
  %v4819 = vpop.permute.xlu0 %4818
  %4820 = vrot.lane.b32.xlu0 %v2030, 96
  %v4821 = vpop.permute.xlu0 %4820
  %4822 = vrot.lane.b32.xlu0 %v2034, 96
  %v4823 = vpop.permute.xlu0 %4822
  %4824 = vrot.lane.b32.xlu0 %v2022, 96
  %v4825 = vpop.permute.xlu0 %4824
  %4826 = vrot.lane.b32.xlu0 %v2026, 96
  %v4827 = vpop.permute.xlu0 %4826
  %4828 = vrot.lane.b32.xlu0 %v2032, 96
  %v4829 = vpop.permute.xlu0 %4828
  %4830 = vrot.lane.b32.xlu0 %v2036, 96
  %v4831 = vpop.permute.xlu0 %4830
  %vm4832 = vcmp.lt.s32.totalorder %v111, 96
  %v4833 = vsel %vm4832, %v4817, %v4825
  %v4834 = vsel %vm4832, %v4819, %v4827
  %v4835 = vsel %vm4832, %v4821, %v4829
  %v4836 = vsel %vm4832, %v4823, %v4831
  %v4837 = vsel %vm4832, %v4809, %v4817
  %v4838 = vsel %vm4832, %v4811, %v4819
  %v4839 = vsel %vm4832, %v4813, %v4821
  %v4840 = vsel %vm4832, %v4815, %v4823
  %v4841 = vsel %vm4832, %v4801, %v4809
  %v4842 = vsel %vm4832, %v4803, %v4811
  %v4843 = vsel %vm4832, %v4805, %v4813
  %v4844 = vsel %vm4832, %v4807, %v4815
  %v4845 = vsel %vm4832, %v4825, %v4801
  %v4846 = vsel %vm4832, %v4827, %v4803
  %v4847 = vsel %vm4832, %v4829, %v4805
  %v4848 = vsel %vm4832, %v4831, %v4807
  %s4849 = scalar_lea.vmem %s7, 704
  %v4850 = vld [vmem:[%s4849] sm:$0xff]
  %v4851 = vld [vmem:[%s4849 + $0x8] sm:$0xff]
  %v4852 = vld [vmem:[%s4849 + $0x10] sm:$0xff]
  %v4853 = vld [vmem:[%s4849 + $0x18] sm:$0xff]
  %4855 = vset.pattern.permute.xlu0 0
  %4856 = vperm.xlu0 %4855, %v4850
  %v4857 = vpop.permute.xlu0 %4856
  %4860 = vset.pattern.permute.xlu0 0
  %4861 = vperm.xlu0 %4860, %v4851
  %v4862 = vpop.permute.xlu0 %4861
  %4865 = vset.pattern.permute.xlu0 0
  %4866 = vperm.xlu0 %4865, %v4852
  %v4867 = vpop.permute.xlu0 %4866
  %4870 = vset.pattern.permute.xlu0 0
  %4871 = vperm.xlu0 %4870, %v4853
  %v4872 = vpop.permute.xlu0 %4871
  %v4874 = vmul.f32 %v4841, %v4857
  %v4875 = vmul.f32 %v4837, %v4857
  %v4876 = vmul.f32 %v4833, %v4857
  %v4877 = vmul.f32 %v4845, %v4857
  %v4878 = vmul.f32 %v4842, %v4862
  %v4879 = vmul.f32 %v4838, %v4862
  %v4880 = vmul.f32 %v4834, %v4862
  %v4881 = vmul.f32 %v4846, %v4862
  %v4882 = vmul.f32 %v4843, %v4867
  %v4883 = vmul.f32 %v4839, %v4867
  %v4884 = vmul.f32 %v4835, %v4867
  %v4885 = vmul.f32 %v4847, %v4867
  %v4886 = vmul.f32 %v4844, %v4872
  %v4887 = vmul.f32 %v4840, %v4872
  %v4888 = vmul.f32 %v4836, %v4872
  %v4889 = vmul.f32 %v4848, %v4872
  %vm4890 = vmand %vm4536, %vm406
  %vm4891 = vmand %vm4537, %vm407
  %vm4892 = vmand %vm4538, %vm408
  %vm4893 = vmand %vm4539, %vm409
  %v4894 = vsel %vm4890, 1.0, 0.0
  %v4895 = vsel %vm4891, 1.0, 0.0
  %v4896 = vsel %vm4892, 1.0, 0.0
  %v4897 = vsel %vm4893, 1.0, 0.0
  %v4898 = vmul.f32 %v4874, %v4894
  %v4899 = vmul.f32 %v4875, %v4895
  %v4900 = vmul.f32 %v4876, %v4896
  %v4901 = vmul.f32 %v4877, %v4897
  %v4902 = vmul.f32 %v4878, %v4894
  %v4903 = vmul.f32 %v4879, %v4895
  %v4904 = vmul.f32 %v4880, %v4896
  %v4905 = vmul.f32 %v4881, %v4897
  %v4906 = vmul.f32 %v4882, %v4894
  %v4907 = vmul.f32 %v4883, %v4895
  %v4908 = vmul.f32 %v4884, %v4896
  %v4909 = vmul.f32 %v4885, %v4897
  %v4910 = vmul.f32 %v4886, %v4894
  %v4911 = vmul.f32 %v4887, %v4895
  %v4912 = vmul.f32 %v4888, %v4896
  %v4913 = vmul.f32 %v4889, %v4897
  %v4914 = vadd.f32 %v4784, %v4898
  %v4915 = vadd.f32 %v4785, %v4899
  %v4916 = vadd.f32 %v4786, %v4900
  %v4917 = vadd.f32 %v4787, %v4901
  %v4918 = vadd.f32 %v4788, %v4902
  %v4919 = vadd.f32 %v4789, %v4903
  %v4920 = vadd.f32 %v4790, %v4904
  %v4921 = vadd.f32 %v4791, %v4905
  %v4922 = vadd.f32 %v4792, %v4906
  %v4923 = vadd.f32 %v4793, %v4907
  %v4924 = vadd.f32 %v4794, %v4908
  %v4925 = vadd.f32 %v4795, %v4909
  %v4926 = vadd.f32 %v4796, %v4910
  %v4927 = vadd.f32 %v4797, %v4911
  %v4928 = vadd.f32 %v4798, %v4912
  %v4929 = vadd.f32 %v4799, %v4913
  %4930 = vrot.lane.b32.xlu0 %v1967, 95
  %v4931 = vpop.permute.xlu0 %4930
  %4932 = vrot.lane.b32.xlu0 %v1971, 95
  %v4933 = vpop.permute.xlu0 %4932
  %4934 = vrot.lane.b32.xlu0 %v1977, 95
  %v4935 = vpop.permute.xlu0 %4934
  %4936 = vrot.lane.b32.xlu0 %v1981, 95
  %v4937 = vpop.permute.xlu0 %4936
  %4938 = vrot.lane.b32.xlu0 %v1969, 95
  %v4939 = vpop.permute.xlu0 %4938
  %4940 = vrot.lane.b32.xlu0 %v1973, 95
  %v4941 = vpop.permute.xlu0 %4940
  %4942 = vrot.lane.b32.xlu0 %v1979, 95
  %v4943 = vpop.permute.xlu0 %4942
  %4944 = vrot.lane.b32.xlu0 %v1983, 95
  %v4945 = vpop.permute.xlu0 %4944
  %4946 = vrot.lane.b32.xlu0 %v2020, 95
  %v4947 = vpop.permute.xlu0 %4946
  %4948 = vrot.lane.b32.xlu0 %v2024, 95
  %v4949 = vpop.permute.xlu0 %4948
  %4950 = vrot.lane.b32.xlu0 %v2030, 95
  %v4951 = vpop.permute.xlu0 %4950
  %4952 = vrot.lane.b32.xlu0 %v2034, 95
  %v4953 = vpop.permute.xlu0 %4952
  %4954 = vrot.lane.b32.xlu0 %v2022, 95
  %v4955 = vpop.permute.xlu0 %4954
  %4956 = vrot.lane.b32.xlu0 %v2026, 95
  %v4957 = vpop.permute.xlu0 %4956
  %4958 = vrot.lane.b32.xlu0 %v2032, 95
  %v4959 = vpop.permute.xlu0 %4958
  %4960 = vrot.lane.b32.xlu0 %v2036, 95
  %v4961 = vpop.permute.xlu0 %4960
  %vm4962 = vcmp.lt.s32.totalorder %v111, 95
  %v4963 = vsel %vm4962, %v4947, %v4955
  %v4964 = vsel %vm4962, %v4949, %v4957
  %v4965 = vsel %vm4962, %v4951, %v4959
  %v4966 = vsel %vm4962, %v4953, %v4961
  %v4967 = vsel %vm4962, %v4939, %v4947
  %v4968 = vsel %vm4962, %v4941, %v4949
  %v4969 = vsel %vm4962, %v4943, %v4951
  %v4970 = vsel %vm4962, %v4945, %v4953
  %v4971 = vsel %vm4962, %v4931, %v4939
  %v4972 = vsel %vm4962, %v4933, %v4941
  %v4973 = vsel %vm4962, %v4935, %v4943
  %v4974 = vsel %vm4962, %v4937, %v4945
  %v4975 = vsel %vm4962, %v4955, %v4931
  %v4976 = vsel %vm4962, %v4957, %v4933
  %v4977 = vsel %vm4962, %v4959, %v4935
  %v4978 = vsel %vm4962, %v4961, %v4937
  %s4979 = scalar_lea.vmem %s7, 736
  %v4980 = vld [vmem:[%s4979] sm:$0xff]
  %v4981 = vld [vmem:[%s4979 + $0x8] sm:$0xff]
  %v4982 = vld [vmem:[%s4979 + $0x10] sm:$0xff]
  %v4983 = vld [vmem:[%s4979 + $0x18] sm:$0xff]
  %4985 = vset.pattern.permute.xlu0 0
  %4986 = vperm.xlu0 %4985, %v4980
  %v4987 = vpop.permute.xlu0 %4986
  %4990 = vset.pattern.permute.xlu0 0
  %4991 = vperm.xlu0 %4990, %v4981
  %v4992 = vpop.permute.xlu0 %4991
  %4995 = vset.pattern.permute.xlu0 0
  %4996 = vperm.xlu0 %4995, %v4982
  %v4997 = vpop.permute.xlu0 %4996
  %5000 = vset.pattern.permute.xlu0 0
  %5001 = vperm.xlu0 %5000, %v4983
  %v5002 = vpop.permute.xlu0 %5001
  %v5004 = vmul.f32 %v4971, %v4987
  %v5005 = vmul.f32 %v4967, %v4987
  %v5006 = vmul.f32 %v4963, %v4987
  %v5007 = vmul.f32 %v4975, %v4987
  %v5008 = vmul.f32 %v4972, %v4992
  %v5009 = vmul.f32 %v4968, %v4992
  %v5010 = vmul.f32 %v4964, %v4992
  %v5011 = vmul.f32 %v4976, %v4992
  %v5012 = vmul.f32 %v4973, %v4997
  %v5013 = vmul.f32 %v4969, %v4997
  %v5014 = vmul.f32 %v4965, %v4997
  %v5015 = vmul.f32 %v4977, %v4997
  %v5016 = vmul.f32 %v4974, %v5002
  %v5017 = vmul.f32 %v4970, %v5002
  %v5018 = vmul.f32 %v4966, %v5002
  %v5019 = vmul.f32 %v4978, %v5002
  %vm5020 = vmand %vm4536, %vm552
  %vm5021 = vmand %vm4537, %vm553
  %vm5022 = vmand %vm4538, %vm554
  %vm5023 = vmand %vm4539, %vm555
  %v5024 = vsel %vm5020, 1.0, 0.0
  %v5025 = vsel %vm5021, 1.0, 0.0
  %v5026 = vsel %vm5022, 1.0, 0.0
  %v5027 = vsel %vm5023, 1.0, 0.0
  %v5028 = vmul.f32 %v5004, %v5024
  %v5029 = vmul.f32 %v5005, %v5025
  %v5030 = vmul.f32 %v5006, %v5026
  %v5031 = vmul.f32 %v5007, %v5027
  %v5032 = vmul.f32 %v5008, %v5024
  %v5033 = vmul.f32 %v5009, %v5025
  %v5034 = vmul.f32 %v5010, %v5026
  %v5035 = vmul.f32 %v5011, %v5027
  %v5036 = vmul.f32 %v5012, %v5024
  %v5037 = vmul.f32 %v5013, %v5025
  %v5038 = vmul.f32 %v5014, %v5026
  %v5039 = vmul.f32 %v5015, %v5027
  %v5040 = vmul.f32 %v5016, %v5024
  %v5041 = vmul.f32 %v5017, %v5025
  %v5042 = vmul.f32 %v5018, %v5026
  %v5043 = vmul.f32 %v5019, %v5027
  %v5044 = vadd.f32 %v4914, %v5028
  %v5045 = vadd.f32 %v4915, %v5029
  %v5046 = vadd.f32 %v4916, %v5030
  %v5047 = vadd.f32 %v4917, %v5031
  %v5048 = vadd.f32 %v4918, %v5032
  %v5049 = vadd.f32 %v4919, %v5033
  %v5050 = vadd.f32 %v4920, %v5034
  %v5051 = vadd.f32 %v4921, %v5035
  %v5052 = vadd.f32 %v4922, %v5036
  %v5053 = vadd.f32 %v4923, %v5037
  %v5054 = vadd.f32 %v4924, %v5038
  %v5055 = vadd.f32 %v4925, %v5039
  %v5056 = vadd.f32 %v4926, %v5040
  %v5057 = vadd.f32 %v4927, %v5041
  %v5058 = vadd.f32 %v4928, %v5042
  %v5059 = vadd.f32 %v4929, %v5043
  %5060 = vrot.lane.b32.xlu0 %v1967, 94
  %v5061 = vpop.permute.xlu0 %5060
  %5062 = vrot.lane.b32.xlu0 %v1971, 94
  %v5063 = vpop.permute.xlu0 %5062
  %5064 = vrot.lane.b32.xlu0 %v1977, 94
  %v5065 = vpop.permute.xlu0 %5064
  %5066 = vrot.lane.b32.xlu0 %v1981, 94
  %v5067 = vpop.permute.xlu0 %5066
  %5068 = vrot.lane.b32.xlu0 %v1969, 94
  %v5069 = vpop.permute.xlu0 %5068
  %5070 = vrot.lane.b32.xlu0 %v1973, 94
  %v5071 = vpop.permute.xlu0 %5070
  %5072 = vrot.lane.b32.xlu0 %v1979, 94
  %v5073 = vpop.permute.xlu0 %5072
  %5074 = vrot.lane.b32.xlu0 %v1983, 94
  %v5075 = vpop.permute.xlu0 %5074
  %5076 = vrot.lane.b32.xlu0 %v2020, 94
  %v5077 = vpop.permute.xlu0 %5076
  %5078 = vrot.lane.b32.xlu0 %v2024, 94
  %v5079 = vpop.permute.xlu0 %5078
  %5080 = vrot.lane.b32.xlu0 %v2030, 94
  %v5081 = vpop.permute.xlu0 %5080
  %5082 = vrot.lane.b32.xlu0 %v2034, 94
  %v5083 = vpop.permute.xlu0 %5082
  %5084 = vrot.lane.b32.xlu0 %v2022, 94
  %v5085 = vpop.permute.xlu0 %5084
  %5086 = vrot.lane.b32.xlu0 %v2026, 94
  %v5087 = vpop.permute.xlu0 %5086
  %5088 = vrot.lane.b32.xlu0 %v2032, 94
  %v5089 = vpop.permute.xlu0 %5088
  %5090 = vrot.lane.b32.xlu0 %v2036, 94
  %v5091 = vpop.permute.xlu0 %5090
  %vm5092 = vcmp.lt.s32.totalorder %v111, 94
  %v5093 = vsel %vm5092, %v5077, %v5085
  %v5094 = vsel %vm5092, %v5079, %v5087
  %v5095 = vsel %vm5092, %v5081, %v5089
  %v5096 = vsel %vm5092, %v5083, %v5091
  %v5097 = vsel %vm5092, %v5069, %v5077
  %v5098 = vsel %vm5092, %v5071, %v5079
  %v5099 = vsel %vm5092, %v5073, %v5081
  %v5100 = vsel %vm5092, %v5075, %v5083
  %v5101 = vsel %vm5092, %v5061, %v5069
  %v5102 = vsel %vm5092, %v5063, %v5071
  %v5103 = vsel %vm5092, %v5065, %v5073
  %v5104 = vsel %vm5092, %v5067, %v5075
  %v5105 = vsel %vm5092, %v5085, %v5061
  %v5106 = vsel %vm5092, %v5087, %v5063
  %v5107 = vsel %vm5092, %v5089, %v5065
  %v5108 = vsel %vm5092, %v5091, %v5067
  %s5109 = scalar_lea.vmem %s7, 768
  %v5110 = vld [vmem:[%s5109] sm:$0xff]
  %v5111 = vld [vmem:[%s5109 + $0x8] sm:$0xff]
  %v5112 = vld [vmem:[%s5109 + $0x10] sm:$0xff]
  %v5113 = vld [vmem:[%s5109 + $0x18] sm:$0xff]
  %5115 = vset.pattern.permute.xlu0 0
  %5116 = vperm.xlu0 %5115, %v5110
  %v5117 = vpop.permute.xlu0 %5116
  %5120 = vset.pattern.permute.xlu0 0
  %5121 = vperm.xlu0 %5120, %v5111
  %v5122 = vpop.permute.xlu0 %5121
  %5125 = vset.pattern.permute.xlu0 0
  %5126 = vperm.xlu0 %5125, %v5112
  %v5127 = vpop.permute.xlu0 %5126
  %5130 = vset.pattern.permute.xlu0 0
  %5131 = vperm.xlu0 %5130, %v5113
  %v5132 = vpop.permute.xlu0 %5131
  %v5134 = vmul.f32 %v5101, %v5117
  %v5135 = vmul.f32 %v5097, %v5117
  %v5136 = vmul.f32 %v5093, %v5117
  %v5137 = vmul.f32 %v5105, %v5117
  %v5138 = vmul.f32 %v5102, %v5122
  %v5139 = vmul.f32 %v5098, %v5122
  %v5140 = vmul.f32 %v5094, %v5122
  %v5141 = vmul.f32 %v5106, %v5122
  %v5142 = vmul.f32 %v5103, %v5127
  %v5143 = vmul.f32 %v5099, %v5127
  %v5144 = vmul.f32 %v5095, %v5127
  %v5145 = vmul.f32 %v5107, %v5127
  %v5146 = vmul.f32 %v5104, %v5132
  %v5147 = vmul.f32 %v5100, %v5132
  %v5148 = vmul.f32 %v5096, %v5132
  %v5149 = vmul.f32 %v5108, %v5132
  %vm5150 = vmand %vm4536, %vm2675
  %vm5151 = vmand %vm4537, %vm2676
  %vm5152 = vmand %vm4538, %vm2677
  %vm5153 = vmand %vm4539, %vm2678
  %v5154 = vsel %vm5150, 1.0, 0.0
  %v5155 = vsel %vm5151, 1.0, 0.0
  %v5156 = vsel %vm5152, 1.0, 0.0
  %v5157 = vsel %vm5153, 1.0, 0.0
  %v5158 = vmul.f32 %v5134, %v5154
  %v5159 = vmul.f32 %v5135, %v5155
  %v5160 = vmul.f32 %v5136, %v5156
  %v5161 = vmul.f32 %v5137, %v5157
  %v5162 = vmul.f32 %v5138, %v5154
  %v5163 = vmul.f32 %v5139, %v5155
  %v5164 = vmul.f32 %v5140, %v5156
  %v5165 = vmul.f32 %v5141, %v5157
  %v5166 = vmul.f32 %v5142, %v5154
  %v5167 = vmul.f32 %v5143, %v5155
  %v5168 = vmul.f32 %v5144, %v5156
  %v5169 = vmul.f32 %v5145, %v5157
  %v5170 = vmul.f32 %v5146, %v5154
  %v5171 = vmul.f32 %v5147, %v5155
  %v5172 = vmul.f32 %v5148, %v5156
  %v5173 = vmul.f32 %v5149, %v5157
  %v5174 = vadd.f32 %v5044, %v5158
  %v5175 = vadd.f32 %v5045, %v5159
  %v5176 = vadd.f32 %v5046, %v5160
  %v5177 = vadd.f32 %v5047, %v5161
  %v5178 = vadd.f32 %v5048, %v5162
  %v5179 = vadd.f32 %v5049, %v5163
  %v5180 = vadd.f32 %v5050, %v5164
  %v5181 = vadd.f32 %v5051, %v5165
  %v5182 = vadd.f32 %v5052, %v5166
  %v5183 = vadd.f32 %v5053, %v5167
  %v5184 = vadd.f32 %v5054, %v5168
  %v5185 = vadd.f32 %v5055, %v5169
  %v5186 = vadd.f32 %v5056, %v5170
  %v5187 = vadd.f32 %v5057, %v5171
  %v5188 = vadd.f32 %v5058, %v5172
  %v5189 = vadd.f32 %v5059, %v5173
  %v5190 = vld [vmem:[%s8] sm:$0xff]
  %v5191 = vld [vmem:[%s8 + $0x8] sm:$0xff]
  %v5192 = vld [vmem:[%s8 + $0x10] sm:$0xff]
  %v5193 = vld [vmem:[%s8 + $0x18] sm:$0xff]
  %5195 = vset.pattern.permute.xlu0 0
  %5196 = vperm.xlu0 %5195, %v5190
  %v5197 = vpop.permute.xlu0 %5196
  %5200 = vset.pattern.permute.xlu0 0
  %5201 = vperm.xlu0 %5200, %v5191
  %v5202 = vpop.permute.xlu0 %5201
  %5205 = vset.pattern.permute.xlu0 0
  %5206 = vperm.xlu0 %5205, %v5192
  %v5207 = vpop.permute.xlu0 %5206
  %5210 = vset.pattern.permute.xlu0 0
  %5211 = vperm.xlu0 %5210, %v5193
  %v5212 = vpop.permute.xlu0 %5211
  %v5214 = vadd.f32 %v5174, %v5197
  %v5215 = vadd.f32 %v5175, %v5197
  %v5216 = vadd.f32 %v5176, %v5197
  %v5217 = vadd.f32 %v5177, %v5197
  %v5218 = vadd.f32 %v5178, %v5202
  %v5219 = vadd.f32 %v5179, %v5202
  %v5220 = vadd.f32 %v5180, %v5202
  %v5221 = vadd.f32 %v5181, %v5202
  %v5222 = vadd.f32 %v5182, %v5207
  %v5223 = vadd.f32 %v5183, %v5207
  %v5224 = vadd.f32 %v5184, %v5207
  %v5225 = vadd.f32 %v5185, %v5207
  %v5226 = vadd.f32 %v5186, %v5212
  %v5227 = vadd.f32 %v5187, %v5212
  %v5228 = vadd.f32 %v5188, %v5212
  %v5229 = vadd.f32 %v5189, %v5212
  %v5230 = vld [vmem:[%s9] sm:$0xf]
  %v5231 = vld [vmem:[%s9 + $0x4] sm:$0xf]
  %v5232 = vld [vmem:[%s9 + $0x8] sm:$0xf]
  %v5233 = vld [vmem:[%s9 + $0xc] sm:$0xf]
  %v5234 = vpack.c.bf16 %v5218, %v5214
  %v5235 = vpack.c.bf16 %v5219, %v5215
  %v5236 = vpack.c.bf16 %v5220, %v5216
  %v5237 = vpack.c.bf16 %v5221, %v5217
  %v5238 = vpack.c.bf16 %v5226, %v5222
  %v5239 = vpack.c.bf16 %v5227, %v5223
  %v5240 = vpack.c.bf16 %v5228, %v5224
  %v5241 = vpack.c.bf16 %v5229, %v5225
  %v5242 = vld [vmem:[%s10] sm:$0xff]
  %v5243 = vld [vmem:[%s10 + $0x8] sm:$0xff]
  %v5244 = vld [vmem:[%s10 + $0x10] sm:$0xff]
  %v5245 = vld [vmem:[%s10 + $0x18] sm:$0xff]
  %5247 = vset.pattern.permute.xlu0 0
  %5248 = vperm.xlu0 %5247, %v5242
  %v5249 = vpop.permute.xlu0 %5248
  %5252 = vset.pattern.permute.xlu0 0
  %5253 = vperm.xlu0 %5252, %v5243
  %v5254 = vpop.permute.xlu0 %5253
  %5257 = vset.pattern.permute.xlu0 0
  %5258 = vperm.xlu0 %5257, %v5244
  %v5259 = vpop.permute.xlu0 %5258
  %5262 = vset.pattern.permute.xlu0 0
  %5263 = vperm.xlu0 %5262, %v5245
  %v5264 = vpop.permute.xlu0 %5263
  %v5270 = vunpack.c.l.b16 %v5230
  %v5271 = vunpack.c.l.b16 %v5231
  %v5272 = vunpack.c.l.b16 %v5232
  %v5273 = vunpack.c.l.b16 %v5233
  %v5274 = vpack.c.b16 %v5271, %v5270
  %v5275 = vpack.c.b16 %v5273, %v5272
  %v5277 = vsel %vm1925, %v5274, 0
  %v5280 = vsel %vm1925, %v5275, 0
  %5282 = vmatprep.subr.bf16.mxu0 0
  %5283 = vmatpush1.bf16.msra.mxu0 0
  %5284 = vmatprep.subr.bf16.mxu0 0
  %5285 = vmatpush1.bf16.msra.mxu0 0
  %5286 = vmatprep.subr.bf16.mxu0 0
  %5287 = vmatpush1.bf16.msra.mxu0 0
  %5288 = vmatprep.subr.bf16.mxu0 0
  %5289 = vmatpush1.bf16.msra.mxu0 0
  %5290 = vmatprep.subr.bf16.mxu0 0
  %5291 = vmatpush1.bf16.msra.mxu0 0
  %5292 = vmatprep.subr.bf16.mxu0 0
  %5293 = vmatpush1.bf16.msra.mxu0 0
  %5294 = vmatprep.subr.bf16.mxu0 %v5239
  %5295 = vmatpush1.bf16.msra.mxu0 %v5238
  %5296 = vmatprep.subr.bf16.mxu0 %v5235
  %5297 = vmatpush1.bf16.msra.mxu0 %v5234
  %5298 = vmatprep.subr.bf16.mxu0 0
  %5299 = vmatpush2.bf16.msra.mxu0 0
  %5300 = vmatprep.subr.bf16.mxu0 0
  %5301 = vmatpush2.bf16.msra.mxu0 0
  %5302 = vmatprep.subr.bf16.mxu0 0
  %5303 = vmatpush2.bf16.msra.mxu0 0
  %5304 = vmatprep.subr.bf16.mxu0 0
  %5305 = vmatpush2.bf16.msra.mxu0 0
  %5306 = vmatprep.subr.bf16.mxu0 0
  %5307 = vmatpush2.bf16.msra.mxu0 0
  %5308 = vmatprep.subr.bf16.mxu0 0
  %5309 = vmatpush2.bf16.msra.mxu0 0
  %5310 = vmatprep.subr.bf16.mxu0 0
  %5311 = vmatpush2.bf16.msra.mxu0 0
  %5312 = vmatprep.subr.bf16.mxu0 0
  %5313 = vmatpush2.bf16.msra.mxu0 0
  %5314 = vmatprep.mubr.bf16.mxu0 0
  %5315 = vmatmul.mubr.bf16.gmra.mxu0 %v5277
  %v5316 = vpop.f32.mrf.mxu0
  %v5317 = vadd.f32 %v5249, %v5316
  %v5318 = vpop.f32.mrf.mxu0
  %v5319 = vadd.f32 %v5249, %v5318
  %v5320 = vpop.f32.mrf.mxu0
  %v5321 = vadd.f32 %v5254, %v5320
  %v5322 = vpop.f32.mrf.mxu0
  %v5323 = vadd.f32 %v5254, %v5322
  %5324 = vmatprep.mubr.bf16.mxu0 0
  %5325 = vmatmul.mubr.bf16.gmra.mxu0 %v5280
  %v5326 = vpop.f32.mrf.mxu0
  %v5327 = vadd.f32 %v5259, %v5326
  %v5328 = vpop.f32.mrf.mxu0
  %v5329 = vadd.f32 %v5259, %v5328
  %v5330 = vpop.f32.mrf.mxu0
  %v5331 = vadd.f32 %v5264, %v5330
  %v5332 = vpop.f32.mrf.mxu0
  %v5333 = vadd.f32 %v5264, %v5332
  %5334 = vdwg.mxu0
  %5335 = vmatprep.subr.bf16.mxu0 0
  %5336 = vmatpush1.bf16.msra.mxu0 0
  %5337 = vmatprep.subr.bf16.mxu0 0
  %5338 = vmatpush1.bf16.msra.mxu0 0
  %5339 = vmatprep.subr.bf16.mxu0 0
  %5340 = vmatpush1.bf16.msra.mxu0 0
  %5341 = vmatprep.subr.bf16.mxu0 0
  %5342 = vmatpush1.bf16.msra.mxu0 0
  %5343 = vmatprep.subr.bf16.mxu0 0
  %5344 = vmatpush1.bf16.msra.mxu0 0
  %5345 = vmatprep.subr.bf16.mxu0 0
  %5346 = vmatpush1.bf16.msra.mxu0 0
  %5347 = vmatprep.subr.bf16.mxu0 %v5241
  %5348 = vmatpush1.bf16.msra.mxu0 %v5240
  %5349 = vmatprep.subr.bf16.mxu0 %v5237
  %5350 = vmatpush1.bf16.msra.mxu0 %v5236
  %5351 = vmatprep.subr.bf16.mxu0 0
  %5352 = vmatpush2.bf16.msra.mxu0 0
  %5353 = vmatprep.subr.bf16.mxu0 0
  %5354 = vmatpush2.bf16.msra.mxu0 0
  %5355 = vmatprep.subr.bf16.mxu0 0
  %5356 = vmatpush2.bf16.msra.mxu0 0
  %5357 = vmatprep.subr.bf16.mxu0 0
  %5358 = vmatpush2.bf16.msra.mxu0 0
  %5359 = vmatprep.subr.bf16.mxu0 0
  %5360 = vmatpush2.bf16.msra.mxu0 0
  %5361 = vmatprep.subr.bf16.mxu0 0
  %5362 = vmatpush2.bf16.msra.mxu0 0
  %5363 = vmatprep.subr.bf16.mxu0 0
  %5364 = vmatpush2.bf16.msra.mxu0 0
  %5365 = vmatprep.subr.bf16.mxu0 0
  %5366 = vmatpush2.bf16.msra.mxu0 0
  %5367 = vmatprep.mubr.bf16.mxu0 0
  %5368 = vmatmul.mubr.bf16.gmra.mxu0 %v5277
  %v5369 = vpop.f32.mrf.mxu0
  %v5370 = vadd.f32 %v5249, %v5369
  %v5371 = vpop.f32.mrf.mxu0
  %v5372 = vadd.f32 %v5249, %v5371
  %v5373 = vpop.f32.mrf.mxu0
  %v5374 = vadd.f32 %v5254, %v5373
  %v5375 = vpop.f32.mrf.mxu0
  %v5376 = vadd.f32 %v5254, %v5375
  %5377 = vmatprep.mubr.bf16.mxu0 0
  %5378 = vmatmul.mubr.bf16.gmra.mxu0 %v5280
  %v5379 = vpop.f32.mrf.mxu0
  %v5380 = vadd.f32 %v5259, %v5379
  %v5381 = vpop.f32.mrf.mxu0
  %v5382 = vadd.f32 %v5259, %v5381
  %v5383 = vpop.f32.mrf.mxu0
  %v5384 = vadd.f32 %v5264, %v5383
  %v5385 = vpop.f32.mrf.mxu0
  %v5386 = vadd.f32 %v5264, %v5385
  %5387 = vdwg.mxu0
  %v5388 = vadd.f32 %v1371, %v5317
  %v5389 = vadd.f32 %v1372, %v5319
  %v5390 = vadd.f32 %v1373, %v5370
  %v5391 = vadd.f32 %v1374, %v5372
  %v5392 = vadd.f32 %v1375, %v5321
  %v5393 = vadd.f32 %v1376, %v5323
  %v5394 = vadd.f32 %v1377, %v5374
  %v5395 = vadd.f32 %v1378, %v5376
  %v5396 = vadd.f32 %v1379, %v5327
  %v5397 = vadd.f32 %v1380, %v5329
  %v5398 = vadd.f32 %v1381, %v5380
  %v5399 = vadd.f32 %v1382, %v5382
  %v5400 = vadd.f32 %v1383, %v5331
  %v5401 = vadd.f32 %v1384, %v5333
  %v5402 = vadd.f32 %v1385, %v5384
  %v5403 = vadd.f32 %v1386, %v5386
  %v5404 = vld [vmem:[%s11] sm:$0xff]
  %v5405 = vld [vmem:[%s11 + $0x8] sm:$0xff]
  %v5406 = vld [vmem:[%s11 + $0x10] sm:$0xff]
  %v5407 = vld [vmem:[%s11 + $0x18] sm:$0xff]
  %v5408 = vld [vmem:[%s12] sm:$0xff]
  %v5409 = vld [vmem:[%s12 + $0x8] sm:$0xff]
  %v5410 = vld [vmem:[%s12 + $0x10] sm:$0xff]
  %v5411 = vld [vmem:[%s12 + $0x18] sm:$0xff]
  %5412 = vmatprep.subr.mxu0 0.0
  %5413 = vmatpush1.msra.mxu0 1.0
  %5414 = vmatprep.subr.mxu0 0.0
  %5415 = vmatpush1.msra.mxu0 1.0
  %5416 = vmatprep.subr.mxu0 0.0
  %5417 = vmatpush1.msra.mxu0 1.0
  %5418 = vmatprep.subr.mxu0 0.0
  %5419 = vmatpush1.msra.mxu0 1.0
  %5420 = vmatprep.subr.mxu0 0.0
  %5421 = vmatpush1.msra.mxu0 1.0
  %5422 = vmatprep.subr.mxu0 0.0
  %5423 = vmatpush1.msra.mxu0 1.0
  %5424 = vmatprep.subr.mxu0 0.0
  %5425 = vmatpush1.msra.mxu0 1.0
  %5426 = vmatprep.subr.mxu0 0.0
  %5427 = vmatpush1.msra.mxu0 1.0
  %5428 = vmatprep.subr.mxu0 0.0
  %5429 = vmatpush1.msra.mxu0 1.0
  %5430 = vmatprep.subr.mxu0 0.0
  %5431 = vmatpush1.msra.mxu0 1.0
  %5432 = vmatprep.subr.mxu0 0.0
  %5433 = vmatpush1.msra.mxu0 1.0
  %5434 = vmatprep.subr.mxu0 0.0
  %5435 = vmatpush1.msra.mxu0 1.0
  %5436 = vmatprep.subr.mxu0 0.0
  %5437 = vmatpush1.msra.mxu0 1.0
  %5438 = vmatprep.subr.mxu0 0.0
  %5439 = vmatpush1.msra.mxu0 1.0
  %5440 = vmatprep.subr.mxu0 0.0
  %5441 = vmatpush1.msra.mxu0 1.0
  %5442 = vmatprep.subr.mxu0 0.0
  %5443 = vmatpush1.msra.mxu0 1.0
  %5444 = vmatprep.subr.mxu0 0.0
  %5445 = vmatpush2.msra.mxu0 1.0
  %5446 = vmatprep.subr.mxu0 0.0
  %5447 = vmatpush2.msra.mxu0 1.0
  %5448 = vmatprep.subr.mxu0 0.0
  %5449 = vmatpush2.msra.mxu0 1.0
  %5450 = vmatprep.subr.mxu0 0.0
  %5451 = vmatpush2.msra.mxu0 1.0
  %5452 = vmatprep.subr.mxu0 0.0
  %5453 = vmatpush2.msra.mxu0 1.0
  %5454 = vmatprep.subr.mxu0 0.0
  %5455 = vmatpush2.msra.mxu0 1.0
  %5456 = vmatprep.subr.mxu0 0.0
  %5457 = vmatpush2.msra.mxu0 1.0
  %5458 = vmatprep.subr.mxu0 0.0
  %5459 = vmatpush2.msra.mxu0 1.0
  %5460 = vmatprep.subr.mxu0 0.0
  %5461 = vmatpush2.msra.mxu0 1.0
  %5462 = vmatprep.subr.mxu0 0.0
  %5463 = vmatpush2.msra.mxu0 1.0
  %5464 = vmatprep.subr.mxu0 0.0
  %5465 = vmatpush2.msra.mxu0 1.0
  %5466 = vmatprep.subr.mxu0 0.0
  %5467 = vmatpush2.msra.mxu0 1.0
  %5468 = vmatprep.subr.mxu0 0.0
  %5469 = vmatpush2.msra.mxu0 1.0
  %5470 = vmatprep.subr.mxu0 0.0
  %5471 = vmatpush2.msra.mxu0 1.0
  %5472 = vmatprep.subr.mxu0 0.0
  %5473 = vmatpush2.msra.mxu0 1.0
  %5474 = vmatprep.subr.mxu0 0.0
  %5475 = vmatpush2.msra.mxu0 1.0
  %5476 = vmatprep.mubr.f32.mxu0 %v5389
  %5477 = vmatmul.mubr.f32.gmra.mxu0 %v5388
  %v5478 = vpop.f32.mrf.mxu0
  %v5479 = vadd.f32 0.0, %v5478
  %v5480 = vpop.f32.mrf.mxu0
  %5481 = vmatprep.mubr.f32.mxu0 %v5393
  %5482 = vmatmul.mubr.f32.gmra.mxu0 %v5392
  %v5483 = vpop.f32.mrf.mxu0
  %v5484 = vadd.f32 0.0, %v5483
  %v5485 = vpop.f32.mrf.mxu0
  %5486 = vmatprep.mubr.f32.mxu0 %v5397
  %5487 = vmatmul.mubr.f32.gmra.mxu0 %v5396
  %v5488 = vpop.f32.mrf.mxu0
  %v5489 = vadd.f32 0.0, %v5488
  %v5490 = vpop.f32.mrf.mxu0
  %5491 = vmatprep.mubr.f32.mxu0 %v5401
  %5492 = vmatmul.mubr.f32.gmra.mxu0 %v5400
  %v5493 = vpop.f32.mrf.mxu0
  %v5494 = vadd.f32 0.0, %v5493
  %v5495 = vpop.f32.mrf.mxu0
  %5496 = vdwg.mxu0
  %5497 = vmatprep.subr.mxu0 0.0
  %5498 = vmatpush1.msra.mxu0 1.0
  %5499 = vmatprep.subr.mxu0 0.0
  %5500 = vmatpush1.msra.mxu0 1.0
  %5501 = vmatprep.subr.mxu0 0.0
  %5502 = vmatpush1.msra.mxu0 1.0
  %5503 = vmatprep.subr.mxu0 0.0
  %5504 = vmatpush1.msra.mxu0 1.0
  %5505 = vmatprep.subr.mxu0 0.0
  %5506 = vmatpush1.msra.mxu0 1.0
  %5507 = vmatprep.subr.mxu0 0.0
  %5508 = vmatpush1.msra.mxu0 1.0
  %5509 = vmatprep.subr.mxu0 0.0
  %5510 = vmatpush1.msra.mxu0 1.0
  %5511 = vmatprep.subr.mxu0 0.0
  %5512 = vmatpush1.msra.mxu0 1.0
  %5513 = vmatprep.subr.mxu0 0.0
  %5514 = vmatpush1.msra.mxu0 1.0
  %5515 = vmatprep.subr.mxu0 0.0
  %5516 = vmatpush1.msra.mxu0 1.0
  %5517 = vmatprep.subr.mxu0 0.0
  %5518 = vmatpush1.msra.mxu0 1.0
  %5519 = vmatprep.subr.mxu0 0.0
  %5520 = vmatpush1.msra.mxu0 1.0
  %5521 = vmatprep.subr.mxu0 0.0
  %5522 = vmatpush1.msra.mxu0 1.0
  %5523 = vmatprep.subr.mxu0 0.0
  %5524 = vmatpush1.msra.mxu0 1.0
  %5525 = vmatprep.subr.mxu0 0.0
  %5526 = vmatpush1.msra.mxu0 1.0
  %5527 = vmatprep.subr.mxu0 0.0
  %5528 = vmatpush1.msra.mxu0 1.0
  %5529 = vmatprep.subr.mxu0 0.0
  %5530 = vmatpush2.msra.mxu0 1.0
  %5531 = vmatprep.subr.mxu0 0.0
  %5532 = vmatpush2.msra.mxu0 1.0
  %5533 = vmatprep.subr.mxu0 0.0
  %5534 = vmatpush2.msra.mxu0 1.0
  %5535 = vmatprep.subr.mxu0 0.0
  %5536 = vmatpush2.msra.mxu0 1.0
  %5537 = vmatprep.subr.mxu0 0.0
  %5538 = vmatpush2.msra.mxu0 1.0
  %5539 = vmatprep.subr.mxu0 0.0
  %5540 = vmatpush2.msra.mxu0 1.0
  %5541 = vmatprep.subr.mxu0 0.0
  %5542 = vmatpush2.msra.mxu0 1.0
  %5543 = vmatprep.subr.mxu0 0.0
  %5544 = vmatpush2.msra.mxu0 1.0
  %5545 = vmatprep.subr.mxu0 0.0
  %5546 = vmatpush2.msra.mxu0 1.0
  %5547 = vmatprep.subr.mxu0 0.0
  %5548 = vmatpush2.msra.mxu0 1.0
  %5549 = vmatprep.subr.mxu0 0.0
  %5550 = vmatpush2.msra.mxu0 1.0
  %5551 = vmatprep.subr.mxu0 0.0
  %5552 = vmatpush2.msra.mxu0 1.0
  %5553 = vmatprep.subr.mxu0 0.0
  %5554 = vmatpush2.msra.mxu0 1.0
  %5555 = vmatprep.subr.mxu0 0.0
  %5556 = vmatpush2.msra.mxu0 1.0
  %5557 = vmatprep.subr.mxu0 0.0
  %5558 = vmatpush2.msra.mxu0 1.0
  %5559 = vmatprep.subr.mxu0 0.0
  %5560 = vmatpush2.msra.mxu0 1.0
  %5561 = vmatprep.mubr.f32.mxu0 %v5391
  %5562 = vmatmul.mubr.f32.gmra.mxu0 %v5390
  %v5563 = vpop.f32.mrf.mxu0
  %v5564 = vadd.f32 %v5479, %v5563
  %v5565 = vpop.f32.mrf.mxu0
  %5566 = vmatprep.mubr.f32.mxu0 %v5395
  %5567 = vmatmul.mubr.f32.gmra.mxu0 %v5394
  %v5568 = vpop.f32.mrf.mxu0
  %v5569 = vadd.f32 %v5484, %v5568
  %v5570 = vpop.f32.mrf.mxu0
  %5571 = vmatprep.mubr.f32.mxu0 %v5399
  %5572 = vmatmul.mubr.f32.gmra.mxu0 %v5398
  %v5573 = vpop.f32.mrf.mxu0
  %v5574 = vadd.f32 %v5489, %v5573
  %v5575 = vpop.f32.mrf.mxu0
  %5576 = vmatprep.mubr.f32.mxu0 %v5403
  %5577 = vmatmul.mubr.f32.gmra.mxu0 %v5402
  %v5578 = vpop.f32.mrf.mxu0
  %v5579 = vadd.f32 %v5494, %v5578
  %v5580 = vpop.f32.mrf.mxu0
  %5581 = vdwg.mxu0
  %v5582 = vmul.f32 %v5564, 0.001953125
  %v5583 = vmul.f32 %v5569, 0.001953125
  %v5584 = vmul.f32 %v5574, 0.001953125
  %v5585 = vmul.f32 %v5579, 0.001953125
  %5587 = vset.pattern.permute.xlu0 0
  %5588 = vperm.xlu0 %5587, %v5582
  %v5589 = vpop.permute.xlu0 %5588
  %5592 = vset.pattern.permute.xlu0 0
  %5593 = vperm.xlu0 %5592, %v5583
  %v5594 = vpop.permute.xlu0 %5593
  %5597 = vset.pattern.permute.xlu0 0
  %5598 = vperm.xlu0 %5597, %v5584
  %v5599 = vpop.permute.xlu0 %5598
  %5602 = vset.pattern.permute.xlu0 0
  %5603 = vperm.xlu0 %5602, %v5585
  %v5604 = vpop.permute.xlu0 %5603
  %v5606 = vsub.f32 %v5388, %v5589
  %v5607 = vsub.f32 %v5389, %v5589
  %v5608 = vsub.f32 %v5390, %v5589
  %v5609 = vsub.f32 %v5391, %v5589
  %v5610 = vsub.f32 %v5392, %v5594
  %v5611 = vsub.f32 %v5393, %v5594
  %v5612 = vsub.f32 %v5394, %v5594
  %v5613 = vsub.f32 %v5395, %v5594
  %v5614 = vsub.f32 %v5396, %v5599
  %v5615 = vsub.f32 %v5397, %v5599
  %v5616 = vsub.f32 %v5398, %v5599
  %v5617 = vsub.f32 %v5399, %v5599
  %v5618 = vsub.f32 %v5400, %v5604
  %v5619 = vsub.f32 %v5401, %v5604
  %v5620 = vsub.f32 %v5402, %v5604
  %v5621 = vsub.f32 %v5403, %v5604
  %v5622 = vmul.f32 %v5606, %v5606
  %v5623 = vmul.f32 %v5607, %v5607
  %v5624 = vmul.f32 %v5608, %v5608
  %v5625 = vmul.f32 %v5609, %v5609
  %v5626 = vmul.f32 %v5610, %v5610
  %v5627 = vmul.f32 %v5611, %v5611
  %v5628 = vmul.f32 %v5612, %v5612
  %v5629 = vmul.f32 %v5613, %v5613
  %v5630 = vmul.f32 %v5614, %v5614
  %v5631 = vmul.f32 %v5615, %v5615
  %v5632 = vmul.f32 %v5616, %v5616
  %v5633 = vmul.f32 %v5617, %v5617
  %v5634 = vmul.f32 %v5618, %v5618
  %v5635 = vmul.f32 %v5619, %v5619
  %v5636 = vmul.f32 %v5620, %v5620
  %v5637 = vmul.f32 %v5621, %v5621
  %5638 = vmatprep.subr.mxu0 0.0
  %5639 = vmatpush1.msra.mxu0 1.0
  %5640 = vmatprep.subr.mxu0 0.0
  %5641 = vmatpush1.msra.mxu0 1.0
  %5642 = vmatprep.subr.mxu0 0.0
  %5643 = vmatpush1.msra.mxu0 1.0
  %5644 = vmatprep.subr.mxu0 0.0
  %5645 = vmatpush1.msra.mxu0 1.0
  %5646 = vmatprep.subr.mxu0 0.0
  %5647 = vmatpush1.msra.mxu0 1.0
  %5648 = vmatprep.subr.mxu0 0.0
  %5649 = vmatpush1.msra.mxu0 1.0
  %5650 = vmatprep.subr.mxu0 0.0
  %5651 = vmatpush1.msra.mxu0 1.0
  %5652 = vmatprep.subr.mxu0 0.0
  %5653 = vmatpush1.msra.mxu0 1.0
  %5654 = vmatprep.subr.mxu0 0.0
  %5655 = vmatpush1.msra.mxu0 1.0
  %5656 = vmatprep.subr.mxu0 0.0
  %5657 = vmatpush1.msra.mxu0 1.0
  %5658 = vmatprep.subr.mxu0 0.0
  %5659 = vmatpush1.msra.mxu0 1.0
  %5660 = vmatprep.subr.mxu0 0.0
  %5661 = vmatpush1.msra.mxu0 1.0
  %5662 = vmatprep.subr.mxu0 0.0
  %5663 = vmatpush1.msra.mxu0 1.0
  %5664 = vmatprep.subr.mxu0 0.0
  %5665 = vmatpush1.msra.mxu0 1.0
  %5666 = vmatprep.subr.mxu0 0.0
  %5667 = vmatpush1.msra.mxu0 1.0
  %5668 = vmatprep.subr.mxu0 0.0
  %5669 = vmatpush1.msra.mxu0 1.0
  %5670 = vmatprep.subr.mxu0 0.0
  %5671 = vmatpush2.msra.mxu0 1.0
  %5672 = vmatprep.subr.mxu0 0.0
  %5673 = vmatpush2.msra.mxu0 1.0
  %5674 = vmatprep.subr.mxu0 0.0
  %5675 = vmatpush2.msra.mxu0 1.0
  %5676 = vmatprep.subr.mxu0 0.0
  %5677 = vmatpush2.msra.mxu0 1.0
  %5678 = vmatprep.subr.mxu0 0.0
  %5679 = vmatpush2.msra.mxu0 1.0
  %5680 = vmatprep.subr.mxu0 0.0
  %5681 = vmatpush2.msra.mxu0 1.0
  %5682 = vmatprep.subr.mxu0 0.0
  %5683 = vmatpush2.msra.mxu0 1.0
  %5684 = vmatprep.subr.mxu0 0.0
  %5685 = vmatpush2.msra.mxu0 1.0
  %5686 = vmatprep.subr.mxu0 0.0
  %5687 = vmatpush2.msra.mxu0 1.0
  %5688 = vmatprep.subr.mxu0 0.0
  %5689 = vmatpush2.msra.mxu0 1.0
  %5690 = vmatprep.subr.mxu0 0.0
  %5691 = vmatpush2.msra.mxu0 1.0
  %5692 = vmatprep.subr.mxu0 0.0
  %5693 = vmatpush2.msra.mxu0 1.0
  %5694 = vmatprep.subr.mxu0 0.0
  %5695 = vmatpush2.msra.mxu0 1.0
  %5696 = vmatprep.subr.mxu0 0.0
  %5697 = vmatpush2.msra.mxu0 1.0
  %5698 = vmatprep.subr.mxu0 0.0
  %5699 = vmatpush2.msra.mxu0 1.0
  %5700 = vmatprep.subr.mxu0 0.0
  %5701 = vmatpush2.msra.mxu0 1.0
  %5702 = vmatprep.mubr.f32.mxu0 %v5623
  %5703 = vmatmul.mubr.f32.gmra.mxu0 %v5622
  %v5704 = vpop.f32.mrf.mxu0
  %v5705 = vadd.f32 0.0, %v5704
  %v5706 = vpop.f32.mrf.mxu0
  %5707 = vmatprep.mubr.f32.mxu0 %v5627
  %5708 = vmatmul.mubr.f32.gmra.mxu0 %v5626
  %v5709 = vpop.f32.mrf.mxu0
  %v5710 = vadd.f32 0.0, %v5709
  %v5711 = vpop.f32.mrf.mxu0
  %5712 = vmatprep.mubr.f32.mxu0 %v5631
  %5713 = vmatmul.mubr.f32.gmra.mxu0 %v5630
  %v5714 = vpop.f32.mrf.mxu0
  %v5715 = vadd.f32 0.0, %v5714
  %v5716 = vpop.f32.mrf.mxu0
  %5717 = vmatprep.mubr.f32.mxu0 %v5635
  %5718 = vmatmul.mubr.f32.gmra.mxu0 %v5634
  %v5719 = vpop.f32.mrf.mxu0
  %v5720 = vadd.f32 0.0, %v5719
  %v5721 = vpop.f32.mrf.mxu0
  %5722 = vdwg.mxu0
  %5723 = vmatprep.subr.mxu0 0.0
  %5724 = vmatpush1.msra.mxu0 1.0
  %5725 = vmatprep.subr.mxu0 0.0
  %5726 = vmatpush1.msra.mxu0 1.0
  %5727 = vmatprep.subr.mxu0 0.0
  %5728 = vmatpush1.msra.mxu0 1.0
  %5729 = vmatprep.subr.mxu0 0.0
  %5730 = vmatpush1.msra.mxu0 1.0
  %5731 = vmatprep.subr.mxu0 0.0
  %5732 = vmatpush1.msra.mxu0 1.0
  %5733 = vmatprep.subr.mxu0 0.0
  %5734 = vmatpush1.msra.mxu0 1.0
  %5735 = vmatprep.subr.mxu0 0.0
  %5736 = vmatpush1.msra.mxu0 1.0
  %5737 = vmatprep.subr.mxu0 0.0
  %5738 = vmatpush1.msra.mxu0 1.0
  %5739 = vmatprep.subr.mxu0 0.0
  %5740 = vmatpush1.msra.mxu0 1.0
  %5741 = vmatprep.subr.mxu0 0.0
  %5742 = vmatpush1.msra.mxu0 1.0
  %5743 = vmatprep.subr.mxu0 0.0
  %5744 = vmatpush1.msra.mxu0 1.0
  %5745 = vmatprep.subr.mxu0 0.0
  %5746 = vmatpush1.msra.mxu0 1.0
  %5747 = vmatprep.subr.mxu0 0.0
  %5748 = vmatpush1.msra.mxu0 1.0
  %5749 = vmatprep.subr.mxu0 0.0
  %5750 = vmatpush1.msra.mxu0 1.0
  %5751 = vmatprep.subr.mxu0 0.0
  %5752 = vmatpush1.msra.mxu0 1.0
  %5753 = vmatprep.subr.mxu0 0.0
  %5754 = vmatpush1.msra.mxu0 1.0
  %5755 = vmatprep.subr.mxu0 0.0
  %5756 = vmatpush2.msra.mxu0 1.0
  %5757 = vmatprep.subr.mxu0 0.0
  %5758 = vmatpush2.msra.mxu0 1.0
  %5759 = vmatprep.subr.mxu0 0.0
  %5760 = vmatpush2.msra.mxu0 1.0
  %5761 = vmatprep.subr.mxu0 0.0
  %5762 = vmatpush2.msra.mxu0 1.0
  %5763 = vmatprep.subr.mxu0 0.0
  %5764 = vmatpush2.msra.mxu0 1.0
  %5765 = vmatprep.subr.mxu0 0.0
  %5766 = vmatpush2.msra.mxu0 1.0
  %5767 = vmatprep.subr.mxu0 0.0
  %5768 = vmatpush2.msra.mxu0 1.0
  %5769 = vmatprep.subr.mxu0 0.0
  %5770 = vmatpush2.msra.mxu0 1.0
  %5771 = vmatprep.subr.mxu0 0.0
  %5772 = vmatpush2.msra.mxu0 1.0
  %5773 = vmatprep.subr.mxu0 0.0
  %5774 = vmatpush2.msra.mxu0 1.0
  %5775 = vmatprep.subr.mxu0 0.0
  %5776 = vmatpush2.msra.mxu0 1.0
  %5777 = vmatprep.subr.mxu0 0.0
  %5778 = vmatpush2.msra.mxu0 1.0
  %5779 = vmatprep.subr.mxu0 0.0
  %5780 = vmatpush2.msra.mxu0 1.0
  %5781 = vmatprep.subr.mxu0 0.0
  %5782 = vmatpush2.msra.mxu0 1.0
  %5783 = vmatprep.subr.mxu0 0.0
  %5784 = vmatpush2.msra.mxu0 1.0
  %5785 = vmatprep.subr.mxu0 0.0
  %5786 = vmatpush2.msra.mxu0 1.0
  %5787 = vmatprep.mubr.f32.mxu0 %v5625
  %5788 = vmatmul.mubr.f32.gmra.mxu0 %v5624
  %v5789 = vpop.f32.mrf.mxu0
  %v5790 = vadd.f32 %v5705, %v5789
  %v5791 = vpop.f32.mrf.mxu0
  %5792 = vmatprep.mubr.f32.mxu0 %v5629
  %5793 = vmatmul.mubr.f32.gmra.mxu0 %v5628
  %v5794 = vpop.f32.mrf.mxu0
  %v5795 = vadd.f32 %v5710, %v5794
  %v5796 = vpop.f32.mrf.mxu0
  %5797 = vmatprep.mubr.f32.mxu0 %v5633
  %5798 = vmatmul.mubr.f32.gmra.mxu0 %v5632
  %v5799 = vpop.f32.mrf.mxu0
  %v5800 = vadd.f32 %v5715, %v5799
  %v5801 = vpop.f32.mrf.mxu0
  %5802 = vmatprep.mubr.f32.mxu0 %v5637
  %5803 = vmatmul.mubr.f32.gmra.mxu0 %v5636
  %v5804 = vpop.f32.mrf.mxu0
  %v5805 = vadd.f32 %v5720, %v5804
  %v5806 = vpop.f32.mrf.mxu0
  %5807 = vdwg.mxu0
  %v5808 = vmul.f32 %v5790, 0.001953125
  %v5809 = vmul.f32 %v5795, 0.001953125
  %v5810 = vmul.f32 %v5800, 0.001953125
  %v5811 = vmul.f32 %v5805, 0.001953125
  %v5812 = vadd.f32 %v5808, 1e-05
  %v5813 = vadd.f32 %v5809, 1e-05
  %v5814 = vadd.f32 %v5810, 1e-05
  %v5815 = vadd.f32 %v5811, 1e-05
  %v5816 = vrsqrt.pop %v5812
  %v5817 = vrsqrt.pop %v5813
  %v5818 = vrsqrt.pop %v5814
  %v5819 = vrsqrt.pop %v5815
  %v5820 = vmul.f32 %v5404, %v5816
  %v5821 = vmul.f32 %v5405, %v5817
  %v5822 = vmul.f32 %v5406, %v5818
  %v5823 = vmul.f32 %v5407, %v5819
  %5825 = vset.pattern.permute.xlu0 0
  %5826 = vperm.xlu0 %5825, %v5820
  %v5827 = vpop.permute.xlu0 %5826
  %5830 = vset.pattern.permute.xlu0 0
  %5831 = vperm.xlu0 %5830, %v5821
  %v5832 = vpop.permute.xlu0 %5831
  %5835 = vset.pattern.permute.xlu0 0
  %5836 = vperm.xlu0 %5835, %v5822
  %v5837 = vpop.permute.xlu0 %5836
  %5840 = vset.pattern.permute.xlu0 0
  %5841 = vperm.xlu0 %5840, %v5823
  %v5842 = vpop.permute.xlu0 %5841
  %v5844 = vmul.f32 %v5606, %v5827
  %v5845 = vmul.f32 %v5607, %v5827
  %v5846 = vmul.f32 %v5608, %v5827
  %v5847 = vmul.f32 %v5609, %v5827
  %v5848 = vmul.f32 %v5610, %v5832
  %v5849 = vmul.f32 %v5611, %v5832
  %v5850 = vmul.f32 %v5612, %v5832
  %v5851 = vmul.f32 %v5613, %v5832
  %v5852 = vmul.f32 %v5614, %v5837
  %v5853 = vmul.f32 %v5615, %v5837
  %v5854 = vmul.f32 %v5616, %v5837
  %v5855 = vmul.f32 %v5617, %v5837
  %v5856 = vmul.f32 %v5618, %v5842
  %v5857 = vmul.f32 %v5619, %v5842
  %v5858 = vmul.f32 %v5620, %v5842
  %v5859 = vmul.f32 %v5621, %v5842
  %5861 = vset.pattern.permute.xlu0 0
  %5862 = vperm.xlu0 %5861, %v5408
  %v5863 = vpop.permute.xlu0 %5862
  %5866 = vset.pattern.permute.xlu0 0
  %5867 = vperm.xlu0 %5866, %v5409
  %v5868 = vpop.permute.xlu0 %5867
  %5871 = vset.pattern.permute.xlu0 0
  %5872 = vperm.xlu0 %5871, %v5410
  %v5873 = vpop.permute.xlu0 %5872
  %5876 = vset.pattern.permute.xlu0 0
  %5877 = vperm.xlu0 %5876, %v5411
  %v5878 = vpop.permute.xlu0 %5877
  %v5880 = vadd.f32 %v5844, %v5863
  %v5881 = vadd.f32 %v5845, %v5863
  %v5882 = vadd.f32 %v5846, %v5863
  %v5883 = vadd.f32 %v5847, %v5863
  %v5884 = vadd.f32 %v5848, %v5868
  %v5885 = vadd.f32 %v5849, %v5868
  %v5886 = vadd.f32 %v5850, %v5868
  %v5887 = vadd.f32 %v5851, %v5868
  %v5888 = vadd.f32 %v5852, %v5873
  %v5889 = vadd.f32 %v5853, %v5873
  %v5890 = vadd.f32 %v5854, %v5873
  %v5891 = vadd.f32 %v5855, %v5873
  %v5892 = vadd.f32 %v5856, %v5878
  %v5893 = vadd.f32 %v5857, %v5878
  %v5894 = vadd.f32 %v5858, %v5878
  %v5895 = vadd.f32 %v5859, %v5878
  %v5896 = vld [vmem:[%s13] sm:$0xf]
  %v5897 = vld [vmem:[%s13 + $0x4] sm:$0xf]
  %v5898 = vld [vmem:[%s13 + $0x8] sm:$0xf]
  %v5899 = vld [vmem:[%s13 + $0xc] sm:$0xf]
  %v5900 = vld [vmem:[%s13 + $0x10] sm:$0xf]
  %v5901 = vld [vmem:[%s13 + $0x14] sm:$0xf]
  %v5902 = vld [vmem:[%s13 + $0x18] sm:$0xf]
  %v5903 = vld [vmem:[%s13 + $0x1c] sm:$0xf]
  %v5904 = vld [vmem:[%s13 + $0x20] sm:$0xf]
  %v5905 = vld [vmem:[%s13 + $0x24] sm:$0xf]
  %v5906 = vld [vmem:[%s13 + $0x28] sm:$0xf]
  %v5907 = vld [vmem:[%s13 + $0x2c] sm:$0xf]
  %v5908 = vld [vmem:[%s13 + $0x30] sm:$0xf]
  %v5909 = vld [vmem:[%s13 + $0x34] sm:$0xf]
  %v5910 = vld [vmem:[%s13 + $0x38] sm:$0xf]
  %v5911 = vld [vmem:[%s13 + $0x3c] sm:$0xf]
  %v5912 = vpack.c.bf16 %v5884, %v5880
  %v5913 = vpack.c.bf16 %v5885, %v5881
  %v5914 = vpack.c.bf16 %v5886, %v5882
  %v5915 = vpack.c.bf16 %v5887, %v5883
  %v5916 = vpack.c.bf16 %v5892, %v5888
  %v5917 = vpack.c.bf16 %v5893, %v5889
  %v5918 = vpack.c.bf16 %v5894, %v5890
  %v5919 = vpack.c.bf16 %v5895, %v5891
  %v5920 = vld [vmem:[%s14] sm:$0xff]
  %v5921 = vld [vmem:[%s14 + $0x8] sm:$0xff]
  %v5922 = vld [vmem:[%s14 + $0x10] sm:$0xff]
  %v5923 = vld [vmem:[%s14 + $0x18] sm:$0xff]
  %v5924 = vld [vmem:[%s14 + $0x20] sm:$0xff]
  %v5925 = vld [vmem:[%s14 + $0x28] sm:$0xff]
  %v5926 = vld [vmem:[%s14 + $0x30] sm:$0xff]
  %v5927 = vld [vmem:[%s14 + $0x38] sm:$0xff]
  %v5928 = vld [vmem:[%s14 + $0x40] sm:$0xff]
  %v5929 = vld [vmem:[%s14 + $0x48] sm:$0xff]
  %v5930 = vld [vmem:[%s14 + $0x50] sm:$0xff]
  %v5931 = vld [vmem:[%s14 + $0x58] sm:$0xff]
  %v5932 = vld [vmem:[%s14 + $0x60] sm:$0xff]
  %v5933 = vld [vmem:[%s14 + $0x68] sm:$0xff]
  %v5934 = vld [vmem:[%s14 + $0x70] sm:$0xff]
  %v5935 = vld [vmem:[%s14 + $0x78] sm:$0xff]
  %5937 = vset.pattern.permute.xlu0 0
  %5938 = vperm.xlu0 %5937, %v5920
  %v5939 = vpop.permute.xlu0 %5938
  %5942 = vset.pattern.permute.xlu0 0
  %5943 = vperm.xlu0 %5942, %v5921
  %v5944 = vpop.permute.xlu0 %5943
  %5947 = vset.pattern.permute.xlu0 0
  %5948 = vperm.xlu0 %5947, %v5922
  %v5949 = vpop.permute.xlu0 %5948
  %5952 = vset.pattern.permute.xlu0 0
  %5953 = vperm.xlu0 %5952, %v5923
  %v5954 = vpop.permute.xlu0 %5953
  %5957 = vset.pattern.permute.xlu0 0
  %5958 = vperm.xlu0 %5957, %v5924
  %v5959 = vpop.permute.xlu0 %5958
  %5962 = vset.pattern.permute.xlu0 0
  %5963 = vperm.xlu0 %5962, %v5925
  %v5964 = vpop.permute.xlu0 %5963
  %5967 = vset.pattern.permute.xlu0 0
  %5968 = vperm.xlu0 %5967, %v5926
  %v5969 = vpop.permute.xlu0 %5968
  %5972 = vset.pattern.permute.xlu0 0
  %5973 = vperm.xlu0 %5972, %v5927
  %v5974 = vpop.permute.xlu0 %5973
  %5977 = vset.pattern.permute.xlu0 0
  %5978 = vperm.xlu0 %5977, %v5928
  %v5979 = vpop.permute.xlu0 %5978
  %5982 = vset.pattern.permute.xlu0 0
  %5983 = vperm.xlu0 %5982, %v5929
  %v5984 = vpop.permute.xlu0 %5983
  %5987 = vset.pattern.permute.xlu0 0
  %5988 = vperm.xlu0 %5987, %v5930
  %v5989 = vpop.permute.xlu0 %5988
  %5992 = vset.pattern.permute.xlu0 0
  %5993 = vperm.xlu0 %5992, %v5931
  %v5994 = vpop.permute.xlu0 %5993
  %5997 = vset.pattern.permute.xlu0 0
  %5998 = vperm.xlu0 %5997, %v5932
  %v5999 = vpop.permute.xlu0 %5998
  %6002 = vset.pattern.permute.xlu0 0
  %6003 = vperm.xlu0 %6002, %v5933
  %v6004 = vpop.permute.xlu0 %6003
  %6007 = vset.pattern.permute.xlu0 0
  %6008 = vperm.xlu0 %6007, %v5934
  %v6009 = vpop.permute.xlu0 %6008
  %6012 = vset.pattern.permute.xlu0 0
  %6013 = vperm.xlu0 %6012, %v5935
  %v6014 = vpop.permute.xlu0 %6013
  %v6032 = vunpack.c.l.b16 %v5896
  %v6033 = vunpack.c.l.b16 %v5897
  %v6034 = vunpack.c.l.b16 %v5898
  %v6035 = vunpack.c.l.b16 %v5899
  %v6036 = vunpack.c.l.b16 %v5900
  %v6037 = vunpack.c.l.b16 %v5901
  %v6038 = vunpack.c.l.b16 %v5902
  %v6039 = vunpack.c.l.b16 %v5903
  %v6040 = vunpack.c.l.b16 %v5904
  %v6041 = vunpack.c.l.b16 %v5905
  %v6042 = vunpack.c.l.b16 %v5906
  %v6043 = vunpack.c.l.b16 %v5907
  %v6044 = vunpack.c.l.b16 %v5908
  %v6045 = vunpack.c.l.b16 %v5909
  %v6046 = vunpack.c.l.b16 %v5910
  %v6047 = vunpack.c.l.b16 %v5911
  %v6048 = vpack.c.b16 %v6033, %v6032
  %v6049 = vpack.c.b16 %v6035, %v6034
  %v6050 = vpack.c.b16 %v6037, %v6036
  %v6051 = vpack.c.b16 %v6039, %v6038
  %v6052 = vpack.c.b16 %v6041, %v6040
  %v6053 = vpack.c.b16 %v6043, %v6042
  %v6054 = vpack.c.b16 %v6045, %v6044
  %v6055 = vpack.c.b16 %v6047, %v6046
  %v6057 = vsel %vm1925, %v6048, 0
  %v6060 = vsel %vm1925, %v6049, 0
  %v6063 = vsel %vm1925, %v6050, 0
  %v6066 = vsel %vm1925, %v6051, 0
  %v6069 = vsel %vm1925, %v6052, 0
  %v6072 = vsel %vm1925, %v6053, 0
  %v6075 = vsel %vm1925, %v6054, 0
  %v6078 = vsel %vm1925, %v6055, 0
  %6080 = vmatprep.subr.bf16.mxu0 0
  %6081 = vmatpush1.bf16.msra.mxu0 0
  %6082 = vmatprep.subr.bf16.mxu0 0
  %6083 = vmatpush1.bf16.msra.mxu0 0
  %6084 = vmatprep.subr.bf16.mxu0 0
  %6085 = vmatpush1.bf16.msra.mxu0 0
  %6086 = vmatprep.subr.bf16.mxu0 0
  %6087 = vmatpush1.bf16.msra.mxu0 0
  %6088 = vmatprep.subr.bf16.mxu0 0
  %6089 = vmatpush1.bf16.msra.mxu0 0
  %6090 = vmatprep.subr.bf16.mxu0 0
  %6091 = vmatpush1.bf16.msra.mxu0 0
  %6092 = vmatprep.subr.bf16.mxu0 %v5917
  %6093 = vmatpush1.bf16.msra.mxu0 %v5916
  %6094 = vmatprep.subr.bf16.mxu0 %v5913
  %6095 = vmatpush1.bf16.msra.mxu0 %v5912
  %6096 = vmatprep.subr.bf16.mxu0 0
  %6097 = vmatpush2.bf16.msra.mxu0 0
  %6098 = vmatprep.subr.bf16.mxu0 0
  %6099 = vmatpush2.bf16.msra.mxu0 0
  %6100 = vmatprep.subr.bf16.mxu0 0
  %6101 = vmatpush2.bf16.msra.mxu0 0
  %6102 = vmatprep.subr.bf16.mxu0 0
  %6103 = vmatpush2.bf16.msra.mxu0 0
  %6104 = vmatprep.subr.bf16.mxu0 0
  %6105 = vmatpush2.bf16.msra.mxu0 0
  %6106 = vmatprep.subr.bf16.mxu0 0
  %6107 = vmatpush2.bf16.msra.mxu0 0
  %6108 = vmatprep.subr.bf16.mxu0 0
  %6109 = vmatpush2.bf16.msra.mxu0 0
  %6110 = vmatprep.subr.bf16.mxu0 0
  %6111 = vmatpush2.bf16.msra.mxu0 0
  %6112 = vmatprep.mubr.bf16.mxu0 0
  %6113 = vmatmul.mubr.bf16.gmra.mxu0 %v6057
  %v6114 = vpop.f32.mrf.mxu0
  %v6115 = vadd.f32 %v5939, %v6114
  %v6116 = vpop.f32.mrf.mxu0
  %v6117 = vadd.f32 %v5939, %v6116
  %v6118 = vpop.f32.mrf.mxu0
  %v6119 = vadd.f32 %v5944, %v6118
  %v6120 = vpop.f32.mrf.mxu0
  %v6121 = vadd.f32 %v5944, %v6120
  %6122 = vmatprep.mubr.bf16.mxu0 0
  %6123 = vmatmul.mubr.bf16.gmra.mxu0 %v6060
  %v6124 = vpop.f32.mrf.mxu0
  %v6125 = vadd.f32 %v5949, %v6124
  %v6126 = vpop.f32.mrf.mxu0
  %v6127 = vadd.f32 %v5949, %v6126
  %v6128 = vpop.f32.mrf.mxu0
  %v6129 = vadd.f32 %v5954, %v6128
  %v6130 = vpop.f32.mrf.mxu0
  %v6131 = vadd.f32 %v5954, %v6130
  %6132 = vmatprep.mubr.bf16.mxu0 0
  %6133 = vmatmul.mubr.bf16.gmra.mxu0 %v6063
  %v6134 = vpop.f32.mrf.mxu0
  %v6135 = vadd.f32 %v5959, %v6134
  %v6136 = vpop.f32.mrf.mxu0
  %v6137 = vadd.f32 %v5959, %v6136
  %v6138 = vpop.f32.mrf.mxu0
  %v6139 = vadd.f32 %v5964, %v6138
  %v6140 = vpop.f32.mrf.mxu0
  %v6141 = vadd.f32 %v5964, %v6140
  %6142 = vmatprep.mubr.bf16.mxu0 0
  %6143 = vmatmul.mubr.bf16.gmra.mxu0 %v6066
  %v6144 = vpop.f32.mrf.mxu0
  %v6145 = vadd.f32 %v5969, %v6144
  %v6146 = vpop.f32.mrf.mxu0
  %v6147 = vadd.f32 %v5969, %v6146
  %v6148 = vpop.f32.mrf.mxu0
  %v6149 = vadd.f32 %v5974, %v6148
  %v6150 = vpop.f32.mrf.mxu0
  %v6151 = vadd.f32 %v5974, %v6150
  %6152 = vmatprep.mubr.bf16.mxu0 0
  %6153 = vmatmul.mubr.bf16.gmra.mxu0 %v6069
  %v6154 = vpop.f32.mrf.mxu0
  %v6155 = vadd.f32 %v5979, %v6154
  %v6156 = vpop.f32.mrf.mxu0
  %v6157 = vadd.f32 %v5979, %v6156
  %v6158 = vpop.f32.mrf.mxu0
  %v6159 = vadd.f32 %v5984, %v6158
  %v6160 = vpop.f32.mrf.mxu0
  %v6161 = vadd.f32 %v5984, %v6160
  %6162 = vmatprep.mubr.bf16.mxu0 0
  %6163 = vmatmul.mubr.bf16.gmra.mxu0 %v6072
  %v6164 = vpop.f32.mrf.mxu0
  %v6165 = vadd.f32 %v5989, %v6164
  %v6166 = vpop.f32.mrf.mxu0
  %v6167 = vadd.f32 %v5989, %v6166
  %v6168 = vpop.f32.mrf.mxu0
  %v6169 = vadd.f32 %v5994, %v6168
  %v6170 = vpop.f32.mrf.mxu0
  %v6171 = vadd.f32 %v5994, %v6170
  %6172 = vmatprep.mubr.bf16.mxu0 0
  %6173 = vmatmul.mubr.bf16.gmra.mxu0 %v6075
  %v6174 = vpop.f32.mrf.mxu0
  %v6175 = vadd.f32 %v5999, %v6174
  %v6176 = vpop.f32.mrf.mxu0
  %v6177 = vadd.f32 %v5999, %v6176
  %v6178 = vpop.f32.mrf.mxu0
  %v6179 = vadd.f32 %v6004, %v6178
  %v6180 = vpop.f32.mrf.mxu0
  %v6181 = vadd.f32 %v6004, %v6180
  %6182 = vmatprep.mubr.bf16.mxu0 0
  %6183 = vmatmul.mubr.bf16.gmra.mxu0 %v6078
  %v6184 = vpop.f32.mrf.mxu0
  %v6185 = vadd.f32 %v6009, %v6184
  %v6186 = vpop.f32.mrf.mxu0
  %v6187 = vadd.f32 %v6009, %v6186
  %v6188 = vpop.f32.mrf.mxu0
  %v6189 = vadd.f32 %v6014, %v6188
  %v6190 = vpop.f32.mrf.mxu0
  %v6191 = vadd.f32 %v6014, %v6190
  %6192 = vdwg.mxu0
  %6193 = vmatprep.subr.bf16.mxu0 0
  %6194 = vmatpush1.bf16.msra.mxu0 0
  %6195 = vmatprep.subr.bf16.mxu0 0
  %6196 = vmatpush1.bf16.msra.mxu0 0
  %6197 = vmatprep.subr.bf16.mxu0 0
  %6198 = vmatpush1.bf16.msra.mxu0 0
  %6199 = vmatprep.subr.bf16.mxu0 0
  %6200 = vmatpush1.bf16.msra.mxu0 0
  %6201 = vmatprep.subr.bf16.mxu0 0
  %6202 = vmatpush1.bf16.msra.mxu0 0
  %6203 = vmatprep.subr.bf16.mxu0 0
  %6204 = vmatpush1.bf16.msra.mxu0 0
  %6205 = vmatprep.subr.bf16.mxu0 %v5919
  %6206 = vmatpush1.bf16.msra.mxu0 %v5918
  %6207 = vmatprep.subr.bf16.mxu0 %v5915
  %6208 = vmatpush1.bf16.msra.mxu0 %v5914
  %6209 = vmatprep.subr.bf16.mxu0 0
  %6210 = vmatpush2.bf16.msra.mxu0 0
  %6211 = vmatprep.subr.bf16.mxu0 0
  %6212 = vmatpush2.bf16.msra.mxu0 0
  %6213 = vmatprep.subr.bf16.mxu0 0
  %6214 = vmatpush2.bf16.msra.mxu0 0
  %6215 = vmatprep.subr.bf16.mxu0 0
  %6216 = vmatpush2.bf16.msra.mxu0 0
  %6217 = vmatprep.subr.bf16.mxu0 0
  %6218 = vmatpush2.bf16.msra.mxu0 0
  %6219 = vmatprep.subr.bf16.mxu0 0
  %6220 = vmatpush2.bf16.msra.mxu0 0
  %6221 = vmatprep.subr.bf16.mxu0 0
  %6222 = vmatpush2.bf16.msra.mxu0 0
  %6223 = vmatprep.subr.bf16.mxu0 0
  %6224 = vmatpush2.bf16.msra.mxu0 0
  %6225 = vmatprep.mubr.bf16.mxu0 0
  %6226 = vmatmul.mubr.bf16.gmra.mxu0 %v6057
  %v6227 = vpop.f32.mrf.mxu0
  %v6228 = vadd.f32 %v5939, %v6227
  %v6229 = vpop.f32.mrf.mxu0
  %v6230 = vadd.f32 %v5939, %v6229
  %v6231 = vpop.f32.mrf.mxu0
  %v6232 = vadd.f32 %v5944, %v6231
  %v6233 = vpop.f32.mrf.mxu0
  %v6234 = vadd.f32 %v5944, %v6233
  %6235 = vmatprep.mubr.bf16.mxu0 0
  %6236 = vmatmul.mubr.bf16.gmra.mxu0 %v6060
  %v6237 = vpop.f32.mrf.mxu0
  %v6238 = vadd.f32 %v5949, %v6237
  %v6239 = vpop.f32.mrf.mxu0
  %v6240 = vadd.f32 %v5949, %v6239
  %v6241 = vpop.f32.mrf.mxu0
  %v6242 = vadd.f32 %v5954, %v6241
  %v6243 = vpop.f32.mrf.mxu0
  %v6244 = vadd.f32 %v5954, %v6243
  %6245 = vmatprep.mubr.bf16.mxu0 0
  %6246 = vmatmul.mubr.bf16.gmra.mxu0 %v6063
  %v6247 = vpop.f32.mrf.mxu0
  %v6248 = vadd.f32 %v5959, %v6247
  %v6249 = vpop.f32.mrf.mxu0
  %v6250 = vadd.f32 %v5959, %v6249
  %v6251 = vpop.f32.mrf.mxu0
  %v6252 = vadd.f32 %v5964, %v6251
  %v6253 = vpop.f32.mrf.mxu0
  %v6254 = vadd.f32 %v5964, %v6253
  %6255 = vmatprep.mubr.bf16.mxu0 0
  %6256 = vmatmul.mubr.bf16.gmra.mxu0 %v6066
  %v6257 = vpop.f32.mrf.mxu0
  %v6258 = vadd.f32 %v5969, %v6257
  %v6259 = vpop.f32.mrf.mxu0
  %v6260 = vadd.f32 %v5969, %v6259
  %v6261 = vpop.f32.mrf.mxu0
  %v6262 = vadd.f32 %v5974, %v6261
  %v6263 = vpop.f32.mrf.mxu0
  %v6264 = vadd.f32 %v5974, %v6263
  %6265 = vmatprep.mubr.bf16.mxu0 0
  %6266 = vmatmul.mubr.bf16.gmra.mxu0 %v6069
  %v6267 = vpop.f32.mrf.mxu0
  %v6268 = vadd.f32 %v5979, %v6267
  %v6269 = vpop.f32.mrf.mxu0
  %v6270 = vadd.f32 %v5979, %v6269
  %v6271 = vpop.f32.mrf.mxu0
  %v6272 = vadd.f32 %v5984, %v6271
  %v6273 = vpop.f32.mrf.mxu0
  %v6274 = vadd.f32 %v5984, %v6273
  %6275 = vmatprep.mubr.bf16.mxu0 0
  %6276 = vmatmul.mubr.bf16.gmra.mxu0 %v6072
  %v6277 = vpop.f32.mrf.mxu0
  %v6278 = vadd.f32 %v5989, %v6277
  %v6279 = vpop.f32.mrf.mxu0
  %v6280 = vadd.f32 %v5989, %v6279
  %v6281 = vpop.f32.mrf.mxu0
  %v6282 = vadd.f32 %v5994, %v6281
  %v6283 = vpop.f32.mrf.mxu0
  %v6284 = vadd.f32 %v5994, %v6283
  %6285 = vmatprep.mubr.bf16.mxu0 0
  %6286 = vmatmul.mubr.bf16.gmra.mxu0 %v6075
  %v6287 = vpop.f32.mrf.mxu0
  %v6288 = vadd.f32 %v5999, %v6287
  %v6289 = vpop.f32.mrf.mxu0
  %v6290 = vadd.f32 %v5999, %v6289
  %v6291 = vpop.f32.mrf.mxu0
  %v6292 = vadd.f32 %v6004, %v6291
  %v6293 = vpop.f32.mrf.mxu0
  %v6294 = vadd.f32 %v6004, %v6293
  %6295 = vmatprep.mubr.bf16.mxu0 0
  %6296 = vmatmul.mubr.bf16.gmra.mxu0 %v6078
  %v6297 = vpop.f32.mrf.mxu0
  %v6298 = vadd.f32 %v6009, %v6297
  %v6299 = vpop.f32.mrf.mxu0
  %v6300 = vadd.f32 %v6009, %v6299
  %v6301 = vpop.f32.mrf.mxu0
  %v6302 = vadd.f32 %v6014, %v6301
  %v6303 = vpop.f32.mrf.mxu0
  %v6304 = vadd.f32 %v6014, %v6303
  %6305 = vdwg.mxu0
  %v6306 = vpack.c.bf16 %v6119, %v6115
  %v6307 = vpack.c.bf16 %v6121, %v6117
  %v6308 = vpack.c.bf16 %v6232, %v6228
  %v6309 = vpack.c.bf16 %v6234, %v6230
  %v6310 = vpack.c.bf16 %v6129, %v6125
  %v6311 = vpack.c.bf16 %v6131, %v6127
  %v6312 = vpack.c.bf16 %v6242, %v6238
  %v6313 = vpack.c.bf16 %v6244, %v6240
  %v6314 = vpack.c.bf16 %v6139, %v6135
  %v6315 = vpack.c.bf16 %v6141, %v6137
  %v6316 = vpack.c.bf16 %v6252, %v6248
  %v6317 = vpack.c.bf16 %v6254, %v6250
  %v6318 = vpack.c.bf16 %v6149, %v6145
  %v6319 = vpack.c.bf16 %v6151, %v6147
  %v6320 = vpack.c.bf16 %v6262, %v6258
  %v6321 = vpack.c.bf16 %v6264, %v6260
  %v6322 = vpack.c.bf16 %v6159, %v6155
  %v6323 = vpack.c.bf16 %v6161, %v6157
  %v6324 = vpack.c.bf16 %v6272, %v6268
  %v6325 = vpack.c.bf16 %v6274, %v6270
  %v6326 = vpack.c.bf16 %v6169, %v6165
  %v6327 = vpack.c.bf16 %v6171, %v6167
  %v6328 = vpack.c.bf16 %v6282, %v6278
  %v6329 = vpack.c.bf16 %v6284, %v6280
  %v6330 = vpack.c.bf16 %v6179, %v6175
  %v6331 = vpack.c.bf16 %v6181, %v6177
  %v6332 = vpack.c.bf16 %v6292, %v6288
  %v6333 = vpack.c.bf16 %v6294, %v6290
  %v6334 = vpack.c.bf16 %v6189, %v6185
  %v6335 = vpack.c.bf16 %v6191, %v6187
  %v6336 = vpack.c.bf16 %v6302, %v6298
  %v6337 = vpack.c.bf16 %v6304, %v6300
  %v6338 = vmul.bf16 %v6306, 1056980736
  %v6339 = vmul.bf16 %v6307, 1056980736
  %v6340 = vmul.bf16 %v6308, 1056980736
  %v6341 = vmul.bf16 %v6309, 1056980736
  %v6342 = vmul.bf16 %v6310, 1056980736
  %v6343 = vmul.bf16 %v6311, 1056980736
  %v6344 = vmul.bf16 %v6312, 1056980736
  %v6345 = vmul.bf16 %v6313, 1056980736
  %v6346 = vmul.bf16 %v6314, 1056980736
  %v6347 = vmul.bf16 %v6315, 1056980736
  %v6348 = vmul.bf16 %v6316, 1056980736
  %v6349 = vmul.bf16 %v6317, 1056980736
  %v6350 = vmul.bf16 %v6318, 1056980736
  %v6351 = vmul.bf16 %v6319, 1056980736
  %v6352 = vmul.bf16 %v6320, 1056980736
  %v6353 = vmul.bf16 %v6321, 1056980736
  %v6354 = vmul.bf16 %v6322, 1056980736
  %v6355 = vmul.bf16 %v6323, 1056980736
  %v6356 = vmul.bf16 %v6324, 1056980736
  %v6357 = vmul.bf16 %v6325, 1056980736
  %v6358 = vmul.bf16 %v6326, 1056980736
  %v6359 = vmul.bf16 %v6327, 1056980736
  %v6360 = vmul.bf16 %v6328, 1056980736
  %v6361 = vmul.bf16 %v6329, 1056980736
  %v6362 = vmul.bf16 %v6330, 1056980736
  %v6363 = vmul.bf16 %v6331, 1056980736
  %v6364 = vmul.bf16 %v6332, 1056980736
  %v6365 = vmul.bf16 %v6333, 1056980736
  %v6366 = vmul.bf16 %v6334, 1056980736
  %v6367 = vmul.bf16 %v6335, 1056980736
  %v6368 = vmul.bf16 %v6336, 1056980736
  %v6369 = vmul.bf16 %v6337, 1056980736
  %v6370 = vmul.bf16 %v6306, %v6306
  %v6371 = vmul.bf16 %v6307, %v6307
  %v6372 = vmul.bf16 %v6308, %v6308
  %v6373 = vmul.bf16 %v6309, %v6309
  %v6374 = vmul.bf16 %v6310, %v6310
  %v6375 = vmul.bf16 %v6311, %v6311
  %v6376 = vmul.bf16 %v6312, %v6312
  %v6377 = vmul.bf16 %v6313, %v6313
  %v6378 = vmul.bf16 %v6314, %v6314
  %v6379 = vmul.bf16 %v6315, %v6315
  %v6380 = vmul.bf16 %v6316, %v6316
  %v6381 = vmul.bf16 %v6317, %v6317
  %v6382 = vmul.bf16 %v6318, %v6318
  %v6383 = vmul.bf16 %v6319, %v6319
  %v6384 = vmul.bf16 %v6320, %v6320
  %v6385 = vmul.bf16 %v6321, %v6321
  %v6386 = vmul.bf16 %v6322, %v6322
  %v6387 = vmul.bf16 %v6323, %v6323
  %v6388 = vmul.bf16 %v6324, %v6324
  %v6389 = vmul.bf16 %v6325, %v6325
  %v6390 = vmul.bf16 %v6326, %v6326
  %v6391 = vmul.bf16 %v6327, %v6327
  %v6392 = vmul.bf16 %v6328, %v6328
  %v6393 = vmul.bf16 %v6329, %v6329
  %v6394 = vmul.bf16 %v6330, %v6330
  %v6395 = vmul.bf16 %v6331, %v6331
  %v6396 = vmul.bf16 %v6332, %v6332
  %v6397 = vmul.bf16 %v6333, %v6333
  %v6398 = vmul.bf16 %v6334, %v6334
  %v6399 = vmul.bf16 %v6335, %v6335
  %v6400 = vmul.bf16 %v6336, %v6336
  %v6401 = vmul.bf16 %v6337, %v6337
  %v6402 = vmul.bf16 %v6370, %v6306
  %v6403 = vmul.bf16 %v6371, %v6307
  %v6404 = vmul.bf16 %v6372, %v6308
  %v6405 = vmul.bf16 %v6373, %v6309
  %v6406 = vmul.bf16 %v6374, %v6310
  %v6407 = vmul.bf16 %v6375, %v6311
  %v6408 = vmul.bf16 %v6376, %v6312
  %v6409 = vmul.bf16 %v6377, %v6313
  %v6410 = vmul.bf16 %v6378, %v6314
  %v6411 = vmul.bf16 %v6379, %v6315
  %v6412 = vmul.bf16 %v6380, %v6316
  %v6413 = vmul.bf16 %v6381, %v6317
  %v6414 = vmul.bf16 %v6382, %v6318
  %v6415 = vmul.bf16 %v6383, %v6319
  %v6416 = vmul.bf16 %v6384, %v6320
  %v6417 = vmul.bf16 %v6385, %v6321
  %v6418 = vmul.bf16 %v6386, %v6322
  %v6419 = vmul.bf16 %v6387, %v6323
  %v6420 = vmul.bf16 %v6388, %v6324
  %v6421 = vmul.bf16 %v6389, %v6325
  %v6422 = vmul.bf16 %v6390, %v6326
  %v6423 = vmul.bf16 %v6391, %v6327
  %v6424 = vmul.bf16 %v6392, %v6328
  %v6425 = vmul.bf16 %v6393, %v6329
  %v6426 = vmul.bf16 %v6394, %v6330
  %v6427 = vmul.bf16 %v6395, %v6331
  %v6428 = vmul.bf16 %v6396, %v6332
  %v6429 = vmul.bf16 %v6397, %v6333
  %v6430 = vmul.bf16 %v6398, %v6334
  %v6431 = vmul.bf16 %v6399, %v6335
  %v6432 = vmul.bf16 %v6400, %v6336
  %v6433 = vmul.bf16 %v6401, %v6337
  %v6434 = vmul.bf16 %v6402, 1027030327
  %v6435 = vmul.bf16 %v6403, 1027030327
  %v6436 = vmul.bf16 %v6404, 1027030327
  %v6437 = vmul.bf16 %v6405, 1027030327
  %v6438 = vmul.bf16 %v6406, 1027030327
  %v6439 = vmul.bf16 %v6407, 1027030327
  %v6440 = vmul.bf16 %v6408, 1027030327
  %v6441 = vmul.bf16 %v6409, 1027030327
  %v6442 = vmul.bf16 %v6410, 1027030327
  %v6443 = vmul.bf16 %v6411, 1027030327
  %v6444 = vmul.bf16 %v6412, 1027030327
  %v6445 = vmul.bf16 %v6413, 1027030327
  %v6446 = vmul.bf16 %v6414, 1027030327
  %v6447 = vmul.bf16 %v6415, 1027030327
  %v6448 = vmul.bf16 %v6416, 1027030327
  %v6449 = vmul.bf16 %v6417, 1027030327
  %v6450 = vmul.bf16 %v6418, 1027030327
  %v6451 = vmul.bf16 %v6419, 1027030327
  %v6452 = vmul.bf16 %v6420, 1027030327
  %v6453 = vmul.bf16 %v6421, 1027030327
  %v6454 = vmul.bf16 %v6422, 1027030327
  %v6455 = vmul.bf16 %v6423, 1027030327
  %v6456 = vmul.bf16 %v6424, 1027030327
  %v6457 = vmul.bf16 %v6425, 1027030327
  %v6458 = vmul.bf16 %v6426, 1027030327
  %v6459 = vmul.bf16 %v6427, 1027030327
  %v6460 = vmul.bf16 %v6428, 1027030327
  %v6461 = vmul.bf16 %v6429, 1027030327
  %v6462 = vmul.bf16 %v6430, 1027030327
  %v6463 = vmul.bf16 %v6431, 1027030327
  %v6464 = vmul.bf16 %v6432, 1027030327
  %v6465 = vmul.bf16 %v6433, 1027030327
  %v6466 = vadd.bf16 %v6306, %v6434
  %v6467 = vadd.bf16 %v6307, %v6435
  %v6468 = vadd.bf16 %v6308, %v6436
  %v6469 = vadd.bf16 %v6309, %v6437
  %v6470 = vadd.bf16 %v6310, %v6438
  %v6471 = vadd.bf16 %v6311, %v6439
  %v6472 = vadd.bf16 %v6312, %v6440
  %v6473 = vadd.bf16 %v6313, %v6441
  %v6474 = vadd.bf16 %v6314, %v6442
  %v6475 = vadd.bf16 %v6315, %v6443
  %v6476 = vadd.bf16 %v6316, %v6444
  %v6477 = vadd.bf16 %v6317, %v6445
  %v6478 = vadd.bf16 %v6318, %v6446
  %v6479 = vadd.bf16 %v6319, %v6447
  %v6480 = vadd.bf16 %v6320, %v6448
  %v6481 = vadd.bf16 %v6321, %v6449
  %v6482 = vadd.bf16 %v6322, %v6450
  %v6483 = vadd.bf16 %v6323, %v6451
  %v6484 = vadd.bf16 %v6324, %v6452
  %v6485 = vadd.bf16 %v6325, %v6453
  %v6486 = vadd.bf16 %v6326, %v6454
  %v6487 = vadd.bf16 %v6327, %v6455
  %v6488 = vadd.bf16 %v6328, %v6456
  %v6489 = vadd.bf16 %v6329, %v6457
  %v6490 = vadd.bf16 %v6330, %v6458
  %v6491 = vadd.bf16 %v6331, %v6459
  %v6492 = vadd.bf16 %v6332, %v6460
  %v6493 = vadd.bf16 %v6333, %v6461
  %v6494 = vadd.bf16 %v6334, %v6462
  %v6495 = vadd.bf16 %v6335, %v6463
  %v6496 = vadd.bf16 %v6336, %v6464
  %v6497 = vadd.bf16 %v6337, %v6465
  %v6498 = vmul.bf16 %v6466, 1061961548
  %v6499 = vmul.bf16 %v6467, 1061961548
  %v6500 = vmul.bf16 %v6468, 1061961548
  %v6501 = vmul.bf16 %v6469, 1061961548
  %v6502 = vmul.bf16 %v6470, 1061961548
  %v6503 = vmul.bf16 %v6471, 1061961548
  %v6504 = vmul.bf16 %v6472, 1061961548
  %v6505 = vmul.bf16 %v6473, 1061961548
  %v6506 = vmul.bf16 %v6474, 1061961548
  %v6507 = vmul.bf16 %v6475, 1061961548
  %v6508 = vmul.bf16 %v6476, 1061961548
  %v6509 = vmul.bf16 %v6477, 1061961548
  %v6510 = vmul.bf16 %v6478, 1061961548
  %v6511 = vmul.bf16 %v6479, 1061961548
  %v6512 = vmul.bf16 %v6480, 1061961548
  %v6513 = vmul.bf16 %v6481, 1061961548
  %v6514 = vmul.bf16 %v6482, 1061961548
  %v6515 = vmul.bf16 %v6483, 1061961548
  %v6516 = vmul.bf16 %v6484, 1061961548
  %v6517 = vmul.bf16 %v6485, 1061961548
  %v6518 = vmul.bf16 %v6486, 1061961548
  %v6519 = vmul.bf16 %v6487, 1061961548
  %v6520 = vmul.bf16 %v6488, 1061961548
  %v6521 = vmul.bf16 %v6489, 1061961548
  %v6522 = vmul.bf16 %v6490, 1061961548
  %v6523 = vmul.bf16 %v6491, 1061961548
  %v6524 = vmul.bf16 %v6492, 1061961548
  %v6525 = vmul.bf16 %v6493, 1061961548
  %v6526 = vmul.bf16 %v6494, 1061961548
  %v6527 = vmul.bf16 %v6495, 1061961548
  %v6528 = vmul.bf16 %v6496, 1061961548
  %v6529 = vmul.bf16 %v6497, 1061961548
  %v6530 = vtanh.bf16.pop %v6498
  %v6531 = vtanh.bf16.pop %v6499
  %v6532 = vtanh.bf16.pop %v6500
  %v6533 = vtanh.bf16.pop %v6501
  %v6534 = vtanh.bf16.pop %v6502
  %v6535 = vtanh.bf16.pop %v6503
  %v6536 = vtanh.bf16.pop %v6504
  %v6537 = vtanh.bf16.pop %v6505
  %v6538 = vtanh.bf16.pop %v6506
  %v6539 = vtanh.bf16.pop %v6507
  %v6540 = vtanh.bf16.pop %v6508
  %v6541 = vtanh.bf16.pop %v6509
  %v6542 = vtanh.bf16.pop %v6510
  %v6543 = vtanh.bf16.pop %v6511
  %v6544 = vtanh.bf16.pop %v6512
  %v6545 = vtanh.bf16.pop %v6513
  %v6546 = vtanh.bf16.pop %v6514
  %v6547 = vtanh.bf16.pop %v6515
  %v6548 = vtanh.bf16.pop %v6516
  %v6549 = vtanh.bf16.pop %v6517
  %v6550 = vtanh.bf16.pop %v6518
  %v6551 = vtanh.bf16.pop %v6519
  %v6552 = vtanh.bf16.pop %v6520
  %v6553 = vtanh.bf16.pop %v6521
  %v6554 = vtanh.bf16.pop %v6522
  %v6555 = vtanh.bf16.pop %v6523
  %v6556 = vtanh.bf16.pop %v6524
  %v6557 = vtanh.bf16.pop %v6525
  %v6558 = vtanh.bf16.pop %v6526
  %v6559 = vtanh.bf16.pop %v6527
  %v6560 = vtanh.bf16.pop %v6528
  %v6561 = vtanh.bf16.pop %v6529
  %v6562 = vadd.bf16 %v6530, 1065369472
  %v6563 = vadd.bf16 %v6531, 1065369472
  %v6564 = vadd.bf16 %v6532, 1065369472
  %v6565 = vadd.bf16 %v6533, 1065369472
  %v6566 = vadd.bf16 %v6534, 1065369472
  %v6567 = vadd.bf16 %v6535, 1065369472
  %v6568 = vadd.bf16 %v6536, 1065369472
  %v6569 = vadd.bf16 %v6537, 1065369472
  %v6570 = vadd.bf16 %v6538, 1065369472
  %v6571 = vadd.bf16 %v6539, 1065369472
  %v6572 = vadd.bf16 %v6540, 1065369472
  %v6573 = vadd.bf16 %v6541, 1065369472
  %v6574 = vadd.bf16 %v6542, 1065369472
  %v6575 = vadd.bf16 %v6543, 1065369472
  %v6576 = vadd.bf16 %v6544, 1065369472
  %v6577 = vadd.bf16 %v6545, 1065369472
  %v6578 = vadd.bf16 %v6546, 1065369472
  %v6579 = vadd.bf16 %v6547, 1065369472
  %v6580 = vadd.bf16 %v6548, 1065369472
  %v6581 = vadd.bf16 %v6549, 1065369472
  %v6582 = vadd.bf16 %v6550, 1065369472
  %v6583 = vadd.bf16 %v6551, 1065369472
  %v6584 = vadd.bf16 %v6552, 1065369472
  %v6585 = vadd.bf16 %v6553, 1065369472
  %v6586 = vadd.bf16 %v6554, 1065369472
  %v6587 = vadd.bf16 %v6555, 1065369472
  %v6588 = vadd.bf16 %v6556, 1065369472
  %v6589 = vadd.bf16 %v6557, 1065369472
  %v6590 = vadd.bf16 %v6558, 1065369472
  %v6591 = vadd.bf16 %v6559, 1065369472
  %v6592 = vadd.bf16 %v6560, 1065369472
  %v6593 = vadd.bf16 %v6561, 1065369472
  %v6594 = vmul.bf16 %v6338, %v6562
  %v6595 = vmul.bf16 %v6339, %v6563
  %v6596 = vmul.bf16 %v6340, %v6564
  %v6597 = vmul.bf16 %v6341, %v6565
  %v6598 = vmul.bf16 %v6342, %v6566
  %v6599 = vmul.bf16 %v6343, %v6567
  %v6600 = vmul.bf16 %v6344, %v6568
  %v6601 = vmul.bf16 %v6345, %v6569
  %v6602 = vmul.bf16 %v6346, %v6570
  %v6603 = vmul.bf16 %v6347, %v6571
  %v6604 = vmul.bf16 %v6348, %v6572
  %v6605 = vmul.bf16 %v6349, %v6573
  %v6606 = vmul.bf16 %v6350, %v6574
  %v6607 = vmul.bf16 %v6351, %v6575
  %v6608 = vmul.bf16 %v6352, %v6576
  %v6609 = vmul.bf16 %v6353, %v6577
  %v6610 = vmul.bf16 %v6354, %v6578
  %v6611 = vmul.bf16 %v6355, %v6579
  %v6612 = vmul.bf16 %v6356, %v6580
  %v6613 = vmul.bf16 %v6357, %v6581
  %v6614 = vmul.bf16 %v6358, %v6582
  %v6615 = vmul.bf16 %v6359, %v6583
  %v6616 = vmul.bf16 %v6360, %v6584
  %v6617 = vmul.bf16 %v6361, %v6585
  %v6618 = vmul.bf16 %v6362, %v6586
  %v6619 = vmul.bf16 %v6363, %v6587
  %v6620 = vmul.bf16 %v6364, %v6588
  %v6621 = vmul.bf16 %v6365, %v6589
  %v6622 = vmul.bf16 %v6366, %v6590
  %v6623 = vmul.bf16 %v6367, %v6591
  %v6624 = vmul.bf16 %v6368, %v6592
  %v6625 = vmul.bf16 %v6369, %v6593
  %v6626 = vld [vmem:[%s15] sm:$0xf]
  %v6627 = vld [vmem:[%s15 + $0x4] sm:$0xf]
  %v6628 = vld [vmem:[%s15 + $0x8] sm:$0xf]
  %v6629 = vld [vmem:[%s15 + $0xc] sm:$0xf]
  %v6630 = vld [vmem:[%s16] sm:$0xff]
  %v6631 = vld [vmem:[%s16 + $0x8] sm:$0xff]
  %v6632 = vld [vmem:[%s16 + $0x10] sm:$0xff]
  %v6633 = vld [vmem:[%s16 + $0x18] sm:$0xff]
  %6635 = vset.pattern.permute.xlu0 0
  %6636 = vperm.xlu0 %6635, %v6630
  %v6637 = vpop.permute.xlu0 %6636
  %6640 = vset.pattern.permute.xlu0 0
  %6641 = vperm.xlu0 %6640, %v6631
  %v6642 = vpop.permute.xlu0 %6641
  %6645 = vset.pattern.permute.xlu0 0
  %6646 = vperm.xlu0 %6645, %v6632
  %v6647 = vpop.permute.xlu0 %6646
  %6650 = vset.pattern.permute.xlu0 0
  %6651 = vperm.xlu0 %6650, %v6633
  %v6652 = vpop.permute.xlu0 %6651
  %v6658 = vunpack.c.l.b16 %v6626
  %v6659 = vunpack.c.l.b16 %v6627
  %v6660 = vunpack.c.l.b16 %v6628
  %v6661 = vunpack.c.l.b16 %v6629
  %v6662 = vpack.c.b16 %v6659, %v6658
  %v6663 = vpack.c.b16 %v6661, %v6660
  %6666 = vmatprep.subr.bf16.mxu0 %v6623
  %6667 = vmatpush1.bf16.msra.mxu0 %v6622
  %6668 = vmatprep.subr.bf16.mxu0 %v6619
  %6669 = vmatpush1.bf16.msra.mxu0 %v6618
  %6670 = vmatprep.subr.bf16.mxu0 %v6615
  %6671 = vmatpush1.bf16.msra.mxu0 %v6614
  %6672 = vmatprep.subr.bf16.mxu0 %v6611
  %6673 = vmatpush1.bf16.msra.mxu0 %v6610
  %6674 = vmatprep.subr.bf16.mxu0 %v6607
  %6675 = vmatpush1.bf16.msra.mxu0 %v6606
  %6676 = vmatprep.subr.bf16.mxu0 %v6603
  %6677 = vmatpush1.bf16.msra.mxu0 %v6602
  %6678 = vmatprep.subr.bf16.mxu0 %v6599
  %6679 = vmatpush1.bf16.msra.mxu0 %v6598
  %6680 = vmatprep.subr.bf16.mxu0 %v6595
  %6681 = vmatpush1.bf16.msra.mxu0 %v6594
  %6682 = vmatprep.subr.bf16.mxu0 0
  %6683 = vmatpush2.bf16.msra.mxu0 0
  %6684 = vmatprep.subr.bf16.mxu0 0
  %6685 = vmatpush2.bf16.msra.mxu0 0
  %6686 = vmatprep.subr.bf16.mxu0 0
  %6687 = vmatpush2.bf16.msra.mxu0 0
  %6688 = vmatprep.subr.bf16.mxu0 0
  %6689 = vmatpush2.bf16.msra.mxu0 0
  %6690 = vmatprep.subr.bf16.mxu0 0
  %6691 = vmatpush2.bf16.msra.mxu0 0
  %6692 = vmatprep.subr.bf16.mxu0 0
  %6693 = vmatpush2.bf16.msra.mxu0 0
  %6694 = vmatprep.subr.bf16.mxu0 0
  %6695 = vmatpush2.bf16.msra.mxu0 0
  %6696 = vmatprep.subr.bf16.mxu0 0
  %6697 = vmatpush2.bf16.msra.mxu0 0
  %6698 = vmatprep.mubr.bf16.mxu0 0
  %6699 = vmatmul.mubr.bf16.gmra.mxu0 %v6662
  %v6700 = vpop.f32.mrf.mxu0
  %v6701 = vadd.f32 %v6637, %v6700
  %v6702 = vpop.f32.mrf.mxu0
  %v6703 = vadd.f32 %v6637, %v6702
  %v6704 = vpop.f32.mrf.mxu0
  %v6705 = vadd.f32 %v6642, %v6704
  %v6706 = vpop.f32.mrf.mxu0
  %v6707 = vadd.f32 %v6642, %v6706
  %6708 = vmatprep.mubr.bf16.mxu0 0
  %6709 = vmatmul.mubr.bf16.gmra.mxu0 %v6663
  %v6710 = vpop.f32.mrf.mxu0
  %v6711 = vadd.f32 %v6647, %v6710
  %v6712 = vpop.f32.mrf.mxu0
  %v6713 = vadd.f32 %v6647, %v6712
  %v6714 = vpop.f32.mrf.mxu0
  %v6715 = vadd.f32 %v6652, %v6714
  %v6716 = vpop.f32.mrf.mxu0
  %v6717 = vadd.f32 %v6652, %v6716
  %6718 = vdwg.mxu0
  %6719 = vmatprep.subr.bf16.mxu0 %v6625
  %6720 = vmatpush1.bf16.msra.mxu0 %v6624
  %6721 = vmatprep.subr.bf16.mxu0 %v6621
  %6722 = vmatpush1.bf16.msra.mxu0 %v6620
  %6723 = vmatprep.subr.bf16.mxu0 %v6617
  %6724 = vmatpush1.bf16.msra.mxu0 %v6616
  %6725 = vmatprep.subr.bf16.mxu0 %v6613
  %6726 = vmatpush1.bf16.msra.mxu0 %v6612
  %6727 = vmatprep.subr.bf16.mxu0 %v6609
  %6728 = vmatpush1.bf16.msra.mxu0 %v6608
  %6729 = vmatprep.subr.bf16.mxu0 %v6605
  %6730 = vmatpush1.bf16.msra.mxu0 %v6604
  %6731 = vmatprep.subr.bf16.mxu0 %v6601
  %6732 = vmatpush1.bf16.msra.mxu0 %v6600
  %6733 = vmatprep.subr.bf16.mxu0 %v6597
  %6734 = vmatpush1.bf16.msra.mxu0 %v6596
  %6735 = vmatprep.subr.bf16.mxu0 0
  %6736 = vmatpush2.bf16.msra.mxu0 0
  %6737 = vmatprep.subr.bf16.mxu0 0
  %6738 = vmatpush2.bf16.msra.mxu0 0
  %6739 = vmatprep.subr.bf16.mxu0 0
  %6740 = vmatpush2.bf16.msra.mxu0 0
  %6741 = vmatprep.subr.bf16.mxu0 0
  %6742 = vmatpush2.bf16.msra.mxu0 0
  %6743 = vmatprep.subr.bf16.mxu0 0
  %6744 = vmatpush2.bf16.msra.mxu0 0
  %6745 = vmatprep.subr.bf16.mxu0 0
  %6746 = vmatpush2.bf16.msra.mxu0 0
  %6747 = vmatprep.subr.bf16.mxu0 0
  %6748 = vmatpush2.bf16.msra.mxu0 0
  %6749 = vmatprep.subr.bf16.mxu0 0
  %6750 = vmatpush2.bf16.msra.mxu0 0
  %6751 = vmatprep.mubr.bf16.mxu0 0
  %6752 = vmatmul.mubr.bf16.gmra.mxu0 %v6662
  %v6753 = vpop.f32.mrf.mxu0
  %v6754 = vadd.f32 %v6637, %v6753
  %v6755 = vpop.f32.mrf.mxu0
  %v6756 = vadd.f32 %v6637, %v6755
  %v6757 = vpop.f32.mrf.mxu0
  %v6758 = vadd.f32 %v6642, %v6757
  %v6759 = vpop.f32.mrf.mxu0
  %v6760 = vadd.f32 %v6642, %v6759
  %6761 = vmatprep.mubr.bf16.mxu0 0
  %6762 = vmatmul.mubr.bf16.gmra.mxu0 %v6663
  %v6763 = vpop.f32.mrf.mxu0
  %v6764 = vadd.f32 %v6647, %v6763
  %v6765 = vpop.f32.mrf.mxu0
  %v6766 = vadd.f32 %v6647, %v6765
  %v6767 = vpop.f32.mrf.mxu0
  %v6768 = vadd.f32 %v6652, %v6767
  %v6769 = vpop.f32.mrf.mxu0
  %v6770 = vadd.f32 %v6652, %v6769
  %6771 = vdwg.mxu0
  %v6772 = vadd.f32 %v5388, %v6701
  %v6773 = vadd.f32 %v5389, %v6703
  %v6774 = vadd.f32 %v5390, %v6754
  %v6775 = vadd.f32 %v5391, %v6756
  %v6776 = vadd.f32 %v5392, %v6705
  %v6777 = vadd.f32 %v5393, %v6707
  %v6778 = vadd.f32 %v5394, %v6758
  %v6779 = vadd.f32 %v5395, %v6760
  %v6780 = vadd.f32 %v5396, %v6711
  %v6781 = vadd.f32 %v5397, %v6713
  %v6782 = vadd.f32 %v5398, %v6764
  %v6783 = vadd.f32 %v5399, %v6766
  %v6784 = vadd.f32 %v5400, %v6715
  %v6785 = vadd.f32 %v5401, %v6717
  %v6786 = vadd.f32 %v5402, %v6768
  %v6787 = vadd.f32 %v5403, %v6770
  %6788 = vst [vmem:[%s17] sm:$0xff] %v6772
  %6789 = vst [vmem:[%s17 + $0x8] sm:$0xff] %v6773
  %6790 = vst [vmem:[%s17 + $0x10] sm:$0xff] %v6776
  %6791 = vst [vmem:[%s17 + $0x18] sm:$0xff] %v6777
  %6792 = vst [vmem:[%s17 + $0x20] sm:$0xff] %v6780
  %6793 = vst [vmem:[%s17 + $0x28] sm:$0xff] %v6781
  %6794 = vst [vmem:[%s17 + $0x30] sm:$0xff] %v6784
  %6795 = vst [vmem:[%s17 + $0x38] sm:$0xff] %v6785
  %s6796 = scalar_lea.vmem %s17, 64
  %6797 = vst [vmem:[%s6796] sm:$0xff] %v6774
  %6798 = vst [vmem:[%s6796 + $0x8] sm:$0xff] %v6775
  %6799 = vst [vmem:[%s6796 + $0x10] sm:$0xff] %v6778
  %6800 = vst [vmem:[%s6796 + $0x18] sm:$0xff] %v6779
  %6801 = vst [vmem:[%s6796 + $0x20] sm:$0xff] %v6782
  %6802 = vst [vmem:[%s6796 + $0x28] sm:$0xff] %v6783
  %6803 = vst [vmem:[%s6796 + $0x30] sm:$0xff] %v6786
  %6804 = vst [vmem:[%s6796 + $0x38] sm:$0xff] %v6787
  // Predicated region
  $region70: #{high_frequency_operator.1} parent=0 // pred_check
    _
  $region71: #{high_frequency_operator.1} parent=0 // pred_check_branch
    %6806 = sbr.rel (0) target = $region73
  $region72: #{high_frequency_operator.1} parent=0 // pred_region
    _
  $region73: #{high_frequency_operator.1} parent=0 // pred_fallthru
    _
  // Predicated region
  $region74: #{high_frequency_operator.1} parent=0 // pred_check
    _
  $region75: #{high_frequency_operator.1} parent=0 // pred_check_branch
    %6808 = sbr.rel (0) target = $region77
  $region76: #{high_frequency_operator.1} parent=0 // pred_region
    _
  $region77: #{high_frequency_operator.1} parent=0 // pred_fallthru
    _

</llo_original>
